<compile_context>
chip_gen: v7x
topology: tpu7x:2x2x1
jax: 0.10.0
libtpu: 0.0.40
codegen_flags: <defaults>
</compile_context>

<pallas_src>
import functools

import jax
import jax.numpy as jnp
from jax.experimental import pallas as pl
from jax.experimental.pallas import tpu as pltpu

C_FEAT = 64        # fixed feature width of the ResNet branch (spec hard-codes 64)
FB_PER_STEP = 2    # identity res-blocks processed per grid step (6 blocks -> grid=(3,))


def _out_len(L, stride):
    # PyTorch Conv1d(k=3, pad=1, stride) / conv1x1(stride) output length.
    return (L - 1) // stride + 1


# ----------------------------- in-kernel helpers (traced) -----------------------------

def _pair_sum(s):
    # s: (R, C) per-channel partial sums; returns, for every channel c, the sum over
    # its 2-channel GroupNorm group {2g, 2g+1}  (GroupNorm(32, 64) => 32 groups of 2
    # consecutive channels), built from lane shifts + a select (no (C,C) matmul).
    nxt = jnp.concatenate([s[:, 1:], s[:, :1]], axis=1)    # s[i+1] (wrap lane unused)
    prv = jnp.concatenate([s[:, -1:], s[:, :-1]], axis=1)  # s[i-1] (wrap lane unused)
    lane = jax.lax.broadcasted_iota(jnp.int32, s.shape, 1)
    return jnp.where(lane % 2 == 0, s + nxt, s + prv)


def _gn_relu(y, gamma, beta, *, eps, relu=True):
    # GroupNorm(32, C) over channels-last (B, L, C), group size 2.
    # Review item 4: affine + ReLU fused into one y*scale + shift pass (scale/shift
    # are tiny (B, C) tensors).  Review item 5 (reduced XLU shuffle work): both
    # moments are reduced in one pass and share a single pair-shift.
    Bb, L, _ = y.shape
    n = 2.0 * L
    stats = jnp.concatenate([jnp.sum(y, axis=1), jnp.sum(y * y, axis=1)], axis=0)
    g = _pair_sum(stats) / n                               # (2B, C) group mean / mean-sq
    mean, msq = g[:Bb], g[Bb:]
    var = jnp.maximum(msq - mean * mean, 0.0)
    scale = gamma * jax.lax.rsqrt(var + eps)               # (B, C)
    shift = beta - mean * scale                            # (B, C)
    out = y * scale[:, None, :] + shift[:, None, :]
    return jnp.maximum(out, 0.0) if relu else out


def _conv3(y, w3, *, stride, Lout):
    # Conv1d(k=3, pad=1, stride) on channels-last y: (B, L, Cin); w3: (3, Cin, Cout).
    # Review items 1-2: three accumulated MXU matmuls on sublane-shifted views
    # (no K*Cin im2col, no lane-axis concat).  For stride 2 the taps are accumulated
    # at full temporal resolution and the result is parity-subsampled ONCE per conv.
    Bb, L, Cin = y.shape
    Cout = w3.shape[-1]
    rows = stride * Lout                       # rows carried through the matmuls
    rpad = rows + 1 - L                        # right zero-pad so every tap view exists
    zl = jnp.zeros((Bb, 1, Cin), y.dtype)
    parts = [zl, y]
    if rpad > 0:
        parts.append(jnp.zeros((Bb, rpad, Cin), y.dtype))
    yp = jnp.concatenate(parts, axis=1)        # (B, 1 + L + rpad, Cin)
    acc = None
    for k in range(3):
        tap = yp[:, k:k + rows, :].reshape(Bb * rows, Cin)
        p = jnp.dot(tap, w3[k], preferred_element_type=jnp.float32)
        acc = p if acc is None else acc + p
    out = acc.reshape(Bb, rows, Cout)
    if stride > 1:                             # keep every `stride`-th output row
        out = jnp.concatenate(
            [out[:, j * stride:j * stride + 1, :] for j in range(Lout)], axis=1)
    return out


# ----------------------------- fused forward kernel -----------------------------

def _fused_kernel(x_lstm_ref, xc_ref,
                  lstm_w_ref, lstm_b_ref,
                  stem_w_ref, stem_b_ref,
                  d_w1_ref, d_w2_ref, d_g1_ref, d_b1_ref, d_g2_ref, d_b2_ref,
                  f_w1_ref, f_w2_ref, f_g1_ref, f_b1_ref, f_g2_ref, f_b2_ref,
                  gnf_g_ref, gnf_b_ref, fc_w_ref, fc_b_ref,
                  out_ref,
                  y_sc, h_sc,
                  *, B, Cin, T, H, eps):
    f32 = jnp.float32
    C = C_FEAT
    step = pl.program_id(0)
    L0 = T - 2                                  # Conv1d(Cin, 64, 3, 1): no padding
    L1 = _out_len(L0, 2)
    L2 = _out_len(L1, 2)

    # -------------- step 0: LSTM branch + conv stem + 2 downsampling blocks --------
    @pl.when(step == 0)
    def _prologue():
        # nn.LSTM over seq_len == 1 with zero initial state reduces to one cell step;
        # the three live gates are fused into a single (D, 3H) matmul packed [i|g|o]
        # (forget gate irrelevant since c0 == 0), bias = b_ih + b_hh.
        z = jnp.dot(x_lstm_ref[...], lstm_w_ref[...],
                    preferred_element_type=f32) + lstm_b_ref[...]
        i_g = jax.nn.sigmoid(z[:, :H])
        g_g = jnp.tanh(z[:, H:2 * H])
        o_g = jax.nn.sigmoid(z[:, 2 * H:])
        h_sc[...] = o_g * jnp.tanh(i_g * g_g)                    # (B, H)

        # Stem Conv1d(Cin, 64, 3, stride=1, pad=0), per-tap accumulation.
        xc = xc_ref[...]                                         # (B, T, Cin)
        if Cin == 1:   # taps broadcast against the (1, 64) weight rows (VPU FMAs)
            y = stem_b_ref[...] + xc[:, 0:L0, :] * stem_w_ref[0]
            for k in (1, 2):
                y = y + xc[:, k:k + L0, :] * stem_w_ref[k]
        else:          # general Cin: per-tap accumulated matmuls
            acc = jnp.zeros((B * L0, C), f32)
            for k in range(3):
                acc = acc + jnp.dot(xc[:, k:k + L0, :].reshape(B * L0, Cin),
                                    stem_w_ref[k], preferred_element_type=f32)
            y = acc.reshape(B, L0, C) + stem_b_ref[...]

        # Two stride-2 pre-activation res-blocks.  Review item 3: the 1x1 shortcut is
        # folded into the centre tap of conv1, so each tap matmul has 128 output
        # lanes and directly yields [conv1_out | shortcut].
        for blk, Lout in ((0, L1), (1, L2)):
            act = _gn_relu(y, d_g1_ref[blk], d_b1_ref[blk], eps=eps)
            comb = _conv3(act, d_w1_ref[blk], stride=2, Lout=Lout)   # (B, Lout, 2C)
            t, short = comb[:, :, :C], comb[:, :, C:]
            t = _gn_relu(t, d_g2_ref[blk], d_b2_ref[blk], eps=eps)
            t = _conv3(t, d_w2_ref[blk], stride=1, Lout=Lout)
            y = t + short
        y_sc[...] = y                                            # (B, L2, C)

    # ------------ every step: FB_PER_STEP identity res-blocks (stride 1) -----------
    # Only these blocks' weights are gridded, so the next step's conv / GN weights
    # are DMA'd while this step computes (review item 7).
    y = y_sc[...]
    for j in range(FB_PER_STEP):
        act = _gn_relu(y, f_g1_ref[j], f_b1_ref[j], eps=eps)
        t = _conv3(act, f_w1_ref[j], stride=1, Lout=L2)
        t = _gn_relu(t, f_g2_ref[j], f_b2_ref[j], eps=eps)
        t = _conv3(t, f_w2_ref[j], stride=1, Lout=L2)
        y = y + t
    y_sc[...] = y

    # -------------- last step: norm -> ReLU -> avg-pool -> concat -> linear --------
    @pl.when(step == pl.num_programs(0) - 1)
    def _epilogue():
        yf = _gn_relu(y_sc[...], gnf_g_ref[...], gnf_b_ref[...], eps=eps)
        feat = jnp.mean(yf, axis=1)                              # (B, C)
        zc = jnp.concatenate([h_sc[...], feat], axis=1)          # (B, H + C)
        out_ref[...] = jnp.dot(zc, fc_w_ref[...],
                               preferred_element_type=f32) + fc_b_ref[...]


# ----------------------------- wrapper -----------------------------

def lstmfrn_forward(x, params, *, eps=1e-5):
    # x: (B, C_in, T) -- PyTorch NCW convention.
    B, Cin, T = x.shape
    H = params["lstm_w"].shape[1] // 3
    nv = params["fc_w"].shape[1]
    nfeat = params["f_w1"].shape[0]
    assert nfeat % FB_PER_STEP == 0
    grid = (nfeat // FB_PER_STEP,)
    L2 = _out_len(_out_len(T - 2, 2), 2)       # activation length after downsampling

    # Zero-copy views of the single HBM input (review item 6: the wrapper-built
    # im2col buffer of the previous version is gone; for Cin == 1 both views are
    # pure bitcasts).
    x_lstm = x.reshape(B, Cin * T)             # torch.reshape(x, (B, -1))
    xc = jnp.transpose(x, (0, 2, 1))           # (B, T, Cin) channels-last

    def resident(a):                           # whole array resident in VMEM
        nd = a.ndim
        return pl.BlockSpec(tuple(a.shape), lambda i: (0,) * nd)

    def per_step(a):                           # FB_PER_STEP res-blocks' worth per step
        nd = a.ndim
        return pl.BlockSpec((FB_PER_STEP,) + tuple(a.shape[1:]),
                            lambda i: (i,) + (0,) * (nd - 1))

    in_specs = [
        resident(x_lstm), resident(xc),
        resident(params["lstm_w"]), resident(params["lstm_b"]),
        resident(params["stem_w"]), resident(params["stem_b"]),
        resident(params["d_w1"]), resident(params["d_w2"]),
        resident(params["d_g1"]), resident(params["d_b1"]),
        resident(params["d_g2"]), resident(params["d_b2"]),
        per_step(params["f_w1"]), per_step(params["f_w2"]),
        per_step(params["f_g1"]), per_step(params["f_b1"]),
        per_step(params["f_g2"]), per_step(params["f_b2"]),
        resident(params["gnf_g"]), resident(params["gnf_b"]),
        resident(params["fc_w"]), resident(params["fc_b"]),
    ]

    kernel = functools.partial(_fused_kernel, B=B, Cin=Cin, T=T, H=H, eps=eps)
    return pl.pallas_call(
        kernel,
        out_shape=jax.ShapeDtypeStruct((B, nv), jnp.float32),
        grid=grid,
        in_specs=in_specs,
        out_specs=pl.BlockSpec((B, nv), lambda i: (0, 0)),
        scratch_shapes=[
            pltpu.VMEM((B, L2, C_FEAT), jnp.float32),   # activation carried across steps
            pltpu.VMEM((B, H), jnp.float32),            # LSTM branch output
        ],
        compiler_params=pltpu.CompilerParams(
            dimension_semantics=("arbitrary",),         # sequential carry through scratch
            vmem_limit_bytes=32 * 1024 * 1024,
        ),
    )(x_lstm, xc,
      params["lstm_w"], params["lstm_b"],
      params["stem_w"], params["stem_b"],
      params["d_w1"], params["d_w2"],
      params["d_g1"], params["d_b1"], params["d_g2"], params["d_b2"],
      params["f_w1"], params["f_w2"],
      params["f_g1"], params["f_b1"], params["f_g2"], params["f_b2"],
      params["gnf_g"], params["gnf_b"],
      params["fc_w"], params["fc_b"])


# ----------------------------- parameter init -----------------------------

def init_params(key, *, time_steps, in_channels, lstm_hs, num_variables):
    # LSTM gate weights are packed as (D, 3H) columns [i | g | o] with bias
    # b_ih + b_hh (valid because h0 = c0 = 0 and seq_len == 1).  Conv weights are
    # stored per-tap as (3, Cin, Cout); for the two downsampling blocks the 1x1
    # stride-2 shortcut is folded into the centre tap as 64 extra output columns.
    C = C_FEAT
    D = time_steps * in_channels
    keys = iter(jax.random.split(key, 32))

    def nrm(shape, scale=0.05):
        return scale * jax.random.normal(next(keys), shape, jnp.float32)

    conv1_ds = nrm((2, 3, C, C))            # conv3x3(64, 64, stride=2), bias=False
    down = nrm((2, C, C))                   # conv1x1(64, 64, stride=2), bias=False
    d_w1 = jnp.zeros((2, 3, C, 2 * C), jnp.float32)
    d_w1 = d_w1.at[:, :, :, :C].set(conv1_ds)
    d_w1 = d_w1.at[:, 1, :, C:].set(down)   # shortcut == centre tap of the 3-tap conv

    return {
        "lstm_w": nrm((D, 3 * lstm_hs)),
        "lstm_b": nrm((1, 3 * lstm_hs)),
        "stem_w": nrm((3, in_channels, C)),  # Conv1d(Cin, 64, 3, 1), bias=True
        "stem_b": nrm((1, C)),
        "d_w1": d_w1,
        "d_w2": nrm((2, 3, C, C)),           # conv3x3(64, 64, stride=1), bias=False
        "d_g1": jnp.ones((2, 1, C), jnp.float32),
        "d_b1": jnp.zeros((2, 1, C), jnp.float32),
        "d_g2": jnp.ones((2, 1, C), jnp.float32),
        "d_b2": jnp.zeros((2, 1, C), jnp.float32),
        "f_w1": nrm((6, 3, C, C)),
        "f_w2": nrm((6, 3, C, C)),
        "f_g1": jnp.ones((6, 1, C), jnp.float32),
        "f_b1": jnp.zeros((6, 1, C), jnp.float32),
        "f_g2": jnp.ones((6, 1, C), jnp.float32),
        "f_b2": jnp.zeros((6, 1, C), jnp.float32),
        "gnf_g": jnp.ones((1, C), jnp.float32),
        "gnf_b": jnp.zeros((1, C), jnp.float32),
        "fc_w": nrm((lstm_hs + C, num_variables)),
        "fc_b": nrm((1, num_variables)),
    }


if __name__ == "__main__":
    key = jax.random.PRNGKey(0)
    kx, kp = jax.random.split(key)

    B, C_in, T = 2, 1, 16
    lstm_hs, num_variables = 64, 1

    x = jax.random.normal(kx, (B, C_in, T), jnp.float32)
    params = init_params(kp, time_steps=T, in_channels=C_in,
                         lstm_hs=lstm_hs, num_variables=num_variables)

    out = jax.jit(lstmfrn_forward)(x, params)
    out = jax.block_until_ready(out)
    assert out.shape == (B, num_variables), out.shape
    assert bool(jnp.all(jnp.isfinite(out)))
    print("KERNEL_OK")
</pallas_src>

<mosaic_0001>
module attributes {stable_mosaic.version = 11 : i64} {
  func.func @_fused_kernel(%arg0: i32, %arg1: memref<2x16xf32, #tpu.memory_space<vmem>>, %arg2: memref<2x16x1xf32, #tpu.memory_space<vmem>>, %arg3: memref<16x192xf32, #tpu.memory_space<vmem>>, %arg4: memref<1x192xf32, #tpu.memory_space<vmem>>, %arg5: memref<3x1x64xf32, #tpu.memory_space<vmem>>, %arg6: memref<1x64xf32, #tpu.memory_space<vmem>>, %arg7: memref<2x3x64x128xf32, #tpu.memory_space<vmem>>, %arg8: memref<2x3x64x64xf32, #tpu.memory_space<vmem>>, %arg9: memref<2x1x64xf32, #tpu.memory_space<vmem>>, %arg10: memref<2x1x64xf32, #tpu.memory_space<vmem>>, %arg11: memref<2x1x64xf32, #tpu.memory_space<vmem>>, %arg12: memref<2x1x64xf32, #tpu.memory_space<vmem>>, %arg13: memref<2x3x64x64xf32, #tpu.memory_space<vmem>>, %arg14: memref<2x3x64x64xf32, #tpu.memory_space<vmem>>, %arg15: memref<2x1x64xf32, #tpu.memory_space<vmem>>, %arg16: memref<2x1x64xf32, #tpu.memory_space<vmem>>, %arg17: memref<2x1x64xf32, #tpu.memory_space<vmem>>, %arg18: memref<2x1x64xf32, #tpu.memory_space<vmem>>, %arg19: memref<1x64xf32, #tpu.memory_space<vmem>>, %arg20: memref<1x64xf32, #tpu.memory_space<vmem>>, %arg21: memref<128x1xf32, #tpu.memory_space<vmem>>, %arg22: memref<1x1xf32, #tpu.memory_space<vmem>>, %arg23: memref<2x1xf32, #tpu.memory_space<vmem>>, %arg24: memref<2x4x64xf32, #tpu.memory_space<vmem>>, %arg25: memref<2x64xf32, #tpu.memory_space<vmem>>) attributes {dimension_semantics = [#tpu.dimension_semantics<arbitrary>], iteration_bounds = array<i64: 3>, scalar_prefetch = 0 : i64, scratch_operands = 2 : i64, tpu.core_type = #tpu.core_type<tc>, window_params = [{pipeline_mode = #tpu.pipeline_mode<synchronous>, transform_indices = @transform_0, window_bounds = array<i64: 2, 16>}, {pipeline_mode = #tpu.pipeline_mode<synchronous>, transform_indices = @transform_1, window_bounds = array<i64: 2, 16, 1>}, {pipeline_mode = #tpu.pipeline_mode<synchronous>, transform_indices = @transform_2, window_bounds = array<i64: 16, 192>}, {pipeline_mode = #tpu.pipeline_mode<synchronous>, transform_indices = @transform_3, window_bounds = array<i64: 1, 192>}, {pipeline_mode = #tpu.pipeline_mode<synchronous>, transform_indices = @transform_4, window_bounds = array<i64: 3, 1, 64>}, {pipeline_mode = #tpu.pipeline_mode<synchronous>, transform_indices = @transform_5, window_bounds = array<i64: 1, 64>}, {pipeline_mode = #tpu.pipeline_mode<synchronous>, transform_indices = @transform_6, window_bounds = array<i64: 2, 3, 64, 128>}, {pipeline_mode = #tpu.pipeline_mode<synchronous>, transform_indices = @transform_7, window_bounds = array<i64: 2, 3, 64, 64>}, {pipeline_mode = #tpu.pipeline_mode<synchronous>, transform_indices = @transform_8, window_bounds = array<i64: 2, 1, 64>}, {pipeline_mode = #tpu.pipeline_mode<synchronous>, transform_indices = @transform_9, window_bounds = array<i64: 2, 1, 64>}, {pipeline_mode = #tpu.pipeline_mode<synchronous>, transform_indices = @transform_10, window_bounds = array<i64: 2, 1, 64>}, {pipeline_mode = #tpu.pipeline_mode<synchronous>, transform_indices = @transform_11, window_bounds = array<i64: 2, 1, 64>}, {transform_indices = @transform_12, window_bounds = array<i64: 2, 3, 64, 64>}, {transform_indices = @transform_13, window_bounds = array<i64: 2, 3, 64, 64>}, {transform_indices = @transform_14, window_bounds = array<i64: 2, 1, 64>}, {transform_indices = @transform_15, window_bounds = array<i64: 2, 1, 64>}, {transform_indices = @transform_16, window_bounds = array<i64: 2, 1, 64>}, {transform_indices = @transform_17, window_bounds = array<i64: 2, 1, 64>}, {pipeline_mode = #tpu.pipeline_mode<synchronous>, transform_indices = @transform_18, window_bounds = array<i64: 1, 64>}, {pipeline_mode = #tpu.pipeline_mode<synchronous>, transform_indices = @transform_19, window_bounds = array<i64: 1, 64>}, {pipeline_mode = #tpu.pipeline_mode<synchronous>, transform_indices = @transform_20, window_bounds = array<i64: 128, 1>}, {pipeline_mode = #tpu.pipeline_mode<synchronous>, transform_indices = @transform_21, window_bounds = array<i64: 1, 1>}, {pipeline_mode = #tpu.pipeline_mode<synchronous>, transform_indices = @transform_22, window_bounds = array<i64: 2, 1>}]} {
    %c0_i32 = arith.constant 0 : i32
    %0 = arith.cmpi eq, %arg0, %c0_i32 : i32
    %1 = arith.extui %0 : i1 to i32
    %c0_i32_0 = arith.constant 0 : i32
    %2 = arith.cmpi ne, %1, %c0_i32_0 : i32
    scf.if %2 {
      %c0_116 = arith.constant 0 : index
      %c0_117 = arith.constant 0 : index
      %342 = vector.load %arg1[%c0_116, %c0_117] : memref<2x16xf32, #tpu.memory_space<vmem>>, vector<2x16xf32>
      %c0_118 = arith.constant 0 : index
      %c0_119 = arith.constant 0 : index
      %343 = vector.load %arg3[%c0_118, %c0_119] : memref<16x192xf32, #tpu.memory_space<vmem>>, vector<16x192xf32>
      %cst_120 = arith.constant dense<0.000000e+00> : vector<2x192xf32>
      %344 = tpu.matmul %342, %343, %cst_120 {dimension_numbers = #tpu.dot_dimension_numbers<[1], [0], [0], [1], [0, 0, 1, 1], [], []>} : vector<2x16xf32>, vector<16x192xf32>, vector<2x192xf32> -> vector<2x192xf32>
      %c0_121 = arith.constant 0 : index
      %c0_122 = arith.constant 0 : index
      %345 = vector.load %arg4[%c0_121, %c0_122] : memref<1x192xf32, #tpu.memory_space<vmem>>, vector<1x192xf32>
      %346 = vector.broadcast %345 : vector<1x192xf32> to vector<2x192xf32>
      %347 = arith.addf %344, %346 : vector<2x192xf32>
      %348 = vector.extract_strided_slice %347 {offsets = [0, 0], sizes = [2, 64], strides = [1, 1]} : vector<2x192xf32> to vector<2x64xf32>
      %349 = arith.negf %348 : vector<2x64xf32>
      %350 = math.exp %349 : vector<2x64xf32>
      %cst_123 = arith.constant 1.000000e+00 : f32
      %351 = vector.broadcast %cst_123 : f32 to vector<2x64xf32>
      %352 = arith.addf %351, %350 : vector<2x64xf32>
      %353 = arith.divf %351, %352 : vector<2x64xf32>
      %354 = vector.extract_strided_slice %347 {offsets = [0, 64], sizes = [2, 64], strides = [1, 1]} : vector<2x192xf32> to vector<2x64xf32>
      %355 = math.tanh %354 : vector<2x64xf32>
      %356 = vector.extract_strided_slice %347 {offsets = [0, 128], sizes = [2, 64], strides = [1, 1]} : vector<2x192xf32> to vector<2x64xf32>
      %357 = arith.negf %356 : vector<2x64xf32>
      %358 = math.exp %357 : vector<2x64xf32>
      %cst_124 = arith.constant 1.000000e+00 : f32
      %359 = vector.broadcast %cst_124 : f32 to vector<2x64xf32>
      %360 = arith.addf %359, %358 : vector<2x64xf32>
      %361 = arith.divf %359, %360 : vector<2x64xf32>
      %362 = arith.mulf %353, %355 : vector<2x64xf32>
      %363 = math.tanh %362 : vector<2x64xf32>
      %364 = arith.mulf %361, %363 : vector<2x64xf32>
      %c0_125 = arith.constant 0 : index
      %c0_126 = arith.constant 0 : index
      %365 = vector.load %arg25[%c0_125, %c0_126] : memref<2x64xf32, #tpu.memory_space<vmem>>, vector<2x64xf32>
      tpu.vector_store %arg25[%c0_125, %c0_126], %364 {strides = array<i32>} : memref<2x64xf32, #tpu.memory_space<vmem>>, vector<2x64xf32>,
      %c0_127 = arith.constant 0 : index
      %c0_128 = arith.constant 0 : index
      %c0_129 = arith.constant 0 : index
      %366 = vector.load %arg2[%c0_127, %c0_128, %c0_129] : memref<2x16x1xf32, #tpu.memory_space<vmem>>, vector<2x16x1xf32>
      %c0_130 = arith.constant 0 : index
      %c0_131 = arith.constant 0 : index
      %367 = vector.load %arg6[%c0_130, %c0_131] : memref<1x64xf32, #tpu.memory_space<vmem>>, vector<1x64xf32>
      %368 = vector.extract_strided_slice %366 {offsets = [0, 0, 0], sizes = [2, 14, 1], strides = [1, 1, 1]} : vector<2x16x1xf32> to vector<2x14x1xf32>
      %c0_132 = arith.constant 0 : index
      %c0_133 = arith.constant 0 : index
      %c0_134 = arith.constant 0 : index
      %369 = vector.load %arg5[%c0_132, %c0_133, %c0_134] : memref<3x1x64xf32, #tpu.memory_space<vmem>>, vector<1x1x64xf32>
      %370 = vector.shape_cast %369 : vector<1x1x64xf32> to vector<1x64xf32>
      %371 = vector.shape_cast %370 : vector<1x64xf32> to vector<1x1x64xf32>
      %372 = vector.broadcast %368 : vector<2x14x1xf32> to vector<2x14x64xf32>
      %373 = vector.broadcast %371 : vector<1x1x64xf32> to vector<2x14x64xf32>
      %374 = arith.mulf %372, %373 : vector<2x14x64xf32>
      %375 = vector.shape_cast %367 : vector<1x64xf32> to vector<1x1x64xf32>
      %376 = vector.broadcast %375 : vector<1x1x64xf32> to vector<2x14x64xf32>
      %377 = arith.addf %376, %374 : vector<2x14x64xf32>
      %378 = vector.extract_strided_slice %366 {offsets = [0, 1, 0], sizes = [2, 14, 1], strides = [1, 1, 1]} : vector<2x16x1xf32> to vector<2x14x1xf32>
      %c1_135 = arith.constant 1 : index
      %c0_136 = arith.constant 0 : index
      %c0_137 = arith.constant 0 : index
      %379 = vector.load %arg5[%c1_135, %c0_136, %c0_137] : memref<3x1x64xf32, #tpu.memory_space<vmem>>, vector<1x1x64xf32>
      %380 = vector.shape_cast %379 : vector<1x1x64xf32> to vector<1x64xf32>
      %381 = vector.shape_cast %380 : vector<1x64xf32> to vector<1x1x64xf32>
      %382 = vector.broadcast %378 : vector<2x14x1xf32> to vector<2x14x64xf32>
      %383 = vector.broadcast %381 : vector<1x1x64xf32> to vector<2x14x64xf32>
      %384 = arith.mulf %382, %383 : vector<2x14x64xf32>
      %385 = arith.addf %377, %384 : vector<2x14x64xf32>
      %386 = vector.extract_strided_slice %366 {offsets = [0, 2, 0], sizes = [2, 14, 1], strides = [1, 1, 1]} : vector<2x16x1xf32> to vector<2x14x1xf32>
      %c2 = arith.constant 2 : index
      %c0_138 = arith.constant 0 : index
      %c0_139 = arith.constant 0 : index
      %387 = vector.load %arg5[%c2, %c0_138, %c0_139] : memref<3x1x64xf32, #tpu.memory_space<vmem>>, vector<1x1x64xf32>
      %388 = vector.shape_cast %387 : vector<1x1x64xf32> to vector<1x64xf32>
      %389 = vector.shape_cast %388 : vector<1x64xf32> to vector<1x1x64xf32>
      %390 = vector.broadcast %386 : vector<2x14x1xf32> to vector<2x14x64xf32>
      %391 = vector.broadcast %389 : vector<1x1x64xf32> to vector<2x14x64xf32>
      %392 = arith.mulf %390, %391 : vector<2x14x64xf32>
      %393 = arith.addf %385, %392 : vector<2x14x64xf32>
      %c0_140 = arith.constant 0 : index
      %c0_141 = arith.constant 0 : index
      %c0_142 = arith.constant 0 : index
      %394 = vector.load %arg9[%c0_140, %c0_141, %c0_142] : memref<2x1x64xf32, #tpu.memory_space<vmem>>, vector<1x1x64xf32>
      %395 = vector.shape_cast %394 : vector<1x1x64xf32> to vector<1x64xf32>
      %c0_143 = arith.constant 0 : index
      %c0_144 = arith.constant 0 : index
      %c0_145 = arith.constant 0 : index
      %396 = vector.load %arg10[%c0_143, %c0_144, %c0_145] : memref<2x1x64xf32, #tpu.memory_space<vmem>>, vector<1x1x64xf32>
      %397 = vector.shape_cast %396 : vector<1x1x64xf32> to vector<1x64xf32>
      %cst_146 = arith.constant dense<0.000000e+00> : vector<2x64xf32>
      %398 = vector.multi_reduction <add>, %393, %cst_146 [1] : vector<2x14x64xf32> to vector<2x64xf32>
      %399 = arith.mulf %393, %393 : vector<2x14x64xf32>
      %cst_147 = arith.constant dense<0.000000e+00> : vector<2x64xf32>
      %400 = vector.multi_reduction <add>, %399, %cst_147 [1] : vector<2x14x64xf32> to vector<2x64xf32>
      %401 = tpu.concatenate %398, %400 in 0 : vector<2x64xf32>, vector<2x64xf32> -> vector<4x64xf32>
      %402 = vector.extract_strided_slice %401 {offsets = [0, 1], sizes = [4, 63], strides = [1, 1]} : vector<4x64xf32> to vector<4x63xf32>
      %403 = vector.extract_strided_slice %401 {offsets = [0, 0], sizes = [4, 1], strides = [1, 1]} : vector<4x64xf32> to vector<4x1xf32>
      %404 = tpu.concatenate %402, %403 in 1 : vector<4x63xf32>, vector<4x1xf32> -> vector<4x64xf32>
      %405 = vector.extract_strided_slice %401 {offsets = [0, 63], sizes = [4, 1], strides = [1, 1]} : vector<4x64xf32> to vector<4x1xf32>
      %406 = vector.extract_strided_slice %401 {offsets = [0, 0], sizes = [4, 63], strides = [1, 1]} : vector<4x64xf32> to vector<4x63xf32>
      %407 = tpu.concatenate %405, %406 in 1 : vector<4x1xf32>, vector<4x63xf32> -> vector<4x64xf32>
      %408 = tpu.iota {dimensions = array<i32: 1>} : vector<4x64xi32>
      %c2_i32_148 = arith.constant 2 : i32
      %c0_i32_149 = arith.constant 0 : i32
      %409 = arith.cmpi eq, %c2_i32_148, %c0_i32_149 : i32
      %c1_i32_150 = arith.constant 1 : i32
      %410 = arith.select %409, %c1_i32_150, %c2_i32_148 : i32
      %411 = vector.broadcast %410 : i32 to vector<4x64xi32>
      %412 = arith.remsi %408, %411 : vector<4x64xi32>
      %c0_i32_151 = arith.constant 0 : i32
      %413 = vector.broadcast %c0_i32_151 : i32 to vector<4x64xi32>
      %414 = arith.cmpi ne, %412, %413 : vector<4x64xi32>
      %c0_i32_152 = arith.constant 0 : i32
      %415 = vector.broadcast %c0_i32_152 : i32 to vector<4x64xi32>
      %416 = arith.cmpi slt, %412, %415 : vector<4x64xi32>
      %c0_i32_153 = arith.constant 0 : i32
      %417 = arith.cmpi slt, %410, %c0_i32_153 : i32
      %418 = vector.broadcast %417 : i1 to vector<4x64xi1>
      %419 = vector.broadcast %418 : vector<4x64xi1> to vector<4x64xi1>
      %420 = arith.xori %416, %419 : vector<4x64xi1>
      %421 = arith.andi %420, %414 : vector<4x64xi1>
      %422 = vector.broadcast %410 : i32 to vector<4x64xi32>
      %423 = arith.addi %412, %422 : vector<4x64xi32>
      %424 = arith.select %421, %423, %412 : vector<4x64xi1>, vector<4x64xi32>
      %c0_i32_154 = arith.constant 0 : i32
      %425 = vector.broadcast %c0_i32_154 : i32 to vector<4x64xi32>
      %426 = arith.cmpi eq, %424, %425 : vector<4x64xi32>
      %427 = arith.addf %401, %404 : vector<4x64xf32>
      %428 = arith.addf %401, %407 : vector<4x64xf32>
      %429 = arith.select %426, %427, %428 : vector<4x64xi1>, vector<4x64xf32>
      %cst_155 = arith.constant 2.800000e+01 : f32
      %430 = vector.broadcast %cst_155 : f32 to vector<4x64xf32>
      %431 = arith.divf %429, %430 : vector<4x64xf32>
      %432 = vector.extract_strided_slice %431 {offsets = [0, 0], sizes = [2, 64], strides = [1, 1]} : vector<4x64xf32> to vector<2x64xf32>
      %433 = vector.extract_strided_slice %431 {offsets = [2, 0], sizes = [2, 64], strides = [1, 1]} : vector<4x64xf32> to vector<2x64xf32>
      %434 = arith.mulf %432, %432 : vector<2x64xf32>
      %435 = arith.subf %433, %434 : vector<2x64xf32>
      %cst_156 = arith.constant 0.000000e+00 : f32
      %436 = vector.broadcast %cst_156 : f32 to vector<2x64xf32>
      %437 = arith.maximumf %435, %436 : vector<2x64xf32>
      %cst_157 = arith.constant 9.99999974E-6 : f32
      %438 = vector.broadcast %cst_157 : f32 to vector<2x64xf32>
      %439 = arith.addf %437, %438 : vector<2x64xf32>
      %440 = math.rsqrt %439 : vector<2x64xf32>
      %441 = vector.broadcast %395 : vector<1x64xf32> to vector<2x64xf32>
      %442 = arith.mulf %441, %440 : vector<2x64xf32>
      %443 = arith.mulf %432, %442 : vector<2x64xf32>
      %444 = vector.broadcast %397 : vector<1x64xf32> to vector<2x64xf32>
      %445 = arith.subf %444, %443 : vector<2x64xf32>
      %446 = vector.shape_cast %442 : vector<2x64xf32> to vector<2x1x64xf32>
      %447 = vector.broadcast %446 : vector<2x1x64xf32> to vector<2x14x64xf32>
      %448 = arith.mulf %393, %447 : vector<2x14x64xf32>
      %449 = vector.shape_cast %445 : vector<2x64xf32> to vector<2x1x64xf32>
      %450 = vector.broadcast %449 : vector<2x1x64xf32> to vector<2x14x64xf32>
      %451 = arith.addf %448, %450 : vector<2x14x64xf32>
      %cst_158 = arith.constant 0.000000e+00 : f32
      %452 = vector.broadcast %cst_158 : f32 to vector<2x14x64xf32>
      %453 = arith.maximumf %451, %452 : vector<2x14x64xf32>
      %c0_159 = arith.constant 0 : index
      %c0_160 = arith.constant 0 : index
      %c0_161 = arith.constant 0 : index
      %c0_162 = arith.constant 0 : index
      %454 = vector.load %arg7[%c0_159, %c0_160, %c0_161, %c0_162] : memref<2x3x64x128xf32, #tpu.memory_space<vmem>>, vector<1x3x64x128xf32>
      %455 = vector.shape_cast %454 : vector<1x3x64x128xf32> to vector<3x64x128xf32>
      %cst_163 = arith.constant 0.000000e+00 : f32
      %456 = vector.broadcast %cst_163 : f32 to vector<2x1x64xf32>
      %cst_164 = arith.constant 0.000000e+00 : f32
      %457 = vector.broadcast %cst_164 : f32 to vector<2x1x64xf32>
      %458 = tpu.concatenate %456, %453, %457 in 1 : vector<2x1x64xf32>, vector<2x14x64xf32>, vector<2x1x64xf32> -> vector<2x16x64xf32>
      %459 = vector.extract_strided_slice %458 {offsets = [0, 0, 0], sizes = [2, 14, 64], strides = [1, 1, 1]} : vector<2x16x64xf32> to vector<2x14x64xf32>
      %460 = vector.shape_cast %459 : vector<2x14x64xf32> to vector<28x64xf32>
      %461 = vector.extract_strided_slice %455 {offsets = [0, 0, 0], sizes = [1, 64, 128], strides = [1, 1, 1]} : vector<3x64x128xf32> to vector<1x64x128xf32>
      %462 = vector.shape_cast %461 : vector<1x64x128xf32> to vector<64x128xf32>
      %cst_165 = arith.constant dense<0.000000e+00> : vector<28x128xf32>
      %463 = tpu.matmul %460, %462, %cst_165 {dimension_numbers = #tpu.dot_dimension_numbers<[1], [0], [0], [1], [0, 0, 1, 1], [], []>} : vector<28x64xf32>, vector<64x128xf32>, vector<28x128xf32> -> vector<28x128xf32>
      %464 = vector.extract_strided_slice %458 {offsets = [0, 1, 0], sizes = [2, 14, 64], strides = [1, 1, 1]} : vector<2x16x64xf32> to vector<2x14x64xf32>
      %465 = vector.shape_cast %464 : vector<2x14x64xf32> to vector<28x64xf32>
      %466 = vector.extract_strided_slice %455 {offsets = [1, 0, 0], sizes = [1, 64, 128], strides = [1, 1, 1]} : vector<3x64x128xf32> to vector<1x64x128xf32>
      %467 = vector.shape_cast %466 : vector<1x64x128xf32> to vector<64x128xf32>
      %cst_166 = arith.constant dense<0.000000e+00> : vector<28x128xf32>
      %468 = tpu.matmul %465, %467, %cst_166 {dimension_numbers = #tpu.dot_dimension_numbers<[1], [0], [0], [1], [0, 0, 1, 1], [], []>} : vector<28x64xf32>, vector<64x128xf32>, vector<28x128xf32> -> vector<28x128xf32>
      %469 = arith.addf %463, %468 : vector<28x128xf32>
      %470 = vector.extract_strided_slice %458 {offsets = [0, 2, 0], sizes = [2, 14, 64], strides = [1, 1, 1]} : vector<2x16x64xf32> to vector<2x14x64xf32>
      %471 = vector.shape_cast %470 : vector<2x14x64xf32> to vector<28x64xf32>
      %472 = vector.extract_strided_slice %455 {offsets = [2, 0, 0], sizes = [1, 64, 128], strides = [1, 1, 1]} : vector<3x64x128xf32> to vector<1x64x128xf32>
      %473 = vector.shape_cast %472 : vector<1x64x128xf32> to vector<64x128xf32>
      %cst_167 = arith.constant dense<0.000000e+00> : vector<28x128xf32>
      %474 = tpu.matmul %471, %473, %cst_167 {dimension_numbers = #tpu.dot_dimension_numbers<[1], [0], [0], [1], [0, 0, 1, 1], [], []>} : vector<28x64xf32>, vector<64x128xf32>, vector<28x128xf32> -> vector<28x128xf32>
      %475 = arith.addf %469, %474 : vector<28x128xf32>
      %476 = vector.shape_cast %475 : vector<28x128xf32> to vector<2x14x128xf32>
      %477 = vector.extract_strided_slice %476 {offsets = [0, 0, 0], sizes = [2, 1, 128], strides = [1, 1, 1]} : vector<2x14x128xf32> to vector<2x1x128xf32>
      %478 = vector.extract_strided_slice %476 {offsets = [0, 2, 0], sizes = [2, 1, 128], strides = [1, 1, 1]} : vector<2x14x128xf32> to vector<2x1x128xf32>
      %479 = vector.extract_strided_slice %476 {offsets = [0, 4, 0], sizes = [2, 1, 128], strides = [1, 1, 1]} : vector<2x14x128xf32> to vector<2x1x128xf32>
      %480 = vector.extract_strided_slice %476 {offsets = [0, 6, 0], sizes = [2, 1, 128], strides = [1, 1, 1]} : vector<2x14x128xf32> to vector<2x1x128xf32>
      %481 = vector.extract_strided_slice %476 {offsets = [0, 8, 0], sizes = [2, 1, 128], strides = [1, 1, 1]} : vector<2x14x128xf32> to vector<2x1x128xf32>
      %482 = vector.extract_strided_slice %476 {offsets = [0, 10, 0], sizes = [2, 1, 128], strides = [1, 1, 1]} : vector<2x14x128xf32> to vector<2x1x128xf32>
      %483 = vector.extract_strided_slice %476 {offsets = [0, 12, 0], sizes = [2, 1, 128], strides = [1, 1, 1]} : vector<2x14x128xf32> to vector<2x1x128xf32>
      %484 = tpu.concatenate %477, %478, %479, %480, %481, %482, %483 in 1 : vector<2x1x128xf32>, vector<2x1x128xf32>, vector<2x1x128xf32>, vector<2x1x128xf32>, vector<2x1x128xf32>, vector<2x1x128xf32>, vector<2x1x128xf32> -> vector<2x7x128xf32>
      %485 = vector.extract_strided_slice %484 {offsets = [0, 0, 0], sizes = [2, 7, 64], strides = [1, 1, 1]} : vector<2x7x128xf32> to vector<2x7x64xf32>
      %486 = vector.extract_strided_slice %484 {offsets = [0, 0, 64], sizes = [2, 7, 64], strides = [1, 1, 1]} : vector<2x7x128xf32> to vector<2x7x64xf32>
      %c0_168 = arith.constant 0 : index
      %c0_169 = arith.constant 0 : index
      %c0_170 = arith.constant 0 : index
      %487 = vector.load %arg11[%c0_168, %c0_169, %c0_170] : memref<2x1x64xf32, #tpu.memory_space<vmem>>, vector<1x1x64xf32>
      %488 = vector.shape_cast %487 : vector<1x1x64xf32> to vector<1x64xf32>
      %c0_171 = arith.constant 0 : index
      %c0_172 = arith.constant 0 : index
      %c0_173 = arith.constant 0 : index
      %489 = vector.load %arg12[%c0_171, %c0_172, %c0_173] : memref<2x1x64xf32, #tpu.memory_space<vmem>>, vector<1x1x64xf32>
      %490 = vector.shape_cast %489 : vector<1x1x64xf32> to vector<1x64xf32>
      %cst_174 = arith.constant dense<0.000000e+00> : vector<2x64xf32>
      %491 = vector.multi_reduction <add>, %485, %cst_174 [1] : vector<2x7x64xf32> to vector<2x64xf32>
      %492 = arith.mulf %485, %485 : vector<2x7x64xf32>
      %cst_175 = arith.constant dense<0.000000e+00> : vector<2x64xf32>
      %493 = vector.multi_reduction <add>, %492, %cst_175 [1] : vector<2x7x64xf32> to vector<2x64xf32>
      %494 = tpu.concatenate %491, %493 in 0 : vector<2x64xf32>, vector<2x64xf32> -> vector<4x64xf32>
      %495 = vector.extract_strided_slice %494 {offsets = [0, 1], sizes = [4, 63], strides = [1, 1]} : vector<4x64xf32> to vector<4x63xf32>
      %496 = vector.extract_strided_slice %494 {offsets = [0, 0], sizes = [4, 1], strides = [1, 1]} : vector<4x64xf32> to vector<4x1xf32>
      %497 = tpu.concatenate %495, %496 in 1 : vector<4x63xf32>, vector<4x1xf32> -> vector<4x64xf32>
      %498 = vector.extract_strided_slice %494 {offsets = [0, 63], sizes = [4, 1], strides = [1, 1]} : vector<4x64xf32> to vector<4x1xf32>
      %499 = vector.extract_strided_slice %494 {offsets = [0, 0], sizes = [4, 63], strides = [1, 1]} : vector<4x64xf32> to vector<4x63xf32>
      %500 = tpu.concatenate %498, %499 in 1 : vector<4x1xf32>, vector<4x63xf32> -> vector<4x64xf32>
      %501 = tpu.iota {dimensions = array<i32: 1>} : vector<4x64xi32>
      %c2_i32_176 = arith.constant 2 : i32
      %c0_i32_177 = arith.constant 0 : i32
      %502 = arith.cmpi eq, %c2_i32_176, %c0_i32_177 : i32
      %c1_i32_178 = arith.constant 1 : i32
      %503 = arith.select %502, %c1_i32_178, %c2_i32_176 : i32
      %504 = vector.broadcast %503 : i32 to vector<4x64xi32>
      %505 = arith.remsi %501, %504 : vector<4x64xi32>
      %c0_i32_179 = arith.constant 0 : i32
      %506 = vector.broadcast %c0_i32_179 : i32 to vector<4x64xi32>
      %507 = arith.cmpi ne, %505, %506 : vector<4x64xi32>
      %c0_i32_180 = arith.constant 0 : i32
      %508 = vector.broadcast %c0_i32_180 : i32 to vector<4x64xi32>
      %509 = arith.cmpi slt, %505, %508 : vector<4x64xi32>
      %c0_i32_181 = arith.constant 0 : i32
      %510 = arith.cmpi slt, %503, %c0_i32_181 : i32
      %511 = vector.broadcast %510 : i1 to vector<4x64xi1>
      %512 = vector.broadcast %511 : vector<4x64xi1> to vector<4x64xi1>
      %513 = arith.xori %509, %512 : vector<4x64xi1>
      %514 = arith.andi %513, %507 : vector<4x64xi1>
      %515 = vector.broadcast %503 : i32 to vector<4x64xi32>
      %516 = arith.addi %505, %515 : vector<4x64xi32>
      %517 = arith.select %514, %516, %505 : vector<4x64xi1>, vector<4x64xi32>
      %c0_i32_182 = arith.constant 0 : i32
      %518 = vector.broadcast %c0_i32_182 : i32 to vector<4x64xi32>
      %519 = arith.cmpi eq, %517, %518 : vector<4x64xi32>
      %520 = arith.addf %494, %497 : vector<4x64xf32>
      %521 = arith.addf %494, %500 : vector<4x64xf32>
      %522 = arith.select %519, %520, %521 : vector<4x64xi1>, vector<4x64xf32>
      %cst_183 = arith.constant 1.400000e+01 : f32
      %523 = vector.broadcast %cst_183 : f32 to vector<4x64xf32>
      %524 = arith.divf %522, %523 : vector<4x64xf32>
      %525 = vector.extract_strided_slice %524 {offsets = [0, 0], sizes = [2, 64], strides = [1, 1]} : vector<4x64xf32> to vector<2x64xf32>
      %526 = vector.extract_strided_slice %524 {offsets = [2, 0], sizes = [2, 64], strides = [1, 1]} : vector<4x64xf32> to vector<2x64xf32>
      %527 = arith.mulf %525, %525 : vector<2x64xf32>
      %528 = arith.subf %526, %527 : vector<2x64xf32>
      %cst_184 = arith.constant 0.000000e+00 : f32
      %529 = vector.broadcast %cst_184 : f32 to vector<2x64xf32>
      %530 = arith.maximumf %528, %529 : vector<2x64xf32>
      %cst_185 = arith.constant 9.99999974E-6 : f32
      %531 = vector.broadcast %cst_185 : f32 to vector<2x64xf32>
      %532 = arith.addf %530, %531 : vector<2x64xf32>
      %533 = math.rsqrt %532 : vector<2x64xf32>
      %534 = vector.broadcast %488 : vector<1x64xf32> to vector<2x64xf32>
      %535 = arith.mulf %534, %533 : vector<2x64xf32>
      %536 = arith.mulf %525, %535 : vector<2x64xf32>
      %537 = vector.broadcast %490 : vector<1x64xf32> to vector<2x64xf32>
      %538 = arith.subf %537, %536 : vector<2x64xf32>
      %539 = vector.shape_cast %535 : vector<2x64xf32> to vector<2x1x64xf32>
      %540 = vector.broadcast %539 : vector<2x1x64xf32> to vector<2x7x64xf32>
      %541 = arith.mulf %485, %540 : vector<2x7x64xf32>
      %542 = vector.shape_cast %538 : vector<2x64xf32> to vector<2x1x64xf32>
      %543 = vector.broadcast %542 : vector<2x1x64xf32> to vector<2x7x64xf32>
      %544 = arith.addf %541, %543 : vector<2x7x64xf32>
      %cst_186 = arith.constant 0.000000e+00 : f32
      %545 = vector.broadcast %cst_186 : f32 to vector<2x7x64xf32>
      %546 = arith.maximumf %544, %545 : vector<2x7x64xf32>
      %c0_187 = arith.constant 0 : index
      %c0_188 = arith.constant 0 : index
      %c0_189 = arith.constant 0 : index
      %c0_190 = arith.constant 0 : index
      %547 = vector.load %arg8[%c0_187, %c0_188, %c0_189, %c0_190] : memref<2x3x64x64xf32, #tpu.memory_space<vmem>>, vector<1x3x64x64xf32>
      %548 = vector.shape_cast %547 : vector<1x3x64x64xf32> to vector<3x64x64xf32>
      %cst_191 = arith.constant 0.000000e+00 : f32
      %549 = vector.broadcast %cst_191 : f32 to vector<2x1x64xf32>
      %cst_192 = arith.constant 0.000000e+00 : f32
      %550 = vector.broadcast %cst_192 : f32 to vector<2x1x64xf32>
      %551 = tpu.concatenate %549, %546, %550 in 1 : vector<2x1x64xf32>, vector<2x7x64xf32>, vector<2x1x64xf32> -> vector<2x9x64xf32>
      %552 = vector.extract_strided_slice %551 {offsets = [0, 0, 0], sizes = [2, 7, 64], strides = [1, 1, 1]} : vector<2x9x64xf32> to vector<2x7x64xf32>
      %553 = vector.shape_cast %552 : vector<2x7x64xf32> to vector<14x64xf32>
      %554 = vector.extract_strided_slice %548 {offsets = [0, 0, 0], sizes = [1, 64, 64], strides = [1, 1, 1]} : vector<3x64x64xf32> to vector<1x64x64xf32>
      %555 = vector.shape_cast %554 : vector<1x64x64xf32> to vector<64x64xf32>
      %cst_193 = arith.constant dense<0.000000e+00> : vector<14x64xf32>
      %556 = tpu.matmul %553, %555, %cst_193 {dimension_numbers = #tpu.dot_dimension_numbers<[1], [0], [0], [1], [0, 0, 1, 1], [], []>} : vector<14x64xf32>, vector<64x64xf32>, vector<14x64xf32> -> vector<14x64xf32>
      %557 = vector.extract_strided_slice %551 {offsets = [0, 1, 0], sizes = [2, 7, 64], strides = [1, 1, 1]} : vector<2x9x64xf32> to vector<2x7x64xf32>
      %558 = vector.shape_cast %557 : vector<2x7x64xf32> to vector<14x64xf32>
      %559 = vector.extract_strided_slice %548 {offsets = [1, 0, 0], sizes = [1, 64, 64], strides = [1, 1, 1]} : vector<3x64x64xf32> to vector<1x64x64xf32>
      %560 = vector.shape_cast %559 : vector<1x64x64xf32> to vector<64x64xf32>
      %cst_194 = arith.constant dense<0.000000e+00> : vector<14x64xf32>
      %561 = tpu.matmul %558, %560, %cst_194 {dimension_numbers = #tpu.dot_dimension_numbers<[1], [0], [0], [1], [0, 0, 1, 1], [], []>} : vector<14x64xf32>, vector<64x64xf32>, vector<14x64xf32> -> vector<14x64xf32>
      %562 = arith.addf %556, %561 : vector<14x64xf32>
      %563 = vector.extract_strided_slice %551 {offsets = [0, 2, 0], sizes = [2, 7, 64], strides = [1, 1, 1]} : vector<2x9x64xf32> to vector<2x7x64xf32>
      %564 = vector.shape_cast %563 : vector<2x7x64xf32> to vector<14x64xf32>
      %565 = vector.extract_strided_slice %548 {offsets = [2, 0, 0], sizes = [1, 64, 64], strides = [1, 1, 1]} : vector<3x64x64xf32> to vector<1x64x64xf32>
      %566 = vector.shape_cast %565 : vector<1x64x64xf32> to vector<64x64xf32>
      %cst_195 = arith.constant dense<0.000000e+00> : vector<14x64xf32>
      %567 = tpu.matmul %564, %566, %cst_195 {dimension_numbers = #tpu.dot_dimension_numbers<[1], [0], [0], [1], [0, 0, 1, 1], [], []>} : vector<14x64xf32>, vector<64x64xf32>, vector<14x64xf32> -> vector<14x64xf32>
      %568 = arith.addf %562, %567 : vector<14x64xf32>
      %569 = vector.shape_cast %568 : vector<14x64xf32> to vector<2x7x64xf32>
      %570 = arith.addf %569, %486 : vector<2x7x64xf32>
      %c1_196 = arith.constant 1 : index
      %c0_197 = arith.constant 0 : index
      %c0_198 = arith.constant 0 : index
      %571 = vector.load %arg9[%c1_196, %c0_197, %c0_198] : memref<2x1x64xf32, #tpu.memory_space<vmem>>, vector<1x1x64xf32>
      %572 = vector.shape_cast %571 : vector<1x1x64xf32> to vector<1x64xf32>
      %c1_199 = arith.constant 1 : index
      %c0_200 = arith.constant 0 : index
      %c0_201 = arith.constant 0 : index
      %573 = vector.load %arg10[%c1_199, %c0_200, %c0_201] : memref<2x1x64xf32, #tpu.memory_space<vmem>>, vector<1x1x64xf32>
      %574 = vector.shape_cast %573 : vector<1x1x64xf32> to vector<1x64xf32>
      %cst_202 = arith.constant dense<0.000000e+00> : vector<2x64xf32>
      %575 = vector.multi_reduction <add>, %570, %cst_202 [1] : vector<2x7x64xf32> to vector<2x64xf32>
      %576 = arith.mulf %570, %570 : vector<2x7x64xf32>
      %cst_203 = arith.constant dense<0.000000e+00> : vector<2x64xf32>
      %577 = vector.multi_reduction <add>, %576, %cst_203 [1] : vector<2x7x64xf32> to vector<2x64xf32>
      %578 = tpu.concatenate %575, %577 in 0 : vector<2x64xf32>, vector<2x64xf32> -> vector<4x64xf32>
      %579 = vector.extract_strided_slice %578 {offsets = [0, 1], sizes = [4, 63], strides = [1, 1]} : vector<4x64xf32> to vector<4x63xf32>
      %580 = vector.extract_strided_slice %578 {offsets = [0, 0], sizes = [4, 1], strides = [1, 1]} : vector<4x64xf32> to vector<4x1xf32>
      %581 = tpu.concatenate %579, %580 in 1 : vector<4x63xf32>, vector<4x1xf32> -> vector<4x64xf32>
      %582 = vector.extract_strided_slice %578 {offsets = [0, 63], sizes = [4, 1], strides = [1, 1]} : vector<4x64xf32> to vector<4x1xf32>
      %583 = vector.extract_strided_slice %578 {offsets = [0, 0], sizes = [4, 63], strides = [1, 1]} : vector<4x64xf32> to vector<4x63xf32>
      %584 = tpu.concatenate %582, %583 in 1 : vector<4x1xf32>, vector<4x63xf32> -> vector<4x64xf32>
      %585 = tpu.iota {dimensions = array<i32: 1>} : vector<4x64xi32>
      %c2_i32_204 = arith.constant 2 : i32
      %c0_i32_205 = arith.constant 0 : i32
      %586 = arith.cmpi eq, %c2_i32_204, %c0_i32_205 : i32
      %c1_i32_206 = arith.constant 1 : i32
      %587 = arith.select %586, %c1_i32_206, %c2_i32_204 : i32
      %588 = vector.broadcast %587 : i32 to vector<4x64xi32>
      %589 = arith.remsi %585, %588 : vector<4x64xi32>
      %c0_i32_207 = arith.constant 0 : i32
      %590 = vector.broadcast %c0_i32_207 : i32 to vector<4x64xi32>
      %591 = arith.cmpi ne, %589, %590 : vector<4x64xi32>
      %c0_i32_208 = arith.constant 0 : i32
      %592 = vector.broadcast %c0_i32_208 : i32 to vector<4x64xi32>
      %593 = arith.cmpi slt, %589, %592 : vector<4x64xi32>
      %c0_i32_209 = arith.constant 0 : i32
      %594 = arith.cmpi slt, %587, %c0_i32_209 : i32
      %595 = vector.broadcast %594 : i1 to vector<4x64xi1>
      %596 = vector.broadcast %595 : vector<4x64xi1> to vector<4x64xi1>
      %597 = arith.xori %593, %596 : vector<4x64xi1>
      %598 = arith.andi %597, %591 : vector<4x64xi1>
      %599 = vector.broadcast %587 : i32 to vector<4x64xi32>
      %600 = arith.addi %589, %599 : vector<4x64xi32>
      %601 = arith.select %598, %600, %589 : vector<4x64xi1>, vector<4x64xi32>
      %c0_i32_210 = arith.constant 0 : i32
      %602 = vector.broadcast %c0_i32_210 : i32 to vector<4x64xi32>
      %603 = arith.cmpi eq, %601, %602 : vector<4x64xi32>
      %604 = arith.addf %578, %581 : vector<4x64xf32>
      %605 = arith.addf %578, %584 : vector<4x64xf32>
      %606 = arith.select %603, %604, %605 : vector<4x64xi1>, vector<4x64xf32>
      %cst_211 = arith.constant 1.400000e+01 : f32
      %607 = vector.broadcast %cst_211 : f32 to vector<4x64xf32>
      %608 = arith.divf %606, %607 : vector<4x64xf32>
      %609 = vector.extract_strided_slice %608 {offsets = [0, 0], sizes = [2, 64], strides = [1, 1]} : vector<4x64xf32> to vector<2x64xf32>
      %610 = vector.extract_strided_slice %608 {offsets = [2, 0], sizes = [2, 64], strides = [1, 1]} : vector<4x64xf32> to vector<2x64xf32>
      %611 = arith.mulf %609, %609 : vector<2x64xf32>
      %612 = arith.subf %610, %611 : vector<2x64xf32>
      %cst_212 = arith.constant 0.000000e+00 : f32
      %613 = vector.broadcast %cst_212 : f32 to vector<2x64xf32>
      %614 = arith.maximumf %612, %613 : vector<2x64xf32>
      %cst_213 = arith.constant 9.99999974E-6 : f32
      %615 = vector.broadcast %cst_213 : f32 to vector<2x64xf32>
      %616 = arith.addf %614, %615 : vector<2x64xf32>
      %617 = math.rsqrt %616 : vector<2x64xf32>
      %618 = vector.broadcast %572 : vector<1x64xf32> to vector<2x64xf32>
      %619 = arith.mulf %618, %617 : vector<2x64xf32>
      %620 = arith.mulf %609, %619 : vector<2x64xf32>
      %621 = vector.broadcast %574 : vector<1x64xf32> to vector<2x64xf32>
      %622 = arith.subf %621, %620 : vector<2x64xf32>
      %623 = vector.shape_cast %619 : vector<2x64xf32> to vector<2x1x64xf32>
      %624 = vector.broadcast %623 : vector<2x1x64xf32> to vector<2x7x64xf32>
      %625 = arith.mulf %570, %624 : vector<2x7x64xf32>
      %626 = vector.shape_cast %622 : vector<2x64xf32> to vector<2x1x64xf32>
      %627 = vector.broadcast %626 : vector<2x1x64xf32> to vector<2x7x64xf32>
      %628 = arith.addf %625, %627 : vector<2x7x64xf32>
      %cst_214 = arith.constant 0.000000e+00 : f32
      %629 = vector.broadcast %cst_214 : f32 to vector<2x7x64xf32>
      %630 = arith.maximumf %628, %629 : vector<2x7x64xf32>
      %c1_215 = arith.constant 1 : index
      %c0_216 = arith.constant 0 : index
      %c0_217 = arith.constant 0 : index
      %c0_218 = arith.constant 0 : index
      %631 = vector.load %arg7[%c1_215, %c0_216, %c0_217, %c0_218] : memref<2x3x64x128xf32, #tpu.memory_space<vmem>>, vector<1x3x64x128xf32>
      %632 = vector.shape_cast %631 : vector<1x3x64x128xf32> to vector<3x64x128xf32>
      %cst_219 = arith.constant 0.000000e+00 : f32
      %633 = vector.broadcast %cst_219 : f32 to vector<2x1x64xf32>
      %cst_220 = arith.constant 0.000000e+00 : f32
      %634 = vector.broadcast %cst_220 : f32 to vector<2x2x64xf32>
      %635 = tpu.concatenate %633, %630, %634 in 1 : vector<2x1x64xf32>, vector<2x7x64xf32>, vector<2x2x64xf32> -> vector<2x10x64xf32>
      %636 = vector.extract_strided_slice %635 {offsets = [0, 0, 0], sizes = [2, 8, 64], strides = [1, 1, 1]} : vector<2x10x64xf32> to vector<2x8x64xf32>
      %637 = vector.shape_cast %636 : vector<2x8x64xf32> to vector<16x64xf32>
      %638 = vector.extract_strided_slice %632 {offsets = [0, 0, 0], sizes = [1, 64, 128], strides = [1, 1, 1]} : vector<3x64x128xf32> to vector<1x64x128xf32>
      %639 = vector.shape_cast %638 : vector<1x64x128xf32> to vector<64x128xf32>
      %cst_221 = arith.constant dense<0.000000e+00> : vector<16x128xf32>
      %640 = tpu.matmul %637, %639, %cst_221 {dimension_numbers = #tpu.dot_dimension_numbers<[1], [0], [0], [1], [0, 0, 1, 1], [], []>} : vector<16x64xf32>, vector<64x128xf32>, vector<16x128xf32> -> vector<16x128xf32>
      %641 = vector.extract_strided_slice %635 {offsets = [0, 1, 0], sizes = [2, 8, 64], strides = [1, 1, 1]} : vector<2x10x64xf32> to vector<2x8x64xf32>
      %642 = vector.shape_cast %641 : vector<2x8x64xf32> to vector<16x64xf32>
      %643 = vector.extract_strided_slice %632 {offsets = [1, 0, 0], sizes = [1, 64, 128], strides = [1, 1, 1]} : vector<3x64x128xf32> to vector<1x64x128xf32>
      %644 = vector.shape_cast %643 : vector<1x64x128xf32> to vector<64x128xf32>
      %cst_222 = arith.constant dense<0.000000e+00> : vector<16x128xf32>
      %645 = tpu.matmul %642, %644, %cst_222 {dimension_numbers = #tpu.dot_dimension_numbers<[1], [0], [0], [1], [0, 0, 1, 1], [], []>} : vector<16x64xf32>, vector<64x128xf32>, vector<16x128xf32> -> vector<16x128xf32>
      %646 = arith.addf %640, %645 : vector<16x128xf32>
      %647 = vector.extract_strided_slice %635 {offsets = [0, 2, 0], sizes = [2, 8, 64], strides = [1, 1, 1]} : vector<2x10x64xf32> to vector<2x8x64xf32>
      %648 = vector.shape_cast %647 : vector<2x8x64xf32> to vector<16x64xf32>
      %649 = vector.extract_strided_slice %632 {offsets = [2, 0, 0], sizes = [1, 64, 128], strides = [1, 1, 1]} : vector<3x64x128xf32> to vector<1x64x128xf32>
      %650 = vector.shape_cast %649 : vector<1x64x128xf32> to vector<64x128xf32>
      %cst_223 = arith.constant dense<0.000000e+00> : vector<16x128xf32>
      %651 = tpu.matmul %648, %650, %cst_223 {dimension_numbers = #tpu.dot_dimension_numbers<[1], [0], [0], [1], [0, 0, 1, 1], [], []>} : vector<16x64xf32>, vector<64x128xf32>, vector<16x128xf32> -> vector<16x128xf32>
      %652 = arith.addf %646, %651 : vector<16x128xf32>
      %653 = vector.shape_cast %652 : vector<16x128xf32> to vector<2x8x128xf32>
      %654 = vector.extract_strided_slice %653 {offsets = [0, 0, 0], sizes = [2, 1, 128], strides = [1, 1, 1]} : vector<2x8x128xf32> to vector<2x1x128xf32>
      %655 = vector.extract_strided_slice %653 {offsets = [0, 2, 0], sizes = [2, 1, 128], strides = [1, 1, 1]} : vector<2x8x128xf32> to vector<2x1x128xf32>
      %656 = vector.extract_strided_slice %653 {offsets = [0, 4, 0], sizes = [2, 1, 128], strides = [1, 1, 1]} : vector<2x8x128xf32> to vector<2x1x128xf32>
      %657 = vector.extract_strided_slice %653 {offsets = [0, 6, 0], sizes = [2, 1, 128], strides = [1, 1, 1]} : vector<2x8x128xf32> to vector<2x1x128xf32>
      %658 = tpu.concatenate %654, %655, %656, %657 in 1 : vector<2x1x128xf32>, vector<2x1x128xf32>, vector<2x1x128xf32>, vector<2x1x128xf32> -> vector<2x4x128xf32>
      %659 = vector.extract_strided_slice %658 {offsets = [0, 0, 0], sizes = [2, 4, 64], strides = [1, 1, 1]} : vector<2x4x128xf32> to vector<2x4x64xf32>
      %660 = vector.extract_strided_slice %658 {offsets = [0, 0, 64], sizes = [2, 4, 64], strides = [1, 1, 1]} : vector<2x4x128xf32> to vector<2x4x64xf32>
      %c1_224 = arith.constant 1 : index
      %c0_225 = arith.constant 0 : index
      %c0_226 = arith.constant 0 : index
      %661 = vector.load %arg11[%c1_224, %c0_225, %c0_226] : memref<2x1x64xf32, #tpu.memory_space<vmem>>, vector<1x1x64xf32>
      %662 = vector.shape_cast %661 : vector<1x1x64xf32> to vector<1x64xf32>
      %c1_227 = arith.constant 1 : index
      %c0_228 = arith.constant 0 : index
      %c0_229 = arith.constant 0 : index
      %663 = vector.load %arg12[%c1_227, %c0_228, %c0_229] : memref<2x1x64xf32, #tpu.memory_space<vmem>>, vector<1x1x64xf32>
      %664 = vector.shape_cast %663 : vector<1x1x64xf32> to vector<1x64xf32>
      %cst_230 = arith.constant dense<0.000000e+00> : vector<2x64xf32>
      %665 = vector.multi_reduction <add>, %659, %cst_230 [1] : vector<2x4x64xf32> to vector<2x64xf32>
      %666 = arith.mulf %659, %659 : vector<2x4x64xf32>
      %cst_231 = arith.constant dense<0.000000e+00> : vector<2x64xf32>
      %667 = vector.multi_reduction <add>, %666, %cst_231 [1] : vector<2x4x64xf32> to vector<2x64xf32>
      %668 = tpu.concatenate %665, %667 in 0 : vector<2x64xf32>, vector<2x64xf32> -> vector<4x64xf32>
      %669 = vector.extract_strided_slice %668 {offsets = [0, 1], sizes = [4, 63], strides = [1, 1]} : vector<4x64xf32> to vector<4x63xf32>
      %670 = vector.extract_strided_slice %668 {offsets = [0, 0], sizes = [4, 1], strides = [1, 1]} : vector<4x64xf32> to vector<4x1xf32>
      %671 = tpu.concatenate %669, %670 in 1 : vector<4x63xf32>, vector<4x1xf32> -> vector<4x64xf32>
      %672 = vector.extract_strided_slice %668 {offsets = [0, 63], sizes = [4, 1], strides = [1, 1]} : vector<4x64xf32> to vector<4x1xf32>
      %673 = vector.extract_strided_slice %668 {offsets = [0, 0], sizes = [4, 63], strides = [1, 1]} : vector<4x64xf32> to vector<4x63xf32>
      %674 = tpu.concatenate %672, %673 in 1 : vector<4x1xf32>, vector<4x63xf32> -> vector<4x64xf32>
      %675 = tpu.iota {dimensions = array<i32: 1>} : vector<4x64xi32>
      %c2_i32_232 = arith.constant 2 : i32
      %c0_i32_233 = arith.constant 0 : i32
      %676 = arith.cmpi eq, %c2_i32_232, %c0_i32_233 : i32
      %c1_i32_234 = arith.constant 1 : i32
      %677 = arith.select %676, %c1_i32_234, %c2_i32_232 : i32
      %678 = vector.broadcast %677 : i32 to vector<4x64xi32>
      %679 = arith.remsi %675, %678 : vector<4x64xi32>
      %c0_i32_235 = arith.constant 0 : i32
      %680 = vector.broadcast %c0_i32_235 : i32 to vector<4x64xi32>
      %681 = arith.cmpi ne, %679, %680 : vector<4x64xi32>
      %c0_i32_236 = arith.constant 0 : i32
      %682 = vector.broadcast %c0_i32_236 : i32 to vector<4x64xi32>
      %683 = arith.cmpi slt, %679, %682 : vector<4x64xi32>
      %c0_i32_237 = arith.constant 0 : i32
      %684 = arith.cmpi slt, %677, %c0_i32_237 : i32
      %685 = vector.broadcast %684 : i1 to vector<4x64xi1>
      %686 = vector.broadcast %685 : vector<4x64xi1> to vector<4x64xi1>
      %687 = arith.xori %683, %686 : vector<4x64xi1>
      %688 = arith.andi %687, %681 : vector<4x64xi1>
      %689 = vector.broadcast %677 : i32 to vector<4x64xi32>
      %690 = arith.addi %679, %689 : vector<4x64xi32>
      %691 = arith.select %688, %690, %679 : vector<4x64xi1>, vector<4x64xi32>
      %c0_i32_238 = arith.constant 0 : i32
      %692 = vector.broadcast %c0_i32_238 : i32 to vector<4x64xi32>
      %693 = arith.cmpi eq, %691, %692 : vector<4x64xi32>
      %694 = arith.addf %668, %671 : vector<4x64xf32>
      %695 = arith.addf %668, %674 : vector<4x64xf32>
      %696 = arith.select %693, %694, %695 : vector<4x64xi1>, vector<4x64xf32>
      %cst_239 = arith.constant 8.000000e+00 : f32
      %697 = vector.broadcast %cst_239 : f32 to vector<4x64xf32>
      %698 = arith.divf %696, %697 : vector<4x64xf32>
      %699 = vector.extract_strided_slice %698 {offsets = [0, 0], sizes = [2, 64], strides = [1, 1]} : vector<4x64xf32> to vector<2x64xf32>
      %700 = vector.extract_strided_slice %698 {offsets = [2, 0], sizes = [2, 64], strides = [1, 1]} : vector<4x64xf32> to vector<2x64xf32>
      %701 = arith.mulf %699, %699 : vector<2x64xf32>
      %702 = arith.subf %700, %701 : vector<2x64xf32>
      %cst_240 = arith.constant 0.000000e+00 : f32
      %703 = vector.broadcast %cst_240 : f32 to vector<2x64xf32>
      %704 = arith.maximumf %702, %703 : vector<2x64xf32>
      %cst_241 = arith.constant 9.99999974E-6 : f32
      %705 = vector.broadcast %cst_241 : f32 to vector<2x64xf32>
      %706 = arith.addf %704, %705 : vector<2x64xf32>
      %707 = math.rsqrt %706 : vector<2x64xf32>
      %708 = vector.broadcast %662 : vector<1x64xf32> to vector<2x64xf32>
      %709 = arith.mulf %708, %707 : vector<2x64xf32>
      %710 = arith.mulf %699, %709 : vector<2x64xf32>
      %711 = vector.broadcast %664 : vector<1x64xf32> to vector<2x64xf32>
      %712 = arith.subf %711, %710 : vector<2x64xf32>
      %713 = vector.shape_cast %709 : vector<2x64xf32> to vector<2x1x64xf32>
      %714 = vector.broadcast %713 : vector<2x1x64xf32> to vector<2x4x64xf32>
      %715 = arith.mulf %659, %714 : vector<2x4x64xf32>
      %716 = vector.shape_cast %712 : vector<2x64xf32> to vector<2x1x64xf32>
      %717 = vector.broadcast %716 : vector<2x1x64xf32> to vector<2x4x64xf32>
      %718 = arith.addf %715, %717 : vector<2x4x64xf32>
      %cst_242 = arith.constant 0.000000e+00 : f32
      %719 = vector.broadcast %cst_242 : f32 to vector<2x4x64xf32>
      %720 = arith.maximumf %718, %719 : vector<2x4x64xf32>
      %c1_243 = arith.constant 1 : index
      %c0_244 = arith.constant 0 : index
      %c0_245 = arith.constant 0 : index
      %c0_246 = arith.constant 0 : index
      %721 = vector.load %arg8[%c1_243, %c0_244, %c0_245, %c0_246] : memref<2x3x64x64xf32, #tpu.memory_space<vmem>>, vector<1x3x64x64xf32>
      %722 = vector.shape_cast %721 : vector<1x3x64x64xf32> to vector<3x64x64xf32>
      %cst_247 = arith.constant 0.000000e+00 : f32
      %723 = vector.broadcast %cst_247 : f32 to vector<2x1x64xf32>
      %cst_248 = arith.constant 0.000000e+00 : f32
      %724 = vector.broadcast %cst_248 : f32 to vector<2x1x64xf32>
      %725 = tpu.concatenate %723, %720, %724 in 1 : vector<2x1x64xf32>, vector<2x4x64xf32>, vector<2x1x64xf32> -> vector<2x6x64xf32>
      %726 = vector.extract_strided_slice %725 {offsets = [0, 0, 0], sizes = [2, 4, 64], strides = [1, 1, 1]} : vector<2x6x64xf32> to vector<2x4x64xf32>
      %727 = vector.shape_cast %726 : vector<2x4x64xf32> to vector<8x64xf32>
      %728 = vector.extract_strided_slice %722 {offsets = [0, 0, 0], sizes = [1, 64, 64], strides = [1, 1, 1]} : vector<3x64x64xf32> to vector<1x64x64xf32>
      %729 = vector.shape_cast %728 : vector<1x64x64xf32> to vector<64x64xf32>
      %cst_249 = arith.constant dense<0.000000e+00> : vector<8x64xf32>
      %730 = tpu.matmul %727, %729, %cst_249 {dimension_numbers = #tpu.dot_dimension_numbers<[1], [0], [0], [1], [0, 0, 1, 1], [], []>} : vector<8x64xf32>, vector<64x64xf32>, vector<8x64xf32> -> vector<8x64xf32>
      %731 = vector.extract_strided_slice %725 {offsets = [0, 1, 0], sizes = [2, 4, 64], strides = [1, 1, 1]} : vector<2x6x64xf32> to vector<2x4x64xf32>
      %732 = vector.shape_cast %731 : vector<2x4x64xf32> to vector<8x64xf32>
      %733 = vector.extract_strided_slice %722 {offsets = [1, 0, 0], sizes = [1, 64, 64], strides = [1, 1, 1]} : vector<3x64x64xf32> to vector<1x64x64xf32>
      %734 = vector.shape_cast %733 : vector<1x64x64xf32> to vector<64x64xf32>
      %cst_250 = arith.constant dense<0.000000e+00> : vector<8x64xf32>
      %735 = tpu.matmul %732, %734, %cst_250 {dimension_numbers = #tpu.dot_dimension_numbers<[1], [0], [0], [1], [0, 0, 1, 1], [], []>} : vector<8x64xf32>, vector<64x64xf32>, vector<8x64xf32> -> vector<8x64xf32>
      %736 = arith.addf %730, %735 : vector<8x64xf32>
      %737 = vector.extract_strided_slice %725 {offsets = [0, 2, 0], sizes = [2, 4, 64], strides = [1, 1, 1]} : vector<2x6x64xf32> to vector<2x4x64xf32>
      %738 = vector.shape_cast %737 : vector<2x4x64xf32> to vector<8x64xf32>
      %739 = vector.extract_strided_slice %722 {offsets = [2, 0, 0], sizes = [1, 64, 64], strides = [1, 1, 1]} : vector<3x64x64xf32> to vector<1x64x64xf32>
      %740 = vector.shape_cast %739 : vector<1x64x64xf32> to vector<64x64xf32>
      %cst_251 = arith.constant dense<0.000000e+00> : vector<8x64xf32>
      %741 = tpu.matmul %738, %740, %cst_251 {dimension_numbers = #tpu.dot_dimension_numbers<[1], [0], [0], [1], [0, 0, 1, 1], [], []>} : vector<8x64xf32>, vector<64x64xf32>, vector<8x64xf32> -> vector<8x64xf32>
      %742 = arith.addf %736, %741 : vector<8x64xf32>
      %743 = vector.shape_cast %742 : vector<8x64xf32> to vector<2x4x64xf32>
      %744 = arith.addf %743, %660 : vector<2x4x64xf32>
      %c0_252 = arith.constant 0 : index
      %c0_253 = arith.constant 0 : index
      %c0_254 = arith.constant 0 : index
      %745 = vector.load %arg24[%c0_252, %c0_253, %c0_254] : memref<2x4x64xf32, #tpu.memory_space<vmem>>, vector<2x4x64xf32>
      tpu.vector_store %arg24[%c0_252, %c0_253, %c0_254], %744 {strides = array<i32>} : memref<2x4x64xf32, #tpu.memory_space<vmem>>, vector<2x4x64xf32>,
    } else {
    }
    %c0 = arith.constant 0 : index
    %c0_1 = arith.constant 0 : index
    %c0_2 = arith.constant 0 : index
    %3 = vector.load %arg24[%c0, %c0_1, %c0_2] : memref<2x4x64xf32, #tpu.memory_space<vmem>>, vector<2x4x64xf32>
    %c0_3 = arith.constant 0 : index
    %c0_4 = arith.constant 0 : index
    %c0_5 = arith.constant 0 : index
    %4 = vector.load %arg15[%c0_3, %c0_4, %c0_5] : memref<2x1x64xf32, #tpu.memory_space<vmem>>, vector<1x1x64xf32>
    %5 = vector.shape_cast %4 : vector<1x1x64xf32> to vector<1x64xf32>
    %c0_6 = arith.constant 0 : index
    %c0_7 = arith.constant 0 : index
    %c0_8 = arith.constant 0 : index
    %6 = vector.load %arg16[%c0_6, %c0_7, %c0_8] : memref<2x1x64xf32, #tpu.memory_space<vmem>>, vector<1x1x64xf32>
    %7 = vector.shape_cast %6 : vector<1x1x64xf32> to vector<1x64xf32>
    %cst = arith.constant dense<0.000000e+00> : vector<2x64xf32>
    %8 = vector.multi_reduction <add>, %3, %cst [1] : vector<2x4x64xf32> to vector<2x64xf32>
    %9 = arith.mulf %3, %3 : vector<2x4x64xf32>
    %cst_9 = arith.constant dense<0.000000e+00> : vector<2x64xf32>
    %10 = vector.multi_reduction <add>, %9, %cst_9 [1] : vector<2x4x64xf32> to vector<2x64xf32>
    %11 = tpu.concatenate %8, %10 in 0 : vector<2x64xf32>, vector<2x64xf32> -> vector<4x64xf32>
    %12 = vector.extract_strided_slice %11 {offsets = [0, 1], sizes = [4, 63], strides = [1, 1]} : vector<4x64xf32> to vector<4x63xf32>
    %13 = vector.extract_strided_slice %11 {offsets = [0, 0], sizes = [4, 1], strides = [1, 1]} : vector<4x64xf32> to vector<4x1xf32>
    %14 = tpu.concatenate %12, %13 in 1 : vector<4x63xf32>, vector<4x1xf32> -> vector<4x64xf32>
    %15 = vector.extract_strided_slice %11 {offsets = [0, 63], sizes = [4, 1], strides = [1, 1]} : vector<4x64xf32> to vector<4x1xf32>
    %16 = vector.extract_strided_slice %11 {offsets = [0, 0], sizes = [4, 63], strides = [1, 1]} : vector<4x64xf32> to vector<4x63xf32>
    %17 = tpu.concatenate %15, %16 in 1 : vector<4x1xf32>, vector<4x63xf32> -> vector<4x64xf32>
    %18 = tpu.iota {dimensions = array<i32: 1>} : vector<4x64xi32>
    %c2_i32 = arith.constant 2 : i32
    %c0_i32_10 = arith.constant 0 : i32
    %19 = arith.cmpi eq, %c2_i32, %c0_i32_10 : i32
    %c1_i32 = arith.constant 1 : i32
    %20 = arith.select %19, %c1_i32, %c2_i32 : i32
    %21 = vector.broadcast %20 : i32 to vector<4x64xi32>
    %22 = arith.remsi %18, %21 : vector<4x64xi32>
    %c0_i32_11 = arith.constant 0 : i32
    %23 = vector.broadcast %c0_i32_11 : i32 to vector<4x64xi32>
    %24 = arith.cmpi ne, %22, %23 : vector<4x64xi32>
    %c0_i32_12 = arith.constant 0 : i32
    %25 = vector.broadcast %c0_i32_12 : i32 to vector<4x64xi32>
    %26 = arith.cmpi slt, %22, %25 : vector<4x64xi32>
    %c0_i32_13 = arith.constant 0 : i32
    %27 = arith.cmpi slt, %20, %c0_i32_13 : i32
    %28 = vector.broadcast %27 : i1 to vector<4x64xi1>
    %29 = vector.broadcast %28 : vector<4x64xi1> to vector<4x64xi1>
    %30 = arith.xori %26, %29 : vector<4x64xi1>
    %31 = arith.andi %30, %24 : vector<4x64xi1>
    %32 = vector.broadcast %20 : i32 to vector<4x64xi32>
    %33 = arith.addi %22, %32 : vector<4x64xi32>
    %34 = arith.select %31, %33, %22 : vector<4x64xi1>, vector<4x64xi32>
    %c0_i32_14 = arith.constant 0 : i32
    %35 = vector.broadcast %c0_i32_14 : i32 to vector<4x64xi32>
    %36 = arith.cmpi eq, %34, %35 : vector<4x64xi32>
    %37 = arith.addf %11, %14 : vector<4x64xf32>
    %38 = arith.addf %11, %17 : vector<4x64xf32>
    %39 = arith.select %36, %37, %38 : vector<4x64xi1>, vector<4x64xf32>
    %cst_15 = arith.constant 8.000000e+00 : f32
    %40 = vector.broadcast %cst_15 : f32 to vector<4x64xf32>
    %41 = arith.divf %39, %40 : vector<4x64xf32>
    %42 = vector.extract_strided_slice %41 {offsets = [0, 0], sizes = [2, 64], strides = [1, 1]} : vector<4x64xf32> to vector<2x64xf32>
    %43 = vector.extract_strided_slice %41 {offsets = [2, 0], sizes = [2, 64], strides = [1, 1]} : vector<4x64xf32> to vector<2x64xf32>
    %44 = arith.mulf %42, %42 : vector<2x64xf32>
    %45 = arith.subf %43, %44 : vector<2x64xf32>
    %cst_16 = arith.constant 0.000000e+00 : f32
    %46 = vector.broadcast %cst_16 : f32 to vector<2x64xf32>
    %47 = arith.maximumf %45, %46 : vector<2x64xf32>
    %cst_17 = arith.constant 9.99999974E-6 : f32
    %48 = vector.broadcast %cst_17 : f32 to vector<2x64xf32>
    %49 = arith.addf %47, %48 : vector<2x64xf32>
    %50 = math.rsqrt %49 : vector<2x64xf32>
    %51 = vector.broadcast %5 : vector<1x64xf32> to vector<2x64xf32>
    %52 = arith.mulf %51, %50 : vector<2x64xf32>
    %53 = arith.mulf %42, %52 : vector<2x64xf32>
    %54 = vector.broadcast %7 : vector<1x64xf32> to vector<2x64xf32>
    %55 = arith.subf %54, %53 : vector<2x64xf32>
    %56 = vector.shape_cast %52 : vector<2x64xf32> to vector<2x1x64xf32>
    %57 = vector.broadcast %56 : vector<2x1x64xf32> to vector<2x4x64xf32>
    %58 = arith.mulf %3, %57 : vector<2x4x64xf32>
    %59 = vector.shape_cast %55 : vector<2x64xf32> to vector<2x1x64xf32>
    %60 = vector.broadcast %59 : vector<2x1x64xf32> to vector<2x4x64xf32>
    %61 = arith.addf %58, %60 : vector<2x4x64xf32>
    %cst_18 = arith.constant 0.000000e+00 : f32
    %62 = vector.broadcast %cst_18 : f32 to vector<2x4x64xf32>
    %63 = arith.maximumf %61, %62 : vector<2x4x64xf32>
    %c0_19 = arith.constant 0 : index
    %c0_20 = arith.constant 0 : index
    %c0_21 = arith.constant 0 : index
    %c0_22 = arith.constant 0 : index
    %64 = vector.load %arg13[%c0_19, %c0_20, %c0_21, %c0_22] : memref<2x3x64x64xf32, #tpu.memory_space<vmem>>, vector<1x3x64x64xf32>
    %65 = vector.shape_cast %64 : vector<1x3x64x64xf32> to vector<3x64x64xf32>
    %cst_23 = arith.constant 0.000000e+00 : f32
    %66 = vector.broadcast %cst_23 : f32 to vector<2x1x64xf32>
    %cst_24 = arith.constant 0.000000e+00 : f32
    %67 = vector.broadcast %cst_24 : f32 to vector<2x1x64xf32>
    %68 = tpu.concatenate %66, %63, %67 in 1 : vector<2x1x64xf32>, vector<2x4x64xf32>, vector<2x1x64xf32> -> vector<2x6x64xf32>
    %69 = vector.extract_strided_slice %68 {offsets = [0, 0, 0], sizes = [2, 4, 64], strides = [1, 1, 1]} : vector<2x6x64xf32> to vector<2x4x64xf32>
    %70 = vector.shape_cast %69 : vector<2x4x64xf32> to vector<8x64xf32>
    %71 = vector.extract_strided_slice %65 {offsets = [0, 0, 0], sizes = [1, 64, 64], strides = [1, 1, 1]} : vector<3x64x64xf32> to vector<1x64x64xf32>
    %72 = vector.shape_cast %71 : vector<1x64x64xf32> to vector<64x64xf32>
    %cst_25 = arith.constant dense<0.000000e+00> : vector<8x64xf32>
    %73 = tpu.matmul %70, %72, %cst_25 {dimension_numbers = #tpu.dot_dimension_numbers<[1], [0], [0], [1], [0, 0, 1, 1], [], []>} : vector<8x64xf32>, vector<64x64xf32>, vector<8x64xf32> -> vector<8x64xf32>
    %74 = vector.extract_strided_slice %68 {offsets = [0, 1, 0], sizes = [2, 4, 64], strides = [1, 1, 1]} : vector<2x6x64xf32> to vector<2x4x64xf32>
    %75 = vector.shape_cast %74 : vector<2x4x64xf32> to vector<8x64xf32>
    %76 = vector.extract_strided_slice %65 {offsets = [1, 0, 0], sizes = [1, 64, 64], strides = [1, 1, 1]} : vector<3x64x64xf32> to vector<1x64x64xf32>
    %77 = vector.shape_cast %76 : vector<1x64x64xf32> to vector<64x64xf32>
    %cst_26 = arith.constant dense<0.000000e+00> : vector<8x64xf32>
    %78 = tpu.matmul %75, %77, %cst_26 {dimension_numbers = #tpu.dot_dimension_numbers<[1], [0], [0], [1], [0, 0, 1, 1], [], []>} : vector<8x64xf32>, vector<64x64xf32>, vector<8x64xf32> -> vector<8x64xf32>
    %79 = arith.addf %73, %78 : vector<8x64xf32>
    %80 = vector.extract_strided_slice %68 {offsets = [0, 2, 0], sizes = [2, 4, 64], strides = [1, 1, 1]} : vector<2x6x64xf32> to vector<2x4x64xf32>
    %81 = vector.shape_cast %80 : vector<2x4x64xf32> to vector<8x64xf32>
    %82 = vector.extract_strided_slice %65 {offsets = [2, 0, 0], sizes = [1, 64, 64], strides = [1, 1, 1]} : vector<3x64x64xf32> to vector<1x64x64xf32>
    %83 = vector.shape_cast %82 : vector<1x64x64xf32> to vector<64x64xf32>
    %cst_27 = arith.constant dense<0.000000e+00> : vector<8x64xf32>
    %84 = tpu.matmul %81, %83, %cst_27 {dimension_numbers = #tpu.dot_dimension_numbers<[1], [0], [0], [1], [0, 0, 1, 1], [], []>} : vector<8x64xf32>, vector<64x64xf32>, vector<8x64xf32> -> vector<8x64xf32>
    %85 = arith.addf %79, %84 : vector<8x64xf32>
    %86 = vector.shape_cast %85 : vector<8x64xf32> to vector<2x4x64xf32>
    %c0_28 = arith.constant 0 : index
    %c0_29 = arith.constant 0 : index
    %c0_30 = arith.constant 0 : index
    %87 = vector.load %arg17[%c0_28, %c0_29, %c0_30] : memref<2x1x64xf32, #tpu.memory_space<vmem>>, vector<1x1x64xf32>
    %88 = vector.shape_cast %87 : vector<1x1x64xf32> to vector<1x64xf32>
    %c0_31 = arith.constant 0 : index
    %c0_32 = arith.constant 0 : index
    %c0_33 = arith.constant 0 : index
    %89 = vector.load %arg18[%c0_31, %c0_32, %c0_33] : memref<2x1x64xf32, #tpu.memory_space<vmem>>, vector<1x1x64xf32>
    %90 = vector.shape_cast %89 : vector<1x1x64xf32> to vector<1x64xf32>
    %cst_34 = arith.constant dense<0.000000e+00> : vector<2x64xf32>
    %91 = vector.multi_reduction <add>, %86, %cst_34 [1] : vector<2x4x64xf32> to vector<2x64xf32>
    %92 = arith.mulf %86, %86 : vector<2x4x64xf32>
    %cst_35 = arith.constant dense<0.000000e+00> : vector<2x64xf32>
    %93 = vector.multi_reduction <add>, %92, %cst_35 [1] : vector<2x4x64xf32> to vector<2x64xf32>
    %94 = tpu.concatenate %91, %93 in 0 : vector<2x64xf32>, vector<2x64xf32> -> vector<4x64xf32>
    %95 = vector.extract_strided_slice %94 {offsets = [0, 1], sizes = [4, 63], strides = [1, 1]} : vector<4x64xf32> to vector<4x63xf32>
    %96 = vector.extract_strided_slice %94 {offsets = [0, 0], sizes = [4, 1], strides = [1, 1]} : vector<4x64xf32> to vector<4x1xf32>
    %97 = tpu.concatenate %95, %96 in 1 : vector<4x63xf32>, vector<4x1xf32> -> vector<4x64xf32>
    %98 = vector.extract_strided_slice %94 {offsets = [0, 63], sizes = [4, 1], strides = [1, 1]} : vector<4x64xf32> to vector<4x1xf32>
    %99 = vector.extract_strided_slice %94 {offsets = [0, 0], sizes = [4, 63], strides = [1, 1]} : vector<4x64xf32> to vector<4x63xf32>
    %100 = tpu.concatenate %98, %99 in 1 : vector<4x1xf32>, vector<4x63xf32> -> vector<4x64xf32>
    %101 = tpu.iota {dimensions = array<i32: 1>} : vector<4x64xi32>
    %c2_i32_36 = arith.constant 2 : i32
    %c0_i32_37 = arith.constant 0 : i32
    %102 = arith.cmpi eq, %c2_i32_36, %c0_i32_37 : i32
    %c1_i32_38 = arith.constant 1 : i32
    %103 = arith.select %102, %c1_i32_38, %c2_i32_36 : i32
    %104 = vector.broadcast %103 : i32 to vector<4x64xi32>
    %105 = arith.remsi %101, %104 : vector<4x64xi32>
    %c0_i32_39 = arith.constant 0 : i32
    %106 = vector.broadcast %c0_i32_39 : i32 to vector<4x64xi32>
    %107 = arith.cmpi ne, %105, %106 : vector<4x64xi32>
    %c0_i32_40 = arith.constant 0 : i32
    %108 = vector.broadcast %c0_i32_40 : i32 to vector<4x64xi32>
    %109 = arith.cmpi slt, %105, %108 : vector<4x64xi32>
    %c0_i32_41 = arith.constant 0 : i32
    %110 = arith.cmpi slt, %103, %c0_i32_41 : i32
    %111 = vector.broadcast %110 : i1 to vector<4x64xi1>
    %112 = vector.broadcast %111 : vector<4x64xi1> to vector<4x64xi1>
    %113 = arith.xori %109, %112 : vector<4x64xi1>
    %114 = arith.andi %113, %107 : vector<4x64xi1>
    %115 = vector.broadcast %103 : i32 to vector<4x64xi32>
    %116 = arith.addi %105, %115 : vector<4x64xi32>
    %117 = arith.select %114, %116, %105 : vector<4x64xi1>, vector<4x64xi32>
    %c0_i32_42 = arith.constant 0 : i32
    %118 = vector.broadcast %c0_i32_42 : i32 to vector<4x64xi32>
    %119 = arith.cmpi eq, %117, %118 : vector<4x64xi32>
    %120 = arith.addf %94, %97 : vector<4x64xf32>
    %121 = arith.addf %94, %100 : vector<4x64xf32>
    %122 = arith.select %119, %120, %121 : vector<4x64xi1>, vector<4x64xf32>
    %cst_43 = arith.constant 8.000000e+00 : f32
    %123 = vector.broadcast %cst_43 : f32 to vector<4x64xf32>
    %124 = arith.divf %122, %123 : vector<4x64xf32>
    %125 = vector.extract_strided_slice %124 {offsets = [0, 0], sizes = [2, 64], strides = [1, 1]} : vector<4x64xf32> to vector<2x64xf32>
    %126 = vector.extract_strided_slice %124 {offsets = [2, 0], sizes = [2, 64], strides = [1, 1]} : vector<4x64xf32> to vector<2x64xf32>
    %127 = arith.mulf %125, %125 : vector<2x64xf32>
    %128 = arith.subf %126, %127 : vector<2x64xf32>
    %cst_44 = arith.constant 0.000000e+00 : f32
    %129 = vector.broadcast %cst_44 : f32 to vector<2x64xf32>
    %130 = arith.maximumf %128, %129 : vector<2x64xf32>
    %cst_45 = arith.constant 9.99999974E-6 : f32
    %131 = vector.broadcast %cst_45 : f32 to vector<2x64xf32>
    %132 = arith.addf %130, %131 : vector<2x64xf32>
    %133 = math.rsqrt %132 : vector<2x64xf32>
    %134 = vector.broadcast %88 : vector<1x64xf32> to vector<2x64xf32>
    %135 = arith.mulf %134, %133 : vector<2x64xf32>
    %136 = arith.mulf %125, %135 : vector<2x64xf32>
    %137 = vector.broadcast %90 : vector<1x64xf32> to vector<2x64xf32>
    %138 = arith.subf %137, %136 : vector<2x64xf32>
    %139 = vector.shape_cast %135 : vector<2x64xf32> to vector<2x1x64xf32>
    %140 = vector.broadcast %139 : vector<2x1x64xf32> to vector<2x4x64xf32>
    %141 = arith.mulf %86, %140 : vector<2x4x64xf32>
    %142 = vector.shape_cast %138 : vector<2x64xf32> to vector<2x1x64xf32>
    %143 = vector.broadcast %142 : vector<2x1x64xf32> to vector<2x4x64xf32>
    %144 = arith.addf %141, %143 : vector<2x4x64xf32>
    %cst_46 = arith.constant 0.000000e+00 : f32
    %145 = vector.broadcast %cst_46 : f32 to vector<2x4x64xf32>
    %146 = arith.maximumf %144, %145 : vector<2x4x64xf32>
    %c0_47 = arith.constant 0 : index
    %c0_48 = arith.constant 0 : index
    %c0_49 = arith.constant 0 : index
    %c0_50 = arith.constant 0 : index
    %147 = vector.load %arg14[%c0_47, %c0_48, %c0_49, %c0_50] : memref<2x3x64x64xf32, #tpu.memory_space<vmem>>, vector<1x3x64x64xf32>
    %148 = vector.shape_cast %147 : vector<1x3x64x64xf32> to vector<3x64x64xf32>
    %cst_51 = arith.constant 0.000000e+00 : f32
    %149 = vector.broadcast %cst_51 : f32 to vector<2x1x64xf32>
    %cst_52 = arith.constant 0.000000e+00 : f32
    %150 = vector.broadcast %cst_52 : f32 to vector<2x1x64xf32>
    %151 = tpu.concatenate %149, %146, %150 in 1 : vector<2x1x64xf32>, vector<2x4x64xf32>, vector<2x1x64xf32> -> vector<2x6x64xf32>
    %152 = vector.extract_strided_slice %151 {offsets = [0, 0, 0], sizes = [2, 4, 64], strides = [1, 1, 1]} : vector<2x6x64xf32> to vector<2x4x64xf32>
    %153 = vector.shape_cast %152 : vector<2x4x64xf32> to vector<8x64xf32>
    %154 = vector.extract_strided_slice %148 {offsets = [0, 0, 0], sizes = [1, 64, 64], strides = [1, 1, 1]} : vector<3x64x64xf32> to vector<1x64x64xf32>
    %155 = vector.shape_cast %154 : vector<1x64x64xf32> to vector<64x64xf32>
    %cst_53 = arith.constant dense<0.000000e+00> : vector<8x64xf32>
    %156 = tpu.matmul %153, %155, %cst_53 {dimension_numbers = #tpu.dot_dimension_numbers<[1], [0], [0], [1], [0, 0, 1, 1], [], []>} : vector<8x64xf32>, vector<64x64xf32>, vector<8x64xf32> -> vector<8x64xf32>
    %157 = vector.extract_strided_slice %151 {offsets = [0, 1, 0], sizes = [2, 4, 64], strides = [1, 1, 1]} : vector<2x6x64xf32> to vector<2x4x64xf32>
    %158 = vector.shape_cast %157 : vector<2x4x64xf32> to vector<8x64xf32>
    %159 = vector.extract_strided_slice %148 {offsets = [1, 0, 0], sizes = [1, 64, 64], strides = [1, 1, 1]} : vector<3x64x64xf32> to vector<1x64x64xf32>
    %160 = vector.shape_cast %159 : vector<1x64x64xf32> to vector<64x64xf32>
    %cst_54 = arith.constant dense<0.000000e+00> : vector<8x64xf32>
    %161 = tpu.matmul %158, %160, %cst_54 {dimension_numbers = #tpu.dot_dimension_numbers<[1], [0], [0], [1], [0, 0, 1, 1], [], []>} : vector<8x64xf32>, vector<64x64xf32>, vector<8x64xf32> -> vector<8x64xf32>
    %162 = arith.addf %156, %161 : vector<8x64xf32>
    %163 = vector.extract_strided_slice %151 {offsets = [0, 2, 0], sizes = [2, 4, 64], strides = [1, 1, 1]} : vector<2x6x64xf32> to vector<2x4x64xf32>
    %164 = vector.shape_cast %163 : vector<2x4x64xf32> to vector<8x64xf32>
    %165 = vector.extract_strided_slice %148 {offsets = [2, 0, 0], sizes = [1, 64, 64], strides = [1, 1, 1]} : vector<3x64x64xf32> to vector<1x64x64xf32>
    %166 = vector.shape_cast %165 : vector<1x64x64xf32> to vector<64x64xf32>
    %cst_55 = arith.constant dense<0.000000e+00> : vector<8x64xf32>
    %167 = tpu.matmul %164, %166, %cst_55 {dimension_numbers = #tpu.dot_dimension_numbers<[1], [0], [0], [1], [0, 0, 1, 1], [], []>} : vector<8x64xf32>, vector<64x64xf32>, vector<8x64xf32> -> vector<8x64xf32>
    %168 = arith.addf %162, %167 : vector<8x64xf32>
    %169 = vector.shape_cast %168 : vector<8x64xf32> to vector<2x4x64xf32>
    %170 = arith.addf %3, %169 : vector<2x4x64xf32>
    %c1 = arith.constant 1 : index
    %c0_56 = arith.constant 0 : index
    %c0_57 = arith.constant 0 : index
    %171 = vector.load %arg15[%c1, %c0_56, %c0_57] : memref<2x1x64xf32, #tpu.memory_space<vmem>>, vector<1x1x64xf32>
    %172 = vector.shape_cast %171 : vector<1x1x64xf32> to vector<1x64xf32>
    %c1_58 = arith.constant 1 : index
    %c0_59 = arith.constant 0 : index
    %c0_60 = arith.constant 0 : index
    %173 = vector.load %arg16[%c1_58, %c0_59, %c0_60] : memref<2x1x64xf32, #tpu.memory_space<vmem>>, vector<1x1x64xf32>
    %174 = vector.shape_cast %173 : vector<1x1x64xf32> to vector<1x64xf32>
    %cst_61 = arith.constant dense<0.000000e+00> : vector<2x64xf32>
    %175 = vector.multi_reduction <add>, %170, %cst_61 [1] : vector<2x4x64xf32> to vector<2x64xf32>
    %176 = arith.mulf %170, %170 : vector<2x4x64xf32>
    %cst_62 = arith.constant dense<0.000000e+00> : vector<2x64xf32>
    %177 = vector.multi_reduction <add>, %176, %cst_62 [1] : vector<2x4x64xf32> to vector<2x64xf32>
    %178 = tpu.concatenate %175, %177 in 0 : vector<2x64xf32>, vector<2x64xf32> -> vector<4x64xf32>
    %179 = vector.extract_strided_slice %178 {offsets = [0, 1], sizes = [4, 63], strides = [1, 1]} : vector<4x64xf32> to vector<4x63xf32>
    %180 = vector.extract_strided_slice %178 {offsets = [0, 0], sizes = [4, 1], strides = [1, 1]} : vector<4x64xf32> to vector<4x1xf32>
    %181 = tpu.concatenate %179, %180 in 1 : vector<4x63xf32>, vector<4x1xf32> -> vector<4x64xf32>
    %182 = vector.extract_strided_slice %178 {offsets = [0, 63], sizes = [4, 1], strides = [1, 1]} : vector<4x64xf32> to vector<4x1xf32>
    %183 = vector.extract_strided_slice %178 {offsets = [0, 0], sizes = [4, 63], strides = [1, 1]} : vector<4x64xf32> to vector<4x63xf32>
    %184 = tpu.concatenate %182, %183 in 1 : vector<4x1xf32>, vector<4x63xf32> -> vector<4x64xf32>
    %185 = tpu.iota {dimensions = array<i32: 1>} : vector<4x64xi32>
    %c2_i32_63 = arith.constant 2 : i32
    %c0_i32_64 = arith.constant 0 : i32
    %186 = arith.cmpi eq, %c2_i32_63, %c0_i32_64 : i32
    %c1_i32_65 = arith.constant 1 : i32
    %187 = arith.select %186, %c1_i32_65, %c2_i32_63 : i32
    %188 = vector.broadcast %187 : i32 to vector<4x64xi32>
    %189 = arith.remsi %185, %188 : vector<4x64xi32>
    %c0_i32_66 = arith.constant 0 : i32
    %190 = vector.broadcast %c0_i32_66 : i32 to vector<4x64xi32>
    %191 = arith.cmpi ne, %189, %190 : vector<4x64xi32>
    %c0_i32_67 = arith.constant 0 : i32
    %192 = vector.broadcast %c0_i32_67 : i32 to vector<4x64xi32>
    %193 = arith.cmpi slt, %189, %192 : vector<4x64xi32>
    %c0_i32_68 = arith.constant 0 : i32
    %194 = arith.cmpi slt, %187, %c0_i32_68 : i32
    %195 = vector.broadcast %194 : i1 to vector<4x64xi1>
    %196 = vector.broadcast %195 : vector<4x64xi1> to vector<4x64xi1>
    %197 = arith.xori %193, %196 : vector<4x64xi1>
    %198 = arith.andi %197, %191 : vector<4x64xi1>
    %199 = vector.broadcast %187 : i32 to vector<4x64xi32>
    %200 = arith.addi %189, %199 : vector<4x64xi32>
    %201 = arith.select %198, %200, %189 : vector<4x64xi1>, vector<4x64xi32>
    %c0_i32_69 = arith.constant 0 : i32
    %202 = vector.broadcast %c0_i32_69 : i32 to vector<4x64xi32>
    %203 = arith.cmpi eq, %201, %202 : vector<4x64xi32>
    %204 = arith.addf %178, %181 : vector<4x64xf32>
    %205 = arith.addf %178, %184 : vector<4x64xf32>
    %206 = arith.select %203, %204, %205 : vector<4x64xi1>, vector<4x64xf32>
    %cst_70 = arith.constant 8.000000e+00 : f32
    %207 = vector.broadcast %cst_70 : f32 to vector<4x64xf32>
    %208 = arith.divf %206, %207 : vector<4x64xf32>
    %209 = vector.extract_strided_slice %208 {offsets = [0, 0], sizes = [2, 64], strides = [1, 1]} : vector<4x64xf32> to vector<2x64xf32>
    %210 = vector.extract_strided_slice %208 {offsets = [2, 0], sizes = [2, 64], strides = [1, 1]} : vector<4x64xf32> to vector<2x64xf32>
    %211 = arith.mulf %209, %209 : vector<2x64xf32>
    %212 = arith.subf %210, %211 : vector<2x64xf32>
    %cst_71 = arith.constant 0.000000e+00 : f32
    %213 = vector.broadcast %cst_71 : f32 to vector<2x64xf32>
    %214 = arith.maximumf %212, %213 : vector<2x64xf32>
    %cst_72 = arith.constant 9.99999974E-6 : f32
    %215 = vector.broadcast %cst_72 : f32 to vector<2x64xf32>
    %216 = arith.addf %214, %215 : vector<2x64xf32>
    %217 = math.rsqrt %216 : vector<2x64xf32>
    %218 = vector.broadcast %172 : vector<1x64xf32> to vector<2x64xf32>
    %219 = arith.mulf %218, %217 : vector<2x64xf32>
    %220 = arith.mulf %209, %219 : vector<2x64xf32>
    %221 = vector.broadcast %174 : vector<1x64xf32> to vector<2x64xf32>
    %222 = arith.subf %221, %220 : vector<2x64xf32>
    %223 = vector.shape_cast %219 : vector<2x64xf32> to vector<2x1x64xf32>
    %224 = vector.broadcast %223 : vector<2x1x64xf32> to vector<2x4x64xf32>
    %225 = arith.mulf %170, %224 : vector<2x4x64xf32>
    %226 = vector.shape_cast %222 : vector<2x64xf32> to vector<2x1x64xf32>
    %227 = vector.broadcast %226 : vector<2x1x64xf32> to vector<2x4x64xf32>
    %228 = arith.addf %225, %227 : vector<2x4x64xf32>
    %cst_73 = arith.constant 0.000000e+00 : f32
    %229 = vector.broadcast %cst_73 : f32 to vector<2x4x64xf32>
    %230 = arith.maximumf %228, %229 : vector<2x4x64xf32>
    %c1_74 = arith.constant 1 : index
    %c0_75 = arith.constant 0 : index
    %c0_76 = arith.constant 0 : index
    %c0_77 = arith.constant 0 : index
    %231 = vector.load %arg13[%c1_74, %c0_75, %c0_76, %c0_77] : memref<2x3x64x64xf32, #tpu.memory_space<vmem>>, vector<1x3x64x64xf32>
    %232 = vector.shape_cast %231 : vector<1x3x64x64xf32> to vector<3x64x64xf32>
    %cst_78 = arith.constant 0.000000e+00 : f32
    %233 = vector.broadcast %cst_78 : f32 to vector<2x1x64xf32>
    %cst_79 = arith.constant 0.000000e+00 : f32
    %234 = vector.broadcast %cst_79 : f32 to vector<2x1x64xf32>
    %235 = tpu.concatenate %233, %230, %234 in 1 : vector<2x1x64xf32>, vector<2x4x64xf32>, vector<2x1x64xf32> -> vector<2x6x64xf32>
    %236 = vector.extract_strided_slice %235 {offsets = [0, 0, 0], sizes = [2, 4, 64], strides = [1, 1, 1]} : vector<2x6x64xf32> to vector<2x4x64xf32>
    %237 = vector.shape_cast %236 : vector<2x4x64xf32> to vector<8x64xf32>
    %238 = vector.extract_strided_slice %232 {offsets = [0, 0, 0], sizes = [1, 64, 64], strides = [1, 1, 1]} : vector<3x64x64xf32> to vector<1x64x64xf32>
    %239 = vector.shape_cast %238 : vector<1x64x64xf32> to vector<64x64xf32>
    %cst_80 = arith.constant dense<0.000000e+00> : vector<8x64xf32>
    %240 = tpu.matmul %237, %239, %cst_80 {dimension_numbers = #tpu.dot_dimension_numbers<[1], [0], [0], [1], [0, 0, 1, 1], [], []>} : vector<8x64xf32>, vector<64x64xf32>, vector<8x64xf32> -> vector<8x64xf32>
    %241 = vector.extract_strided_slice %235 {offsets = [0, 1, 0], sizes = [2, 4, 64], strides = [1, 1, 1]} : vector<2x6x64xf32> to vector<2x4x64xf32>
    %242 = vector.shape_cast %241 : vector<2x4x64xf32> to vector<8x64xf32>
    %243 = vector.extract_strided_slice %232 {offsets = [1, 0, 0], sizes = [1, 64, 64], strides = [1, 1, 1]} : vector<3x64x64xf32> to vector<1x64x64xf32>
    %244 = vector.shape_cast %243 : vector<1x64x64xf32> to vector<64x64xf32>
    %cst_81 = arith.constant dense<0.000000e+00> : vector<8x64xf32>
    %245 = tpu.matmul %242, %244, %cst_81 {dimension_numbers = #tpu.dot_dimension_numbers<[1], [0], [0], [1], [0, 0, 1, 1], [], []>} : vector<8x64xf32>, vector<64x64xf32>, vector<8x64xf32> -> vector<8x64xf32>
    %246 = arith.addf %240, %245 : vector<8x64xf32>
    %247 = vector.extract_strided_slice %235 {offsets = [0, 2, 0], sizes = [2, 4, 64], strides = [1, 1, 1]} : vector<2x6x64xf32> to vector<2x4x64xf32>
    %248 = vector.shape_cast %247 : vector<2x4x64xf32> to vector<8x64xf32>
    %249 = vector.extract_strided_slice %232 {offsets = [2, 0, 0], sizes = [1, 64, 64], strides = [1, 1, 1]} : vector<3x64x64xf32> to vector<1x64x64xf32>
    %250 = vector.shape_cast %249 : vector<1x64x64xf32> to vector<64x64xf32>
    %cst_82 = arith.constant dense<0.000000e+00> : vector<8x64xf32>
    %251 = tpu.matmul %248, %250, %cst_82 {dimension_numbers = #tpu.dot_dimension_numbers<[1], [0], [0], [1], [0, 0, 1, 1], [], []>} : vector<8x64xf32>, vector<64x64xf32>, vector<8x64xf32> -> vector<8x64xf32>
    %252 = arith.addf %246, %251 : vector<8x64xf32>
    %253 = vector.shape_cast %252 : vector<8x64xf32> to vector<2x4x64xf32>
    %c1_83 = arith.constant 1 : index
    %c0_84 = arith.constant 0 : index
    %c0_85 = arith.constant 0 : index
    %254 = vector.load %arg17[%c1_83, %c0_84, %c0_85] : memref<2x1x64xf32, #tpu.memory_space<vmem>>, vector<1x1x64xf32>
    %255 = vector.shape_cast %254 : vector<1x1x64xf32> to vector<1x64xf32>
    %c1_86 = arith.constant 1 : index
    %c0_87 = arith.constant 0 : index
    %c0_88 = arith.constant 0 : index
    %256 = vector.load %arg18[%c1_86, %c0_87, %c0_88] : memref<2x1x64xf32, #tpu.memory_space<vmem>>, vector<1x1x64xf32>
    %257 = vector.shape_cast %256 : vector<1x1x64xf32> to vector<1x64xf32>
    %cst_89 = arith.constant dense<0.000000e+00> : vector<2x64xf32>
    %258 = vector.multi_reduction <add>, %253, %cst_89 [1] : vector<2x4x64xf32> to vector<2x64xf32>
    %259 = arith.mulf %253, %253 : vector<2x4x64xf32>
    %cst_90 = arith.constant dense<0.000000e+00> : vector<2x64xf32>
    %260 = vector.multi_reduction <add>, %259, %cst_90 [1] : vector<2x4x64xf32> to vector<2x64xf32>
    %261 = tpu.concatenate %258, %260 in 0 : vector<2x64xf32>, vector<2x64xf32> -> vector<4x64xf32>
    %262 = vector.extract_strided_slice %261 {offsets = [0, 1], sizes = [4, 63], strides = [1, 1]} : vector<4x64xf32> to vector<4x63xf32>
    %263 = vector.extract_strided_slice %261 {offsets = [0, 0], sizes = [4, 1], strides = [1, 1]} : vector<4x64xf32> to vector<4x1xf32>
    %264 = tpu.concatenate %262, %263 in 1 : vector<4x63xf32>, vector<4x1xf32> -> vector<4x64xf32>
    %265 = vector.extract_strided_slice %261 {offsets = [0, 63], sizes = [4, 1], strides = [1, 1]} : vector<4x64xf32> to vector<4x1xf32>
    %266 = vector.extract_strided_slice %261 {offsets = [0, 0], sizes = [4, 63], strides = [1, 1]} : vector<4x64xf32> to vector<4x63xf32>
    %267 = tpu.concatenate %265, %266 in 1 : vector<4x1xf32>, vector<4x63xf32> -> vector<4x64xf32>
    %268 = tpu.iota {dimensions = array<i32: 1>} : vector<4x64xi32>
    %c2_i32_91 = arith.constant 2 : i32
    %c0_i32_92 = arith.constant 0 : i32
    %269 = arith.cmpi eq, %c2_i32_91, %c0_i32_92 : i32
    %c1_i32_93 = arith.constant 1 : i32
    %270 = arith.select %269, %c1_i32_93, %c2_i32_91 : i32
    %271 = vector.broadcast %270 : i32 to vector<4x64xi32>
    %272 = arith.remsi %268, %271 : vector<4x64xi32>
    %c0_i32_94 = arith.constant 0 : i32
    %273 = vector.broadcast %c0_i32_94 : i32 to vector<4x64xi32>
    %274 = arith.cmpi ne, %272, %273 : vector<4x64xi32>
    %c0_i32_95 = arith.constant 0 : i32
    %275 = vector.broadcast %c0_i32_95 : i32 to vector<4x64xi32>
    %276 = arith.cmpi slt, %272, %275 : vector<4x64xi32>
    %c0_i32_96 = arith.constant 0 : i32
    %277 = arith.cmpi slt, %270, %c0_i32_96 : i32
    %278 = vector.broadcast %277 : i1 to vector<4x64xi1>
    %279 = vector.broadcast %278 : vector<4x64xi1> to vector<4x64xi1>
    %280 = arith.xori %276, %279 : vector<4x64xi1>
    %281 = arith.andi %280, %274 : vector<4x64xi1>
    %282 = vector.broadcast %270 : i32 to vector<4x64xi32>
    %283 = arith.addi %272, %282 : vector<4x64xi32>
    %284 = arith.select %281, %283, %272 : vector<4x64xi1>, vector<4x64xi32>
    %c0_i32_97 = arith.constant 0 : i32
    %285 = vector.broadcast %c0_i32_97 : i32 to vector<4x64xi32>
    %286 = arith.cmpi eq, %284, %285 : vector<4x64xi32>
    %287 = arith.addf %261, %264 : vector<4x64xf32>
    %288 = arith.addf %261, %267 : vector<4x64xf32>
    %289 = arith.select %286, %287, %288 : vector<4x64xi1>, vector<4x64xf32>
    %cst_98 = arith.constant 8.000000e+00 : f32
    %290 = vector.broadcast %cst_98 : f32 to vector<4x64xf32>
    %291 = arith.divf %289, %290 : vector<4x64xf32>
    %292 = vector.extract_strided_slice %291 {offsets = [0, 0], sizes = [2, 64], strides = [1, 1]} : vector<4x64xf32> to vector<2x64xf32>
    %293 = vector.extract_strided_slice %291 {offsets = [2, 0], sizes = [2, 64], strides = [1, 1]} : vector<4x64xf32> to vector<2x64xf32>
    %294 = arith.mulf %292, %292 : vector<2x64xf32>
    %295 = arith.subf %293, %294 : vector<2x64xf32>
    %cst_99 = arith.constant 0.000000e+00 : f32
    %296 = vector.broadcast %cst_99 : f32 to vector<2x64xf32>
    %297 = arith.maximumf %295, %296 : vector<2x64xf32>
    %cst_100 = arith.constant 9.99999974E-6 : f32
    %298 = vector.broadcast %cst_100 : f32 to vector<2x64xf32>
    %299 = arith.addf %297, %298 : vector<2x64xf32>
    %300 = math.rsqrt %299 : vector<2x64xf32>
    %301 = vector.broadcast %255 : vector<1x64xf32> to vector<2x64xf32>
    %302 = arith.mulf %301, %300 : vector<2x64xf32>
    %303 = arith.mulf %292, %302 : vector<2x64xf32>
    %304 = vector.broadcast %257 : vector<1x64xf32> to vector<2x64xf32>
    %305 = arith.subf %304, %303 : vector<2x64xf32>
    %306 = vector.shape_cast %302 : vector<2x64xf32> to vector<2x1x64xf32>
    %307 = vector.broadcast %306 : vector<2x1x64xf32> to vector<2x4x64xf32>
    %308 = arith.mulf %253, %307 : vector<2x4x64xf32>
    %309 = vector.shape_cast %305 : vector<2x64xf32> to vector<2x1x64xf32>
    %310 = vector.broadcast %309 : vector<2x1x64xf32> to vector<2x4x64xf32>
    %311 = arith.addf %308, %310 : vector<2x4x64xf32>
    %cst_101 = arith.constant 0.000000e+00 : f32
    %312 = vector.broadcast %cst_101 : f32 to vector<2x4x64xf32>
    %313 = arith.maximumf %311, %312 : vector<2x4x64xf32>
    %c1_102 = arith.constant 1 : index
    %c0_103 = arith.constant 0 : index
    %c0_104 = arith.constant 0 : index
    %c0_105 = arith.constant 0 : index
    %314 = vector.load %arg14[%c1_102, %c0_103, %c0_104, %c0_105] : memref<2x3x64x64xf32, #tpu.memory_space<vmem>>, vector<1x3x64x64xf32>
    %315 = vector.shape_cast %314 : vector<1x3x64x64xf32> to vector<3x64x64xf32>
    %cst_106 = arith.constant 0.000000e+00 : f32
    %316 = vector.broadcast %cst_106 : f32 to vector<2x1x64xf32>
    %cst_107 = arith.constant 0.000000e+00 : f32
    %317 = vector.broadcast %cst_107 : f32 to vector<2x1x64xf32>
    %318 = tpu.concatenate %316, %313, %317 in 1 : vector<2x1x64xf32>, vector<2x4x64xf32>, vector<2x1x64xf32> -> vector<2x6x64xf32>
    %319 = vector.extract_strided_slice %318 {offsets = [0, 0, 0], sizes = [2, 4, 64], strides = [1, 1, 1]} : vector<2x6x64xf32> to vector<2x4x64xf32>
    %320 = vector.shape_cast %319 : vector<2x4x64xf32> to vector<8x64xf32>
    %321 = vector.extract_strided_slice %315 {offsets = [0, 0, 0], sizes = [1, 64, 64], strides = [1, 1, 1]} : vector<3x64x64xf32> to vector<1x64x64xf32>
    %322 = vector.shape_cast %321 : vector<1x64x64xf32> to vector<64x64xf32>
    %cst_108 = arith.constant dense<0.000000e+00> : vector<8x64xf32>
    %323 = tpu.matmul %320, %322, %cst_108 {dimension_numbers = #tpu.dot_dimension_numbers<[1], [0], [0], [1], [0, 0, 1, 1], [], []>} : vector<8x64xf32>, vector<64x64xf32>, vector<8x64xf32> -> vector<8x64xf32>
    %324 = vector.extract_strided_slice %318 {offsets = [0, 1, 0], sizes = [2, 4, 64], strides = [1, 1, 1]} : vector<2x6x64xf32> to vector<2x4x64xf32>
    %325 = vector.shape_cast %324 : vector<2x4x64xf32> to vector<8x64xf32>
    %326 = vector.extract_strided_slice %315 {offsets = [1, 0, 0], sizes = [1, 64, 64], strides = [1, 1, 1]} : vector<3x64x64xf32> to vector<1x64x64xf32>
    %327 = vector.shape_cast %326 : vector<1x64x64xf32> to vector<64x64xf32>
    %cst_109 = arith.constant dense<0.000000e+00> : vector<8x64xf32>
    %328 = tpu.matmul %325, %327, %cst_109 {dimension_numbers = #tpu.dot_dimension_numbers<[1], [0], [0], [1], [0, 0, 1, 1], [], []>} : vector<8x64xf32>, vector<64x64xf32>, vector<8x64xf32> -> vector<8x64xf32>
    %329 = arith.addf %323, %328 : vector<8x64xf32>
    %330 = vector.extract_strided_slice %318 {offsets = [0, 2, 0], sizes = [2, 4, 64], strides = [1, 1, 1]} : vector<2x6x64xf32> to vector<2x4x64xf32>
    %331 = vector.shape_cast %330 : vector<2x4x64xf32> to vector<8x64xf32>
    %332 = vector.extract_strided_slice %315 {offsets = [2, 0, 0], sizes = [1, 64, 64], strides = [1, 1, 1]} : vector<3x64x64xf32> to vector<1x64x64xf32>
    %333 = vector.shape_cast %332 : vector<1x64x64xf32> to vector<64x64xf32>
    %cst_110 = arith.constant dense<0.000000e+00> : vector<8x64xf32>
    %334 = tpu.matmul %331, %333, %cst_110 {dimension_numbers = #tpu.dot_dimension_numbers<[1], [0], [0], [1], [0, 0, 1, 1], [], []>} : vector<8x64xf32>, vector<64x64xf32>, vector<8x64xf32> -> vector<8x64xf32>
    %335 = arith.addf %329, %334 : vector<8x64xf32>
    %336 = vector.shape_cast %335 : vector<8x64xf32> to vector<2x4x64xf32>
    %337 = arith.addf %170, %336 : vector<2x4x64xf32>
    %c0_111 = arith.constant 0 : index
    %c0_112 = arith.constant 0 : index
    %c0_113 = arith.constant 0 : index
    %338 = vector.load %arg24[%c0_111, %c0_112, %c0_113] : memref<2x4x64xf32, #tpu.memory_space<vmem>>, vector<2x4x64xf32>
    tpu.vector_store %arg24[%c0_111, %c0_112, %c0_113], %337 {strides = array<i32>} : memref<2x4x64xf32, #tpu.memory_space<vmem>>, vector<2x4x64xf32>,
    %c2_i32_114 = arith.constant 2 : i32
    %339 = arith.cmpi eq, %arg0, %c2_i32_114 : i32
    %340 = arith.extui %339 : i1 to i32
    %c0_i32_115 = arith.constant 0 : i32
    %341 = arith.cmpi ne, %340, %c0_i32_115 : i32
    scf.if %341 {
      %c0_116 = arith.constant 0 : index
      %c0_117 = arith.constant 0 : index
      %c0_118 = arith.constant 0 : index
      %342 = vector.load %arg24[%c0_116, %c0_117, %c0_118] : memref<2x4x64xf32, #tpu.memory_space<vmem>>, vector<2x4x64xf32>
      %c0_119 = arith.constant 0 : index
      %c0_120 = arith.constant 0 : index
      %343 = vector.load %arg19[%c0_119, %c0_120] : memref<1x64xf32, #tpu.memory_space<vmem>>, vector<1x64xf32>
      %c0_121 = arith.constant 0 : index
      %c0_122 = arith.constant 0 : index
      %344 = vector.load %arg20[%c0_121, %c0_122] : memref<1x64xf32, #tpu.memory_space<vmem>>, vector<1x64xf32>
      %cst_123 = arith.constant dense<0.000000e+00> : vector<2x64xf32>
      %345 = vector.multi_reduction <add>, %342, %cst_123 [1] : vector<2x4x64xf32> to vector<2x64xf32>
      %346 = arith.mulf %342, %342 : vector<2x4x64xf32>
      %cst_124 = arith.constant dense<0.000000e+00> : vector<2x64xf32>
      %347 = vector.multi_reduction <add>, %346, %cst_124 [1] : vector<2x4x64xf32> to vector<2x64xf32>
      %348 = tpu.concatenate %345, %347 in 0 : vector<2x64xf32>, vector<2x64xf32> -> vector<4x64xf32>
      %349 = vector.extract_strided_slice %348 {offsets = [0, 1], sizes = [4, 63], strides = [1, 1]} : vector<4x64xf32> to vector<4x63xf32>
      %350 = vector.extract_strided_slice %348 {offsets = [0, 0], sizes = [4, 1], strides = [1, 1]} : vector<4x64xf32> to vector<4x1xf32>
      %351 = tpu.concatenate %349, %350 in 1 : vector<4x63xf32>, vector<4x1xf32> -> vector<4x64xf32>
      %352 = vector.extract_strided_slice %348 {offsets = [0, 63], sizes = [4, 1], strides = [1, 1]} : vector<4x64xf32> to vector<4x1xf32>
      %353 = vector.extract_strided_slice %348 {offsets = [0, 0], sizes = [4, 63], strides = [1, 1]} : vector<4x64xf32> to vector<4x63xf32>
      %354 = tpu.concatenate %352, %353 in 1 : vector<4x1xf32>, vector<4x63xf32> -> vector<4x64xf32>
      %355 = tpu.iota {dimensions = array<i32: 1>} : vector<4x64xi32>
      %c2_i32_125 = arith.constant 2 : i32
      %c0_i32_126 = arith.constant 0 : i32
      %356 = arith.cmpi eq, %c2_i32_125, %c0_i32_126 : i32
      %c1_i32_127 = arith.constant 1 : i32
      %357 = arith.select %356, %c1_i32_127, %c2_i32_125 : i32
      %358 = vector.broadcast %357 : i32 to vector<4x64xi32>
      %359 = arith.remsi %355, %358 : vector<4x64xi32>
      %c0_i32_128 = arith.constant 0 : i32
      %360 = vector.broadcast %c0_i32_128 : i32 to vector<4x64xi32>
      %361 = arith.cmpi ne, %359, %360 : vector<4x64xi32>
      %c0_i32_129 = arith.constant 0 : i32
      %362 = vector.broadcast %c0_i32_129 : i32 to vector<4x64xi32>
      %363 = arith.cmpi slt, %359, %362 : vector<4x64xi32>
      %c0_i32_130 = arith.constant 0 : i32
      %364 = arith.cmpi slt, %357, %c0_i32_130 : i32
      %365 = vector.broadcast %364 : i1 to vector<4x64xi1>
      %366 = vector.broadcast %365 : vector<4x64xi1> to vector<4x64xi1>
      %367 = arith.xori %363, %366 : vector<4x64xi1>
      %368 = arith.andi %367, %361 : vector<4x64xi1>
      %369 = vector.broadcast %357 : i32 to vector<4x64xi32>
      %370 = arith.addi %359, %369 : vector<4x64xi32>
      %371 = arith.select %368, %370, %359 : vector<4x64xi1>, vector<4x64xi32>
      %c0_i32_131 = arith.constant 0 : i32
      %372 = vector.broadcast %c0_i32_131 : i32 to vector<4x64xi32>
      %373 = arith.cmpi eq, %371, %372 : vector<4x64xi32>
      %374 = arith.addf %348, %351 : vector<4x64xf32>
      %375 = arith.addf %348, %354 : vector<4x64xf32>
      %376 = arith.select %373, %374, %375 : vector<4x64xi1>, vector<4x64xf32>
      %cst_132 = arith.constant 8.000000e+00 : f32
      %377 = vector.broadcast %cst_132 : f32 to vector<4x64xf32>
      %378 = arith.divf %376, %377 : vector<4x64xf32>
      %379 = vector.extract_strided_slice %378 {offsets = [0, 0], sizes = [2, 64], strides = [1, 1]} : vector<4x64xf32> to vector<2x64xf32>
      %380 = vector.extract_strided_slice %378 {offsets = [2, 0], sizes = [2, 64], strides = [1, 1]} : vector<4x64xf32> to vector<2x64xf32>
      %381 = arith.mulf %379, %379 : vector<2x64xf32>
      %382 = arith.subf %380, %381 : vector<2x64xf32>
      %cst_133 = arith.constant 0.000000e+00 : f32
      %383 = vector.broadcast %cst_133 : f32 to vector<2x64xf32>
      %384 = arith.maximumf %382, %383 : vector<2x64xf32>
      %cst_134 = arith.constant 9.99999974E-6 : f32
      %385 = vector.broadcast %cst_134 : f32 to vector<2x64xf32>
      %386 = arith.addf %384, %385 : vector<2x64xf32>
      %387 = math.rsqrt %386 : vector<2x64xf32>
      %388 = vector.broadcast %343 : vector<1x64xf32> to vector<2x64xf32>
      %389 = arith.mulf %388, %387 : vector<2x64xf32>
      %390 = arith.mulf %379, %389 : vector<2x64xf32>
      %391 = vector.broadcast %344 : vector<1x64xf32> to vector<2x64xf32>
      %392 = arith.subf %391, %390 : vector<2x64xf32>
      %393 = vector.shape_cast %389 : vector<2x64xf32> to vector<2x1x64xf32>
      %394 = vector.broadcast %393 : vector<2x1x64xf32> to vector<2x4x64xf32>
      %395 = arith.mulf %342, %394 : vector<2x4x64xf32>
      %396 = vector.shape_cast %392 : vector<2x64xf32> to vector<2x1x64xf32>
      %397 = vector.broadcast %396 : vector<2x1x64xf32> to vector<2x4x64xf32>
      %398 = arith.addf %395, %397 : vector<2x4x64xf32>
      %cst_135 = arith.constant 0.000000e+00 : f32
      %399 = vector.broadcast %cst_135 : f32 to vector<2x4x64xf32>
      %400 = arith.maximumf %398, %399 : vector<2x4x64xf32>
      %cst_136 = arith.constant dense<0.000000e+00> : vector<2x64xf32>
      %401 = vector.multi_reduction <add>, %400, %cst_136 [1] : vector<2x4x64xf32> to vector<2x64xf32>
      %cst_137 = arith.constant 4.000000e+00 : f32
      %402 = vector.broadcast %cst_137 : f32 to vector<2x64xf32>
      %403 = arith.divf %401, %402 : vector<2x64xf32>
      %c0_138 = arith.constant 0 : index
      %c0_139 = arith.constant 0 : index
      %404 = vector.load %arg25[%c0_138, %c0_139] : memref<2x64xf32, #tpu.memory_space<vmem>>, vector<2x64xf32>
      %405 = tpu.concatenate %404, %403 in 1 : vector<2x64xf32>, vector<2x64xf32> -> vector<2x128xf32>
      %c0_140 = arith.constant 0 : index
      %c0_141 = arith.constant 0 : index
      %406 = vector.load %arg21[%c0_140, %c0_141] : memref<128x1xf32, #tpu.memory_space<vmem>>, vector<128x1xf32>
      %cst_142 = arith.constant dense<0.000000e+00> : vector<2x1xf32>
      %407 = tpu.matmul %405, %406, %cst_142 {dimension_numbers = #tpu.dot_dimension_numbers<[1], [0], [0], [1], [0, 0, 1, 1], [], []>} : vector<2x128xf32>, vector<128x1xf32>, vector<2x1xf32> -> vector<2x1xf32>
      %c0_143 = arith.constant 0 : index
      %c0_144 = arith.constant 0 : index
      %408 = vector.load %arg22[%c0_143, %c0_144] : memref<1x1xf32, #tpu.memory_space<vmem>>, vector<1x1xf32>
      %409 = vector.broadcast %408 : vector<1x1xf32> to vector<2x1xf32>
      %410 = arith.addf %407, %409 : vector<2x1xf32>
      %c0_145 = arith.constant 0 : index
      %c0_146 = arith.constant 0 : index
      %411 = vector.load %arg23[%c0_145, %c0_146] : memref<2x1xf32, #tpu.memory_space<vmem>>, vector<2x1xf32>
      tpu.vector_store %arg23[%c0_145, %c0_146], %410 {strides = array<i32>} : memref<2x1xf32, #tpu.memory_space<vmem>>, vector<2x1xf32>,
    } else {
    }
    return
  }
  func.func @transform_0(%arg0: i32) -> (i32, i32) {
    %c0_i32 = arith.constant 0 : i32
    %c0_i32_0 = arith.constant 0 : i32
    %c0_i32_1 = arith.constant 0 : i32
    return %c0_i32, %c0_i32_0 : i32, i32
  }
  func.func @transform_1(%arg0: i32) -> (i32, i32, i32) {
    %c0_i32 = arith.constant 0 : i32
    %c0_i32_0 = arith.constant 0 : i32
    %c0_i32_1 = arith.constant 0 : i32
    %c0_i32_2 = arith.constant 0 : i32
    return %c0_i32, %c0_i32_0, %c0_i32_1 : i32, i32, i32
  }
  func.func @transform_2(%arg0: i32) -> (i32, i32) {
    %c0_i32 = arith.constant 0 : i32
    %c0_i32_0 = arith.constant 0 : i32
    %c0_i32_1 = arith.constant 0 : i32
    return %c0_i32, %c0_i32_0 : i32, i32
  }
  func.func @transform_3(%arg0: i32) -> (i32, i32) {
    %c0_i32 = arith.constant 0 : i32
    %c0_i32_0 = arith.constant 0 : i32
    %c0_i32_1 = arith.constant 0 : i32
    return %c0_i32, %c0_i32_0 : i32, i32
  }
  func.func @transform_4(%arg0: i32) -> (i32, i32, i32) {
    %c0_i32 = arith.constant 0 : i32
    %c0_i32_0 = arith.constant 0 : i32
    %c0_i32_1 = arith.constant 0 : i32
    %c0_i32_2 = arith.constant 0 : i32
    return %c0_i32, %c0_i32_0, %c0_i32_1 : i32, i32, i32
  }
  func.func @transform_5(%arg0: i32) -> (i32, i32) {
    %c0_i32 = arith.constant 0 : i32
    %c0_i32_0 = arith.constant 0 : i32
    %c0_i32_1 = arith.constant 0 : i32
    return %c0_i32, %c0_i32_0 : i32, i32
  }
  func.func @transform_6(%arg0: i32) -> (i32, i32, i32, i32) {
    %c0_i32 = arith.constant 0 : i32
    %c0_i32_0 = arith.constant 0 : i32
    %c0_i32_1 = arith.constant 0 : i32
    %c0_i32_2 = arith.constant 0 : i32
    %c0_i32_3 = arith.constant 0 : i32
    return %c0_i32, %c0_i32_0, %c0_i32_1, %c0_i32_2 : i32, i32, i32, i32
  }
  func.func @transform_7(%arg0: i32) -> (i32, i32, i32, i32) {
    %c0_i32 = arith.constant 0 : i32
    %c0_i32_0 = arith.constant 0 : i32
    %c0_i32_1 = arith.constant 0 : i32
    %c0_i32_2 = arith.constant 0 : i32
    %c0_i32_3 = arith.constant 0 : i32
    return %c0_i32, %c0_i32_0, %c0_i32_1, %c0_i32_2 : i32, i32, i32, i32
  }
  func.func @transform_8(%arg0: i32) -> (i32, i32, i32) {
    %c0_i32 = arith.constant 0 : i32
    %c0_i32_0 = arith.constant 0 : i32
    %c0_i32_1 = arith.constant 0 : i32
    %c0_i32_2 = arith.constant 0 : i32
    return %c0_i32, %c0_i32_0, %c0_i32_1 : i32, i32, i32
  }
  func.func @transform_9(%arg0: i32) -> (i32, i32, i32) {
    %c0_i32 = arith.constant 0 : i32
    %c0_i32_0 = arith.constant 0 : i32
    %c0_i32_1 = arith.constant 0 : i32
    %c0_i32_2 = arith.constant 0 : i32
    return %c0_i32, %c0_i32_0, %c0_i32_1 : i32, i32, i32
  }
  func.func @transform_10(%arg0: i32) -> (i32, i32, i32) {
    %c0_i32 = arith.constant 0 : i32
    %c0_i32_0 = arith.constant 0 : i32
    %c0_i32_1 = arith.constant 0 : i32
    %c0_i32_2 = arith.constant 0 : i32
    return %c0_i32, %c0_i32_0, %c0_i32_1 : i32, i32, i32
  }
  func.func @transform_11(%arg0: i32) -> (i32, i32, i32) {
    %c0_i32 = arith.constant 0 : i32
    %c0_i32_0 = arith.constant 0 : i32
    %c0_i32_1 = arith.constant 0 : i32
    %c0_i32_2 = arith.constant 0 : i32
    return %c0_i32, %c0_i32_0, %c0_i32_1 : i32, i32, i32
  }
  func.func @transform_12(%arg0: i32) -> (i32, i32, i32, i32) {
    %c0_i32 = arith.constant 0 : i32
    %c0_i32_0 = arith.constant 0 : i32
    %c0_i32_1 = arith.constant 0 : i32
    %c0_i32_2 = arith.constant 0 : i32
    return %arg0, %c0_i32, %c0_i32_0, %c0_i32_1 : i32, i32, i32, i32
  }
  func.func @transform_13(%arg0: i32) -> (i32, i32, i32, i32) {
    %c0_i32 = arith.constant 0 : i32
    %c0_i32_0 = arith.constant 0 : i32
    %c0_i32_1 = arith.constant 0 : i32
    %c0_i32_2 = arith.constant 0 : i32
    return %arg0, %c0_i32, %c0_i32_0, %c0_i32_1 : i32, i32, i32, i32
  }
  func.func @transform_14(%arg0: i32) -> (i32, i32, i32) {
    %c0_i32 = arith.constant 0 : i32
    %c0_i32_0 = arith.constant 0 : i32
    %c0_i32_1 = arith.constant 0 : i32
    return %arg0, %c0_i32, %c0_i32_0 : i32, i32, i32
  }
  func.func @transform_15(%arg0: i32) -> (i32, i32, i32) {
    %c0_i32 = arith.constant 0 : i32
    %c0_i32_0 = arith.constant 0 : i32
    %c0_i32_1 = arith.constant 0 : i32
    return %arg0, %c0_i32, %c0_i32_0 : i32, i32, i32
  }
  func.func @transform_16(%arg0: i32) -> (i32, i32, i32) {
    %c0_i32 = arith.constant 0 : i32
    %c0_i32_0 = arith.constant 0 : i32
    %c0_i32_1 = arith.constant 0 : i32
    return %arg0, %c0_i32, %c0_i32_0 : i32, i32, i32
  }
  func.func @transform_17(%arg0: i32) -> (i32, i32, i32) {
    %c0_i32 = arith.constant 0 : i32
    %c0_i32_0 = arith.constant 0 : i32
    %c0_i32_1 = arith.constant 0 : i32
    return %arg0, %c0_i32, %c0_i32_0 : i32, i32, i32
  }
  func.func @transform_18(%arg0: i32) -> (i32, i32) {
    %c0_i32 = arith.constant 0 : i32
    %c0_i32_0 = arith.constant 0 : i32
    %c0_i32_1 = arith.constant 0 : i32
    return %c0_i32, %c0_i32_0 : i32, i32
  }
  func.func @transform_19(%arg0: i32) -> (i32, i32) {
    %c0_i32 = arith.constant 0 : i32
    %c0_i32_0 = arith.constant 0 : i32
    %c0_i32_1 = arith.constant 0 : i32
    return %c0_i32, %c0_i32_0 : i32, i32
  }
  func.func @transform_20(%arg0: i32) -> (i32, i32) {
    %c0_i32 = arith.constant 0 : i32
    %c0_i32_0 = arith.constant 0 : i32
    %c0_i32_1 = arith.constant 0 : i32
    return %c0_i32, %c0_i32_0 : i32, i32
  }
  func.func @transform_21(%arg0: i32) -> (i32, i32) {
    %c0_i32 = arith.constant 0 : i32
    %c0_i32_0 = arith.constant 0 : i32
    %c0_i32_1 = arith.constant 0 : i32
    return %c0_i32, %c0_i32_0 : i32, i32
  }
  func.func @transform_22(%arg0: i32) -> (i32, i32) {
    %c0_i32 = arith.constant 0 : i32
    %c0_i32_0 = arith.constant 0 : i32
    %c0_i32_1 = arith.constant 0 : i32
    return %c0_i32, %c0_i32_0 : i32, i32
  }
}

</mosaic_0001>

<llo_original>
// kernel: lstmfrn_forward.1
$region0: #{lstmfrn_forward.1}
  #allocation0 [shape = 'u32[]', space=smem, size = 0x4, offset = 0x4, fixed_abs, tag = 'smem constant byte address 0x4 - core index']
  #allocation1 [shape = 'u32[144,128]{1,0:T(1,128)}', space=vmem, size = 0x12000, scoped, tag = 'internal scratch']
  #allocation2 [shape = 'f32[2,4,64]{2,1,0:T(4,128)}', space=vmem, size = 0x1000, scoped, tag = 'scratch operand']
  #allocation3 [shape = 'f32[2,64]{1,0:T(2,128)}', space=vmem, size = 0x400, scoped, tag = 'scratch operand']
  #allocation4 [shape = 'f32[1,1]{1,0:T(1,128)S(1)}', space=vmem, size = 0x200, scoped, tag = 'scoped memory for lstmfrn_forward.1']
  %s0 = inlined_call_operand.vmem [shape: f32[2,16], index: 0, kind: input, shape index: {}]
  %s1 = inlined_call_operand.vmem [shape: f32[2,16,1], index: 1, kind: input, shape index: {}]
  %s2 = inlined_call_operand.vmem [shape: f32[16,192], index: 2, kind: input, shape index: {}]
  %s3 = inlined_call_operand.vmem [shape: f32[1,192], index: 3, kind: input, shape index: {}]
  %s4 = inlined_call_operand.vmem [shape: f32[3,1,64], index: 4, kind: input, shape index: {}]
  %s5 = inlined_call_operand.vmem [shape: f32[1,64], index: 5, kind: input, shape index: {}]
  %s6 = inlined_call_operand.hbm [shape: f32[2,3,64,128], index: 6, kind: input, shape index: {}]
  %s7 = inlined_call_operand.hbm [shape: f32[2,3,64,64], index: 7, kind: input, shape index: {}]
  %s8 = inlined_call_operand.vmem [shape: f32[2,1,64], index: 8, kind: input, shape index: {}]
  %s9 = inlined_call_operand.vmem [shape: f32[2,1,64], index: 9, kind: input, shape index: {}]
  %s10 = inlined_call_operand.vmem [shape: f32[2,1,64], index: 10, kind: input, shape index: {}]
  %s11 = inlined_call_operand.vmem [shape: f32[2,1,64], index: 11, kind: input, shape index: {}]
  %s12 = inlined_call_operand.hbm [shape: f32[6,3,64,64], index: 12, kind: input, shape index: {}]
  %s13 = inlined_call_operand.hbm [shape: f32[6,3,64,64], index: 13, kind: input, shape index: {}]
  %s14 = inlined_call_operand.vmem [shape: f32[6,1,64], index: 14, kind: input, shape index: {}]
  %s15 = inlined_call_operand.vmem [shape: f32[6,1,64], index: 15, kind: input, shape index: {}]
  %s16 = inlined_call_operand.vmem [shape: f32[6,1,64], index: 16, kind: input, shape index: {}]
  %s17 = inlined_call_operand.vmem [shape: f32[6,1,64], index: 17, kind: input, shape index: {}]
  %s18 = inlined_call_operand.vmem [shape: f32[1,64], index: 18, kind: input, shape index: {}]
  %s19 = inlined_call_operand.vmem [shape: f32[1,64], index: 19, kind: input, shape index: {}]
  %s20 = inlined_call_operand.vmem [shape: f32[128,1], index: 20, kind: input, shape index: {}]
  %s21 = inlined_call_operand.<no memory space> [shape: f32[1,1], index: 21, kind: input, shape index: {}]
  %s22 = inlined_call_operand.vmem [shape: f32[2,1], index: 22, kind: output, shape index: {}]
  %s23 = sld [smem:[#allocation0]]
  $region145: #{lstmfrn_forward.1} parent=0
    _
  %s25 = ssub.s32 1, %s23
  %s26 = scalar_select 0, %s25, %s23
  %v27 = vstv %s21
  %28 = vst [vmem:[#allocation4] sm:$0x1] %v27
  $region1: #{lstmfrn_forward.1} parent=0
    #allocation5 [shape = 'u8[196608]{0}', space=vmem, size = 0x30000, scoped, tag = 'input window, operand 6, single buffered']
    #allocation6 [shape = 's32[2]{0}', space=sflag, size = 0x8, scoped, tag = 'scoped memory for lstmfrn_forward.1']
    #allocation7 [shape = 'u8[196608]{0}', space=vmem, size = 0x30000, scoped, tag = 'input window, operand 7, single buffered']
    #allocation8 [shape = 's32[1]{0}', space=sflag, size = 0x4, scoped, tag = 'scoped memory for lstmfrn_forward.1']
    #allocation9 [shape = 'u8[393216]{0}', space=vmem, size = 0x60000, scoped, tag = 'input window, operand 12']
    #allocation10 [shape = 'u8[393216]{0}', space=vmem, size = 0x60000, scoped, tag = 'input window, operand 13']
    %29 = vsyncpa [#allocation6], 0
    %30 = vsyncpa [#allocation8], 0
    loop: start=0, step=1, limit=5
    $region2: #{lstmfrn_forward.1} parent=1 // loop_pre_header
      _
    $region3: #{lstmfrn_forward.1} parent=1 // loop_header
      %s32 = sphi 0, %s36
      %p33 = scmp.ge.s32.totalorder %s32, 5
      %s40 = sphi 0, %s40
      %s42 = sphi 0, %s40
      %s43 = sphi 0, %s42
      %s57 = sphi 0, %s43
      %s61 = sphi 0, %s61
      %s63 = sphi 0, %s61
      %s64 = sphi 0, %s63
      %s78 = sphi 0, %s64
      %s82 = sphi 0, %s82
      %s84 = sphi 0, %s82
      %s85 = sphi 0, %s84
      %s99 = sphi 0, %s85
      %s103 = sphi 0, %s103
      %s105 = sphi 0, %s103
      %s106 = sphi 0, %s105
      %s120 = sphi 0, %s106
      %s124 = sphi 0, %s124
      %s126 = sphi 0, %s124
      %s127 = sphi 0, %s126
      %s141 = sphi 0, %s127
      %s145 = sphi 0, %s145
      %s147 = sphi 0, %s145
      %s148 = sphi 0, %s147
      %s162 = sphi 0, %s148
      %s166 = sphi 0, %s166
      %s168 = sphi 0, %s166
      %s169 = sphi 0, %s168
      %s183 = sphi 0, %s169
      %s187 = sphi 0, %s187
      %s189 = sphi 0, %s187
      %s190 = sphi 0, %s189
      %s204 = sphi 0, %s190
      %s208 = sphi 0, %s208
      %s210 = sphi 0, %s208
      %s211 = sphi 0, %s210
      %s225 = sphi 0, %s211
      %s229 = sphi 0, %s229
      %s231 = sphi 0, %s229
      %s232 = sphi 0, %s231
      %s246 = sphi 0, %s232
      %s250 = sphi 0, %s250
      %s252 = sphi 0, %s250
      %s253 = sphi 0, %s252
      %s267 = sphi 0, %s253
      %s271 = sphi 0, %s271
      %s273 = sphi 0, %s271
      %s274 = sphi 0, %s273
      %s288 = sphi 0, %s274
      %s294 = sphi 0, %s296
      %s297 = sphi 0, %s294
      %s298 = sphi 0, %s297
      %s314 = sphi 0, %s298
      %s320 = sphi 0, %s322
      %s323 = sphi 0, %s320
      %s324 = sphi 0, %s323
      %s340 = sphi 0, %s324
      %s346 = sphi 0, %s348
      %s349 = sphi 0, %s346
      %s350 = sphi 0, %s349
      %s366 = sphi 0, %s350
      %s372 = sphi 0, %s374
      %s375 = sphi 0, %s372
      %s376 = sphi 0, %s375
      %s392 = sphi 0, %s376
      %s398 = sphi 0, %s400
      %s401 = sphi 0, %s398
      %s402 = sphi 0, %s401
      %s418 = sphi 0, %s402
      %s424 = sphi 0, %s426
      %s427 = sphi 0, %s424
      %s428 = sphi 0, %s427
      %s444 = sphi 0, %s428
      %s448 = sphi 0, %s448
      %s450 = sphi 0, %s448
      %s451 = sphi 0, %s450
      %s465 = sphi 0, %s451
      %s469 = sphi 0, %s469
      %s471 = sphi 0, %s469
      %s472 = sphi 0, %s471
      %s486 = sphi 0, %s472
      %s490 = sphi 0, %s490
      %s492 = sphi 0, %s490
      %s493 = sphi 0, %s492
      %s507 = sphi 0, %s493
      %s511 = sphi 0, %s511
      %s513 = sphi 0, %s511
      %s514 = sphi 0, %s513
      %s528 = sphi 0, %s514
      %s532 = sphi 0, %s532
      %s534 = sphi 0, %s532
      %s535 = sphi 0, %s534
      %s549 = sphi 0, %s535
    $region4: #{lstmfrn_forward.1} parent=1 // loop_header_branch
      %35 = sbr.rel (%p33) target = $region8
    $region5: #{lstmfrn_forward.1} parent=1 // loop_body
      %s37 = ssub.s32 %s32, 1
      %s38 = ssub.s32 %s32, 2
      %s39 = sadd.s32 %s32, 1
      %s41 = sadd.s32 %s40, 1
      %p44 = scmp.eq.s32.totalorder %s32, 2
      %p45 = scmp.ne.s32.totalorder %s40, %s42
      %p46 = scmp.eq.s32.totalorder %s32, 0
      %p47 = por %p45, %p46
      %p48 = scmp.ne.s32.totalorder %s40, %s42
      %p49 = scmp.eq.s32.totalorder %s37, 2
      %p50 = por %p48, %p49
      %p51 = scmp.ne.s32.totalorder %s42, %s43
      %p52 = scmp.eq.s32.totalorder %s37, 0
      %p53 = por %p51, %p52
      %p54 = scmp.ne.s32.totalorder %s42, %s43
      %p55 = scmp.eq.s32.totalorder %s38, 2
      %p56 = por %p54, %p55
      %p58 = scmp.ne.s32.totalorder %s43, %s57
      %p59 = scmp.eq.s32.totalorder %s38, 0
      %p60 = por %p58, %p59
      %s62 = sadd.s32 %s61, 1
      %p65 = scmp.eq.s32.totalorder %s32, 2
      %p66 = scmp.ne.s32.totalorder %s61, %s63
      %p67 = scmp.eq.s32.totalorder %s32, 0
      %p68 = por %p66, %p67
      %p69 = scmp.ne.s32.totalorder %s61, %s63
      %p70 = scmp.eq.s32.totalorder %s37, 2
      %p71 = por %p69, %p70
      %p72 = scmp.ne.s32.totalorder %s63, %s64
      %p73 = scmp.eq.s32.totalorder %s37, 0
      %p74 = por %p72, %p73
      %p75 = scmp.ne.s32.totalorder %s63, %s64
      %p76 = scmp.eq.s32.totalorder %s38, 2
      %p77 = por %p75, %p76
      %p79 = scmp.ne.s32.totalorder %s64, %s78
      %p80 = scmp.eq.s32.totalorder %s38, 0
      %p81 = por %p79, %p80
      %s83 = sadd.s32 %s82, 1
      %p86 = scmp.eq.s32.totalorder %s32, 2
      %p87 = scmp.ne.s32.totalorder %s82, %s84
      %p88 = scmp.eq.s32.totalorder %s32, 0
      %p89 = por %p87, %p88
      %p90 = scmp.ne.s32.totalorder %s82, %s84
      %p91 = scmp.eq.s32.totalorder %s37, 2
      %p92 = por %p90, %p91
      %p93 = scmp.ne.s32.totalorder %s84, %s85
      %p94 = scmp.eq.s32.totalorder %s37, 0
      %p95 = por %p93, %p94
      %p96 = scmp.ne.s32.totalorder %s84, %s85
      %p97 = scmp.eq.s32.totalorder %s38, 2
      %p98 = por %p96, %p97
      %p100 = scmp.ne.s32.totalorder %s85, %s99
      %p101 = scmp.eq.s32.totalorder %s38, 0
      %p102 = por %p100, %p101
      %s104 = sadd.s32 %s103, 1
      %p107 = scmp.eq.s32.totalorder %s32, 2
      %p108 = scmp.ne.s32.totalorder %s103, %s105
      %p109 = scmp.eq.s32.totalorder %s32, 0
      %p110 = por %p108, %p109
      %p111 = scmp.ne.s32.totalorder %s103, %s105
      %p112 = scmp.eq.s32.totalorder %s37, 2
      %p113 = por %p111, %p112
      %p114 = scmp.ne.s32.totalorder %s105, %s106
      %p115 = scmp.eq.s32.totalorder %s37, 0
      %p116 = por %p114, %p115
      %p117 = scmp.ne.s32.totalorder %s105, %s106
      %p118 = scmp.eq.s32.totalorder %s38, 2
      %p119 = por %p117, %p118
      %p121 = scmp.ne.s32.totalorder %s106, %s120
      %p122 = scmp.eq.s32.totalorder %s38, 0
      %p123 = por %p121, %p122
      %s125 = sadd.s32 %s124, 1
      %p128 = scmp.eq.s32.totalorder %s32, 2
      %p129 = scmp.ne.s32.totalorder %s124, %s126
      %p130 = scmp.eq.s32.totalorder %s32, 0
      %p131 = por %p129, %p130
      %p132 = scmp.ne.s32.totalorder %s124, %s126
      %p133 = scmp.eq.s32.totalorder %s37, 2
      %p134 = por %p132, %p133
      %p135 = scmp.ne.s32.totalorder %s126, %s127
      %p136 = scmp.eq.s32.totalorder %s37, 0
      %p137 = por %p135, %p136
      %p138 = scmp.ne.s32.totalorder %s126, %s127
      %p139 = scmp.eq.s32.totalorder %s38, 2
      %p140 = por %p138, %p139
      %p142 = scmp.ne.s32.totalorder %s127, %s141
      %p143 = scmp.eq.s32.totalorder %s38, 0
      %p144 = por %p142, %p143
      %s146 = sadd.s32 %s145, 1
      %p149 = scmp.eq.s32.totalorder %s32, 2
      %p150 = scmp.ne.s32.totalorder %s145, %s147
      %p151 = scmp.eq.s32.totalorder %s32, 0
      %p152 = por %p150, %p151
      %p153 = scmp.ne.s32.totalorder %s145, %s147
      %p154 = scmp.eq.s32.totalorder %s37, 2
      %p155 = por %p153, %p154
      %p156 = scmp.ne.s32.totalorder %s147, %s148
      %p157 = scmp.eq.s32.totalorder %s37, 0
      %p158 = por %p156, %p157
      %p159 = scmp.ne.s32.totalorder %s147, %s148
      %p160 = scmp.eq.s32.totalorder %s38, 2
      %p161 = por %p159, %p160
      %p163 = scmp.ne.s32.totalorder %s148, %s162
      %p164 = scmp.eq.s32.totalorder %s38, 0
      %p165 = por %p163, %p164
      %s167 = sadd.s32 %s166, 1
      %p170 = scmp.eq.s32.totalorder %s32, 2
      %p171 = scmp.ne.s32.totalorder %s166, %s168
      %p172 = scmp.eq.s32.totalorder %s32, 0
      %p173 = por %p171, %p172
      %p174 = scmp.ne.s32.totalorder %s166, %s168
      %p175 = scmp.eq.s32.totalorder %s37, 2
      %p176 = por %p174, %p175
      %p177 = scmp.ne.s32.totalorder %s168, %s169
      %p178 = scmp.eq.s32.totalorder %s37, 0
      %p179 = por %p177, %p178
      %p180 = scmp.ne.s32.totalorder %s168, %s169
      %p181 = scmp.eq.s32.totalorder %s38, 2
      %p182 = por %p180, %p181
      %p184 = scmp.ne.s32.totalorder %s169, %s183
      %p185 = scmp.eq.s32.totalorder %s38, 0
      %p186 = por %p184, %p185
      %s188 = sadd.s32 %s187, 1
      %p191 = scmp.eq.s32.totalorder %s32, 2
      %p192 = scmp.ne.s32.totalorder %s187, %s189
      %p193 = scmp.eq.s32.totalorder %s32, 0
      %p194 = por %p192, %p193
      %p195 = scmp.ne.s32.totalorder %s187, %s189
      %p196 = scmp.eq.s32.totalorder %s37, 2
      %p197 = por %p195, %p196
      %p198 = scmp.ne.s32.totalorder %s189, %s190
      %p199 = scmp.eq.s32.totalorder %s37, 0
      %p200 = por %p198, %p199
      %p201 = scmp.ne.s32.totalorder %s189, %s190
      %p202 = scmp.eq.s32.totalorder %s38, 2
      %p203 = por %p201, %p202
      %p205 = scmp.ne.s32.totalorder %s190, %s204
      %p206 = scmp.eq.s32.totalorder %s38, 0
      %p207 = por %p205, %p206
      %s209 = sadd.s32 %s208, 1
      %p212 = scmp.eq.s32.totalorder %s32, 2
      %p213 = scmp.ne.s32.totalorder %s208, %s210
      %p214 = scmp.eq.s32.totalorder %s32, 0
      %p215 = por %p213, %p214
      %p216 = scmp.ne.s32.totalorder %s208, %s210
      %p217 = scmp.eq.s32.totalorder %s37, 2
      %p218 = por %p216, %p217
      %p219 = scmp.ne.s32.totalorder %s210, %s211
      %p220 = scmp.eq.s32.totalorder %s37, 0
      %p221 = por %p219, %p220
      %p222 = scmp.ne.s32.totalorder %s210, %s211
      %p223 = scmp.eq.s32.totalorder %s38, 2
      %p224 = por %p222, %p223
      %p226 = scmp.ne.s32.totalorder %s211, %s225
      %p227 = scmp.eq.s32.totalorder %s38, 0
      %p228 = por %p226, %p227
      %s230 = sadd.s32 %s229, 1
      %p233 = scmp.eq.s32.totalorder %s32, 2
      %p234 = scmp.ne.s32.totalorder %s229, %s231
      %p235 = scmp.eq.s32.totalorder %s32, 0
      %p236 = por %p234, %p235
      %p237 = scmp.ne.s32.totalorder %s229, %s231
      %p238 = scmp.eq.s32.totalorder %s37, 2
      %p239 = por %p237, %p238
      %p240 = scmp.ne.s32.totalorder %s231, %s232
      %p241 = scmp.eq.s32.totalorder %s37, 0
      %p242 = por %p240, %p241
      %p243 = scmp.ne.s32.totalorder %s231, %s232
      %p244 = scmp.eq.s32.totalorder %s38, 2
      %p245 = por %p243, %p244
      %p247 = scmp.ne.s32.totalorder %s232, %s246
      %p248 = scmp.eq.s32.totalorder %s38, 0
      %p249 = por %p247, %p248
      %s251 = sadd.s32 %s250, 1
      %p254 = scmp.eq.s32.totalorder %s32, 2
      %p255 = scmp.ne.s32.totalorder %s250, %s252
      %p256 = scmp.eq.s32.totalorder %s32, 0
      %p257 = por %p255, %p256
      %p258 = scmp.ne.s32.totalorder %s250, %s252
      %p259 = scmp.eq.s32.totalorder %s37, 2
      %p260 = por %p258, %p259
      %p261 = scmp.ne.s32.totalorder %s252, %s253
      %p262 = scmp.eq.s32.totalorder %s37, 0
      %p263 = por %p261, %p262
      %p264 = scmp.ne.s32.totalorder %s252, %s253
      %p265 = scmp.eq.s32.totalorder %s38, 2
      %p266 = por %p264, %p265
      %p268 = scmp.ne.s32.totalorder %s253, %s267
      %p269 = scmp.eq.s32.totalorder %s38, 0
      %p270 = por %p268, %p269
      %s272 = sadd.s32 %s271, 1
      %p275 = scmp.eq.s32.totalorder %s32, 2
      %p276 = scmp.ne.s32.totalorder %s271, %s273
      %p277 = scmp.eq.s32.totalorder %s32, 0
      %p278 = por %p276, %p277
      %p279 = scmp.ne.s32.totalorder %s271, %s273
      %p280 = scmp.eq.s32.totalorder %s37, 2
      %p281 = por %p279, %p280
      %p282 = scmp.ne.s32.totalorder %s273, %s274
      %p283 = scmp.eq.s32.totalorder %s37, 0
      %p284 = por %p282, %p283
      %p285 = scmp.ne.s32.totalorder %s273, %s274
      %p286 = scmp.eq.s32.totalorder %s38, 2
      %p287 = por %p285, %p286
      %p289 = scmp.ne.s32.totalorder %s274, %s288
      %p290 = scmp.eq.s32.totalorder %s38, 0
      %p291 = por %p289, %p290
      %s292 = ssub.s32 %s32, %s39
      %p293 = scmp.eq.s32.totalorder %s292, 0
      %s295 = sadd.s32 %s294, 1
      %s296 = scalar_select %p293, %s294, %s295
      %p299 = pneg %p293
      %p300 = scmp.eq.s32.totalorder %s32, 2
      %p301 = por %p299, %p300
      %p302 = scmp.ne.s32.totalorder %s294, %s297
      %p303 = scmp.eq.s32.totalorder %s32, 0
      %p304 = por %p302, %p303
      %p305 = scmp.ne.s32.totalorder %s294, %s297
      %p306 = scmp.eq.s32.totalorder %s37, 2
      %p307 = por %p305, %p306
      %p308 = scmp.ne.s32.totalorder %s297, %s298
      %p309 = scmp.eq.s32.totalorder %s37, 0
      %p310 = por %p308, %p309
      %p311 = scmp.ne.s32.totalorder %s297, %s298
      %p312 = scmp.eq.s32.totalorder %s38, 2
      %p313 = por %p311, %p312
      %p315 = scmp.ne.s32.totalorder %s298, %s314
      %p316 = scmp.eq.s32.totalorder %s38, 0
      %p317 = por %p315, %p316
      %s318 = ssub.s32 %s32, %s39
      %p319 = scmp.eq.s32.totalorder %s318, 0
      %s321 = sadd.s32 %s320, 1
      %s322 = scalar_select %p319, %s320, %s321
      %p325 = pneg %p319
      %p326 = scmp.eq.s32.totalorder %s32, 2
      %p327 = por %p325, %p326
      %p328 = scmp.ne.s32.totalorder %s320, %s323
      %p329 = scmp.eq.s32.totalorder %s32, 0
      %p330 = por %p328, %p329
      %p331 = scmp.ne.s32.totalorder %s320, %s323
      %p332 = scmp.eq.s32.totalorder %s37, 2
      %p333 = por %p331, %p332
      %p334 = scmp.ne.s32.totalorder %s323, %s324
      %p335 = scmp.eq.s32.totalorder %s37, 0
      %p336 = por %p334, %p335
      %p337 = scmp.ne.s32.totalorder %s323, %s324
      %p338 = scmp.eq.s32.totalorder %s38, 2
      %p339 = por %p337, %p338
      %p341 = scmp.ne.s32.totalorder %s324, %s340
      %p342 = scmp.eq.s32.totalorder %s38, 0
      %p343 = por %p341, %p342
      %s344 = ssub.s32 %s32, %s39
      %p345 = scmp.eq.s32.totalorder %s344, 0
      %s347 = sadd.s32 %s346, 1
      %s348 = scalar_select %p345, %s346, %s347
      %p351 = pneg %p345
      %p352 = scmp.eq.s32.totalorder %s32, 2
      %p353 = por %p351, %p352
      %p354 = scmp.ne.s32.totalorder %s346, %s349
      %p355 = scmp.eq.s32.totalorder %s32, 0
      %p356 = por %p354, %p355
      %p357 = scmp.ne.s32.totalorder %s346, %s349
      %p358 = scmp.eq.s32.totalorder %s37, 2
      %p359 = por %p357, %p358
      %p360 = scmp.ne.s32.totalorder %s349, %s350
      %p361 = scmp.eq.s32.totalorder %s37, 0
      %p362 = por %p360, %p361
      %p363 = scmp.ne.s32.totalorder %s349, %s350
      %p364 = scmp.eq.s32.totalorder %s38, 2
      %p365 = por %p363, %p364
      %p367 = scmp.ne.s32.totalorder %s350, %s366
      %p368 = scmp.eq.s32.totalorder %s38, 0
      %p369 = por %p367, %p368
      %s370 = ssub.s32 %s32, %s39
      %p371 = scmp.eq.s32.totalorder %s370, 0
      %s373 = sadd.s32 %s372, 1
      %s374 = scalar_select %p371, %s372, %s373
      %p377 = pneg %p371
      %p378 = scmp.eq.s32.totalorder %s32, 2
      %p379 = por %p377, %p378
      %p380 = scmp.ne.s32.totalorder %s372, %s375
      %p381 = scmp.eq.s32.totalorder %s32, 0
      %p382 = por %p380, %p381
      %p383 = scmp.ne.s32.totalorder %s372, %s375
      %p384 = scmp.eq.s32.totalorder %s37, 2
      %p385 = por %p383, %p384
      %p386 = scmp.ne.s32.totalorder %s375, %s376
      %p387 = scmp.eq.s32.totalorder %s37, 0
      %p388 = por %p386, %p387
      %p389 = scmp.ne.s32.totalorder %s375, %s376
      %p390 = scmp.eq.s32.totalorder %s38, 2
      %p391 = por %p389, %p390
      %p393 = scmp.ne.s32.totalorder %s376, %s392
      %p394 = scmp.eq.s32.totalorder %s38, 0
      %p395 = por %p393, %p394
      %s396 = ssub.s32 %s32, %s39
      %p397 = scmp.eq.s32.totalorder %s396, 0
      %s399 = sadd.s32 %s398, 1
      %s400 = scalar_select %p397, %s398, %s399
      %p403 = pneg %p397
      %p404 = scmp.eq.s32.totalorder %s32, 2
      %p405 = por %p403, %p404
      %p406 = scmp.ne.s32.totalorder %s398, %s401
      %p407 = scmp.eq.s32.totalorder %s32, 0
      %p408 = por %p406, %p407
      %p409 = scmp.ne.s32.totalorder %s398, %s401
      %p410 = scmp.eq.s32.totalorder %s37, 2
      %p411 = por %p409, %p410
      %p412 = scmp.ne.s32.totalorder %s401, %s402
      %p413 = scmp.eq.s32.totalorder %s37, 0
      %p414 = por %p412, %p413
      %p415 = scmp.ne.s32.totalorder %s401, %s402
      %p416 = scmp.eq.s32.totalorder %s38, 2
      %p417 = por %p415, %p416
      %p419 = scmp.ne.s32.totalorder %s402, %s418
      %p420 = scmp.eq.s32.totalorder %s38, 0
      %p421 = por %p419, %p420
      %s422 = ssub.s32 %s32, %s39
      %p423 = scmp.eq.s32.totalorder %s422, 0
      %s425 = sadd.s32 %s424, 1
      %s426 = scalar_select %p423, %s424, %s425
      %p429 = pneg %p423
      %p430 = scmp.eq.s32.totalorder %s32, 2
      %p431 = por %p429, %p430
      %p432 = scmp.ne.s32.totalorder %s424, %s427
      %p433 = scmp.eq.s32.totalorder %s32, 0
      %p434 = por %p432, %p433
      %p435 = scmp.ne.s32.totalorder %s424, %s427
      %p436 = scmp.eq.s32.totalorder %s37, 2
      %p437 = por %p435, %p436
      %p438 = scmp.ne.s32.totalorder %s427, %s428
      %p439 = scmp.eq.s32.totalorder %s37, 0
      %p440 = por %p438, %p439
      %p441 = scmp.ne.s32.totalorder %s427, %s428
      %p442 = scmp.eq.s32.totalorder %s38, 2
      %p443 = por %p441, %p442
      %p445 = scmp.ne.s32.totalorder %s428, %s444
      %p446 = scmp.eq.s32.totalorder %s38, 0
      %p447 = por %p445, %p446
      %s449 = sadd.s32 %s448, 1
      %p452 = scmp.eq.s32.totalorder %s32, 2
      %p453 = scmp.ne.s32.totalorder %s448, %s450
      %p454 = scmp.eq.s32.totalorder %s32, 0
      %p455 = por %p453, %p454
      %p456 = scmp.ne.s32.totalorder %s448, %s450
      %p457 = scmp.eq.s32.totalorder %s37, 2
      %p458 = por %p456, %p457
      %p459 = scmp.ne.s32.totalorder %s450, %s451
      %p460 = scmp.eq.s32.totalorder %s37, 0
      %p461 = por %p459, %p460
      %p462 = scmp.ne.s32.totalorder %s450, %s451
      %p463 = scmp.eq.s32.totalorder %s38, 2
      %p464 = por %p462, %p463
      %p466 = scmp.ne.s32.totalorder %s451, %s465
      %p467 = scmp.eq.s32.totalorder %s38, 0
      %p468 = por %p466, %p467
      %s470 = sadd.s32 %s469, 1
      %p473 = scmp.eq.s32.totalorder %s32, 2
      %p474 = scmp.ne.s32.totalorder %s469, %s471
      %p475 = scmp.eq.s32.totalorder %s32, 0
      %p476 = por %p474, %p475
      %p477 = scmp.ne.s32.totalorder %s469, %s471
      %p478 = scmp.eq.s32.totalorder %s37, 2
      %p479 = por %p477, %p478
      %p480 = scmp.ne.s32.totalorder %s471, %s472
      %p481 = scmp.eq.s32.totalorder %s37, 0
      %p482 = por %p480, %p481
      %p483 = scmp.ne.s32.totalorder %s471, %s472
      %p484 = scmp.eq.s32.totalorder %s38, 2
      %p485 = por %p483, %p484
      %p487 = scmp.ne.s32.totalorder %s472, %s486
      %p488 = scmp.eq.s32.totalorder %s38, 0
      %p489 = por %p487, %p488
      %s491 = sadd.s32 %s490, 1
      %p494 = scmp.eq.s32.totalorder %s32, 2
      %p495 = scmp.ne.s32.totalorder %s490, %s492
      %p496 = scmp.eq.s32.totalorder %s32, 0
      %p497 = por %p495, %p496
      %p498 = scmp.ne.s32.totalorder %s490, %s492
      %p499 = scmp.eq.s32.totalorder %s37, 2
      %p500 = por %p498, %p499
      %p501 = scmp.ne.s32.totalorder %s492, %s493
      %p502 = scmp.eq.s32.totalorder %s37, 0
      %p503 = por %p501, %p502
      %p504 = scmp.ne.s32.totalorder %s492, %s493
      %p505 = scmp.eq.s32.totalorder %s38, 2
      %p506 = por %p504, %p505
      %p508 = scmp.ne.s32.totalorder %s493, %s507
      %p509 = scmp.eq.s32.totalorder %s38, 0
      %p510 = por %p508, %p509
      %s512 = sadd.s32 %s511, 1
      %p515 = scmp.eq.s32.totalorder %s32, 2
      %p516 = scmp.ne.s32.totalorder %s511, %s513
      %p517 = scmp.eq.s32.totalorder %s32, 0
      %p518 = por %p516, %p517
      %p519 = scmp.ne.s32.totalorder %s511, %s513
      %p520 = scmp.eq.s32.totalorder %s37, 2
      %p521 = por %p519, %p520
      %p522 = scmp.ne.s32.totalorder %s513, %s514
      %p523 = scmp.eq.s32.totalorder %s37, 0
      %p524 = por %p522, %p523
      %p525 = scmp.ne.s32.totalorder %s513, %s514
      %p526 = scmp.eq.s32.totalorder %s38, 2
      %p527 = por %p525, %p526
      %p529 = scmp.ne.s32.totalorder %s514, %s528
      %p530 = scmp.eq.s32.totalorder %s38, 0
      %p531 = por %p529, %p530
      %s533 = sadd.s32 %s532, 1
      %p536 = scmp.eq.s32.totalorder %s32, 2
      %p537 = scmp.ne.s32.totalorder %s532, %s534
      %p538 = scmp.eq.s32.totalorder %s32, 0
      %p539 = por %p537, %p538
      %p540 = scmp.ne.s32.totalorder %s532, %s534
      %p541 = scmp.eq.s32.totalorder %s37, 2
      %p542 = por %p540, %p541
      %p543 = scmp.ne.s32.totalorder %s534, %s535
      %p544 = scmp.eq.s32.totalorder %s37, 0
      %p545 = por %p543, %p544
      %p546 = scmp.ne.s32.totalorder %s534, %s535
      %p547 = scmp.eq.s32.totalorder %s38, 2
      %p548 = por %p546, %p547
      %p550 = scmp.ne.s32.totalorder %s535, %s549
      %p551 = scmp.eq.s32.totalorder %s38, 0
      %p552 = por %p550, %p551
      %p553 = scmp.le.s32.totalorder 1, %s32
      %p554 = scmp.lt.s32.totalorder %s32, 4
      %p555 = pnand %p553, %p554
      %p556 = pneg %p555
      // Predicated region
      $region9: #{lstmfrn_forward.1} parent=5 // pred_check
        _
      $region10: #{lstmfrn_forward.1} parent=5 // pred_check_branch
        %558 = sbr.rel (%p555) target = $region12
      $region11: #{lstmfrn_forward.1} parent=5 // pred_region
        %s559 = ssub.s32 %s32, 1
        // Predicated region
        $region13: #{lstmfrn_forward.1} parent=11 // pred_check
          %p560 = pneg %p53
        $region14: #{lstmfrn_forward.1} parent=11 // pred_check_branch
          %562 = sbr.rel (%p560) target = $region16
        $region15: #{lstmfrn_forward.1} parent=11 // pred_region
          _
        $region16: #{lstmfrn_forward.1} parent=11 // pred_fallthru
          _
        // Predicated region
        $region17: #{lstmfrn_forward.1} parent=11 // pred_check
          %p563 = pneg %p74
        $region18: #{lstmfrn_forward.1} parent=11 // pred_check_branch
          %565 = sbr.rel (%p563) target = $region20
        $region19: #{lstmfrn_forward.1} parent=11 // pred_region
          _
        $region20: #{lstmfrn_forward.1} parent=11 // pred_fallthru
          _
        // Predicated region
        $region21: #{lstmfrn_forward.1} parent=11 // pred_check
          %p566 = pneg %p95
        $region22: #{lstmfrn_forward.1} parent=11 // pred_check_branch
          %568 = sbr.rel (%p566) target = $region24
        $region23: #{lstmfrn_forward.1} parent=11 // pred_region
          _
        $region24: #{lstmfrn_forward.1} parent=11 // pred_fallthru
          _
        // Predicated region
        $region25: #{lstmfrn_forward.1} parent=11 // pred_check
          %p569 = pneg %p116
        $region26: #{lstmfrn_forward.1} parent=11 // pred_check_branch
          %571 = sbr.rel (%p569) target = $region28
        $region27: #{lstmfrn_forward.1} parent=11 // pred_region
          _
        $region28: #{lstmfrn_forward.1} parent=11 // pred_fallthru
          _
        // Predicated region
        $region29: #{lstmfrn_forward.1} parent=11 // pred_check
          %p572 = pneg %p137
        $region30: #{lstmfrn_forward.1} parent=11 // pred_check_branch
          %574 = sbr.rel (%p572) target = $region32
        $region31: #{lstmfrn_forward.1} parent=11 // pred_region
          _
        $region32: #{lstmfrn_forward.1} parent=11 // pred_fallthru
          _
        // Predicated region
        $region33: #{lstmfrn_forward.1} parent=11 // pred_check
          %p575 = pneg %p158
        $region34: #{lstmfrn_forward.1} parent=11 // pred_check_branch
          %577 = sbr.rel (%p575) target = $region36
        $region35: #{lstmfrn_forward.1} parent=11 // pred_region
          _
        $region36: #{lstmfrn_forward.1} parent=11 // pred_fallthru
          _
        // Predicated region
        $region37: #{lstmfrn_forward.1} parent=11 // pred_check
          %p578 = pneg %p179
        $region38: #{lstmfrn_forward.1} parent=11 // pred_check_branch
          %580 = sbr.rel (%p578) target = $region40
        $region39: #{lstmfrn_forward.1} parent=11 // pred_region
          %s582 = ssub.s32 6144, 6144
          %583 = vsyncadd [#allocation6], %s582
          %s584 = sshll.u32 [#allocation5], 4
          %s585 = int_to_ptr.vmem [resolvable:$true] %s584
          %590 = dma.hbm_to_vmem [thread:$0]  %s6, 6144, %s585, [#allocation6], 128, 128, 8
        $region40: #{lstmfrn_forward.1} parent=11 // pred_fallthru
          _
        // Predicated region
        $region41: #{lstmfrn_forward.1} parent=11 // pred_check
          %p591 = pneg %p200
        $region42: #{lstmfrn_forward.1} parent=11 // pred_check_branch
          %593 = sbr.rel (%p591) target = $region44
        $region43: #{lstmfrn_forward.1} parent=11 // pred_region
          %s595 = ssub.s32 6144, 6144
          %596 = vsyncadd [#allocation8], %s595
          %s597 = sshll.u32 [#allocation7], 4
          %s598 = int_to_ptr.vmem [resolvable:$true] %s597
          %603 = dma.hbm_to_vmem [thread:$0]  %s7, 6144, %s598, [#allocation8], 128, 128, 8
        $region44: #{lstmfrn_forward.1} parent=11 // pred_fallthru
          _
        // Predicated region
        $region45: #{lstmfrn_forward.1} parent=11 // pred_check
          %p604 = pneg %p221
        $region46: #{lstmfrn_forward.1} parent=11 // pred_check_branch
          %606 = sbr.rel (%p604) target = $region48
        $region47: #{lstmfrn_forward.1} parent=11 // pred_region
          _
        $region48: #{lstmfrn_forward.1} parent=11 // pred_fallthru
          _
        // Predicated region
        $region49: #{lstmfrn_forward.1} parent=11 // pred_check
          %p607 = pneg %p242
        $region50: #{lstmfrn_forward.1} parent=11 // pred_check_branch
          %609 = sbr.rel (%p607) target = $region52
        $region51: #{lstmfrn_forward.1} parent=11 // pred_region
          _
        $region52: #{lstmfrn_forward.1} parent=11 // pred_fallthru
          _
        // Predicated region
        $region53: #{lstmfrn_forward.1} parent=11 // pred_check
          %p610 = pneg %p263
        $region54: #{lstmfrn_forward.1} parent=11 // pred_check_branch
          %612 = sbr.rel (%p610) target = $region56
        $region55: #{lstmfrn_forward.1} parent=11 // pred_region
          _
        $region56: #{lstmfrn_forward.1} parent=11 // pred_fallthru
          _
        // Predicated region
        $region57: #{lstmfrn_forward.1} parent=11 // pred_check
          %p613 = pneg %p284
        $region58: #{lstmfrn_forward.1} parent=11 // pred_check_branch
          %615 = sbr.rel (%p613) target = $region60
        $region59: #{lstmfrn_forward.1} parent=11 // pred_region
          _
        $region60: #{lstmfrn_forward.1} parent=11 // pred_fallthru
          _
        // Predicated region
        $region61: #{lstmfrn_forward.1} parent=11 // pred_check
          %p616 = pneg %p461
        $region62: #{lstmfrn_forward.1} parent=11 // pred_check_branch
          %618 = sbr.rel (%p616) target = $region64
        $region63: #{lstmfrn_forward.1} parent=11 // pred_region
          _
        $region64: #{lstmfrn_forward.1} parent=11 // pred_fallthru
          _
        // Predicated region
        $region65: #{lstmfrn_forward.1} parent=11 // pred_check
          %p619 = pneg %p482
        $region66: #{lstmfrn_forward.1} parent=11 // pred_check_branch
          %621 = sbr.rel (%p619) target = $region68
        $region67: #{lstmfrn_forward.1} parent=11 // pred_region
          _
        $region68: #{lstmfrn_forward.1} parent=11 // pred_fallthru
          _
        // Predicated region
        $region69: #{lstmfrn_forward.1} parent=11 // pred_check
          %p622 = pneg %p503
        $region70: #{lstmfrn_forward.1} parent=11 // pred_check_branch
          %624 = sbr.rel (%p622) target = $region72
        $region71: #{lstmfrn_forward.1} parent=11 // pred_region
          _
        $region72: #{lstmfrn_forward.1} parent=11 // pred_fallthru
          _
        // Predicated region
        $region73: #{lstmfrn_forward.1} parent=11 // pred_check
          %p625 = pneg %p524
        $region74: #{lstmfrn_forward.1} parent=11 // pred_check_branch
          %627 = sbr.rel (%p625) target = $region76
        $region75: #{lstmfrn_forward.1} parent=11 // pred_region
          _
        $region76: #{lstmfrn_forward.1} parent=11 // pred_fallthru
          _
      $region12: #{lstmfrn_forward.1} parent=5 // pred_fallthru
        _
      %p628 = scmp.lt.s32.totalorder %s32, 3
      // Predicated region
      $region77: #{lstmfrn_forward.1} parent=5 // pred_check
        %p629 = pneg %p628
      $region78: #{lstmfrn_forward.1} parent=5 // pred_check_branch
        %631 = sbr.rel (%p629) target = $region80
      $region79: #{lstmfrn_forward.1} parent=5 // pred_region
        // Predicated region
        $region81: #{lstmfrn_forward.1} parent=79 // pred_check
          %p632 = pneg %p304
        $region82: #{lstmfrn_forward.1} parent=79 // pred_check_branch
          %634 = sbr.rel (%p632) target = $region84
        $region83: #{lstmfrn_forward.1} parent=79 // pred_region
          %s635 = sand.u32 %s32, 1
          %s636 = scalar_lea.sflag [#allocation6], %s635
          %s637 = sand.u32 %s294, 1
          %s638 = smul.addr %s637, 384
          %s639 = scalar_lea.vmem [#allocation9], %s638
          %s640 = smul.u32 2, %s32
          %s642 = ssub.s32 6144, 6144
          %643 = vsyncadd %s636, %s642
          %s644 = smul.addr %s640, 24
          %s645 = smul.addr %s644, 128
          %s646 = scalar_lea.hbm %s12, %s645
          %s647 = sshll.u32 %s639, 4
          %s648 = int_to_ptr.vmem [resolvable:$true] %s647
          %653 = dma.hbm_to_vmem [thread:$0]  %s646, 6144, %s648, %s636, 128, 128, 8
        $region84: #{lstmfrn_forward.1} parent=79 // pred_fallthru
          _
        // Predicated region
        $region85: #{lstmfrn_forward.1} parent=79 // pred_check
          %p654 = pneg %p330
        $region86: #{lstmfrn_forward.1} parent=79 // pred_check_branch
          %656 = sbr.rel (%p654) target = $region88
        $region87: #{lstmfrn_forward.1} parent=79 // pred_region
          %s657 = sand.u32 %s32, 1
          %s658 = scalar_lea.sflag [#allocation6], %s657
          %s659 = sand.u32 %s320, 1
          %s660 = smul.addr %s659, 384
          %s661 = scalar_lea.vmem [#allocation10], %s660
          %s662 = smul.u32 2, %s32
          %s664 = ssub.s32 6144, 6144
          %665 = vsyncadd %s658, %s664
          %s666 = smul.addr %s662, 24
          %s667 = smul.addr %s666, 128
          %s668 = scalar_lea.hbm %s13, %s667
          %s669 = sshll.u32 %s661, 4
          %s670 = int_to_ptr.vmem [resolvable:$true] %s669
          %675 = dma.hbm_to_vmem [thread:$0]  %s668, 6144, %s670, %s658, 128, 128, 8
        $region88: #{lstmfrn_forward.1} parent=79 // pred_fallthru
          _
        // Predicated region
        $region89: #{lstmfrn_forward.1} parent=79 // pred_check
          %p676 = pneg %p356
        $region90: #{lstmfrn_forward.1} parent=79 // pred_check_branch
          %678 = sbr.rel (%p676) target = $region92
        $region91: #{lstmfrn_forward.1} parent=79 // pred_region
          %s679 = smul.u32 2, %s32
          %p680 = scmp.lt.s32.totalorder %s679, 5
          %s681 = scalar_select %p680, %s679, 5
          %s682 = scalar_lea.vmem %s14, %s681
          %s683 = smul.u32 2, %s32
        $region92: #{lstmfrn_forward.1} parent=79 // pred_fallthru
          _
        // Predicated region
        $region93: #{lstmfrn_forward.1} parent=79 // pred_check
          %p684 = pneg %p382
        $region94: #{lstmfrn_forward.1} parent=79 // pred_check_branch
          %686 = sbr.rel (%p684) target = $region96
        $region95: #{lstmfrn_forward.1} parent=79 // pred_region
          %s687 = smul.u32 2, %s32
          %p688 = scmp.lt.s32.totalorder %s687, 5
          %s689 = scalar_select %p688, %s687, 5
          %s690 = scalar_lea.vmem %s15, %s689
          %s691 = smul.u32 2, %s32
        $region96: #{lstmfrn_forward.1} parent=79 // pred_fallthru
          _
        // Predicated region
        $region97: #{lstmfrn_forward.1} parent=79 // pred_check
          %p692 = pneg %p408
        $region98: #{lstmfrn_forward.1} parent=79 // pred_check_branch
          %694 = sbr.rel (%p692) target = $region100
        $region99: #{lstmfrn_forward.1} parent=79 // pred_region
          %s695 = smul.u32 2, %s32
          %p696 = scmp.lt.s32.totalorder %s695, 5
          %s697 = scalar_select %p696, %s695, 5
          %s698 = scalar_lea.vmem %s16, %s697
          %s699 = smul.u32 2, %s32
        $region100: #{lstmfrn_forward.1} parent=79 // pred_fallthru
          _
        // Predicated region
        $region101: #{lstmfrn_forward.1} parent=79 // pred_check
          %p700 = pneg %p434
        $region102: #{lstmfrn_forward.1} parent=79 // pred_check_branch
          %702 = sbr.rel (%p700) target = $region104
        $region103: #{lstmfrn_forward.1} parent=79 // pred_region
          %s703 = smul.u32 2, %s32
          %p704 = scmp.lt.s32.totalorder %s703, 5
          %s705 = scalar_select %p704, %s703, 5
          %s706 = scalar_lea.vmem %s17, %s705
          %s707 = smul.u32 2, %s32
        $region104: #{lstmfrn_forward.1} parent=79 // pred_fallthru
          _
      $region80: #{lstmfrn_forward.1} parent=5 // pred_fallthru
        _
      %p708 = scmp.le.s32.totalorder 1, %s32
      %p709 = scmp.lt.s32.totalorder %s32, 4
      %p710 = pnand %p708, %p709
      %p711 = pneg %p710
      // Predicated region
      $region105: #{lstmfrn_forward.1} parent=5 // pred_check
        _
      $region106: #{lstmfrn_forward.1} parent=5 // pred_check_branch
        %713 = sbr.rel (%p710) target = $region108
      $region107: #{lstmfrn_forward.1} parent=5 // pred_region
        %s714 = ssub.s32 %s32, 1
        // Predicated region
        $region109: #{lstmfrn_forward.1} parent=107 // pred_check
          %p715 = pneg %p179
        $region110: #{lstmfrn_forward.1} parent=107 // pred_check_branch
          %717 = sbr.rel (%p715) target = $region112
        $region111: #{lstmfrn_forward.1} parent=107 // pred_region
          %718 = dma.done [#allocation6], 6144
        $region112: #{lstmfrn_forward.1} parent=107 // pred_fallthru
          _
        // Predicated region
        $region113: #{lstmfrn_forward.1} parent=107 // pred_check
          %p719 = pneg %p200
        $region114: #{lstmfrn_forward.1} parent=107 // pred_check_branch
          %721 = sbr.rel (%p719) target = $region116
        $region115: #{lstmfrn_forward.1} parent=107 // pred_region
          %722 = dma.done [#allocation8], 6144
        $region116: #{lstmfrn_forward.1} parent=107 // pred_fallthru
          _
        %s723 = sand.u32 %s37, 1
        %s724 = scalar_lea.sflag [#allocation6], %s723
        %s725 = sand.u32 %s297, 1
        %s726 = smul.addr %s725, 384
        %s727 = scalar_lea.vmem [#allocation9], %s726
        // Predicated region
        $region117: #{lstmfrn_forward.1} parent=107 // pred_check
          %p728 = pneg %p310
        $region118: #{lstmfrn_forward.1} parent=107 // pred_check_branch
          %730 = sbr.rel (%p728) target = $region120
        $region119: #{lstmfrn_forward.1} parent=107 // pred_region
          %731 = dma.done %s724, 6144
        $region120: #{lstmfrn_forward.1} parent=107 // pred_fallthru
          _
        %s732 = sand.u32 %s37, 1
        %s733 = scalar_lea.sflag [#allocation6], %s732
        %s734 = sand.u32 %s323, 1
        %s735 = smul.addr %s734, 384
        %s736 = scalar_lea.vmem [#allocation10], %s735
        // Predicated region
        $region121: #{lstmfrn_forward.1} parent=107 // pred_check
          %p737 = pneg %p336
        $region122: #{lstmfrn_forward.1} parent=107 // pred_check_branch
          %739 = sbr.rel (%p737) target = $region124
        $region123: #{lstmfrn_forward.1} parent=107 // pred_region
          %740 = dma.done %s733, 6144
        $region124: #{lstmfrn_forward.1} parent=107 // pred_fallthru
          _
        %p741 = pneg %p53
        %p742 = pneg %p50
        %p743 = pneg %p74
        %p744 = pneg %p71
        %p745 = pneg %p95
        %p746 = pneg %p92
        %p747 = pneg %p116
        %p748 = pneg %p113
        %p749 = pneg %p137
        %p750 = pneg %p134
        %p751 = pneg %p158
        %p752 = pneg %p155
        %p753 = pneg %p179
        %p754 = pneg %p176
        %p755 = pneg %p200
        %p756 = pneg %p197
        %p757 = pneg %p221
        %p758 = pneg %p218
        %p759 = pneg %p242
        %p760 = pneg %p239
        %p761 = pneg %p263
        %p762 = pneg %p260
        %p763 = pneg %p284
        %p764 = pneg %p281
        %s765 = sand.u32 %s37, 1
        %s766 = scalar_lea.sflag [#allocation6], %s765
        %s767 = sand.u32 %s297, 1
        %s768 = smul.addr %s767, 384
        %s769 = scalar_lea.vmem [#allocation9], %s768
        %p770 = pneg %p310
        %p771 = pneg %p307
        %s772 = sand.u32 %s37, 1
        %s773 = scalar_lea.sflag [#allocation6], %s772
        %s774 = sand.u32 %s323, 1
        %s775 = smul.addr %s774, 384
        %s776 = scalar_lea.vmem [#allocation10], %s775
        %p777 = pneg %p336
        %p778 = pneg %p333
        %s779 = smul.u32 2, %s37
        %p780 = scmp.lt.s32.totalorder %s779, 5
        %s781 = scalar_select %p780, %s779, 5
        %s782 = scalar_lea.vmem %s14, %s781
        %p783 = pneg %p362
        %p784 = pneg %p359
        %s785 = smul.u32 2, %s37
        %p786 = scmp.lt.s32.totalorder %s785, 5
        %s787 = scalar_select %p786, %s785, 5
        %s788 = scalar_lea.vmem %s15, %s787
        %p789 = pneg %p388
        %p790 = pneg %p385
        %s791 = smul.u32 2, %s37
        %p792 = scmp.lt.s32.totalorder %s791, 5
        %s793 = scalar_select %p792, %s791, 5
        %s794 = scalar_lea.vmem %s16, %s793
        %p795 = pneg %p414
        %p796 = pneg %p411
        %s797 = smul.u32 2, %s37
        %p798 = scmp.lt.s32.totalorder %s797, 5
        %s799 = scalar_select %p798, %s797, 5
        %s800 = scalar_lea.vmem %s17, %s799
        %p801 = pneg %p440
        %p802 = pneg %p437
        %p803 = pneg %p461
        %p804 = pneg %p458
        %p805 = pneg %p482
        %p806 = pneg %p479
        %p807 = pneg %p503
        %p808 = pneg %p500
        %p809 = pneg %p524
        %p810 = pneg %p521
        %p811 = pneg %p545
        %p812 = pneg %p542
        %s813 = smul.u32 2, %s37
        %s814 = smul.u32 2, %s37
        %s815 = smul.u32 2, %s37
        %p816 = scmp.lt.s32.totalorder %s815, 5
        %s817 = scalar_select %p816, %s815, 5
        %s818 = scalar_lea.vmem %s14, %s817
        %s819 = smul.u32 2, %s37
        %s820 = smul.u32 2, %s37
        %p821 = scmp.lt.s32.totalorder %s820, 5
        %s822 = scalar_select %p821, %s820, 5
        %s823 = scalar_lea.vmem %s15, %s822
        %s824 = smul.u32 2, %s37
        %s825 = smul.u32 2, %s37
        %p826 = scmp.lt.s32.totalorder %s825, 5
        %s827 = scalar_select %p826, %s825, 5
        %s828 = scalar_lea.vmem %s16, %s827
        %s829 = smul.u32 2, %s37
        %s830 = smul.u32 2, %s37
        %p831 = scmp.lt.s32.totalorder %s830, 5
        %s832 = scalar_select %p831, %s830, 5
        %s833 = scalar_lea.vmem %s17, %s832
        %s834 = smul.u32 2, %s37
        %p835 = scmp.eq.s32.totalorder %s37, 0
        // Predicated region
        $region125: #{lstmfrn_forward.1} parent=107 // pred_check
          %p836 = pneg %p835
        $region126: #{lstmfrn_forward.1} parent=107 // pred_check_branch
          %838 = sbr.rel (%p836) target = $region128
        $region127: #{lstmfrn_forward.1} parent=107 // pred_region
          %v839 = vld [vmem:[%s0] sm:$0x3]
          %v840 = vld [vmem:[%s2] sm:$0xff]
          %v841 = vld [vmem:[%s2 + $0x8] sm:$0xff]
          %v842 = vld [vmem:[%s2 + $0x10] sm:$0xff]
          %v843 = vld [vmem:[%s2 + $0x18] sm:$0xff]
          %v844 = vld [vmem:[%s3] sm:$0x3]
          %v846 = vlaneseq
          %v847 = vshrl.u32 %v846, 7
          %v848 = vsub.s32 0, %v847
          %v849 = vrot.slane %v844, %v848
          %v850 = vlaneseq
          %v851 = vshrl.u32 %v850, 7
          %v852 = vsub.s32 1, %v851
          %v853 = vrot.slane %v844, %v852
          %vm856 = vcmask 130048
          %v858 = vsel %vm856, %v839, 0
          %860 = vmatprep.subr.mxu0 %v841
          %861 = vmatpush1.msra.mxu0 %v840
          %862 = vmatprep.subr.mxu0 %v843
          %863 = vmatpush1.msra.mxu0 %v842
          %864 = vmatprep.subr.mxu0 0.0
          %865 = vmatpush1.msra.mxu0 0.0
          %866 = vmatprep.subr.mxu0 0.0
          %867 = vmatpush1.msra.mxu0 0.0
          %868 = vmatprep.subr.mxu0 0.0
          %869 = vmatpush1.msra.mxu0 0.0
          %870 = vmatprep.subr.mxu0 0.0
          %871 = vmatpush1.msra.mxu0 0.0
          %872 = vmatprep.subr.mxu0 0.0
          %873 = vmatpush1.msra.mxu0 0.0
          %874 = vmatprep.subr.mxu0 0.0
          %875 = vmatpush1.msra.mxu0 0.0
          %876 = vmatprep.subr.mxu0 0.0
          %877 = vmatpush1.msra.mxu0 0.0
          %878 = vmatprep.subr.mxu0 0.0
          %879 = vmatpush1.msra.mxu0 0.0
          %880 = vmatprep.subr.mxu0 0.0
          %881 = vmatpush1.msra.mxu0 0.0
          %882 = vmatprep.subr.mxu0 0.0
          %883 = vmatpush1.msra.mxu0 0.0
          %884 = vmatprep.subr.mxu0 0.0
          %885 = vmatpush1.msra.mxu0 0.0
          %886 = vmatprep.subr.mxu0 0.0
          %887 = vmatpush1.msra.mxu0 0.0
          %888 = vmatprep.subr.mxu0 0.0
          %889 = vmatpush1.msra.mxu0 0.0
          %890 = vmatprep.subr.mxu0 0.0
          %891 = vmatpush1.msra.mxu0 0.0
          %892 = vmatprep.subr.mxu0 0.0
          %893 = vmatpush1.msra.mxu0 0.0
          %894 = vmatprep.subr.mxu0 0.0
          %895 = vmatpush1.msra.mxu0 0.0
          %896 = vmatprep.subr.mxu0 0.0
          %897 = vmatpush1.msra.mxu0 0.0
          %898 = vmatprep.subr.mxu0 0.0
          %899 = vmatpush1.msra.mxu0 0.0
          %900 = vmatprep.subr.mxu0 0.0
          %901 = vmatpush1.msra.mxu0 0.0
          %902 = vmatprep.subr.mxu0 0.0
          %903 = vmatpush1.msra.mxu0 0.0
          %904 = vmatprep.subr.mxu0 0.0
          %905 = vmatpush1.msra.mxu0 0.0
          %906 = vmatprep.subr.mxu0 0.0
          %907 = vmatpush1.msra.mxu0 0.0
          %908 = vmatprep.subr.mxu0 0.0
          %909 = vmatpush1.msra.mxu0 0.0
          %910 = vmatprep.subr.mxu0 0.0
          %911 = vmatpush1.msra.mxu0 0.0
          %912 = vmatprep.subr.mxu0 0.0
          %913 = vmatpush1.msra.mxu0 0.0
          %914 = vmatprep.subr.mxu0 0.0
          %915 = vmatpush1.msra.mxu0 0.0
          %916 = vmatprep.subr.mxu0 0.0
          %917 = vmatpush1.msra.mxu0 0.0
          %918 = vmatprep.subr.mxu0 0.0
          %919 = vmatpush1.msra.mxu0 0.0
          %920 = vmatprep.subr.mxu0 0.0
          %921 = vmatpush1.msra.mxu0 0.0
          %922 = vmatprep.subr.mxu0 0.0
          %923 = vmatpush1.msra.mxu0 0.0
          %924 = vmatprep.mubr.f32.mxu0 0.0
          %925 = vmatmul.mubr.f32.gmra.mrb[0].mxu0 %v858
          %v926 = vpop.f32.mrb[0].mxu0
          %v927 = vadd.f32 %v849, %v926
          %v928 = vpop.f32.mrb[0].mxu0
          %v929 = vadd.f32 %v853, %v928
          %930 = vdwg.mxu0
          %v931 = vxor.u32 %v927, 2147483648
          %v932 = vmul.f32 %v931, 1.442695
          %v933 = vpow.pop %v932
          %v934 = vadd.f32 %v933, 1.0
          %v935 = vrcp.pop %v934
          %v936 = vmul.f32 1.0, %v935
          %v937 = vtanh.pop %v927
          %v938 = vxor.u32 %v929, 2147483648
          %v939 = vmul.f32 %v938, 1.442695
          %v940 = vpow.pop %v939
          %v941 = vadd.f32 %v940, 1.0
          %v942 = vrcp.pop %v941
          %v943 = vmul.f32 1.0, %v942
          %945 = vrot.lane.b32.xlu0 %v937, 64
          %v946 = vpop.permute.xlu0 %945
          %v948 = vmul.f32 %v936, %v946
          %v949 = vtanh.pop %v948
          %v950 = vmul.f32 %v943, %v949
          %vm951 = vcmask 517120
          %952 = vst.msk [vmem:[#allocation3] sm:$0x3] %vm951, %v950
          %v953 = vld [vmem:[%s1] sm:$0xff]
          %v954 = vld [vmem:[%s1 + $0x8] sm:$0xff]
          %v955 = vld [vmem:[%s1 + $0x10] sm:$0xff]
          %v956 = vld [vmem:[%s1 + $0x18] sm:$0xff]
          %v957 = vld [vmem:[%s5] sm:$0x1]
          %v958 = vld [vmem:[%s4] sm:$0x1]
          %960 = vset.pattern.permute.xlu0 0
          %961 = vperm.xlu0 %960, %v953
          %v962 = vpop.permute.xlu0 %961
          %965 = vset.pattern.permute.xlu0 0
          %966 = vperm.xlu0 %965, %v954
          %v967 = vpop.permute.xlu0 %966
          %970 = vset.pattern.permute.xlu0 0
          %971 = vperm.xlu0 %970, %v955
          %v972 = vpop.permute.xlu0 %971
          %975 = vset.pattern.permute.xlu0 0
          %976 = vperm.xlu0 %975, %v956
          %v977 = vpop.permute.xlu0 %976
          %v980 = vlaneseq
          %v981 = vshrl.u32 %v980, 7
          %v982 = vsub.s32 0, %v981
          %v983 = vrot.slane %v958, %v982
          %v985 = vmul.f32 %v962, %v983
          %v986 = vmul.f32 %v967, %v983
          %v987 = vmul.f32 %v972, %v983
          %v988 = vmul.f32 %v977, %v983
          %v990 = vlaneseq
          %v991 = vshrl.u32 %v990, 7
          %v992 = vsub.s32 0, %v991
          %v993 = vrot.slane %v957, %v992
          %v995 = vadd.f32 %v993, %v985
          %v996 = vadd.f32 %v993, %v986
          %v997 = vadd.f32 %v993, %v987
          %v998 = vadd.f32 %v993, %v988
          %s999 = scalar_lea.vmem %s4, 1
          %v1000 = vld [vmem:[%s999] sm:$0x1]
          %v1002 = vlaneseq
          %v1003 = vshrl.u32 %v1002, 7
          %v1004 = vsub.s32 0, %v1003
          %v1005 = vrot.slane %v1000, %v1004
          %v1007 = vmul.f32 %v962, %v1005
          %v1008 = vmul.f32 %v967, %v1005
          %v1009 = vmul.f32 %v972, %v1005
          %v1010 = vmul.f32 %v977, %v1005
          %vm1015 = vcmask 1046528
          %v1016 = vrot.slane %v1007, 1
          %v1017 = vrot.slane %v1008, 1
          %v1018 = vsel %vm1015, %v1016, %v1017
          %v1019 = vrot.slane %v1009, 1
          %v1020 = vrot.slane %v1010, 1
          %v1021 = vsel %vm1015, %v1019, %v1020
          %v1026 = vadd.f32 %v995, %v1018
          %v1027 = vadd.f32 %v996, %v1017
          %v1028 = vadd.f32 %v997, %v1021
          %v1029 = vadd.f32 %v998, %v1020
          %s1030 = scalar_lea.vmem %s4, 2
          %v1031 = vld [vmem:[%s1030] sm:$0x1]
          %v1033 = vlaneseq
          %v1034 = vshrl.u32 %v1033, 7
          %v1035 = vsub.s32 0, %v1034
          %v1036 = vrot.slane %v1031, %v1035
          %v1038 = vmul.f32 %v962, %v1036
          %v1039 = vmul.f32 %v967, %v1036
          %v1040 = vmul.f32 %v972, %v1036
          %v1041 = vmul.f32 %v977, %v1036
          %vm1046 = vcmask 1045504
          %v1047 = vrot.slane %v1038, 2
          %v1048 = vrot.slane %v1039, 2
          %v1049 = vsel %vm1046, %v1047, %v1048
          %v1050 = vrot.slane %v1040, 2
          %v1051 = vrot.slane %v1041, 2
          %v1052 = vsel %vm1046, %v1050, %v1051
          %v1057 = vadd.f32 %v1026, %v1049
          %v1058 = vadd.f32 %v1027, %v1048
          %v1059 = vadd.f32 %v1028, %v1052
          %v1060 = vadd.f32 %v1029, %v1051
          %v1061 = vld [vmem:[%s8] sm:$0x1]
          %v1062 = vld [vmem:[%s9] sm:$0x1]
          %vm1063 = vcmask 523264
          %v1064 = vsel %vm1063, %v1057, 0.0
          %vm1065 = vcmask 521216
          %v1066 = vsel %vm1065, %v1058, 0.0
          %v1067 = vadd.f32 %v1064, %v1066
          %v1068 = vrot.slane %v1067, 4
          %v1069 = vadd.f32 %v1067, %v1068
          %v1070 = vrot.slane %v1069, 2
          %v1071 = vadd.f32 %v1069, %v1070
          %v1072 = vrot.slane %v1071, 1
          %v1073 = vadd.f32 %v1071, %v1072
          %v1074 = vsel %vm1063, %v1059, 0.0
          %v1075 = vsel %vm1065, %v1060, 0.0
          %v1076 = vadd.f32 %v1074, %v1075
          %v1077 = vrot.slane %v1076, 4
          %v1078 = vadd.f32 %v1076, %v1077
          %v1079 = vrot.slane %v1078, 2
          %v1080 = vadd.f32 %v1078, %v1079
          %v1081 = vrot.slane %v1080, 1
          %v1082 = vadd.f32 %v1080, %v1081
          %v1083 = vmul.f32 %v1057, %v1057
          %v1084 = vmul.f32 %v1058, %v1058
          %v1085 = vmul.f32 %v1059, %v1059
          %v1086 = vmul.f32 %v1060, %v1060
          %v1087 = vsel %vm1063, %v1083, 0.0
          %v1088 = vsel %vm1065, %v1084, 0.0
          %v1089 = vadd.f32 %v1087, %v1088
          %v1090 = vrot.slane %v1089, 4
          %v1091 = vadd.f32 %v1089, %v1090
          %v1092 = vrot.slane %v1091, 2
          %v1093 = vadd.f32 %v1091, %v1092
          %v1094 = vrot.slane %v1093, 1
          %v1095 = vadd.f32 %v1093, %v1094
          %v1096 = vsel %vm1063, %v1085, 0.0
          %v1097 = vsel %vm1065, %v1086, 0.0
          %v1098 = vadd.f32 %v1096, %v1097
          %v1099 = vrot.slane %v1098, 4
          %v1100 = vadd.f32 %v1098, %v1099
          %v1101 = vrot.slane %v1100, 2
          %v1102 = vadd.f32 %v1100, %v1101
          %v1103 = vrot.slane %v1102, 1
          %v1104 = vadd.f32 %v1102, %v1103
          %vm1107 = vcmask 1041409
          %v1108 = vsel %vm1107, %v1082, %v1073
          %vm1112 = vcmask 1043459
          %v1113 = vsel %vm1112, %v1104, %v1095
          %vm1115 = vcmask 1041408
          %v1116 = vsel %vm1115, %v1108, %v1113
          %1118 = vrot.lane.b32.xlu0 %v1116, 127
          %v1119 = vpop.permute.xlu0 %1118
          %1121 = vrot.lane.b32.xlu0 %v1116, 63
          %v1122 = vpop.permute.xlu0 %1121
          %vm1124 = vcmask 515072
          %v1125 = vsel %vm1124, %v1119, %v1122
          %1126 = vrot.lane.b32.xlu0 %v1116, 65
          %v1127 = vpop.permute.xlu0 %1126
          %1129 = vrot.lane.b32.xlu0 %v1116, 1
          %v1130 = vpop.permute.xlu0 %1129
          %vm1132 = vcmask 7168
          %v1133 = vsel %vm1132, %v1127, %v1130
          %v1134 = vlaneseq
          %v1135 = vand.u32 %v1134, 127
          %vm1136 = vcmp.lt.s32.totalorder %v1135, 0
          %v1137 = vsub.s32 0, %v1135
          %v1138 = vsel %vm1136, %v1137, %v1135
          %v1139 = vshrl.u32 %v1138, 1
          %v1140 = vand.u32 %v1138, 1
          %v1141 = vsub.s32 0, %v1140
          %v1142 = vsel %vm1136, %v1141, %v1140
          %vm1143 = vcmp.ne.s32.totalorder %v1142, 0
          %vm1144 = vcmp.lt.s32.totalorder %v1142, 0
          %vm1145 = vmand %vm1144, %vm1143
          %v1146 = vadd.s32 %v1142, 2
          %v1147 = vsel %vm1145, %v1146, %v1142
          %vm1148 = vcmp.eq.s32.totalorder %v1147, 0
          %v1149 = vadd.f32 %v1116, %v1125
          %v1150 = vadd.f32 %v1116, %v1133
          %v1151 = vsel %vm1148, %v1149, %v1150
          %v1152 = vrcp.pop 28.0
          %v1153 = vmul.f32 %v1151, %v1152
          %v1154 = vmul.f32 %v1153, %v1153
          %v1156 = vrot.slane %v1154, 6
          %v1158 = vsub.f32 %v1153, %v1156
          %v1159 = vmax.f32 %v1158, 0.0
          %v1160 = vadd.f32 %v1159, 1e-05
          %v1161 = vrsqrt.pop %v1160
          %v1163 = vlaneseq
          %v1164 = vshrl.u32 %v1163, 7
          %v1165 = vsub.s32 0, %v1164
          %v1166 = vrot.slane %v1061, %v1165
          %v1168 = vmul.f32 %v1166, %v1161
          %v1170 = vrot.slane %v1168, 2
          %v1172 = vmul.f32 %v1153, %v1170
          %v1174 = vlaneseq
          %v1175 = vshrl.u32 %v1174, 7
          %v1176 = vsub.s32 0, %v1175
          %v1177 = vrot.slane %v1062, %v1176
          %v1179 = vsub.f32 %v1177, %v1172
          %v1181 = vunpack.c.l.s4 1966171168
          %v1182 = vunpack.c.0.s8 %v1181
          %v1183 = vlaneseq
          %v1184 = vshrl.u32 %v1183, 7
          %v1185 = vsub.s32 %v1182, %v1184
          %v1186 = vrot.slane %v1168, %v1185
          %v1187 = vcombine.high %v1186, %v1186
          %v1189 = vunpack.c.l.s4 1966171168
          %v1190 = vunpack.c.0.s8 %v1189
          %v1191 = vlaneseq
          %v1192 = vshrl.u32 %v1191, 7
          %v1193 = vsub.s32 %v1190, %v1192
          %v1194 = vrot.slane %v1186, %v1193
          %v1196 = vunpack.c.l.s4 1966171168
          %v1197 = vunpack.c.0.s8 %v1196
          %v1198 = vlaneseq
          %v1199 = vshrl.u32 %v1198, 7
          %v1200 = vsub.s32 %v1197, %v1199
          %v1201 = vrot.slane %v1187, %v1200
          %v1202 = vcombine.high %v1194, %v1194
          %v1203 = vcombine.high %v1201, %v1201
          %v1204 = vlaneseq
          %v1205 = vshrl.u32 %v1204, 7
          %v1206 = vsub.s32 0, %v1205
          %v1207 = vrot.slane %v1202, %v1206
          %v1208 = vlaneseq
          %v1209 = vshrl.u32 %v1208, 7
          %v1210 = vsub.s32 0, %v1209
          %v1211 = vrot.slane %v1203, %v1210
          %v1214 = vmul.f32 %v1057, %v1207
          %v1215 = vmul.f32 %v1058, %v1207
          %v1216 = vmul.f32 %v1059, %v1211
          %v1217 = vmul.f32 %v1060, %v1211
          %v1220 = vunpack.c.l.s4 1966171168
          %v1221 = vunpack.c.0.s8 %v1220
          %v1222 = vlaneseq
          %v1223 = vshrl.u32 %v1222, 7
          %v1224 = vsub.s32 %v1221, %v1223
          %v1225 = vrot.slane %v1179, %v1224
          %v1226 = vcombine.high %v1225, %v1225
          %v1228 = vunpack.c.l.s4 1966171168
          %v1229 = vunpack.c.0.s8 %v1228
          %v1230 = vlaneseq
          %v1231 = vshrl.u32 %v1230, 7
          %v1232 = vsub.s32 %v1229, %v1231
          %v1233 = vrot.slane %v1225, %v1232
          %v1235 = vunpack.c.l.s4 1966171168
          %v1236 = vunpack.c.0.s8 %v1235
          %v1237 = vlaneseq
          %v1238 = vshrl.u32 %v1237, 7
          %v1239 = vsub.s32 %v1236, %v1238
          %v1240 = vrot.slane %v1226, %v1239
          %v1241 = vlaneseq
          %v1242 = vshrl.u32 %v1241, 7
          %v1243 = vsub.s32 0, %v1242
          %v1244 = vrot.slane %v1233, %v1243
          %v1245 = vlaneseq
          %v1246 = vshrl.u32 %v1245, 7
          %v1247 = vsub.s32 0, %v1246
          %v1248 = vrot.slane %v1240, %v1247
          %v1251 = vadd.f32 %v1214, %v1244
          %v1252 = vadd.f32 %v1215, %v1244
          %v1253 = vadd.f32 %v1216, %v1248
          %v1254 = vadd.f32 %v1217, %v1248
          %v1255 = vmax.f32 %v1251, 0.0
          %v1256 = vmax.f32 %v1252, 0.0
          %v1257 = vmax.f32 %v1253, 0.0
          %v1258 = vmax.f32 %v1254, 0.0
          %v1259 = vld [vmem:[#allocation5] sm:$0xff]
          %v1260 = vld [vmem:[#allocation5 + $0x8] sm:$0xff]
          %v1261 = vld [vmem:[#allocation5 + $0x10] sm:$0xff]
          %v1262 = vld [vmem:[#allocation5 + $0x18] sm:$0xff]
          %v1263 = vld [vmem:[#allocation5 + $0x20] sm:$0xff]
          %v1264 = vld [vmem:[#allocation5 + $0x28] sm:$0xff]
          %v1265 = vld [vmem:[#allocation5 + $0x30] sm:$0xff]
          %v1266 = vld [vmem:[#allocation5 + $0x38] sm:$0xff]
          %v1267 = vld [vmem:[#allocation5 + $0x40] sm:$0xff]
          %v1268 = vld [vmem:[#allocation5 + $0x48] sm:$0xff]
          %v1269 = vld [vmem:[#allocation5 + $0x50] sm:$0xff]
          %v1270 = vld [vmem:[#allocation5 + $0x58] sm:$0xff]
          %v1271 = vld [vmem:[#allocation5 + $0x60] sm:$0xff]
          %v1272 = vld [vmem:[#allocation5 + $0x68] sm:$0xff]
          %v1273 = vld [vmem:[#allocation5 + $0x70] sm:$0xff]
          %v1274 = vld [vmem:[#allocation5 + $0x78] sm:$0xff]
          %v1275 = vld [vmem:[#allocation5 + $0x80] sm:$0xff]
          %v1276 = vld [vmem:[#allocation5 + $0x88] sm:$0xff]
          %v1277 = vld [vmem:[#allocation5 + $0x90] sm:$0xff]
          %v1278 = vld [vmem:[#allocation5 + $0x98] sm:$0xff]
          %v1279 = vld [vmem:[#allocation5 + $0xa0] sm:$0xff]
          %v1280 = vld [vmem:[#allocation5 + $0xa8] sm:$0xff]
          %v1281 = vld [vmem:[#allocation5 + $0xb0] sm:$0xff]
          %v1282 = vld [vmem:[#allocation5 + $0xb8] sm:$0xff]
          %vm1287 = vcmask 1040384
          %v1288 = vrot.slane %v1255, 7
          %v1289 = vrot.slane %v1256, 7
          %v1290 = vsel %vm1287, %v1288, %v1289
          %v1291 = vrot.slane %v1257, 7
          %v1292 = vrot.slane %v1258, 7
          %v1293 = vsel %vm1287, %v1291, %v1292
          %v1298 = vsel %vm1287, 0.0, %v1288
          %v1299 = vsel %vm1287, 0.0, %v1291
          %v1300 = vsel %vm1015, %v1290, 0.0
          %v1301 = vsel %vm1015, %v1293, 0.0
          %v1306 = vcombine.high %v1298, %v1298
          %v1308 = vunpack.c.l.s4 1983009808
          %v1309 = vunpack.c.0.s8 %v1308
          %v1310 = vlaneseq
          %v1311 = vshrl.u32 %v1310, 7
          %v1312 = vsub.s32 %v1309, %v1311
          %v1313 = vrot.slane %v1298, %v1312
          %v1315 = vunpack.c.l.s4 1983009808
          %v1316 = vunpack.c.0.s8 %v1315
          %v1317 = vlaneseq
          %v1318 = vshrl.u32 %v1317, 7
          %v1319 = vsub.s32 %v1316, %v1318
          %v1320 = vrot.slane %v1306, %v1319
          %v1321 = vcombine.high %v1313, %v1313
          %v1322 = vcombine.high %v1320, %v1320
          %v1323 = vcombine.high %v1300, %v1300
          %v1325 = vunpack.c.l.s4 1983009808
          %v1326 = vunpack.c.0.s8 %v1325
          %v1327 = vlaneseq
          %v1328 = vshrl.u32 %v1327, 7
          %v1329 = vsub.s32 %v1326, %v1328
          %v1330 = vrot.slane %v1300, %v1329
          %v1332 = vunpack.c.l.s4 1983009808
          %v1333 = vunpack.c.0.s8 %v1332
          %v1334 = vlaneseq
          %v1335 = vshrl.u32 %v1334, 7
          %v1336 = vsub.s32 %v1333, %v1335
          %v1337 = vrot.slane %v1323, %v1336
          %v1338 = vcombine.high %v1330, %v1330
          %v1339 = vcombine.high %v1299, %v1299
          %v1341 = vunpack.c.l.s4 1983009808
          %v1342 = vunpack.c.0.s8 %v1341
          %v1343 = vlaneseq
          %v1344 = vshrl.u32 %v1343, 7
          %v1345 = vsub.s32 %v1342, %v1344
          %v1346 = vrot.slane %v1299, %v1345
          %v1348 = vunpack.c.l.s4 1983009808
          %v1349 = vunpack.c.0.s8 %v1348
          %v1350 = vlaneseq
          %v1351 = vshrl.u32 %v1350, 7
          %v1352 = vsub.s32 %v1349, %v1351
          %v1353 = vrot.slane %v1339, %v1352
          %v1354 = vcombine.high %v1346, %v1346
          %v1355 = vcombine.high %v1353, %v1353
          %v1356 = vcombine.high %v1301, %v1301
          %v1358 = vunpack.c.l.s4 1983009808
          %v1359 = vunpack.c.0.s8 %v1358
          %v1360 = vlaneseq
          %v1361 = vshrl.u32 %v1360, 7
          %v1362 = vsub.s32 %v1359, %v1361
          %v1363 = vrot.slane %v1301, %v1362
          %v1365 = vunpack.c.l.s4 1983009808
          %v1366 = vunpack.c.0.s8 %v1365
          %v1367 = vlaneseq
          %v1368 = vshrl.u32 %v1367, 7
          %v1369 = vsub.s32 %v1366, %v1368
          %v1370 = vrot.slane %v1356, %v1369
          %v1371 = vcombine.high %v1363, %v1363
          %v1372 = vcombine.high %v1337, %v1337
          %v1373 = vcombine.high %v1370, %v1370
          %vm1374 = vcmask 1042434
          %vm1375 = vmor %vm1287, %vm1374
          %vm1376 = vcmask 1044484
          %vm1377 = vmor %vm1375, %vm1376
          %vm1378 = vcmask 1046534
          %vm1379 = vmor %vm1377, %vm1378
          %v1380 = vrot.slane %v1313, 7
          %v1381 = vrot.slane %v1380, 2
          %v1382 = vrot.slane %v1321, 7
          %v1383 = vsel %vm1379, %v1381, %v1382
          %v1384 = vrot.slane %v1382, 2
          %v1385 = vrot.slane %v1320, 7
          %v1386 = vsel %vm1379, %v1384, %v1385
          %v1387 = vrot.slane %v1385, 2
          %v1388 = vrot.slane %v1322, 7
          %v1389 = vsel %vm1379, %v1387, %v1388
          %v1390 = vrot.slane %v1388, 2
          %v1391 = vrot.slane %v1330, 7
          %v1392 = vsel %vm1379, %v1390, %v1391
          %v1393 = vrot.slane %v1391, 2
          %v1394 = vrot.slane %v1338, 7
          %v1395 = vsel %vm1379, %v1393, %v1394
          %v1396 = vrot.slane %v1394, 2
          %v1397 = vrot.slane %v1337, 7
          %v1398 = vsel %vm1379, %v1396, %v1397
          %v1399 = vrot.slane %v1397, 2
          %v1400 = vrot.slane %v1372, 7
          %v1401 = vsel %vm1379, %v1399, %v1400
          %v1402 = vrot.slane %v1346, 7
          %v1403 = vrot.slane %v1402, 2
          %v1404 = vrot.slane %v1354, 7
          %v1405 = vsel %vm1379, %v1403, %v1404
          %v1406 = vrot.slane %v1404, 2
          %v1407 = vrot.slane %v1353, 7
          %v1408 = vsel %vm1379, %v1406, %v1407
          %v1409 = vrot.slane %v1407, 2
          %v1410 = vrot.slane %v1355, 7
          %v1411 = vsel %vm1379, %v1409, %v1410
          %v1412 = vrot.slane %v1410, 2
          %v1413 = vrot.slane %v1363, 7
          %v1414 = vsel %vm1379, %v1412, %v1413
          %v1415 = vrot.slane %v1413, 2
          %v1416 = vrot.slane %v1371, 7
          %v1417 = vsel %vm1379, %v1415, %v1416
          %v1418 = vrot.slane %v1416, 2
          %v1419 = vrot.slane %v1370, 7
          %v1420 = vsel %vm1379, %v1418, %v1419
          %v1421 = vrot.slane %v1419, 2
          %v1422 = vrot.slane %v1373, 7
          %v1423 = vsel %vm1379, %v1421, %v1422
          %v1424 = vcombine.low %v1383, %v1386
          %v1425 = vcombine.low %v1389, %v1392
          %v1427 = vunpack.c.l.s4 1983009808
          %v1428 = vunpack.c.0.s8 %v1427
          %v1429 = vlaneseq
          %v1430 = vshrl.u32 %v1429, 7
          %v1431 = vsub.s32 %v1428, %v1430
          %v1432 = vrot.slane %v1424, %v1431
          %v1434 = vunpack.c.l.s4 1983009808
          %v1435 = vunpack.c.0.s8 %v1434
          %v1436 = vlaneseq
          %v1437 = vshrl.u32 %v1436, 7
          %v1438 = vsub.s32 %v1435, %v1437
          %v1439 = vrot.slane %v1425, %v1438
          %v1440 = vcombine.low %v1432, %v1439
          %v1441 = vcombine.low %v1395, %v1398
          %v1442 = vcombine.low %v1401, %v1405
          %v1444 = vunpack.c.l.s4 1983009808
          %v1445 = vunpack.c.0.s8 %v1444
          %v1446 = vlaneseq
          %v1447 = vshrl.u32 %v1446, 7
          %v1448 = vsub.s32 %v1445, %v1447
          %v1449 = vrot.slane %v1441, %v1448
          %v1451 = vunpack.c.l.s4 1983009808
          %v1452 = vunpack.c.0.s8 %v1451
          %v1453 = vlaneseq
          %v1454 = vshrl.u32 %v1453, 7
          %v1455 = vsub.s32 %v1452, %v1454
          %v1456 = vrot.slane %v1442, %v1455
          %v1457 = vcombine.low %v1449, %v1456
          %v1458 = vcombine.low %v1408, %v1411
          %v1459 = vcombine.low %v1414, %v1417
          %v1461 = vunpack.c.l.s4 1983009808
          %v1462 = vunpack.c.0.s8 %v1461
          %v1463 = vlaneseq
          %v1464 = vshrl.u32 %v1463, 7
          %v1465 = vsub.s32 %v1462, %v1464
          %v1466 = vrot.slane %v1458, %v1465
          %v1468 = vunpack.c.l.s4 1983009808
          %v1469 = vunpack.c.0.s8 %v1468
          %v1470 = vlaneseq
          %v1471 = vshrl.u32 %v1470, 7
          %v1472 = vsub.s32 %v1469, %v1471
          %v1473 = vrot.slane %v1459, %v1472
          %v1474 = vcombine.low %v1466, %v1473
          %v1475 = vcombine.low %v1420, %v1423
          %v1477 = vunpack.c.l.s4 1983009808
          %v1478 = vunpack.c.0.s8 %v1477
          %v1479 = vlaneseq
          %v1480 = vshrl.u32 %v1479, 7
          %v1481 = vsub.s32 %v1478, %v1480
          %v1482 = vrot.slane %v1475, %v1481
          %v1483 = vsel %vm1063, %v1440, 0
          %v1485 = vsel %vm1063, %v1457, 0
          %v1487 = vsel %vm1063, %v1474, 0
          %v1489 = vsel %vm1063, %v1482, 0
          %1491 = vmatprep.subr.mxu0 0.0
          %1492 = vmatpush1.msra.mxu0 %v1267
          %1493 = vmatprep.subr.mxu0 0.0
          %1494 = vmatpush1.msra.mxu0 %v1268
          %1495 = vmatprep.subr.mxu0 0.0
          %1496 = vmatpush1.msra.mxu0 %v1269
          %1497 = vmatprep.subr.mxu0 0.0
          %1498 = vmatpush1.msra.mxu0 %v1270
          %1499 = vmatprep.subr.mxu0 0.0
          %1500 = vmatpush1.msra.mxu0 %v1271
          %1501 = vmatprep.subr.mxu0 0.0
          %1502 = vmatpush1.msra.mxu0 %v1272
          %1503 = vmatprep.subr.mxu0 0.0
          %1504 = vmatpush1.msra.mxu0 %v1273
          %1505 = vmatprep.subr.mxu0 0.0
          %1506 = vmatpush1.msra.mxu0 %v1274
          %1507 = vmatprep.subr.mxu0 0.0
          %1508 = vmatpush1.msra.mxu0 0.0
          %1509 = vmatprep.subr.mxu0 0.0
          %1510 = vmatpush1.msra.mxu0 0.0
          %1511 = vmatprep.subr.mxu0 0.0
          %1512 = vmatpush1.msra.mxu0 0.0
          %1513 = vmatprep.subr.mxu0 0.0
          %1514 = vmatpush1.msra.mxu0 0.0
          %1515 = vmatprep.subr.mxu0 0.0
          %1516 = vmatpush1.msra.mxu0 0.0
          %1517 = vmatprep.subr.mxu0 0.0
          %1518 = vmatpush1.msra.mxu0 0.0
          %1519 = vmatprep.subr.mxu0 0.0
          %1520 = vmatpush1.msra.mxu0 0.0
          %1521 = vmatprep.subr.mxu0 0.0
          %1522 = vmatpush1.msra.mxu0 0.0
          %1523 = vmatprep.subr.mxu0 0.0
          %1524 = vmatpush1.msra.mxu0 0.0
          %1525 = vmatprep.subr.mxu0 0.0
          %1526 = vmatpush1.msra.mxu0 0.0
          %1527 = vmatprep.subr.mxu0 0.0
          %1528 = vmatpush1.msra.mxu0 0.0
          %1529 = vmatprep.subr.mxu0 0.0
          %1530 = vmatpush1.msra.mxu0 0.0
          %1531 = vmatprep.subr.mxu0 0.0
          %1532 = vmatpush1.msra.mxu0 0.0
          %1533 = vmatprep.subr.mxu0 0.0
          %1534 = vmatpush1.msra.mxu0 0.0
          %1535 = vmatprep.subr.mxu0 0.0
          %1536 = vmatpush1.msra.mxu0 0.0
          %1537 = vmatprep.subr.mxu0 0.0
          %1538 = vmatpush1.msra.mxu0 0.0
          %1539 = vmatprep.subr.mxu0 0.0
          %1540 = vmatpush1.msra.mxu0 0.0
          %1541 = vmatprep.subr.mxu0 0.0
          %1542 = vmatpush1.msra.mxu0 0.0
          %1543 = vmatprep.subr.mxu0 0.0
          %1544 = vmatpush1.msra.mxu0 0.0
          %1545 = vmatprep.subr.mxu0 0.0
          %1546 = vmatpush1.msra.mxu0 0.0
          %1547 = vmatprep.subr.mxu0 0.0
          %1548 = vmatpush1.msra.mxu0 0.0
          %1549 = vmatprep.subr.mxu0 0.0
          %1550 = vmatpush1.msra.mxu0 0.0
          %1551 = vmatprep.subr.mxu0 0.0
          %1552 = vmatpush1.msra.mxu0 0.0
          %1553 = vmatprep.subr.mxu0 0.0
          %1554 = vmatpush1.msra.mxu0 0.0
          %1555 = vmatprep.mubr.f32.mxu0 0.0
          %1556 = vmatmul.mubr.f32.gmra.mrb[0].mxu0 %v1483
          %v1557 = vpop.f32.mrb[0].mxu0
          %v1558 = vadd.f32 0.0, %v1557
          %v1559 = vpop.f32.mrb[0].mxu0
          %1560 = vmatprep.mubr.f32.mxu0 0.0
          %1561 = vmatmul.mubr.f32.gmra.mrb[0].mxu0 %v1485
          %v1562 = vpop.f32.mrb[0].mxu0
          %v1563 = vadd.f32 0.0, %v1562
          %v1564 = vpop.f32.mrb[0].mxu0
          %1565 = vmatprep.mubr.f32.mxu0 0.0
          %1566 = vmatmul.mubr.f32.gmra.mrb[0].mxu0 %v1487
          %v1567 = vpop.f32.mrb[0].mxu0
          %v1568 = vadd.f32 0.0, %v1567
          %v1569 = vpop.f32.mrb[0].mxu0
          %1570 = vmatprep.mubr.f32.mxu0 0.0
          %1571 = vmatmul.mubr.f32.gmra.mrb[0].mxu0 %v1489
          %v1572 = vpop.f32.mrb[0].mxu0
          %v1573 = vadd.f32 0.0, %v1572
          %v1574 = vpop.f32.mrb[0].mxu0
          %1575 = vdwg.mxu0
          %v1576 = vcombine.low %v1313, %v1321
          %v1577 = vcombine.low %v1320, %v1322
          %v1579 = vunpack.c.l.s4 1983009808
          %v1580 = vunpack.c.0.s8 %v1579
          %v1581 = vlaneseq
          %v1582 = vshrl.u32 %v1581, 7
          %v1583 = vsub.s32 %v1580, %v1582
          %v1584 = vrot.slane %v1576, %v1583
          %v1586 = vunpack.c.l.s4 1983009808
          %v1587 = vunpack.c.0.s8 %v1586
          %v1588 = vlaneseq
          %v1589 = vshrl.u32 %v1588, 7
          %v1590 = vsub.s32 %v1587, %v1589
          %v1591 = vrot.slane %v1577, %v1590
          %v1592 = vcombine.low %v1584, %v1591
          %v1593 = vcombine.low %v1330, %v1338
          %v1594 = vcombine.low %v1337, %v1346
          %v1596 = vunpack.c.l.s4 1983009808
          %v1597 = vunpack.c.0.s8 %v1596
          %v1598 = vlaneseq
          %v1599 = vshrl.u32 %v1598, 7
          %v1600 = vsub.s32 %v1597, %v1599
          %v1601 = vrot.slane %v1593, %v1600
          %v1603 = vunpack.c.l.s4 1983009808
          %v1604 = vunpack.c.0.s8 %v1603
          %v1605 = vlaneseq
          %v1606 = vshrl.u32 %v1605, 7
          %v1607 = vsub.s32 %v1604, %v1606
          %v1608 = vrot.slane %v1594, %v1607
          %v1609 = vcombine.low %v1601, %v1608
          %v1610 = vcombine.low %v1354, %v1353
          %v1611 = vcombine.low %v1355, %v1363
          %v1613 = vunpack.c.l.s4 1983009808
          %v1614 = vunpack.c.0.s8 %v1613
          %v1615 = vlaneseq
          %v1616 = vshrl.u32 %v1615, 7
          %v1617 = vsub.s32 %v1614, %v1616
          %v1618 = vrot.slane %v1610, %v1617
          %v1620 = vunpack.c.l.s4 1983009808
          %v1621 = vunpack.c.0.s8 %v1620
          %v1622 = vlaneseq
          %v1623 = vshrl.u32 %v1622, 7
          %v1624 = vsub.s32 %v1621, %v1623
          %v1625 = vrot.slane %v1611, %v1624
          %v1626 = vcombine.low %v1618, %v1625
          %v1627 = vcombine.low %v1371, %v1370
          %v1629 = vunpack.c.l.s4 1983009808
          %v1630 = vunpack.c.0.s8 %v1629
          %v1631 = vlaneseq
          %v1632 = vshrl.u32 %v1631, 7
          %v1633 = vsub.s32 %v1630, %v1632
          %v1634 = vrot.slane %v1627, %v1633
          %v1635 = vsel %vm1063, %v1592, 0
          %v1637 = vsel %vm1063, %v1609, 0
          %v1639 = vsel %vm1063, %v1626, 0
          %v1641 = vsel %vm1063, %v1634, 0
          %1643 = vmatprep.subr.mxu0 0.0
          %1644 = vmatpush1.msra.mxu0 %v1259
          %1645 = vmatprep.subr.mxu0 0.0
          %1646 = vmatpush1.msra.mxu0 %v1260
          %1647 = vmatprep.subr.mxu0 0.0
          %1648 = vmatpush1.msra.mxu0 %v1261
          %1649 = vmatprep.subr.mxu0 0.0
          %1650 = vmatpush1.msra.mxu0 %v1262
          %1651 = vmatprep.subr.mxu0 0.0
          %1652 = vmatpush1.msra.mxu0 %v1263
          %1653 = vmatprep.subr.mxu0 0.0
          %1654 = vmatpush1.msra.mxu0 %v1264
          %1655 = vmatprep.subr.mxu0 0.0
          %1656 = vmatpush1.msra.mxu0 %v1265
          %1657 = vmatprep.subr.mxu0 0.0
          %1658 = vmatpush1.msra.mxu0 %v1266
          %1659 = vmatprep.subr.mxu0 0.0
          %1660 = vmatpush1.msra.mxu0 0.0
          %1661 = vmatprep.subr.mxu0 0.0
          %1662 = vmatpush1.msra.mxu0 0.0
          %1663 = vmatprep.subr.mxu0 0.0
          %1664 = vmatpush1.msra.mxu0 0.0
          %1665 = vmatprep.subr.mxu0 0.0
          %1666 = vmatpush1.msra.mxu0 0.0
          %1667 = vmatprep.subr.mxu0 0.0
          %1668 = vmatpush1.msra.mxu0 0.0
          %1669 = vmatprep.subr.mxu0 0.0
          %1670 = vmatpush1.msra.mxu0 0.0
          %1671 = vmatprep.subr.mxu0 0.0
          %1672 = vmatpush1.msra.mxu0 0.0
          %1673 = vmatprep.subr.mxu0 0.0
          %1674 = vmatpush1.msra.mxu0 0.0
          %1675 = vmatprep.subr.mxu0 0.0
          %1676 = vmatpush1.msra.mxu0 0.0
          %1677 = vmatprep.subr.mxu0 0.0
          %1678 = vmatpush1.msra.mxu0 0.0
          %1679 = vmatprep.subr.mxu0 0.0
          %1680 = vmatpush1.msra.mxu0 0.0
          %1681 = vmatprep.subr.mxu0 0.0
          %1682 = vmatpush1.msra.mxu0 0.0
          %1683 = vmatprep.subr.mxu0 0.0
          %1684 = vmatpush1.msra.mxu0 0.0
          %1685 = vmatprep.subr.mxu0 0.0
          %1686 = vmatpush1.msra.mxu0 0.0
          %1687 = vmatprep.subr.mxu0 0.0
          %1688 = vmatpush1.msra.mxu0 0.0
          %1689 = vmatprep.subr.mxu0 0.0
          %1690 = vmatpush1.msra.mxu0 0.0
          %1691 = vmatprep.subr.mxu0 0.0
          %1692 = vmatpush1.msra.mxu0 0.0
          %1693 = vmatprep.subr.mxu0 0.0
          %1694 = vmatpush1.msra.mxu0 0.0
          %1695 = vmatprep.subr.mxu0 0.0
          %1696 = vmatpush1.msra.mxu0 0.0
          %1697 = vmatprep.subr.mxu0 0.0
          %1698 = vmatpush1.msra.mxu0 0.0
          %1699 = vmatprep.subr.mxu0 0.0
          %1700 = vmatpush1.msra.mxu0 0.0
          %1701 = vmatprep.subr.mxu0 0.0
          %1702 = vmatpush1.msra.mxu0 0.0
          %1703 = vmatprep.subr.mxu0 0.0
          %1704 = vmatpush1.msra.mxu0 0.0
          %1705 = vmatprep.subr.mxu0 0.0
          %1706 = vmatpush1.msra.mxu0 0.0
          %1707 = vmatprep.mubr.f32.mxu0 0.0
          %1708 = vmatmul.mubr.f32.gmra.mrb[0].mxu0 %v1635
          %v1709 = vpop.f32.mrb[0].mxu0
          %v1710 = vadd.f32 %v1558, %v1709
          %v1711 = vpop.f32.mrb[0].mxu0
          %1712 = vmatprep.mubr.f32.mxu0 0.0
          %1713 = vmatmul.mubr.f32.gmra.mrb[0].mxu0 %v1637
          %v1714 = vpop.f32.mrb[0].mxu0
          %v1715 = vadd.f32 %v1563, %v1714
          %v1716 = vpop.f32.mrb[0].mxu0
          %1717 = vmatprep.mubr.f32.mxu0 0.0
          %1718 = vmatmul.mubr.f32.gmra.mrb[0].mxu0 %v1639
          %v1719 = vpop.f32.mrb[0].mxu0
          %v1720 = vadd.f32 %v1568, %v1719
          %v1721 = vpop.f32.mrb[0].mxu0
          %1722 = vmatprep.mubr.f32.mxu0 0.0
          %1723 = vmatmul.mubr.f32.gmra.mrb[0].mxu0 %v1641
          %v1724 = vpop.f32.mrb[0].mxu0
          %v1725 = vadd.f32 %v1573, %v1724
          %v1726 = vpop.f32.mrb[0].mxu0
          %1727 = vdwg.mxu0
          %v1728 = vcombine.low %v1321, %v1320
          %v1729 = vcombine.low %v1322, %v1330
          %v1731 = vunpack.c.l.s4 1983009808
          %v1732 = vunpack.c.0.s8 %v1731
          %v1733 = vlaneseq
          %v1734 = vshrl.u32 %v1733, 7
          %v1735 = vsub.s32 %v1732, %v1734
          %v1736 = vrot.slane %v1728, %v1735
          %v1738 = vunpack.c.l.s4 1983009808
          %v1739 = vunpack.c.0.s8 %v1738
          %v1740 = vlaneseq
          %v1741 = vshrl.u32 %v1740, 7
          %v1742 = vsub.s32 %v1739, %v1741
          %v1743 = vrot.slane %v1729, %v1742
          %v1744 = vcombine.low %v1736, %v1743
          %v1745 = vcombine.low %v1338, %v1337
          %v1746 = vcombine.low %v1372, %v1354
          %v1748 = vunpack.c.l.s4 1983009808
          %v1749 = vunpack.c.0.s8 %v1748
          %v1750 = vlaneseq
          %v1751 = vshrl.u32 %v1750, 7
          %v1752 = vsub.s32 %v1749, %v1751
          %v1753 = vrot.slane %v1745, %v1752
          %v1755 = vunpack.c.l.s4 1983009808
          %v1756 = vunpack.c.0.s8 %v1755
          %v1757 = vlaneseq
          %v1758 = vshrl.u32 %v1757, 7
          %v1759 = vsub.s32 %v1756, %v1758
          %v1760 = vrot.slane %v1746, %v1759
          %v1761 = vcombine.low %v1753, %v1760
          %v1762 = vcombine.low %v1353, %v1355
          %v1763 = vcombine.low %v1363, %v1371
          %v1765 = vunpack.c.l.s4 1983009808
          %v1766 = vunpack.c.0.s8 %v1765
          %v1767 = vlaneseq
          %v1768 = vshrl.u32 %v1767, 7
          %v1769 = vsub.s32 %v1766, %v1768
          %v1770 = vrot.slane %v1762, %v1769
          %v1772 = vunpack.c.l.s4 1983009808
          %v1773 = vunpack.c.0.s8 %v1772
          %v1774 = vlaneseq
          %v1775 = vshrl.u32 %v1774, 7
          %v1776 = vsub.s32 %v1773, %v1775
          %v1777 = vrot.slane %v1763, %v1776
          %v1778 = vcombine.low %v1770, %v1777
          %v1779 = vcombine.low %v1370, %v1373
          %v1781 = vunpack.c.l.s4 1983009808
          %v1782 = vunpack.c.0.s8 %v1781
          %v1783 = vlaneseq
          %v1784 = vshrl.u32 %v1783, 7
          %v1785 = vsub.s32 %v1782, %v1784
          %v1786 = vrot.slane %v1779, %v1785
          %v1787 = vsel %vm1063, %v1744, 0
          %v1789 = vsel %vm1063, %v1761, 0
          %v1791 = vsel %vm1063, %v1778, 0
          %v1793 = vsel %vm1063, %v1786, 0
          %1795 = vmatprep.subr.mxu0 0.0
          %1796 = vmatpush1.msra.mxu0 %v1275
          %1797 = vmatprep.subr.mxu0 0.0
          %1798 = vmatpush1.msra.mxu0 %v1276
          %1799 = vmatprep.subr.mxu0 0.0
          %1800 = vmatpush1.msra.mxu0 %v1277
          %1801 = vmatprep.subr.mxu0 0.0
          %1802 = vmatpush1.msra.mxu0 %v1278
          %1803 = vmatprep.subr.mxu0 0.0
          %1804 = vmatpush1.msra.mxu0 %v1279
          %1805 = vmatprep.subr.mxu0 0.0
          %1806 = vmatpush1.msra.mxu0 %v1280
          %1807 = vmatprep.subr.mxu0 0.0
          %1808 = vmatpush1.msra.mxu0 %v1281
          %1809 = vmatprep.subr.mxu0 0.0
          %1810 = vmatpush1.msra.mxu0 %v1282
          %1811 = vmatprep.subr.mxu0 0.0
          %1812 = vmatpush1.msra.mxu0 0.0
          %1813 = vmatprep.subr.mxu0 0.0
          %1814 = vmatpush1.msra.mxu0 0.0
          %1815 = vmatprep.subr.mxu0 0.0
          %1816 = vmatpush1.msra.mxu0 0.0
          %1817 = vmatprep.subr.mxu0 0.0
          %1818 = vmatpush1.msra.mxu0 0.0
          %1819 = vmatprep.subr.mxu0 0.0
          %1820 = vmatpush1.msra.mxu0 0.0
          %1821 = vmatprep.subr.mxu0 0.0
          %1822 = vmatpush1.msra.mxu0 0.0
          %1823 = vmatprep.subr.mxu0 0.0
          %1824 = vmatpush1.msra.mxu0 0.0
          %1825 = vmatprep.subr.mxu0 0.0
          %1826 = vmatpush1.msra.mxu0 0.0
          %1827 = vmatprep.subr.mxu0 0.0
          %1828 = vmatpush1.msra.mxu0 0.0
          %1829 = vmatprep.subr.mxu0 0.0
          %1830 = vmatpush1.msra.mxu0 0.0
          %1831 = vmatprep.subr.mxu0 0.0
          %1832 = vmatpush1.msra.mxu0 0.0
          %1833 = vmatprep.subr.mxu0 0.0
          %1834 = vmatpush1.msra.mxu0 0.0
          %1835 = vmatprep.subr.mxu0 0.0
          %1836 = vmatpush1.msra.mxu0 0.0
          %1837 = vmatprep.subr.mxu0 0.0
          %1838 = vmatpush1.msra.mxu0 0.0
          %1839 = vmatprep.subr.mxu0 0.0
          %1840 = vmatpush1.msra.mxu0 0.0
          %1841 = vmatprep.subr.mxu0 0.0
          %1842 = vmatpush1.msra.mxu0 0.0
          %1843 = vmatprep.subr.mxu0 0.0
          %1844 = vmatpush1.msra.mxu0 0.0
          %1845 = vmatprep.subr.mxu0 0.0
          %1846 = vmatpush1.msra.mxu0 0.0
          %1847 = vmatprep.subr.mxu0 0.0
          %1848 = vmatpush1.msra.mxu0 0.0
          %1849 = vmatprep.subr.mxu0 0.0
          %1850 = vmatpush1.msra.mxu0 0.0
          %1851 = vmatprep.subr.mxu0 0.0
          %1852 = vmatpush1.msra.mxu0 0.0
          %1853 = vmatprep.subr.mxu0 0.0
          %1854 = vmatpush1.msra.mxu0 0.0
          %1855 = vmatprep.subr.mxu0 0.0
          %1856 = vmatpush1.msra.mxu0 0.0
          %1857 = vmatprep.subr.mxu0 0.0
          %1858 = vmatpush1.msra.mxu0 0.0
          %1859 = vmatprep.mubr.f32.mxu0 0.0
          %1860 = vmatmul.mubr.f32.gmra.mrb[0].mxu0 %v1787
          %v1861 = vpop.f32.mrb[0].mxu0
          %v1862 = vadd.f32 0.0, %v1861
          %v1863 = vpop.f32.mrb[0].mxu0
          %1864 = vmatprep.mubr.f32.mxu0 0.0
          %1865 = vmatmul.mubr.f32.gmra.mrb[0].mxu0 %v1789
          %v1866 = vpop.f32.mrb[0].mxu0
          %v1867 = vadd.f32 0.0, %v1866
          %v1868 = vpop.f32.mrb[0].mxu0
          %1869 = vmatprep.mubr.f32.mxu0 0.0
          %1870 = vmatmul.mubr.f32.gmra.mrb[0].mxu0 %v1791
          %v1871 = vpop.f32.mrb[0].mxu0
          %v1872 = vadd.f32 0.0, %v1871
          %v1873 = vpop.f32.mrb[0].mxu0
          %1874 = vmatprep.mubr.f32.mxu0 0.0
          %1875 = vmatmul.mubr.f32.gmra.mrb[0].mxu0 %v1793
          %v1876 = vpop.f32.mrb[0].mxu0
          %v1877 = vadd.f32 0.0, %v1876
          %v1878 = vpop.f32.mrb[0].mxu0
          %1879 = vdwg.mxu0
          %v1880 = vadd.f32 %v1710, %v1862
          %v1881 = vadd.f32 %v1715, %v1867
          %v1882 = vadd.f32 %v1720, %v1872
          %v1883 = vadd.f32 %v1725, %v1877
          %v1888 = vcombine.high %v1880, %v1880
          %v1890 = vunpack.c.l.s4 1983009808
          %v1891 = vunpack.c.0.s8 %v1890
          %v1892 = vlaneseq
          %v1893 = vshrl.u32 %v1892, 7
          %v1894 = vsub.s32 %v1891, %v1893
          %v1895 = vrot.slane %v1880, %v1894
          %v1897 = vunpack.c.l.s4 1983009808
          %v1898 = vunpack.c.0.s8 %v1897
          %v1899 = vlaneseq
          %v1900 = vshrl.u32 %v1899, 7
          %v1901 = vsub.s32 %v1898, %v1900
          %v1902 = vrot.slane %v1888, %v1901
          %v1903 = vcombine.high %v1895, %v1895
          %v1904 = vcombine.high %v1902, %v1902
          %v1905 = vcombine.high %v1881, %v1881
          %v1907 = vunpack.c.l.s4 1983009808
          %v1908 = vunpack.c.0.s8 %v1907
          %v1909 = vlaneseq
          %v1910 = vshrl.u32 %v1909, 7
          %v1911 = vsub.s32 %v1908, %v1910
          %v1912 = vrot.slane %v1881, %v1911
          %v1914 = vunpack.c.l.s4 1983009808
          %v1915 = vunpack.c.0.s8 %v1914
          %v1916 = vlaneseq
          %v1917 = vshrl.u32 %v1916, 7
          %v1918 = vsub.s32 %v1915, %v1917
          %v1919 = vrot.slane %v1905, %v1918
          %v1920 = vcombine.high %v1912, %v1912
          %v1921 = vcombine.high %v1919, %v1919
          %v1922 = vcombine.high %v1882, %v1882
          %v1924 = vunpack.c.l.s4 1983009808
          %v1925 = vunpack.c.0.s8 %v1924
          %v1926 = vlaneseq
          %v1927 = vshrl.u32 %v1926, 7
          %v1928 = vsub.s32 %v1925, %v1927
          %v1929 = vrot.slane %v1882, %v1928
          %v1931 = vunpack.c.l.s4 1983009808
          %v1932 = vunpack.c.0.s8 %v1931
          %v1933 = vlaneseq
          %v1934 = vshrl.u32 %v1933, 7
          %v1935 = vsub.s32 %v1932, %v1934
          %v1936 = vrot.slane %v1922, %v1935
          %v1937 = vcombine.high %v1929, %v1929
          %v1938 = vcombine.high %v1936, %v1936
          %v1940 = vunpack.c.l.s4 1983009808
          %v1941 = vunpack.c.0.s8 %v1940
          %v1942 = vlaneseq
          %v1943 = vshrl.u32 %v1942, 7
          %v1944 = vsub.s32 %v1941, %v1943
          %v1945 = vrot.slane %v1883, %v1944
          %v1946 = vcombine.high %v1945, %v1945
          %v1949 = vlaneseq
          %v1950 = vshrl.u32 %v1949, 7
          %v1951 = vsub.s32 0, %v1950
          %v1952 = vrot.slane %v1903, %v1951
          %v1953 = vlaneseq
          %v1954 = vshrl.u32 %v1953, 7
          %v1955 = vsub.s32 0, %v1954
          %v1956 = vrot.slane %v1929, %v1955
          %v1959 = vlaneseq
          %v1960 = vshrl.u32 %v1959, 7
          %v1961 = vsub.s32 0, %v1960
          %v1962 = vrot.slane %v1902, %v1961
          %v1963 = vlaneseq
          %v1964 = vshrl.u32 %v1963, 7
          %v1965 = vsub.s32 0, %v1964
          %v1966 = vrot.slane %v1937, %v1965
          %v1969 = vlaneseq
          %v1970 = vshrl.u32 %v1969, 7
          %v1971 = vsub.s32 0, %v1970
          %v1972 = vrot.slane %v1904, %v1971
          %v1973 = vlaneseq
          %v1974 = vshrl.u32 %v1973, 7
          %v1975 = vsub.s32 0, %v1974
          %v1976 = vrot.slane %v1936, %v1975
          %v1979 = vlaneseq
          %v1980 = vshrl.u32 %v1979, 7
          %v1981 = vsub.s32 0, %v1980
          %v1982 = vrot.slane %v1912, %v1981
          %v1983 = vlaneseq
          %v1984 = vshrl.u32 %v1983, 7
          %v1985 = vsub.s32 0, %v1984
          %v1986 = vrot.slane %v1938, %v1985
          %v1989 = vlaneseq
          %v1990 = vshrl.u32 %v1989, 7
          %v1991 = vsub.s32 0, %v1990
          %v1992 = vrot.slane %v1920, %v1991
          %v1993 = vlaneseq
          %v1994 = vshrl.u32 %v1993, 7
          %v1995 = vsub.s32 0, %v1994
          %v1996 = vrot.slane %v1945, %v1995
          %v1999 = vlaneseq
          %v2000 = vshrl.u32 %v1999, 7
          %v2001 = vsub.s32 0, %v2000
          %v2002 = vrot.slane %v1919, %v2001
          %v2003 = vlaneseq
          %v2004 = vshrl.u32 %v2003, 7
          %v2005 = vsub.s32 0, %v2004
          %v2006 = vrot.slane %v1946, %v2005
          %v2009 = vsel %vm1287, %v1895, %v1952
          %v2010 = vsel %vm1287, %v1921, %v1956
          %v2011 = vsel %vm1115, %v2009, %v1962
          %v2012 = vsel %vm1115, %v2010, %v1966
          %vm2013 = vcmask 1042432
          %v2014 = vsel %vm2013, %v2011, %v1972
          %v2015 = vsel %vm2013, %v2012, %v1976
          %vm2016 = vcmask 1043456
          %v2017 = vsel %vm2016, %v2014, %v1982
          %v2018 = vsel %vm2016, %v2015, %v1986
          %vm2019 = vcmask 1044480
          %v2020 = vsel %vm2019, %v2017, %v1992
          %v2021 = vsel %vm2019, %v2018, %v1996
          %v2022 = vsel %vm1046, %v2020, %v2002
          %v2023 = vsel %vm1046, %v2021, %v2006
          %v2024 = vld [vmem:[%s10] sm:$0x1]
          %v2025 = vld [vmem:[%s11] sm:$0x1]
          %vm2026 = vcmask 522240
          %v2027 = vsel %vm2026, %v2022, 0.0
          %v2028 = vrot.slane %v2027, 4
          %v2029 = vadd.f32 %v2027, %v2028
          %v2030 = vrot.slane %v2029, 2
          %v2031 = vadd.f32 %v2029, %v2030
          %v2032 = vrot.slane %v2031, 1
          %v2033 = vadd.f32 %v2031, %v2032
          %v2034 = vsel %vm2026, %v2023, 0.0
          %v2035 = vrot.slane %v2034, 4
          %v2036 = vadd.f32 %v2034, %v2035
          %v2037 = vrot.slane %v2036, 2
          %v2038 = vadd.f32 %v2036, %v2037
          %v2039 = vrot.slane %v2038, 1
          %v2040 = vadd.f32 %v2038, %v2039
          %v2041 = vmul.f32 %v2022, %v2022
          %v2042 = vmul.f32 %v2023, %v2023
          %v2043 = vsel %vm2026, %v2041, 0.0
          %v2044 = vrot.slane %v2043, 4
          %v2045 = vadd.f32 %v2043, %v2044
          %v2046 = vrot.slane %v2045, 2
          %v2047 = vadd.f32 %v2045, %v2046
          %v2048 = vrot.slane %v2047, 1
          %v2049 = vadd.f32 %v2047, %v2048
          %v2050 = vsel %vm2026, %v2042, 0.0
          %v2051 = vrot.slane %v2050, 4
          %v2052 = vadd.f32 %v2050, %v2051
          %v2053 = vrot.slane %v2052, 2
          %v2054 = vadd.f32 %v2052, %v2053
          %v2055 = vrot.slane %v2054, 1
          %v2056 = vadd.f32 %v2054, %v2055
          %v2059 = vsel %vm1107, %v2040, %v2033
          %v2063 = vsel %vm1112, %v2056, %v2049
          %v2065 = vsel %vm1115, %v2059, %v2063
          %2067 = vrot.lane.b32.xlu0 %v2065, 127
          %v2068 = vpop.permute.xlu0 %2067
          %2070 = vrot.lane.b32.xlu0 %v2065, 63
          %v2071 = vpop.permute.xlu0 %2070
          %v2073 = vsel %vm1124, %v2068, %v2071
          %2074 = vrot.lane.b32.xlu0 %v2065, 65
          %v2075 = vpop.permute.xlu0 %2074
          %2077 = vrot.lane.b32.xlu0 %v2065, 1
          %v2078 = vpop.permute.xlu0 %2077
          %v2080 = vsel %vm1132, %v2075, %v2078
          %v2081 = vadd.f32 %v2065, %v2073
          %v2082 = vadd.f32 %v2065, %v2080
          %v2083 = vsel %vm1148, %v2081, %v2082
          %v2084 = vrcp.pop 14.0
          %v2085 = vmul.f32 %v2083, %v2084
          %v2086 = vmul.f32 %v2085, %v2085
          %v2088 = vrot.slane %v2086, 6
          %v2090 = vsub.f32 %v2085, %v2088
          %v2091 = vmax.f32 %v2090, 0.0
          %v2092 = vadd.f32 %v2091, 1e-05
          %v2093 = vrsqrt.pop %v2092
          %v2095 = vlaneseq
          %v2096 = vshrl.u32 %v2095, 7
          %v2097 = vsub.s32 0, %v2096
          %v2098 = vrot.slane %v2024, %v2097
          %v2100 = vmul.f32 %v2098, %v2093
          %v2102 = vrot.slane %v2100, 2
          %v2104 = vmul.f32 %v2085, %v2102
          %v2106 = vlaneseq
          %v2107 = vshrl.u32 %v2106, 7
          %v2108 = vsub.s32 0, %v2107
          %v2109 = vrot.slane %v2025, %v2108
          %v2111 = vsub.f32 %v2109, %v2104
          %v2113 = vunpack.c.l.s4 1966171168
          %v2114 = vunpack.c.0.s8 %v2113
          %v2115 = vlaneseq
          %v2116 = vshrl.u32 %v2115, 7
          %v2117 = vsub.s32 %v2114, %v2116
          %v2118 = vrot.slane %v2100, %v2117
          %v2119 = vcombine.high %v2118, %v2118
          %v2121 = vunpack.c.l.s4 1966171168
          %v2122 = vunpack.c.0.s8 %v2121
          %v2123 = vlaneseq
          %v2124 = vshrl.u32 %v2123, 7
          %v2125 = vsub.s32 %v2122, %v2124
          %v2126 = vrot.slane %v2118, %v2125
          %v2128 = vunpack.c.l.s4 1966171168
          %v2129 = vunpack.c.0.s8 %v2128
          %v2130 = vlaneseq
          %v2131 = vshrl.u32 %v2130, 7
          %v2132 = vsub.s32 %v2129, %v2131
          %v2133 = vrot.slane %v2119, %v2132
          %v2134 = vcombine.high %v2126, %v2126
          %v2135 = vcombine.high %v2133, %v2133
          %v2136 = vlaneseq
          %v2137 = vshrl.u32 %v2136, 7
          %v2138 = vsub.s32 0, %v2137
          %v2139 = vrot.slane %v2134, %v2138
          %v2140 = vlaneseq
          %v2141 = vshrl.u32 %v2140, 7
          %v2142 = vsub.s32 0, %v2141
          %v2143 = vrot.slane %v2135, %v2142
          %v2146 = vmul.f32 %v2022, %v2139
          %v2147 = vmul.f32 %v2023, %v2143
          %v2150 = vunpack.c.l.s4 1966171168
          %v2151 = vunpack.c.0.s8 %v2150
          %v2152 = vlaneseq
          %v2153 = vshrl.u32 %v2152, 7
          %v2154 = vsub.s32 %v2151, %v2153
          %v2155 = vrot.slane %v2111, %v2154
          %v2156 = vcombine.high %v2155, %v2155
          %v2158 = vunpack.c.l.s4 1966171168
          %v2159 = vunpack.c.0.s8 %v2158
          %v2160 = vlaneseq
          %v2161 = vshrl.u32 %v2160, 7
          %v2162 = vsub.s32 %v2159, %v2161
          %v2163 = vrot.slane %v2155, %v2162
          %v2165 = vunpack.c.l.s4 1966171168
          %v2166 = vunpack.c.0.s8 %v2165
          %v2167 = vlaneseq
          %v2168 = vshrl.u32 %v2167, 7
          %v2169 = vsub.s32 %v2166, %v2168
          %v2170 = vrot.slane %v2156, %v2169
          %v2171 = vlaneseq
          %v2172 = vshrl.u32 %v2171, 7
          %v2173 = vsub.s32 0, %v2172
          %v2174 = vrot.slane %v2163, %v2173
          %v2175 = vlaneseq
          %v2176 = vshrl.u32 %v2175, 7
          %v2177 = vsub.s32 0, %v2176
          %v2178 = vrot.slane %v2170, %v2177
          %v2181 = vadd.f32 %v2146, %v2174
          %v2182 = vadd.f32 %v2147, %v2178
          %v2183 = vmax.f32 %v2181, 0.0
          %v2184 = vmax.f32 %v2182, 0.0
          %v2185 = vld [vmem:[#allocation7] sm:$0xff]
          %v2186 = vld [vmem:[#allocation7 + $0x8] sm:$0xff]
          %v2187 = vld [vmem:[#allocation7 + $0x10] sm:$0xff]
          %v2188 = vld [vmem:[#allocation7 + $0x18] sm:$0xff]
          %v2189 = vld [vmem:[#allocation7 + $0x20] sm:$0xff]
          %v2190 = vld [vmem:[#allocation7 + $0x28] sm:$0xff]
          %v2191 = vld [vmem:[#allocation7 + $0x30] sm:$0xff]
          %v2192 = vld [vmem:[#allocation7 + $0x38] sm:$0xff]
          %v2193 = vld [vmem:[#allocation7 + $0x40] sm:$0xff]
          %v2194 = vld [vmem:[#allocation7 + $0x48] sm:$0xff]
          %v2195 = vld [vmem:[#allocation7 + $0x50] sm:$0xff]
          %v2196 = vld [vmem:[#allocation7 + $0x58] sm:$0xff]
          %v2197 = vld [vmem:[#allocation7 + $0x60] sm:$0xff]
          %v2198 = vld [vmem:[#allocation7 + $0x68] sm:$0xff]
          %v2199 = vld [vmem:[#allocation7 + $0x70] sm:$0xff]
          %v2200 = vld [vmem:[#allocation7 + $0x78] sm:$0xff]
          %v2201 = vld [vmem:[#allocation7 + $0x80] sm:$0xff]
          %v2202 = vld [vmem:[#allocation7 + $0x88] sm:$0xff]
          %v2203 = vld [vmem:[#allocation7 + $0x90] sm:$0xff]
          %v2204 = vld [vmem:[#allocation7 + $0x98] sm:$0xff]
          %v2205 = vld [vmem:[#allocation7 + $0xa0] sm:$0xff]
          %v2206 = vld [vmem:[#allocation7 + $0xa8] sm:$0xff]
          %v2207 = vld [vmem:[#allocation7 + $0xb0] sm:$0xff]
          %v2208 = vld [vmem:[#allocation7 + $0xb8] sm:$0xff]
          %v2211 = vrot.slane %v2183, 7
          %v2212 = vrot.slane %v2184, 7
          %v2215 = vsel %vm1287, 0.0, %v2211
          %v2216 = vsel %vm1287, 0.0, %v2212
          %v2219 = vcombine.high %v2215, %v2215
          %v2221 = vunpack.c.l.s4 1966171168
          %v2222 = vunpack.c.0.s8 %v2221
          %v2223 = vlaneseq
          %v2224 = vshrl.u32 %v2223, 7
          %v2225 = vsub.s32 %v2222, %v2224
          %v2226 = vrot.slane %v2215, %v2225
          %v2228 = vunpack.c.l.s4 1966171168
          %v2229 = vunpack.c.0.s8 %v2228
          %v2230 = vlaneseq
          %v2231 = vshrl.u32 %v2230, 7
          %v2232 = vsub.s32 %v2229, %v2231
          %v2233 = vrot.slane %v2219, %v2232
          %v2234 = vcombine.high %v2226, %v2226
          %v2235 = vcombine.high %v2233, %v2233
          %v2237 = vunpack.c.l.s4 1966171168
          %v2238 = vunpack.c.0.s8 %v2237
          %v2239 = vlaneseq
          %v2240 = vshrl.u32 %v2239, 7
          %v2241 = vsub.s32 %v2238, %v2240
          %v2242 = vrot.slane %v2226, %v2241
          %v2244 = vunpack.c.l.s4 1966171168
          %v2245 = vunpack.c.0.s8 %v2244
          %v2246 = vlaneseq
          %v2247 = vshrl.u32 %v2246, 7
          %v2248 = vsub.s32 %v2245, %v2247
          %v2249 = vrot.slane %v2233, %v2248
          %v2251 = vunpack.c.l.s4 1966171168
          %v2252 = vunpack.c.0.s8 %v2251
          %v2253 = vlaneseq
          %v2254 = vshrl.u32 %v2253, 7
          %v2255 = vsub.s32 %v2252, %v2254
          %v2256 = vrot.slane %v2234, %v2255
          %v2258 = vunpack.c.l.s4 1966171168
          %v2259 = vunpack.c.0.s8 %v2258
          %v2260 = vlaneseq
          %v2261 = vshrl.u32 %v2260, 7
          %v2262 = vsub.s32 %v2259, %v2261
          %v2263 = vrot.slane %v2235, %v2262
          %v2264 = vcombine.high %v2242, %v2242
          %v2265 = vcombine.high %v2249, %v2249
          %v2266 = vcombine.high %v2256, %v2256
          %v2267 = vcombine.high %v2216, %v2216
          %v2269 = vunpack.c.l.s4 1966171168
          %v2270 = vunpack.c.0.s8 %v2269
          %v2271 = vlaneseq
          %v2272 = vshrl.u32 %v2271, 7
          %v2273 = vsub.s32 %v2270, %v2272
          %v2274 = vrot.slane %v2216, %v2273
          %v2276 = vunpack.c.l.s4 1966171168
          %v2277 = vunpack.c.0.s8 %v2276
          %v2278 = vlaneseq
          %v2279 = vshrl.u32 %v2278, 7
          %v2280 = vsub.s32 %v2277, %v2279
          %v2281 = vrot.slane %v2267, %v2280
          %v2282 = vcombine.high %v2274, %v2274
          %v2283 = vcombine.high %v2281, %v2281
          %v2285 = vunpack.c.l.s4 1966171168
          %v2286 = vunpack.c.0.s8 %v2285
          %v2287 = vlaneseq
          %v2288 = vshrl.u32 %v2287, 7
          %v2289 = vsub.s32 %v2286, %v2288
          %v2290 = vrot.slane %v2274, %v2289
          %v2292 = vunpack.c.l.s4 1966171168
          %v2293 = vunpack.c.0.s8 %v2292
          %v2294 = vlaneseq
          %v2295 = vshrl.u32 %v2294, 7
          %v2296 = vsub.s32 %v2293, %v2295
          %v2297 = vrot.slane %v2281, %v2296
          %v2299 = vunpack.c.l.s4 1966171168
          %v2300 = vunpack.c.0.s8 %v2299
          %v2301 = vlaneseq
          %v2302 = vshrl.u32 %v2301, 7
          %v2303 = vsub.s32 %v2300, %v2302
          %v2304 = vrot.slane %v2282, %v2303
          %v2306 = vunpack.c.l.s4 1966171168
          %v2307 = vunpack.c.0.s8 %v2306
          %v2308 = vlaneseq
          %v2309 = vshrl.u32 %v2308, 7
          %v2310 = vsub.s32 %v2307, %v2309
          %v2311 = vrot.slane %v2283, %v2310
          %v2312 = vcombine.high %v2290, %v2290
          %v2313 = vcombine.high %v2297, %v2297
          %v2314 = vcombine.high %v2304, %v2304
          %v2315 = vcombine.high %v2263, %v2263
          %v2316 = vcombine.high %v2311, %v2311
          %v2317 = vcombine.low %v2256, %v2264
          %v2318 = vcombine.low %v2266, %v2249
          %v2319 = vcombine.low %v2263, %v2265
          %v2320 = vcombine.low %v2315, %v2304
          %v2322 = vunpack.c.l.s4 1966171168
          %v2323 = vunpack.c.0.s8 %v2322
          %v2324 = vlaneseq
          %v2325 = vshrl.u32 %v2324, 7
          %v2326 = vsub.s32 %v2323, %v2325
          %v2327 = vrot.slane %v2317, %v2326
          %v2329 = vunpack.c.l.s4 1966171168
          %v2330 = vunpack.c.0.s8 %v2329
          %v2331 = vlaneseq
          %v2332 = vshrl.u32 %v2331, 7
          %v2333 = vsub.s32 %v2330, %v2332
          %v2334 = vrot.slane %v2318, %v2333
          %v2336 = vunpack.c.l.s4 1966171168
          %v2337 = vunpack.c.0.s8 %v2336
          %v2338 = vlaneseq
          %v2339 = vshrl.u32 %v2338, 7
          %v2340 = vsub.s32 %v2337, %v2339
          %v2341 = vrot.slane %v2319, %v2340
          %v2343 = vunpack.c.l.s4 1966171168
          %v2344 = vunpack.c.0.s8 %v2343
          %v2345 = vlaneseq
          %v2346 = vshrl.u32 %v2345, 7
          %v2347 = vsub.s32 %v2344, %v2346
          %v2348 = vrot.slane %v2320, %v2347
          %v2349 = vcombine.low %v2327, %v2334
          %v2350 = vcombine.low %v2341, %v2348
          %v2352 = vunpack.c.l.s4 1966171168
          %v2353 = vunpack.c.0.s8 %v2352
          %v2354 = vlaneseq
          %v2355 = vshrl.u32 %v2354, 7
          %v2356 = vsub.s32 %v2353, %v2355
          %v2357 = vrot.slane %v2349, %v2356
          %v2359 = vunpack.c.l.s4 1966171168
          %v2360 = vunpack.c.0.s8 %v2359
          %v2361 = vlaneseq
          %v2362 = vshrl.u32 %v2361, 7
          %v2363 = vsub.s32 %v2360, %v2362
          %v2364 = vrot.slane %v2350, %v2363
          %v2365 = vcombine.low %v2357, %v2364
          %v2366 = vcombine.low %v2312, %v2314
          %v2367 = vcombine.low %v2297, %v2311
          %v2368 = vcombine.low %v2313, %v2316
          %v2370 = vunpack.c.l.s4 1966171168
          %v2371 = vunpack.c.0.s8 %v2370
          %v2372 = vlaneseq
          %v2373 = vshrl.u32 %v2372, 7
          %v2374 = vsub.s32 %v2371, %v2373
          %v2375 = vrot.slane %v2366, %v2374
          %v2377 = vunpack.c.l.s4 1966171168
          %v2378 = vunpack.c.0.s8 %v2377
          %v2379 = vlaneseq
          %v2380 = vshrl.u32 %v2379, 7
          %v2381 = vsub.s32 %v2378, %v2380
          %v2382 = vrot.slane %v2367, %v2381
          %v2384 = vunpack.c.l.s4 1966171168
          %v2385 = vunpack.c.0.s8 %v2384
          %v2386 = vlaneseq
          %v2387 = vshrl.u32 %v2386, 7
          %v2388 = vsub.s32 %v2385, %v2387
          %v2389 = vrot.slane %v2368, %v2388
          %v2390 = vcombine.low %v2375, %v2382
          %v2392 = vunpack.c.l.s4 1966171168
          %v2393 = vunpack.c.0.s8 %v2392
          %v2394 = vlaneseq
          %v2395 = vshrl.u32 %v2394, 7
          %v2396 = vsub.s32 %v2393, %v2395
          %v2397 = vrot.slane %v2390, %v2396
          %v2399 = vunpack.c.l.s4 1966171168
          %v2400 = vunpack.c.0.s8 %v2399
          %v2401 = vlaneseq
          %v2402 = vshrl.u32 %v2401, 7
          %v2403 = vsub.s32 %v2400, %v2402
          %v2404 = vrot.slane %v2389, %v2403
          %v2405 = vcombine.low %v2397, %v2404
          %v2406 = vsel %vm1063, %v2365, 0
          %v2408 = vsel %vm1063, %v2405, 0
          %2410 = vmatprep.subr.mxu0 0.0
          %2411 = vmatpush1.msra.mxu0 %v2193
          %2412 = vmatprep.subr.mxu0 0.0
          %2413 = vmatpush1.msra.mxu0 %v2194
          %2414 = vmatprep.subr.mxu0 0.0
          %2415 = vmatpush1.msra.mxu0 %v2195
          %2416 = vmatprep.subr.mxu0 0.0
          %2417 = vmatpush1.msra.mxu0 %v2196
          %2418 = vmatprep.subr.mxu0 0.0
          %2419 = vmatpush1.msra.mxu0 %v2197
          %2420 = vmatprep.subr.mxu0 0.0
          %2421 = vmatpush1.msra.mxu0 %v2198
          %2422 = vmatprep.subr.mxu0 0.0
          %2423 = vmatpush1.msra.mxu0 %v2199
          %2424 = vmatprep.subr.mxu0 0.0
          %2425 = vmatpush1.msra.mxu0 %v2200
          %2426 = vmatprep.subr.mxu0 0.0
          %2427 = vmatpush1.msra.mxu0 0.0
          %2428 = vmatprep.subr.mxu0 0.0
          %2429 = vmatpush1.msra.mxu0 0.0
          %2430 = vmatprep.subr.mxu0 0.0
          %2431 = vmatpush1.msra.mxu0 0.0
          %2432 = vmatprep.subr.mxu0 0.0
          %2433 = vmatpush1.msra.mxu0 0.0
          %2434 = vmatprep.subr.mxu0 0.0
          %2435 = vmatpush1.msra.mxu0 0.0
          %2436 = vmatprep.subr.mxu0 0.0
          %2437 = vmatpush1.msra.mxu0 0.0
          %2438 = vmatprep.subr.mxu0 0.0
          %2439 = vmatpush1.msra.mxu0 0.0
          %2440 = vmatprep.subr.mxu0 0.0
          %2441 = vmatpush1.msra.mxu0 0.0
          %2442 = vmatprep.subr.mxu0 0.0
          %2443 = vmatpush1.msra.mxu0 0.0
          %2444 = vmatprep.subr.mxu0 0.0
          %2445 = vmatpush1.msra.mxu0 0.0
          %2446 = vmatprep.subr.mxu0 0.0
          %2447 = vmatpush1.msra.mxu0 0.0
          %2448 = vmatprep.subr.mxu0 0.0
          %2449 = vmatpush1.msra.mxu0 0.0
          %2450 = vmatprep.subr.mxu0 0.0
          %2451 = vmatpush1.msra.mxu0 0.0
          %2452 = vmatprep.subr.mxu0 0.0
          %2453 = vmatpush1.msra.mxu0 0.0
          %2454 = vmatprep.subr.mxu0 0.0
          %2455 = vmatpush1.msra.mxu0 0.0
          %2456 = vmatprep.subr.mxu0 0.0
          %2457 = vmatpush1.msra.mxu0 0.0
          %2458 = vmatprep.subr.mxu0 0.0
          %2459 = vmatpush1.msra.mxu0 0.0
          %2460 = vmatprep.subr.mxu0 0.0
          %2461 = vmatpush1.msra.mxu0 0.0
          %2462 = vmatprep.subr.mxu0 0.0
          %2463 = vmatpush1.msra.mxu0 0.0
          %2464 = vmatprep.subr.mxu0 0.0
          %2465 = vmatpush1.msra.mxu0 0.0
          %2466 = vmatprep.subr.mxu0 0.0
          %2467 = vmatpush1.msra.mxu0 0.0
          %2468 = vmatprep.subr.mxu0 0.0
          %2469 = vmatpush1.msra.mxu0 0.0
          %2470 = vmatprep.subr.mxu0 0.0
          %2471 = vmatpush1.msra.mxu0 0.0
          %2472 = vmatprep.subr.mxu0 0.0
          %2473 = vmatpush1.msra.mxu0 0.0
          %2474 = vmatprep.mubr.f32.mxu0 0.0
          %2475 = vmatmul.mubr.f32.gmra.mrb[0].mxu0 %v2406
          %v2476 = vpop.f32.mrb[0].mxu0
          %v2477 = vadd.f32 0.0, %v2476
          %v2478 = vpop.f32.mrb[0].mxu0
          %2479 = vmatprep.mubr.f32.mxu0 0.0
          %2480 = vmatmul.mubr.f32.gmra.mrb[0].mxu0 %v2408
          %v2481 = vpop.f32.mrb[0].mxu0
          %v2482 = vadd.f32 0.0, %v2481
          %v2483 = vpop.f32.mrb[0].mxu0
          %2484 = vdwg.mxu0
          %v2485 = vcombine.low %v2242, %v2256
          %v2486 = vcombine.low %v2264, %v2266
          %v2487 = vcombine.low %v2249, %v2263
          %v2488 = vcombine.low %v2265, %v2290
          %v2490 = vunpack.c.l.s4 1966171168
          %v2491 = vunpack.c.0.s8 %v2490
          %v2492 = vlaneseq
          %v2493 = vshrl.u32 %v2492, 7
          %v2494 = vsub.s32 %v2491, %v2493
          %v2495 = vrot.slane %v2485, %v2494
          %v2497 = vunpack.c.l.s4 1966171168
          %v2498 = vunpack.c.0.s8 %v2497
          %v2499 = vlaneseq
          %v2500 = vshrl.u32 %v2499, 7
          %v2501 = vsub.s32 %v2498, %v2500
          %v2502 = vrot.slane %v2486, %v2501
          %v2504 = vunpack.c.l.s4 1966171168
          %v2505 = vunpack.c.0.s8 %v2504
          %v2506 = vlaneseq
          %v2507 = vshrl.u32 %v2506, 7
          %v2508 = vsub.s32 %v2505, %v2507
          %v2509 = vrot.slane %v2487, %v2508
          %v2511 = vunpack.c.l.s4 1966171168
          %v2512 = vunpack.c.0.s8 %v2511
          %v2513 = vlaneseq
          %v2514 = vshrl.u32 %v2513, 7
          %v2515 = vsub.s32 %v2512, %v2514
          %v2516 = vrot.slane %v2488, %v2515
          %v2517 = vcombine.low %v2495, %v2502
          %v2518 = vcombine.low %v2509, %v2516
          %v2520 = vunpack.c.l.s4 1966171168
          %v2521 = vunpack.c.0.s8 %v2520
          %v2522 = vlaneseq
          %v2523 = vshrl.u32 %v2522, 7
          %v2524 = vsub.s32 %v2521, %v2523
          %v2525 = vrot.slane %v2517, %v2524
          %v2527 = vunpack.c.l.s4 1966171168
          %v2528 = vunpack.c.0.s8 %v2527
          %v2529 = vlaneseq
          %v2530 = vshrl.u32 %v2529, 7
          %v2531 = vsub.s32 %v2528, %v2530
          %v2532 = vrot.slane %v2518, %v2531
          %v2533 = vcombine.low %v2525, %v2532
          %v2534 = vcombine.low %v2304, %v2312
          %v2535 = vcombine.low %v2314, %v2297
          %v2536 = vcombine.low %v2311, %v2313
          %v2538 = vunpack.c.l.s4 1966171168
          %v2539 = vunpack.c.0.s8 %v2538
          %v2540 = vlaneseq
          %v2541 = vshrl.u32 %v2540, 7
          %v2542 = vsub.s32 %v2539, %v2541
          %v2543 = vrot.slane %v2534, %v2542
          %v2545 = vunpack.c.l.s4 1966171168
          %v2546 = vunpack.c.0.s8 %v2545
          %v2547 = vlaneseq
          %v2548 = vshrl.u32 %v2547, 7
          %v2549 = vsub.s32 %v2546, %v2548
          %v2550 = vrot.slane %v2535, %v2549
          %v2552 = vunpack.c.l.s4 1966171168
          %v2553 = vunpack.c.0.s8 %v2552
          %v2554 = vlaneseq
          %v2555 = vshrl.u32 %v2554, 7
          %v2556 = vsub.s32 %v2553, %v2555
          %v2557 = vrot.slane %v2536, %v2556
          %v2558 = vcombine.low %v2543, %v2550
          %v2560 = vunpack.c.l.s4 1966171168
          %v2561 = vunpack.c.0.s8 %v2560
          %v2562 = vlaneseq
          %v2563 = vshrl.u32 %v2562, 7
          %v2564 = vsub.s32 %v2561, %v2563
          %v2565 = vrot.slane %v2558, %v2564
          %v2567 = vunpack.c.l.s4 1966171168
          %v2568 = vunpack.c.0.s8 %v2567
          %v2569 = vlaneseq
          %v2570 = vshrl.u32 %v2569, 7
          %v2571 = vsub.s32 %v2568, %v2570
          %v2572 = vrot.slane %v2557, %v2571
          %v2573 = vcombine.low %v2565, %v2572
          %v2574 = vsel %vm1063, %v2533, 0
          %v2576 = vsel %vm1063, %v2573, 0
          %2578 = vmatprep.subr.mxu0 0.0
          %2579 = vmatpush1.msra.mxu0 %v2185
          %2580 = vmatprep.subr.mxu0 0.0
          %2581 = vmatpush1.msra.mxu0 %v2186
          %2582 = vmatprep.subr.mxu0 0.0
          %2583 = vmatpush1.msra.mxu0 %v2187
          %2584 = vmatprep.subr.mxu0 0.0
          %2585 = vmatpush1.msra.mxu0 %v2188
          %2586 = vmatprep.subr.mxu0 0.0
          %2587 = vmatpush1.msra.mxu0 %v2189
          %2588 = vmatprep.subr.mxu0 0.0
          %2589 = vmatpush1.msra.mxu0 %v2190
          %2590 = vmatprep.subr.mxu0 0.0
          %2591 = vmatpush1.msra.mxu0 %v2191
          %2592 = vmatprep.subr.mxu0 0.0
          %2593 = vmatpush1.msra.mxu0 %v2192
          %2594 = vmatprep.subr.mxu0 0.0
          %2595 = vmatpush1.msra.mxu0 0.0
          %2596 = vmatprep.subr.mxu0 0.0
          %2597 = vmatpush1.msra.mxu0 0.0
          %2598 = vmatprep.subr.mxu0 0.0
          %2599 = vmatpush1.msra.mxu0 0.0
          %2600 = vmatprep.subr.mxu0 0.0
          %2601 = vmatpush1.msra.mxu0 0.0
          %2602 = vmatprep.subr.mxu0 0.0
          %2603 = vmatpush1.msra.mxu0 0.0
          %2604 = vmatprep.subr.mxu0 0.0
          %2605 = vmatpush1.msra.mxu0 0.0
          %2606 = vmatprep.subr.mxu0 0.0
          %2607 = vmatpush1.msra.mxu0 0.0
          %2608 = vmatprep.subr.mxu0 0.0
          %2609 = vmatpush1.msra.mxu0 0.0
          %2610 = vmatprep.subr.mxu0 0.0
          %2611 = vmatpush1.msra.mxu0 0.0
          %2612 = vmatprep.subr.mxu0 0.0
          %2613 = vmatpush1.msra.mxu0 0.0
          %2614 = vmatprep.subr.mxu0 0.0
          %2615 = vmatpush1.msra.mxu0 0.0
          %2616 = vmatprep.subr.mxu0 0.0
          %2617 = vmatpush1.msra.mxu0 0.0
          %2618 = vmatprep.subr.mxu0 0.0
          %2619 = vmatpush1.msra.mxu0 0.0
          %2620 = vmatprep.subr.mxu0 0.0
          %2621 = vmatpush1.msra.mxu0 0.0
          %2622 = vmatprep.subr.mxu0 0.0
          %2623 = vmatpush1.msra.mxu0 0.0
          %2624 = vmatprep.subr.mxu0 0.0
          %2625 = vmatpush1.msra.mxu0 0.0
          %2626 = vmatprep.subr.mxu0 0.0
          %2627 = vmatpush1.msra.mxu0 0.0
          %2628 = vmatprep.subr.mxu0 0.0
          %2629 = vmatpush1.msra.mxu0 0.0
          %2630 = vmatprep.subr.mxu0 0.0
          %2631 = vmatpush1.msra.mxu0 0.0
          %2632 = vmatprep.subr.mxu0 0.0
          %2633 = vmatpush1.msra.mxu0 0.0
          %2634 = vmatprep.subr.mxu0 0.0
          %2635 = vmatpush1.msra.mxu0 0.0
          %2636 = vmatprep.subr.mxu0 0.0
          %2637 = vmatpush1.msra.mxu0 0.0
          %2638 = vmatprep.subr.mxu0 0.0
          %2639 = vmatpush1.msra.mxu0 0.0
          %2640 = vmatprep.subr.mxu0 0.0
          %2641 = vmatpush1.msra.mxu0 0.0
          %2642 = vmatprep.mubr.f32.mxu0 0.0
          %2643 = vmatmul.mubr.f32.gmra.mrb[0].mxu0 %v2574
          %v2644 = vpop.f32.mrb[0].mxu0
          %v2645 = vadd.f32 %v2477, %v2644
          %v2646 = vpop.f32.mrb[0].mxu0
          %2647 = vmatprep.mubr.f32.mxu0 0.0
          %2648 = vmatmul.mubr.f32.gmra.mrb[0].mxu0 %v2576
          %v2649 = vpop.f32.mrb[0].mxu0
          %v2650 = vadd.f32 %v2482, %v2649
          %v2651 = vpop.f32.mrb[0].mxu0
          %2652 = vdwg.mxu0
          %v2655 = vunpack.c.l.s4 1966171168
          %v2656 = vunpack.c.0.s8 %v2655
          %v2657 = vlaneseq
          %v2658 = vshrl.u32 %v2657, 7
          %v2659 = vsub.s32 %v2656, %v2658
          %v2660 = vrot.slane 0.0, %v2659
          %v2662 = vunpack.c.l.s4 1966171168
          %v2663 = vunpack.c.0.s8 %v2662
          %v2664 = vlaneseq
          %v2665 = vshrl.u32 %v2664, 7
          %v2666 = vsub.s32 %v2663, %v2665
          %v2667 = vrot.slane %v2660, %v2666
          %v2668 = vcombine.low %v2265, %v2315
          %v2669 = vcombine.low %v2667, %v2312
          %v2671 = vunpack.c.l.s4 1966171168
          %v2672 = vunpack.c.0.s8 %v2671
          %v2673 = vlaneseq
          %v2674 = vshrl.u32 %v2673, 7
          %v2675 = vsub.s32 %v2672, %v2674
          %v2676 = vrot.slane %v2668, %v2675
          %v2678 = vunpack.c.l.s4 1966171168
          %v2679 = vunpack.c.0.s8 %v2678
          %v2680 = vlaneseq
          %v2681 = vshrl.u32 %v2680, 7
          %v2682 = vsub.s32 %v2679, %v2681
          %v2683 = vrot.slane %v2669, %v2682
          %v2684 = vcombine.low %v2502, %v2509
          %v2685 = vcombine.low %v2676, %v2683
          %v2687 = vunpack.c.l.s4 1966171168
          %v2688 = vunpack.c.0.s8 %v2687
          %v2689 = vlaneseq
          %v2690 = vshrl.u32 %v2689, 7
          %v2691 = vsub.s32 %v2688, %v2690
          %v2692 = vrot.slane %v2684, %v2691
          %v2694 = vunpack.c.l.s4 1966171168
          %v2695 = vunpack.c.0.s8 %v2694
          %v2696 = vlaneseq
          %v2697 = vshrl.u32 %v2696, 7
          %v2698 = vsub.s32 %v2695, %v2697
          %v2699 = vrot.slane %v2685, %v2698
          %v2700 = vcombine.low %v2692, %v2699
          %v2701 = vcombine.low %v2316, %v2667
          %v2703 = vunpack.c.l.s4 1966171168
          %v2704 = vunpack.c.0.s8 %v2703
          %v2705 = vlaneseq
          %v2706 = vshrl.u32 %v2705, 7
          %v2707 = vsub.s32 %v2704, %v2706
          %v2708 = vrot.slane %v2701, %v2707
          %v2709 = vcombine.low %v2550, %v2557
          %v2711 = vunpack.c.l.s4 1966171168
          %v2712 = vunpack.c.0.s8 %v2711
          %v2713 = vlaneseq
          %v2714 = vshrl.u32 %v2713, 7
          %v2715 = vsub.s32 %v2712, %v2714
          %v2716 = vrot.slane %v2709, %v2715
          %v2718 = vunpack.c.l.s4 1966171168
          %v2719 = vunpack.c.0.s8 %v2718
          %v2720 = vlaneseq
          %v2721 = vshrl.u32 %v2720, 7
          %v2722 = vsub.s32 %v2719, %v2721
          %v2723 = vrot.slane %v2708, %v2722
          %v2724 = vcombine.low %v2716, %v2723
          %v2725 = vsel %vm1063, %v2700, 0
          %v2727 = vsel %vm1063, %v2724, 0
          %2729 = vmatprep.subr.mxu0 0.0
          %2730 = vmatpush1.msra.mxu0 %v2201
          %2731 = vmatprep.subr.mxu0 0.0
          %2732 = vmatpush1.msra.mxu0 %v2202
          %2733 = vmatprep.subr.mxu0 0.0
          %2734 = vmatpush1.msra.mxu0 %v2203
          %2735 = vmatprep.subr.mxu0 0.0
          %2736 = vmatpush1.msra.mxu0 %v2204
          %2737 = vmatprep.subr.mxu0 0.0
          %2738 = vmatpush1.msra.mxu0 %v2205
          %2739 = vmatprep.subr.mxu0 0.0
          %2740 = vmatpush1.msra.mxu0 %v2206
          %2741 = vmatprep.subr.mxu0 0.0
          %2742 = vmatpush1.msra.mxu0 %v2207
          %2743 = vmatprep.subr.mxu0 0.0
          %2744 = vmatpush1.msra.mxu0 %v2208
          %2745 = vmatprep.subr.mxu0 0.0
          %2746 = vmatpush1.msra.mxu0 0.0
          %2747 = vmatprep.subr.mxu0 0.0
          %2748 = vmatpush1.msra.mxu0 0.0
          %2749 = vmatprep.subr.mxu0 0.0
          %2750 = vmatpush1.msra.mxu0 0.0
          %2751 = vmatprep.subr.mxu0 0.0
          %2752 = vmatpush1.msra.mxu0 0.0
          %2753 = vmatprep.subr.mxu0 0.0
          %2754 = vmatpush1.msra.mxu0 0.0
          %2755 = vmatprep.subr.mxu0 0.0
          %2756 = vmatpush1.msra.mxu0 0.0
          %2757 = vmatprep.subr.mxu0 0.0
          %2758 = vmatpush1.msra.mxu0 0.0
          %2759 = vmatprep.subr.mxu0 0.0
          %2760 = vmatpush1.msra.mxu0 0.0
          %2761 = vmatprep.subr.mxu0 0.0
          %2762 = vmatpush1.msra.mxu0 0.0
          %2763 = vmatprep.subr.mxu0 0.0
          %2764 = vmatpush1.msra.mxu0 0.0
          %2765 = vmatprep.subr.mxu0 0.0
          %2766 = vmatpush1.msra.mxu0 0.0
          %2767 = vmatprep.subr.mxu0 0.0
          %2768 = vmatpush1.msra.mxu0 0.0
          %2769 = vmatprep.subr.mxu0 0.0
          %2770 = vmatpush1.msra.mxu0 0.0
          %2771 = vmatprep.subr.mxu0 0.0
          %2772 = vmatpush1.msra.mxu0 0.0
          %2773 = vmatprep.subr.mxu0 0.0
          %2774 = vmatpush1.msra.mxu0 0.0
          %2775 = vmatprep.subr.mxu0 0.0
          %2776 = vmatpush1.msra.mxu0 0.0
          %2777 = vmatprep.subr.mxu0 0.0
          %2778 = vmatpush1.msra.mxu0 0.0
          %2779 = vmatprep.subr.mxu0 0.0
          %2780 = vmatpush1.msra.mxu0 0.0
          %2781 = vmatprep.subr.mxu0 0.0
          %2782 = vmatpush1.msra.mxu0 0.0
          %2783 = vmatprep.subr.mxu0 0.0
          %2784 = vmatpush1.msra.mxu0 0.0
          %2785 = vmatprep.subr.mxu0 0.0
          %2786 = vmatpush1.msra.mxu0 0.0
          %2787 = vmatprep.subr.mxu0 0.0
          %2788 = vmatpush1.msra.mxu0 0.0
          %2789 = vmatprep.subr.mxu0 0.0
          %2790 = vmatpush1.msra.mxu0 0.0
          %2791 = vmatprep.subr.mxu0 0.0
          %2792 = vmatpush1.msra.mxu0 0.0
          %2793 = vmatprep.mubr.f32.mxu0 0.0
          %2794 = vmatmul.mubr.f32.gmra.mrb[0].mxu0 %v2725
          %v2795 = vpop.f32.mrb[0].mxu0
          %v2796 = vadd.f32 0.0, %v2795
          %v2797 = vpop.f32.mrb[0].mxu0
          %2798 = vmatprep.mubr.f32.mxu0 0.0
          %2799 = vmatmul.mubr.f32.gmra.mrb[0].mxu0 %v2727
          %v2800 = vpop.f32.mrb[0].mxu0
          %v2801 = vadd.f32 0.0, %v2800
          %v2802 = vpop.f32.mrb[0].mxu0
          %2803 = vdwg.mxu0
          %v2804 = vadd.f32 %v2645, %v2796
          %v2805 = vadd.f32 %v2650, %v2801
          %v2808 = vcombine.high %v2804, %v2804
          %v2810 = vunpack.c.l.s4 1966171168
          %v2811 = vunpack.c.0.s8 %v2810
          %v2812 = vlaneseq
          %v2813 = vshrl.u32 %v2812, 7
          %v2814 = vsub.s32 %v2811, %v2813
          %v2815 = vrot.slane %v2804, %v2814
          %v2817 = vunpack.c.l.s4 1966171168
          %v2818 = vunpack.c.0.s8 %v2817
          %v2819 = vlaneseq
          %v2820 = vshrl.u32 %v2819, 7
          %v2821 = vsub.s32 %v2818, %v2820
          %v2822 = vrot.slane %v2808, %v2821
          %v2823 = vcombine.high %v2815, %v2815
          %v2824 = vcombine.high %v2822, %v2822
          %v2826 = vunpack.c.l.s4 1966171168
          %v2827 = vunpack.c.0.s8 %v2826
          %v2828 = vlaneseq
          %v2829 = vshrl.u32 %v2828, 7
          %v2830 = vsub.s32 %v2827, %v2829
          %v2831 = vrot.slane %v2815, %v2830
          %v2833 = vunpack.c.l.s4 1966171168
          %v2834 = vunpack.c.0.s8 %v2833
          %v2835 = vlaneseq
          %v2836 = vshrl.u32 %v2835, 7
          %v2837 = vsub.s32 %v2834, %v2836
          %v2838 = vrot.slane %v2822, %v2837
          %v2840 = vunpack.c.l.s4 1966171168
          %v2841 = vunpack.c.0.s8 %v2840
          %v2842 = vlaneseq
          %v2843 = vshrl.u32 %v2842, 7
          %v2844 = vsub.s32 %v2841, %v2843
          %v2845 = vrot.slane %v2823, %v2844
          %v2847 = vunpack.c.l.s4 1966171168
          %v2848 = vunpack.c.0.s8 %v2847
          %v2849 = vlaneseq
          %v2850 = vshrl.u32 %v2849, 7
          %v2851 = vsub.s32 %v2848, %v2850
          %v2852 = vrot.slane %v2824, %v2851
          %v2853 = vcombine.high %v2831, %v2831
          %v2854 = vcombine.high %v2838, %v2838
          %v2855 = vcombine.high %v2845, %v2845
          %v2856 = vcombine.high %v2852, %v2852
          %v2857 = vcombine.high %v2805, %v2805
          %v2859 = vunpack.c.l.s4 1966171168
          %v2860 = vunpack.c.0.s8 %v2859
          %v2861 = vlaneseq
          %v2862 = vshrl.u32 %v2861, 7
          %v2863 = vsub.s32 %v2860, %v2862
          %v2864 = vrot.slane %v2805, %v2863
          %v2866 = vunpack.c.l.s4 1966171168
          %v2867 = vunpack.c.0.s8 %v2866
          %v2868 = vlaneseq
          %v2869 = vshrl.u32 %v2868, 7
          %v2870 = vsub.s32 %v2867, %v2869
          %v2871 = vrot.slane %v2857, %v2870
          %v2872 = vcombine.high %v2864, %v2864
          %v2873 = vcombine.high %v2871, %v2871
          %v2875 = vunpack.c.l.s4 1966171168
          %v2876 = vunpack.c.0.s8 %v2875
          %v2877 = vlaneseq
          %v2878 = vshrl.u32 %v2877, 7
          %v2879 = vsub.s32 %v2876, %v2878
          %v2880 = vrot.slane %v2864, %v2879
          %v2882 = vunpack.c.l.s4 1966171168
          %v2883 = vunpack.c.0.s8 %v2882
          %v2884 = vlaneseq
          %v2885 = vshrl.u32 %v2884, 7
          %v2886 = vsub.s32 %v2883, %v2885
          %v2887 = vrot.slane %v2871, %v2886
          %v2889 = vunpack.c.l.s4 1966171168
          %v2890 = vunpack.c.0.s8 %v2889
          %v2891 = vlaneseq
          %v2892 = vshrl.u32 %v2891, 7
          %v2893 = vsub.s32 %v2890, %v2892
          %v2894 = vrot.slane %v2872, %v2893
          %v2896 = vunpack.c.l.s4 1966171168
          %v2897 = vunpack.c.0.s8 %v2896
          %v2898 = vlaneseq
          %v2899 = vshrl.u32 %v2898, 7
          %v2900 = vsub.s32 %v2897, %v2899
          %v2901 = vrot.slane %v2873, %v2900
          %v2902 = vcombine.high %v2880, %v2880
          %v2903 = vcombine.high %v2894, %v2894
          %v2920 = vcombine.high %v2022, %v2022
          %v2922 = vunpack.c.l.s4 1966171168
          %v2923 = vunpack.c.0.s8 %v2922
          %v2924 = vlaneseq
          %v2925 = vshrl.u32 %v2924, 7
          %v2926 = vsub.s32 %v2923, %v2925
          %v2927 = vrot.slane %v2022, %v2926
          %v2929 = vunpack.c.l.s4 1966171168
          %v2930 = vunpack.c.0.s8 %v2929
          %v2931 = vlaneseq
          %v2932 = vshrl.u32 %v2931, 7
          %v2933 = vsub.s32 %v2930, %v2932
          %v2934 = vrot.slane %v2920, %v2933
          %v2935 = vcombine.high %v2927, %v2927
          %v2936 = vcombine.high %v2934, %v2934
          %v2938 = vunpack.c.l.s4 1966171168
          %v2939 = vunpack.c.0.s8 %v2938
          %v2940 = vlaneseq
          %v2941 = vshrl.u32 %v2940, 7
          %v2942 = vsub.s32 %v2939, %v2941
          %v2943 = vrot.slane %v2927, %v2942
          %v2945 = vunpack.c.l.s4 1966171168
          %v2946 = vunpack.c.0.s8 %v2945
          %v2947 = vlaneseq
          %v2948 = vshrl.u32 %v2947, 7
          %v2949 = vsub.s32 %v2946, %v2948
          %v2950 = vrot.slane %v2934, %v2949
          %v2952 = vunpack.c.l.s4 1966171168
          %v2953 = vunpack.c.0.s8 %v2952
          %v2954 = vlaneseq
          %v2955 = vshrl.u32 %v2954, 7
          %v2956 = vsub.s32 %v2953, %v2955
          %v2957 = vrot.slane %v2935, %v2956
          %v2959 = vunpack.c.l.s4 1966171168
          %v2960 = vunpack.c.0.s8 %v2959
          %v2961 = vlaneseq
          %v2962 = vshrl.u32 %v2961, 7
          %v2963 = vsub.s32 %v2960, %v2962
          %v2964 = vrot.slane %v2936, %v2963
          %v2965 = vcombine.high %v2943, %v2943
          %v2966 = vcombine.high %v2950, %v2950
          %v2967 = vcombine.high %v2957, %v2957
          %v2968 = vcombine.high %v2023, %v2023
          %v2970 = vunpack.c.l.s4 1966171168
          %v2971 = vunpack.c.0.s8 %v2970
          %v2972 = vlaneseq
          %v2973 = vshrl.u32 %v2972, 7
          %v2974 = vsub.s32 %v2971, %v2973
          %v2975 = vrot.slane %v2023, %v2974
          %v2977 = vunpack.c.l.s4 1966171168
          %v2978 = vunpack.c.0.s8 %v2977
          %v2979 = vlaneseq
          %v2980 = vshrl.u32 %v2979, 7
          %v2981 = vsub.s32 %v2978, %v2980
          %v2982 = vrot.slane %v2968, %v2981
          %v2983 = vcombine.high %v2975, %v2975
          %v2984 = vcombine.high %v2982, %v2982
          %v2986 = vunpack.c.l.s4 1966171168
          %v2987 = vunpack.c.0.s8 %v2986
          %v2988 = vlaneseq
          %v2989 = vshrl.u32 %v2988, 7
          %v2990 = vsub.s32 %v2987, %v2989
          %v2991 = vrot.slane %v2975, %v2990
          %v2993 = vunpack.c.l.s4 1966171168
          %v2994 = vunpack.c.0.s8 %v2993
          %v2995 = vlaneseq
          %v2996 = vshrl.u32 %v2995, 7
          %v2997 = vsub.s32 %v2994, %v2996
          %v2998 = vrot.slane %v2982, %v2997
          %v3000 = vunpack.c.l.s4 1966171168
          %v3001 = vunpack.c.0.s8 %v3000
          %v3002 = vlaneseq
          %v3003 = vshrl.u32 %v3002, 7
          %v3004 = vsub.s32 %v3001, %v3003
          %v3005 = vrot.slane %v2983, %v3004
          %v3007 = vunpack.c.l.s4 1966171168
          %v3008 = vunpack.c.0.s8 %v3007
          %v3009 = vlaneseq
          %v3010 = vshrl.u32 %v3009, 7
          %v3011 = vsub.s32 %v3008, %v3010
          %v3012 = vrot.slane %v2984, %v3011
          %v3013 = vcombine.high %v2991, %v2991
          %v3014 = vcombine.high %v2998, %v2998
          %v3015 = vcombine.high %v3005, %v3005
          %3016 = vrot.lane.b32.xlu0 %v2943, 64
          %v3017 = vpop.permute.xlu0 %3016
          %3018 = vrot.lane.b32.xlu0 %v2957, 64
          %v3019 = vpop.permute.xlu0 %3018
          %3020 = vrot.lane.b32.xlu0 %v2965, 64
          %v3021 = vpop.permute.xlu0 %3020
          %3022 = vrot.lane.b32.xlu0 %v2967, 64
          %v3023 = vpop.permute.xlu0 %3022
          %3024 = vrot.lane.b32.xlu0 %v2950, 64
          %v3025 = vpop.permute.xlu0 %3024
          %3026 = vrot.lane.b32.xlu0 %v2964, 64
          %v3027 = vpop.permute.xlu0 %3026
          %3028 = vrot.lane.b32.xlu0 %v2966, 64
          %v3029 = vpop.permute.xlu0 %3028
          %3030 = vrot.lane.b32.xlu0 %v2991, 64
          %v3031 = vpop.permute.xlu0 %3030
          %3032 = vrot.lane.b32.xlu0 %v3005, 64
          %v3033 = vpop.permute.xlu0 %3032
          %3034 = vrot.lane.b32.xlu0 %v3013, 64
          %v3035 = vpop.permute.xlu0 %3034
          %3036 = vrot.lane.b32.xlu0 %v3015, 64
          %v3037 = vpop.permute.xlu0 %3036
          %3038 = vrot.lane.b32.xlu0 %v2998, 64
          %v3039 = vpop.permute.xlu0 %3038
          %3040 = vrot.lane.b32.xlu0 %v3012, 64
          %v3041 = vpop.permute.xlu0 %3040
          %3042 = vrot.lane.b32.xlu0 %v3014, 64
          %v3043 = vpop.permute.xlu0 %3042
          %v3058 = vadd.f32 %v2831, %v3017
          %v3059 = vadd.f32 %v2845, %v3019
          %v3060 = vadd.f32 %v2853, %v3021
          %v3061 = vadd.f32 %v2855, %v3023
          %v3062 = vadd.f32 %v2838, %v3025
          %v3063 = vadd.f32 %v2852, %v3027
          %v3064 = vadd.f32 %v2854, %v3029
          %v3065 = vadd.f32 %v2856, %v3031
          %v3066 = vadd.f32 %v2880, %v3033
          %v3067 = vadd.f32 %v2894, %v3035
          %v3068 = vadd.f32 %v2902, %v3037
          %v3069 = vadd.f32 %v2903, %v3039
          %v3070 = vadd.f32 %v2887, %v3041
          %v3071 = vadd.f32 %v2901, %v3043
          %s3072 = scalar_lea.vmem %s8, 1
          %v3073 = vld [vmem:[%s3072] sm:$0x1]
          %s3074 = scalar_lea.vmem %s9, 1
          %v3075 = vld [vmem:[%s3074] sm:$0x1]
          %v3090 = vcombine.low %v3058, %v3059
          %v3091 = vcombine.low %v3060, %v3061
          %v3092 = vcombine.low %v3062, %v3063
          %v3094 = vunpack.c.l.s4 1966171168
          %v3095 = vunpack.c.0.s8 %v3094
          %v3096 = vlaneseq
          %v3097 = vshrl.u32 %v3096, 7
          %v3098 = vsub.s32 %v3095, %v3097
          %v3099 = vrot.slane %v3090, %v3098
          %v3101 = vunpack.c.l.s4 1966171168
          %v3102 = vunpack.c.0.s8 %v3101
          %v3103 = vlaneseq
          %v3104 = vshrl.u32 %v3103, 7
          %v3105 = vsub.s32 %v3102, %v3104
          %v3106 = vrot.slane %v3091, %v3105
          %v3108 = vunpack.c.l.s4 1966171168
          %v3109 = vunpack.c.0.s8 %v3108
          %v3110 = vlaneseq
          %v3111 = vshrl.u32 %v3110, 7
          %v3112 = vsub.s32 %v3109, %v3111
          %v3113 = vrot.slane %v3092, %v3112
          %v3115 = vunpack.c.l.s4 1966171168
          %v3116 = vunpack.c.0.s8 %v3115
          %v3117 = vlaneseq
          %v3118 = vshrl.u32 %v3117, 7
          %v3119 = vsub.s32 %v3116, %v3118
          %v3120 = vrot.slane %v3064, %v3119
          %v3121 = vcombine.low %v3099, %v3106
          %v3122 = vcombine.low %v3113, %v3120
          %v3124 = vunpack.c.l.s4 1966171168
          %v3125 = vunpack.c.0.s8 %v3124
          %v3126 = vlaneseq
          %v3127 = vshrl.u32 %v3126, 7
          %v3128 = vsub.s32 %v3125, %v3127
          %v3129 = vrot.slane %v3121, %v3128
          %v3131 = vunpack.c.l.s4 1966171168
          %v3132 = vunpack.c.0.s8 %v3131
          %v3133 = vlaneseq
          %v3134 = vshrl.u32 %v3133, 7
          %v3135 = vsub.s32 %v3132, %v3134
          %v3136 = vrot.slane %v3122, %v3135
          %v3137 = vcombine.low %v3129, %v3136
          %v3138 = vcombine.low %v3065, %v3066
          %v3139 = vcombine.low %v3067, %v3068
          %v3140 = vcombine.low %v3069, %v3070
          %v3142 = vunpack.c.l.s4 1966171168
          %v3143 = vunpack.c.0.s8 %v3142
          %v3144 = vlaneseq
          %v3145 = vshrl.u32 %v3144, 7
          %v3146 = vsub.s32 %v3143, %v3145
          %v3147 = vrot.slane %v3138, %v3146
          %v3149 = vunpack.c.l.s4 1966171168
          %v3150 = vunpack.c.0.s8 %v3149
          %v3151 = vlaneseq
          %v3152 = vshrl.u32 %v3151, 7
          %v3153 = vsub.s32 %v3150, %v3152
          %v3154 = vrot.slane %v3139, %v3153
          %v3156 = vunpack.c.l.s4 1966171168
          %v3157 = vunpack.c.0.s8 %v3156
          %v3158 = vlaneseq
          %v3159 = vshrl.u32 %v3158, 7
          %v3160 = vsub.s32 %v3157, %v3159
          %v3161 = vrot.slane %v3140, %v3160
          %v3163 = vunpack.c.l.s4 1966171168
          %v3164 = vunpack.c.0.s8 %v3163
          %v3165 = vlaneseq
          %v3166 = vshrl.u32 %v3165, 7
          %v3167 = vsub.s32 %v3164, %v3166
          %v3168 = vrot.slane %v3071, %v3167
          %v3169 = vcombine.low %v3147, %v3154
          %v3170 = vcombine.low %v3161, %v3168
          %v3172 = vunpack.c.l.s4 1966171168
          %v3173 = vunpack.c.0.s8 %v3172
          %v3174 = vlaneseq
          %v3175 = vshrl.u32 %v3174, 7
          %v3176 = vsub.s32 %v3173, %v3175
          %v3177 = vrot.slane %v3169, %v3176
          %v3179 = vunpack.c.l.s4 1966171168
          %v3180 = vunpack.c.0.s8 %v3179
          %v3181 = vlaneseq
          %v3182 = vshrl.u32 %v3181, 7
          %v3183 = vsub.s32 %v3180, %v3182
          %v3184 = vrot.slane %v3170, %v3183
          %v3185 = vcombine.low %v3177, %v3184
          %v3188 = vsel %vm2026, %v3137, 0.0
          %v3189 = vrot.slane %v3188, 4
          %v3190 = vadd.f32 %v3188, %v3189
          %v3191 = vrot.slane %v3190, 2
          %v3192 = vadd.f32 %v3190, %v3191
          %v3193 = vrot.slane %v3192, 1
          %v3194 = vadd.f32 %v3192, %v3193
          %v3195 = vsel %vm2026, %v3185, 0.0
          %v3196 = vrot.slane %v3195, 4
          %v3197 = vadd.f32 %v3195, %v3196
          %v3198 = vrot.slane %v3197, 2
          %v3199 = vadd.f32 %v3197, %v3198
          %v3200 = vrot.slane %v3199, 1
          %v3201 = vadd.f32 %v3199, %v3200
          %v3202 = vmul.f32 %v3058, %v3058
          %v3203 = vmul.f32 %v3059, %v3059
          %v3204 = vmul.f32 %v3060, %v3060
          %v3205 = vmul.f32 %v3061, %v3061
          %v3206 = vmul.f32 %v3062, %v3062
          %v3207 = vmul.f32 %v3063, %v3063
          %v3208 = vmul.f32 %v3064, %v3064
          %v3209 = vmul.f32 %v3065, %v3065
          %v3210 = vmul.f32 %v3066, %v3066
          %v3211 = vmul.f32 %v3067, %v3067
          %v3212 = vmul.f32 %v3068, %v3068
          %v3213 = vmul.f32 %v3069, %v3069
          %v3214 = vmul.f32 %v3070, %v3070
          %v3215 = vmul.f32 %v3071, %v3071
          %v3230 = vcombine.low %v3202, %v3203
          %v3231 = vcombine.low %v3204, %v3205
          %v3232 = vcombine.low %v3206, %v3207
          %v3234 = vunpack.c.l.s4 1966171168
          %v3235 = vunpack.c.0.s8 %v3234
          %v3236 = vlaneseq
          %v3237 = vshrl.u32 %v3236, 7
          %v3238 = vsub.s32 %v3235, %v3237
          %v3239 = vrot.slane %v3230, %v3238
          %v3241 = vunpack.c.l.s4 1966171168
          %v3242 = vunpack.c.0.s8 %v3241
          %v3243 = vlaneseq
          %v3244 = vshrl.u32 %v3243, 7
          %v3245 = vsub.s32 %v3242, %v3244
          %v3246 = vrot.slane %v3231, %v3245
          %v3248 = vunpack.c.l.s4 1966171168
          %v3249 = vunpack.c.0.s8 %v3248
          %v3250 = vlaneseq
          %v3251 = vshrl.u32 %v3250, 7
          %v3252 = vsub.s32 %v3249, %v3251
          %v3253 = vrot.slane %v3232, %v3252
          %v3255 = vunpack.c.l.s4 1966171168
          %v3256 = vunpack.c.0.s8 %v3255
          %v3257 = vlaneseq
          %v3258 = vshrl.u32 %v3257, 7
          %v3259 = vsub.s32 %v3256, %v3258
          %v3260 = vrot.slane %v3208, %v3259
          %v3261 = vcombine.low %v3239, %v3246
          %v3262 = vcombine.low %v3253, %v3260
          %v3264 = vunpack.c.l.s4 1966171168
          %v3265 = vunpack.c.0.s8 %v3264
          %v3266 = vlaneseq
          %v3267 = vshrl.u32 %v3266, 7
          %v3268 = vsub.s32 %v3265, %v3267
          %v3269 = vrot.slane %v3261, %v3268
          %v3271 = vunpack.c.l.s4 1966171168
          %v3272 = vunpack.c.0.s8 %v3271
          %v3273 = vlaneseq
          %v3274 = vshrl.u32 %v3273, 7
          %v3275 = vsub.s32 %v3272, %v3274
          %v3276 = vrot.slane %v3262, %v3275
          %v3277 = vcombine.low %v3269, %v3276
          %v3278 = vcombine.low %v3209, %v3210
          %v3279 = vcombine.low %v3211, %v3212
          %v3280 = vcombine.low %v3213, %v3214
          %v3282 = vunpack.c.l.s4 1966171168
          %v3283 = vunpack.c.0.s8 %v3282
          %v3284 = vlaneseq
          %v3285 = vshrl.u32 %v3284, 7
          %v3286 = vsub.s32 %v3283, %v3285
          %v3287 = vrot.slane %v3278, %v3286
          %v3289 = vunpack.c.l.s4 1966171168
          %v3290 = vunpack.c.0.s8 %v3289
          %v3291 = vlaneseq
          %v3292 = vshrl.u32 %v3291, 7
          %v3293 = vsub.s32 %v3290, %v3292
          %v3294 = vrot.slane %v3279, %v3293
          %v3296 = vunpack.c.l.s4 1966171168
          %v3297 = vunpack.c.0.s8 %v3296
          %v3298 = vlaneseq
          %v3299 = vshrl.u32 %v3298, 7
          %v3300 = vsub.s32 %v3297, %v3299
          %v3301 = vrot.slane %v3280, %v3300
          %v3303 = vunpack.c.l.s4 1966171168
          %v3304 = vunpack.c.0.s8 %v3303
          %v3305 = vlaneseq
          %v3306 = vshrl.u32 %v3305, 7
          %v3307 = vsub.s32 %v3304, %v3306
          %v3308 = vrot.slane %v3215, %v3307
          %v3309 = vcombine.low %v3287, %v3294
          %v3310 = vcombine.low %v3301, %v3308
          %v3312 = vunpack.c.l.s4 1966171168
          %v3313 = vunpack.c.0.s8 %v3312
          %v3314 = vlaneseq
          %v3315 = vshrl.u32 %v3314, 7
          %v3316 = vsub.s32 %v3313, %v3315
          %v3317 = vrot.slane %v3309, %v3316
          %v3319 = vunpack.c.l.s4 1966171168
          %v3320 = vunpack.c.0.s8 %v3319
          %v3321 = vlaneseq
          %v3322 = vshrl.u32 %v3321, 7
          %v3323 = vsub.s32 %v3320, %v3322
          %v3324 = vrot.slane %v3310, %v3323
          %v3325 = vcombine.low %v3317, %v3324
          %v3328 = vsel %vm2026, %v3277, 0.0
          %v3329 = vrot.slane %v3328, 4
          %v3330 = vadd.f32 %v3328, %v3329
          %v3331 = vrot.slane %v3330, 2
          %v3332 = vadd.f32 %v3330, %v3331
          %v3333 = vrot.slane %v3332, 1
          %v3334 = vadd.f32 %v3332, %v3333
          %v3335 = vsel %vm2026, %v3325, 0.0
          %v3336 = vrot.slane %v3335, 4
          %v3337 = vadd.f32 %v3335, %v3336
          %v3338 = vrot.slane %v3337, 2
          %v3339 = vadd.f32 %v3337, %v3338
          %v3340 = vrot.slane %v3339, 1
          %v3341 = vadd.f32 %v3339, %v3340
          %v3344 = vsel %vm1107, %v3201, %v3194
          %v3348 = vsel %vm1112, %v3341, %v3334
          %v3350 = vsel %vm1115, %v3344, %v3348
          %3352 = vrot.lane.b32.xlu0 %v3350, 127
          %v3353 = vpop.permute.xlu0 %3352
          %3355 = vrot.lane.b32.xlu0 %v3350, 63
          %v3356 = vpop.permute.xlu0 %3355
          %v3358 = vsel %vm1124, %v3353, %v3356
          %3359 = vrot.lane.b32.xlu0 %v3350, 65
          %v3360 = vpop.permute.xlu0 %3359
          %3362 = vrot.lane.b32.xlu0 %v3350, 1
          %v3363 = vpop.permute.xlu0 %3362
          %v3365 = vsel %vm1132, %v3360, %v3363
          %v3366 = vadd.f32 %v3350, %v3358
          %v3367 = vadd.f32 %v3350, %v3365
          %v3368 = vsel %vm1148, %v3366, %v3367
          %v3369 = vmul.f32 %v3368, %v2084
          %v3370 = vmul.f32 %v3369, %v3369
          %v3372 = vrot.slane %v3370, 6
          %v3374 = vsub.f32 %v3369, %v3372
          %v3375 = vmax.f32 %v3374, 0.0
          %v3376 = vadd.f32 %v3375, 1e-05
          %v3377 = vrsqrt.pop %v3376
          %v3379 = vlaneseq
          %v3380 = vshrl.u32 %v3379, 7
          %v3381 = vsub.s32 0, %v3380
          %v3382 = vrot.slane %v3073, %v3381
          %v3384 = vmul.f32 %v3382, %v3377
          %v3386 = vrot.slane %v3384, 2
          %v3388 = vmul.f32 %v3369, %v3386
          %v3390 = vlaneseq
          %v3391 = vshrl.u32 %v3390, 7
          %v3392 = vsub.s32 0, %v3391
          %v3393 = vrot.slane %v3075, %v3392
          %v3395 = vsub.f32 %v3393, %v3388
          %v3397 = vunpack.c.l.s4 1966171168
          %v3398 = vunpack.c.0.s8 %v3397
          %v3399 = vlaneseq
          %v3400 = vshrl.u32 %v3399, 7
          %v3401 = vsub.s32 %v3398, %v3400
          %v3402 = vrot.slane %v3384, %v3401
          %v3403 = vcombine.high %v3402, %v3402
          %v3405 = vunpack.c.l.s4 1966171168
          %v3406 = vunpack.c.0.s8 %v3405
          %v3407 = vlaneseq
          %v3408 = vshrl.u32 %v3407, 7
          %v3409 = vsub.s32 %v3406, %v3408
          %v3410 = vrot.slane %v3402, %v3409
          %v3412 = vunpack.c.l.s4 1966171168
          %v3413 = vunpack.c.0.s8 %v3412
          %v3414 = vlaneseq
          %v3415 = vshrl.u32 %v3414, 7
          %v3416 = vsub.s32 %v3413, %v3415
          %v3417 = vrot.slane %v3403, %v3416
          %v3418 = vcombine.high %v3410, %v3410
          %v3419 = vcombine.high %v3417, %v3417
          %v3420 = vlaneseq
          %v3421 = vshrl.u32 %v3420, 7
          %v3422 = vsub.s32 0, %v3421
          %v3423 = vrot.slane %v3418, %v3422
          %v3424 = vlaneseq
          %v3425 = vshrl.u32 %v3424, 7
          %v3426 = vsub.s32 0, %v3425
          %v3427 = vrot.slane %v3419, %v3426
          %v3428 = vcombine.high %v3423, %v3423
          %v3430 = vunpack.c.l.s4 1966171168
          %v3431 = vunpack.c.0.s8 %v3430
          %v3432 = vlaneseq
          %v3433 = vshrl.u32 %v3432, 7
          %v3434 = vsub.s32 %v3431, %v3433
          %v3435 = vrot.slane %v3423, %v3434
          %v3437 = vunpack.c.l.s4 1966171168
          %v3438 = vunpack.c.0.s8 %v3437
          %v3439 = vlaneseq
          %v3440 = vshrl.u32 %v3439, 7
          %v3441 = vsub.s32 %v3438, %v3440
          %v3442 = vrot.slane %v3428, %v3441
          %v3443 = vcombine.high %v3435, %v3435
          %v3444 = vcombine.high %v3442, %v3442
          %v3446 = vunpack.c.l.s4 1966171168
          %v3447 = vunpack.c.0.s8 %v3446
          %v3448 = vlaneseq
          %v3449 = vshrl.u32 %v3448, 7
          %v3450 = vsub.s32 %v3447, %v3449
          %v3451 = vrot.slane %v3435, %v3450
          %v3453 = vunpack.c.l.s4 1966171168
          %v3454 = vunpack.c.0.s8 %v3453
          %v3455 = vlaneseq
          %v3456 = vshrl.u32 %v3455, 7
          %v3457 = vsub.s32 %v3454, %v3456
          %v3458 = vrot.slane %v3442, %v3457
          %v3460 = vunpack.c.l.s4 1966171168
          %v3461 = vunpack.c.0.s8 %v3460
          %v3462 = vlaneseq
          %v3463 = vshrl.u32 %v3462, 7
          %v3464 = vsub.s32 %v3461, %v3463
          %v3465 = vrot.slane %v3443, %v3464
          %v3467 = vunpack.c.l.s4 1966171168
          %v3468 = vunpack.c.0.s8 %v3467
          %v3469 = vlaneseq
          %v3470 = vshrl.u32 %v3469, 7
          %v3471 = vsub.s32 %v3468, %v3470
          %v3472 = vrot.slane %v3444, %v3471
          %v3473 = vcombine.high %v3451, %v3451
          %v3474 = vcombine.high %v3458, %v3458
          %v3475 = vcombine.high %v3465, %v3465
          %v3476 = vcombine.high %v3427, %v3427
          %v3478 = vunpack.c.l.s4 1966171168
          %v3479 = vunpack.c.0.s8 %v3478
          %v3480 = vlaneseq
          %v3481 = vshrl.u32 %v3480, 7
          %v3482 = vsub.s32 %v3479, %v3481
          %v3483 = vrot.slane %v3427, %v3482
          %v3485 = vunpack.c.l.s4 1966171168
          %v3486 = vunpack.c.0.s8 %v3485
          %v3487 = vlaneseq
          %v3488 = vshrl.u32 %v3487, 7
          %v3489 = vsub.s32 %v3486, %v3488
          %v3490 = vrot.slane %v3476, %v3489
          %v3491 = vcombine.high %v3483, %v3483
          %v3492 = vcombine.high %v3490, %v3490
          %v3494 = vunpack.c.l.s4 1966171168
          %v3495 = vunpack.c.0.s8 %v3494
          %v3496 = vlaneseq
          %v3497 = vshrl.u32 %v3496, 7
          %v3498 = vsub.s32 %v3495, %v3497
          %v3499 = vrot.slane %v3483, %v3498
          %v3501 = vunpack.c.l.s4 1966171168
          %v3502 = vunpack.c.0.s8 %v3501
          %v3503 = vlaneseq
          %v3504 = vshrl.u32 %v3503, 7
          %v3505 = vsub.s32 %v3502, %v3504
          %v3506 = vrot.slane %v3490, %v3505
          %v3508 = vunpack.c.l.s4 1966171168
          %v3509 = vunpack.c.0.s8 %v3508
          %v3510 = vlaneseq
          %v3511 = vshrl.u32 %v3510, 7
          %v3512 = vsub.s32 %v3509, %v3511
          %v3513 = vrot.slane %v3491, %v3512
          %v3515 = vunpack.c.l.s4 1966171168
          %v3516 = vunpack.c.0.s8 %v3515
          %v3517 = vlaneseq
          %v3518 = vshrl.u32 %v3517, 7
          %v3519 = vsub.s32 %v3516, %v3518
          %v3520 = vrot.slane %v3492, %v3519
          %v3521 = vcombine.high %v3499, %v3499
          %v3522 = vcombine.high %v3506, %v3506
          %v3523 = vcombine.high %v3513, %v3513
          %v3538 = vmul.f32 %v3058, %v3451
          %v3539 = vmul.f32 %v3059, %v3465
          %v3540 = vmul.f32 %v3060, %v3473
          %v3541 = vmul.f32 %v3061, %v3475
          %v3542 = vmul.f32 %v3062, %v3458
          %v3543 = vmul.f32 %v3063, %v3472
          %v3544 = vmul.f32 %v3064, %v3474
          %v3545 = vmul.f32 %v3065, %v3499
          %v3546 = vmul.f32 %v3066, %v3513
          %v3547 = vmul.f32 %v3067, %v3521
          %v3548 = vmul.f32 %v3068, %v3523
          %v3549 = vmul.f32 %v3069, %v3506
          %v3550 = vmul.f32 %v3070, %v3520
          %v3551 = vmul.f32 %v3071, %v3522
          %v3554 = vunpack.c.l.s4 1966171168
          %v3555 = vunpack.c.0.s8 %v3554
          %v3556 = vlaneseq
          %v3557 = vshrl.u32 %v3556, 7
          %v3558 = vsub.s32 %v3555, %v3557
          %v3559 = vrot.slane %v3395, %v3558
          %v3560 = vcombine.high %v3559, %v3559
          %v3562 = vunpack.c.l.s4 1966171168
          %v3563 = vunpack.c.0.s8 %v3562
          %v3564 = vlaneseq
          %v3565 = vshrl.u32 %v3564, 7
          %v3566 = vsub.s32 %v3563, %v3565
          %v3567 = vrot.slane %v3559, %v3566
          %v3569 = vunpack.c.l.s4 1966171168
          %v3570 = vunpack.c.0.s8 %v3569
          %v3571 = vlaneseq
          %v3572 = vshrl.u32 %v3571, 7
          %v3573 = vsub.s32 %v3570, %v3572
          %v3574 = vrot.slane %v3560, %v3573
          %v3575 = vlaneseq
          %v3576 = vshrl.u32 %v3575, 7
          %v3577 = vsub.s32 0, %v3576
          %v3578 = vrot.slane %v3567, %v3577
          %v3579 = vlaneseq
          %v3580 = vshrl.u32 %v3579, 7
          %v3581 = vsub.s32 0, %v3580
          %v3582 = vrot.slane %v3574, %v3581
          %v3583 = vcombine.high %v3578, %v3578
          %v3585 = vunpack.c.l.s4 1966171168
          %v3586 = vunpack.c.0.s8 %v3585
          %v3587 = vlaneseq
          %v3588 = vshrl.u32 %v3587, 7
          %v3589 = vsub.s32 %v3586, %v3588
          %v3590 = vrot.slane %v3578, %v3589
          %v3592 = vunpack.c.l.s4 1966171168
          %v3593 = vunpack.c.0.s8 %v3592
          %v3594 = vlaneseq
          %v3595 = vshrl.u32 %v3594, 7
          %v3596 = vsub.s32 %v3593, %v3595
          %v3597 = vrot.slane %v3583, %v3596
          %v3598 = vcombine.high %v3590, %v3590
          %v3599 = vcombine.high %v3597, %v3597
          %v3601 = vunpack.c.l.s4 1966171168
          %v3602 = vunpack.c.0.s8 %v3601
          %v3603 = vlaneseq
          %v3604 = vshrl.u32 %v3603, 7
          %v3605 = vsub.s32 %v3602, %v3604
          %v3606 = vrot.slane %v3590, %v3605
          %v3608 = vunpack.c.l.s4 1966171168
          %v3609 = vunpack.c.0.s8 %v3608
          %v3610 = vlaneseq
          %v3611 = vshrl.u32 %v3610, 7
          %v3612 = vsub.s32 %v3609, %v3611
          %v3613 = vrot.slane %v3597, %v3612
          %v3615 = vunpack.c.l.s4 1966171168
          %v3616 = vunpack.c.0.s8 %v3615
          %v3617 = vlaneseq
          %v3618 = vshrl.u32 %v3617, 7
          %v3619 = vsub.s32 %v3616, %v3618
          %v3620 = vrot.slane %v3598, %v3619
          %v3622 = vunpack.c.l.s4 1966171168
          %v3623 = vunpack.c.0.s8 %v3622
          %v3624 = vlaneseq
          %v3625 = vshrl.u32 %v3624, 7
          %v3626 = vsub.s32 %v3623, %v3625
          %v3627 = vrot.slane %v3599, %v3626
          %v3628 = vcombine.high %v3606, %v3606
          %v3629 = vcombine.high %v3613, %v3613
          %v3630 = vcombine.high %v3620, %v3620
          %v3631 = vcombine.high %v3582, %v3582
          %v3633 = vunpack.c.l.s4 1966171168
          %v3634 = vunpack.c.0.s8 %v3633
          %v3635 = vlaneseq
          %v3636 = vshrl.u32 %v3635, 7
          %v3637 = vsub.s32 %v3634, %v3636
          %v3638 = vrot.slane %v3582, %v3637
          %v3640 = vunpack.c.l.s4 1966171168
          %v3641 = vunpack.c.0.s8 %v3640
          %v3642 = vlaneseq
          %v3643 = vshrl.u32 %v3642, 7
          %v3644 = vsub.s32 %v3641, %v3643
          %v3645 = vrot.slane %v3631, %v3644
          %v3646 = vcombine.high %v3638, %v3638
          %v3647 = vcombine.high %v3645, %v3645
          %v3649 = vunpack.c.l.s4 1966171168
          %v3650 = vunpack.c.0.s8 %v3649
          %v3651 = vlaneseq
          %v3652 = vshrl.u32 %v3651, 7
          %v3653 = vsub.s32 %v3650, %v3652
          %v3654 = vrot.slane %v3638, %v3653
          %v3656 = vunpack.c.l.s4 1966171168
          %v3657 = vunpack.c.0.s8 %v3656
          %v3658 = vlaneseq
          %v3659 = vshrl.u32 %v3658, 7
          %v3660 = vsub.s32 %v3657, %v3659
          %v3661 = vrot.slane %v3645, %v3660
          %v3663 = vunpack.c.l.s4 1966171168
          %v3664 = vunpack.c.0.s8 %v3663
          %v3665 = vlaneseq
          %v3666 = vshrl.u32 %v3665, 7
          %v3667 = vsub.s32 %v3664, %v3666
          %v3668 = vrot.slane %v3646, %v3667
          %v3670 = vunpack.c.l.s4 1966171168
          %v3671 = vunpack.c.0.s8 %v3670
          %v3672 = vlaneseq
          %v3673 = vshrl.u32 %v3672, 7
          %v3674 = vsub.s32 %v3671, %v3673
          %v3675 = vrot.slane %v3647, %v3674
          %v3676 = vcombine.high %v3654, %v3654
          %v3677 = vcombine.high %v3661, %v3661
          %v3678 = vcombine.high %v3668, %v3668
          %v3693 = vadd.f32 %v3538, %v3606
          %v3694 = vadd.f32 %v3539, %v3620
          %v3695 = vadd.f32 %v3540, %v3628
          %v3696 = vadd.f32 %v3541, %v3630
          %v3697 = vadd.f32 %v3542, %v3613
          %v3698 = vadd.f32 %v3543, %v3627
          %v3699 = vadd.f32 %v3544, %v3629
          %v3700 = vadd.f32 %v3545, %v3654
          %v3701 = vadd.f32 %v3546, %v3668
          %v3702 = vadd.f32 %v3547, %v3676
          %v3703 = vadd.f32 %v3548, %v3678
          %v3704 = vadd.f32 %v3549, %v3661
          %v3705 = vadd.f32 %v3550, %v3675
          %v3706 = vadd.f32 %v3551, %v3677
          %v3707 = vmax.f32 %v3693, 0.0
          %v3708 = vmax.f32 %v3694, 0.0
          %v3709 = vmax.f32 %v3695, 0.0
          %v3710 = vmax.f32 %v3696, 0.0
          %v3711 = vmax.f32 %v3697, 0.0
          %v3712 = vmax.f32 %v3698, 0.0
          %v3713 = vmax.f32 %v3699, 0.0
          %v3714 = vmax.f32 %v3700, 0.0
          %v3715 = vmax.f32 %v3701, 0.0
          %v3716 = vmax.f32 %v3702, 0.0
          %v3717 = vmax.f32 %v3703, 0.0
          %v3718 = vmax.f32 %v3704, 0.0
          %v3719 = vmax.f32 %v3705, 0.0
          %v3720 = vmax.f32 %v3706, 0.0
          %s3721 = scalar_lea.vmem [#allocation5], 192
          %v3722 = vld [vmem:[%s3721] sm:$0xff]
          %v3723 = vld [vmem:[%s3721 + $0x8] sm:$0xff]
          %v3724 = vld [vmem:[%s3721 + $0x10] sm:$0xff]
          %v3725 = vld [vmem:[%s3721 + $0x18] sm:$0xff]
          %v3726 = vld [vmem:[%s3721 + $0x20] sm:$0xff]
          %v3727 = vld [vmem:[%s3721 + $0x28] sm:$0xff]
          %v3728 = vld [vmem:[%s3721 + $0x30] sm:$0xff]
          %v3729 = vld [vmem:[%s3721 + $0x38] sm:$0xff]
          %v3730 = vld [vmem:[%s3721 + $0x40] sm:$0xff]
          %v3731 = vld [vmem:[%s3721 + $0x48] sm:$0xff]
          %v3732 = vld [vmem:[%s3721 + $0x50] sm:$0xff]
          %v3733 = vld [vmem:[%s3721 + $0x58] sm:$0xff]
          %v3734 = vld [vmem:[%s3721 + $0x60] sm:$0xff]
          %v3735 = vld [vmem:[%s3721 + $0x68] sm:$0xff]
          %v3736 = vld [vmem:[%s3721 + $0x70] sm:$0xff]
          %v3737 = vld [vmem:[%s3721 + $0x78] sm:$0xff]
          %v3738 = vld [vmem:[%s3721 + $0x80] sm:$0xff]
          %v3739 = vld [vmem:[%s3721 + $0x88] sm:$0xff]
          %v3740 = vld [vmem:[%s3721 + $0x90] sm:$0xff]
          %v3741 = vld [vmem:[%s3721 + $0x98] sm:$0xff]
          %v3742 = vld [vmem:[%s3721 + $0xa0] sm:$0xff]
          %v3743 = vld [vmem:[%s3721 + $0xa8] sm:$0xff]
          %v3744 = vld [vmem:[%s3721 + $0xb0] sm:$0xff]
          %v3745 = vld [vmem:[%s3721 + $0xb8] sm:$0xff]
          %v3760 = vcombine.low %v3707, %v3707
          %v3761 = vcombine.low %v3708, %v3709
          %v3762 = vcombine.low %v3710, %v3711
          %v3763 = vcombine.low %v3712, %v3713
          %v3765 = vunpack.c.l.s4 1966171168
          %v3766 = vunpack.c.0.s8 %v3765
          %v3767 = vlaneseq
          %v3768 = vshrl.u32 %v3767, 7
          %v3769 = vsub.s32 %v3766, %v3768
          %v3770 = vrot.slane %v3760, %v3769
          %v3772 = vunpack.c.l.s4 1966171168
          %v3773 = vunpack.c.0.s8 %v3772
          %v3774 = vlaneseq
          %v3775 = vshrl.u32 %v3774, 7
          %v3776 = vsub.s32 %v3773, %v3775
          %v3777 = vrot.slane %v3761, %v3776
          %v3779 = vunpack.c.l.s4 1966171168
          %v3780 = vunpack.c.0.s8 %v3779
          %v3781 = vlaneseq
          %v3782 = vshrl.u32 %v3781, 7
          %v3783 = vsub.s32 %v3780, %v3782
          %v3784 = vrot.slane %v3762, %v3783
          %v3786 = vunpack.c.l.s4 1966171168
          %v3787 = vunpack.c.0.s8 %v3786
          %v3788 = vlaneseq
          %v3789 = vshrl.u32 %v3788, 7
          %v3790 = vsub.s32 %v3787, %v3789
          %v3791 = vrot.slane %v3763, %v3790
          %v3792 = vcombine.low %v3770, %v3777
          %v3793 = vcombine.low %v3784, %v3791
          %v3795 = vunpack.c.l.s4 1966171168
          %v3796 = vunpack.c.0.s8 %v3795
          %v3797 = vlaneseq
          %v3798 = vshrl.u32 %v3797, 7
          %v3799 = vsub.s32 %v3796, %v3798
          %v3800 = vrot.slane %v3792, %v3799
          %v3802 = vunpack.c.l.s4 1966171168
          %v3803 = vunpack.c.0.s8 %v3802
          %v3804 = vlaneseq
          %v3805 = vshrl.u32 %v3804, 7
          %v3806 = vsub.s32 %v3803, %v3805
          %v3807 = vrot.slane %v3793, %v3806
          %v3808 = vcombine.low %v3800, %v3807
          %v3809 = vcombine.low %v3714, %v3714
          %v3810 = vcombine.low %v3715, %v3716
          %v3811 = vcombine.low %v3717, %v3718
          %v3812 = vcombine.low %v3719, %v3720
          %v3814 = vunpack.c.l.s4 1966171168
          %v3815 = vunpack.c.0.s8 %v3814
          %v3816 = vlaneseq
          %v3817 = vshrl.u32 %v3816, 7
          %v3818 = vsub.s32 %v3815, %v3817
          %v3819 = vrot.slane %v3809, %v3818
          %v3821 = vunpack.c.l.s4 1966171168
          %v3822 = vunpack.c.0.s8 %v3821
          %v3823 = vlaneseq
          %v3824 = vshrl.u32 %v3823, 7
          %v3825 = vsub.s32 %v3822, %v3824
          %v3826 = vrot.slane %v3810, %v3825
          %v3828 = vunpack.c.l.s4 1966171168
          %v3829 = vunpack.c.0.s8 %v3828
          %v3830 = vlaneseq
          %v3831 = vshrl.u32 %v3830, 7
          %v3832 = vsub.s32 %v3829, %v3831
          %v3833 = vrot.slane %v3811, %v3832
          %v3835 = vunpack.c.l.s4 1966171168
          %v3836 = vunpack.c.0.s8 %v3835
          %v3837 = vlaneseq
          %v3838 = vshrl.u32 %v3837, 7
          %v3839 = vsub.s32 %v3836, %v3838
          %v3840 = vrot.slane %v3812, %v3839
          %v3841 = vcombine.low %v3819, %v3826
          %v3842 = vcombine.low %v3833, %v3840
          %v3844 = vunpack.c.l.s4 1966171168
          %v3845 = vunpack.c.0.s8 %v3844
          %v3846 = vlaneseq
          %v3847 = vshrl.u32 %v3846, 7
          %v3848 = vsub.s32 %v3845, %v3847
          %v3849 = vrot.slane %v3841, %v3848
          %v3851 = vunpack.c.l.s4 1966171168
          %v3852 = vunpack.c.0.s8 %v3851
          %v3853 = vlaneseq
          %v3854 = vshrl.u32 %v3853, 7
          %v3855 = vsub.s32 %v3852, %v3854
          %v3856 = vrot.slane %v3842, %v3855
          %v3857 = vcombine.low %v3849, %v3856
          %v3860 = vsel %vm1287, 0.0, %v3808
          %v3861 = vsel %vm1287, 0.0, %v3857
          %v3864 = vrot.slane %v3860, 1
          %v3865 = vrot.slane 0.0, 1
          %v3866 = vsel %vm1015, %v3864, %v3865
          %v3867 = vrot.slane %v3861, 1
          %v3868 = vsel %vm1015, %v3867, %v3865
          %v3869 = vsel %vm1063, %v3866, 0
          %v3871 = vsel %vm1063, %v3868, 0
          %3873 = vmatprep.subr.mxu0 0.0
          %3874 = vmatpush1.msra.mxu0 %v3730
          %3875 = vmatprep.subr.mxu0 0.0
          %3876 = vmatpush1.msra.mxu0 %v3731
          %3877 = vmatprep.subr.mxu0 0.0
          %3878 = vmatpush1.msra.mxu0 %v3732
          %3879 = vmatprep.subr.mxu0 0.0
          %3880 = vmatpush1.msra.mxu0 %v3733
          %3881 = vmatprep.subr.mxu0 0.0
          %3882 = vmatpush1.msra.mxu0 %v3734
          %3883 = vmatprep.subr.mxu0 0.0
          %3884 = vmatpush1.msra.mxu0 %v3735
          %3885 = vmatprep.subr.mxu0 0.0
          %3886 = vmatpush1.msra.mxu0 %v3736
          %3887 = vmatprep.subr.mxu0 0.0
          %3888 = vmatpush1.msra.mxu0 %v3737
          %3889 = vmatprep.subr.mxu0 0.0
          %3890 = vmatpush1.msra.mxu0 0.0
          %3891 = vmatprep.subr.mxu0 0.0
          %3892 = vmatpush1.msra.mxu0 0.0
          %3893 = vmatprep.subr.mxu0 0.0
          %3894 = vmatpush1.msra.mxu0 0.0
          %3895 = vmatprep.subr.mxu0 0.0
          %3896 = vmatpush1.msra.mxu0 0.0
          %3897 = vmatprep.subr.mxu0 0.0
          %3898 = vmatpush1.msra.mxu0 0.0
          %3899 = vmatprep.subr.mxu0 0.0
          %3900 = vmatpush1.msra.mxu0 0.0
          %3901 = vmatprep.subr.mxu0 0.0
          %3902 = vmatpush1.msra.mxu0 0.0
          %3903 = vmatprep.subr.mxu0 0.0
          %3904 = vmatpush1.msra.mxu0 0.0
          %3905 = vmatprep.subr.mxu0 0.0
          %3906 = vmatpush1.msra.mxu0 0.0
          %3907 = vmatprep.subr.mxu0 0.0
          %3908 = vmatpush1.msra.mxu0 0.0
          %3909 = vmatprep.subr.mxu0 0.0
          %3910 = vmatpush1.msra.mxu0 0.0
          %3911 = vmatprep.subr.mxu0 0.0
          %3912 = vmatpush1.msra.mxu0 0.0
          %3913 = vmatprep.subr.mxu0 0.0
          %3914 = vmatpush1.msra.mxu0 0.0
          %3915 = vmatprep.subr.mxu0 0.0
          %3916 = vmatpush1.msra.mxu0 0.0
          %3917 = vmatprep.subr.mxu0 0.0
          %3918 = vmatpush1.msra.mxu0 0.0
          %3919 = vmatprep.subr.mxu0 0.0
          %3920 = vmatpush1.msra.mxu0 0.0
          %3921 = vmatprep.subr.mxu0 0.0
          %3922 = vmatpush1.msra.mxu0 0.0
          %3923 = vmatprep.subr.mxu0 0.0
          %3924 = vmatpush1.msra.mxu0 0.0
          %3925 = vmatprep.subr.mxu0 0.0
          %3926 = vmatpush1.msra.mxu0 0.0
          %3927 = vmatprep.subr.mxu0 0.0
          %3928 = vmatpush1.msra.mxu0 0.0
          %3929 = vmatprep.subr.mxu0 0.0
          %3930 = vmatpush1.msra.mxu0 0.0
          %3931 = vmatprep.subr.mxu0 0.0
          %3932 = vmatpush1.msra.mxu0 0.0
          %3933 = vmatprep.subr.mxu0 0.0
          %3934 = vmatpush1.msra.mxu0 0.0
          %3935 = vmatprep.subr.mxu0 0.0
          %3936 = vmatpush1.msra.mxu0 0.0
          %3937 = vmatprep.mubr.f32.mxu0 0.0
          %3938 = vmatmul.mubr.f32.gmra.mrb[0].mxu0 %v3869
          %v3939 = vpop.f32.mrb[0].mxu0
          %v3940 = vadd.f32 0.0, %v3939
          %v3941 = vpop.f32.mrb[0].mxu0
          %3942 = vmatprep.mubr.f32.mxu0 0.0
          %3943 = vmatmul.mubr.f32.gmra.mrb[0].mxu0 %v3871
          %v3944 = vpop.f32.mrb[0].mxu0
          %v3945 = vadd.f32 0.0, %v3944
          %v3946 = vpop.f32.mrb[0].mxu0
          %3947 = vdwg.mxu0
          %v3948 = vsel %vm1063, %v3860, 0
          %v3950 = vsel %vm1063, %v3861, 0
          %3952 = vmatprep.subr.mxu0 0.0
          %3953 = vmatpush1.msra.mxu0 %v3722
          %3954 = vmatprep.subr.mxu0 0.0
          %3955 = vmatpush1.msra.mxu0 %v3723
          %3956 = vmatprep.subr.mxu0 0.0
          %3957 = vmatpush1.msra.mxu0 %v3724
          %3958 = vmatprep.subr.mxu0 0.0
          %3959 = vmatpush1.msra.mxu0 %v3725
          %3960 = vmatprep.subr.mxu0 0.0
          %3961 = vmatpush1.msra.mxu0 %v3726
          %3962 = vmatprep.subr.mxu0 0.0
          %3963 = vmatpush1.msra.mxu0 %v3727
          %3964 = vmatprep.subr.mxu0 0.0
          %3965 = vmatpush1.msra.mxu0 %v3728
          %3966 = vmatprep.subr.mxu0 0.0
          %3967 = vmatpush1.msra.mxu0 %v3729
          %3968 = vmatprep.subr.mxu0 0.0
          %3969 = vmatpush1.msra.mxu0 0.0
          %3970 = vmatprep.subr.mxu0 0.0
          %3971 = vmatpush1.msra.mxu0 0.0
          %3972 = vmatprep.subr.mxu0 0.0
          %3973 = vmatpush1.msra.mxu0 0.0
          %3974 = vmatprep.subr.mxu0 0.0
          %3975 = vmatpush1.msra.mxu0 0.0
          %3976 = vmatprep.subr.mxu0 0.0
          %3977 = vmatpush1.msra.mxu0 0.0
          %3978 = vmatprep.subr.mxu0 0.0
          %3979 = vmatpush1.msra.mxu0 0.0
          %3980 = vmatprep.subr.mxu0 0.0
          %3981 = vmatpush1.msra.mxu0 0.0
          %3982 = vmatprep.subr.mxu0 0.0
          %3983 = vmatpush1.msra.mxu0 0.0
          %3984 = vmatprep.subr.mxu0 0.0
          %3985 = vmatpush1.msra.mxu0 0.0
          %3986 = vmatprep.subr.mxu0 0.0
          %3987 = vmatpush1.msra.mxu0 0.0
          %3988 = vmatprep.subr.mxu0 0.0
          %3989 = vmatpush1.msra.mxu0 0.0
          %3990 = vmatprep.subr.mxu0 0.0
          %3991 = vmatpush1.msra.mxu0 0.0
          %3992 = vmatprep.subr.mxu0 0.0
          %3993 = vmatpush1.msra.mxu0 0.0
          %3994 = vmatprep.subr.mxu0 0.0
          %3995 = vmatpush1.msra.mxu0 0.0
          %3996 = vmatprep.subr.mxu0 0.0
          %3997 = vmatpush1.msra.mxu0 0.0
          %3998 = vmatprep.subr.mxu0 0.0
          %3999 = vmatpush1.msra.mxu0 0.0
          %4000 = vmatprep.subr.mxu0 0.0
          %4001 = vmatpush1.msra.mxu0 0.0
          %4002 = vmatprep.subr.mxu0 0.0
          %4003 = vmatpush1.msra.mxu0 0.0
          %4004 = vmatprep.subr.mxu0 0.0
          %4005 = vmatpush1.msra.mxu0 0.0
          %4006 = vmatprep.subr.mxu0 0.0
          %4007 = vmatpush1.msra.mxu0 0.0
          %4008 = vmatprep.subr.mxu0 0.0
          %4009 = vmatpush1.msra.mxu0 0.0
          %4010 = vmatprep.subr.mxu0 0.0
          %4011 = vmatpush1.msra.mxu0 0.0
          %4012 = vmatprep.subr.mxu0 0.0
          %4013 = vmatpush1.msra.mxu0 0.0
          %4014 = vmatprep.subr.mxu0 0.0
          %4015 = vmatpush1.msra.mxu0 0.0
          %4016 = vmatprep.mubr.f32.mxu0 0.0
          %4017 = vmatmul.mubr.f32.gmra.mrb[0].mxu0 %v3948
          %v4018 = vpop.f32.mrb[0].mxu0
          %v4019 = vadd.f32 %v3940, %v4018
          %v4020 = vpop.f32.mrb[0].mxu0
          %4021 = vmatprep.mubr.f32.mxu0 0.0
          %4022 = vmatmul.mubr.f32.gmra.mrb[0].mxu0 %v3950
          %v4023 = vpop.f32.mrb[0].mxu0
          %v4024 = vadd.f32 %v3945, %v4023
          %v4025 = vpop.f32.mrb[0].mxu0
          %4026 = vdwg.mxu0
          %v4027 = vrot.slane %v3860, 2
          %v4028 = vrot.slane 0.0, 2
          %v4029 = vsel %vm1046, %v4027, %v4028
          %v4030 = vrot.slane %v3861, 2
          %v4031 = vsel %vm1046, %v4030, %v4028
          %v4032 = vsel %vm1063, %v4029, 0
          %v4034 = vsel %vm1063, %v4031, 0
          %4036 = vmatprep.subr.mxu0 0.0
          %4037 = vmatpush1.msra.mxu0 %v3738
          %4038 = vmatprep.subr.mxu0 0.0
          %4039 = vmatpush1.msra.mxu0 %v3739
          %4040 = vmatprep.subr.mxu0 0.0
          %4041 = vmatpush1.msra.mxu0 %v3740
          %4042 = vmatprep.subr.mxu0 0.0
          %4043 = vmatpush1.msra.mxu0 %v3741
          %4044 = vmatprep.subr.mxu0 0.0
          %4045 = vmatpush1.msra.mxu0 %v3742
          %4046 = vmatprep.subr.mxu0 0.0
          %4047 = vmatpush1.msra.mxu0 %v3743
          %4048 = vmatprep.subr.mxu0 0.0
          %4049 = vmatpush1.msra.mxu0 %v3744
          %4050 = vmatprep.subr.mxu0 0.0
          %4051 = vmatpush1.msra.mxu0 %v3745
          %4052 = vmatprep.subr.mxu0 0.0
          %4053 = vmatpush1.msra.mxu0 0.0
          %4054 = vmatprep.subr.mxu0 0.0
          %4055 = vmatpush1.msra.mxu0 0.0
          %4056 = vmatprep.subr.mxu0 0.0
          %4057 = vmatpush1.msra.mxu0 0.0
          %4058 = vmatprep.subr.mxu0 0.0
          %4059 = vmatpush1.msra.mxu0 0.0
          %4060 = vmatprep.subr.mxu0 0.0
          %4061 = vmatpush1.msra.mxu0 0.0
          %4062 = vmatprep.subr.mxu0 0.0
          %4063 = vmatpush1.msra.mxu0 0.0
          %4064 = vmatprep.subr.mxu0 0.0
          %4065 = vmatpush1.msra.mxu0 0.0
          %4066 = vmatprep.subr.mxu0 0.0
          %4067 = vmatpush1.msra.mxu0 0.0
          %4068 = vmatprep.subr.mxu0 0.0
          %4069 = vmatpush1.msra.mxu0 0.0
          %4070 = vmatprep.subr.mxu0 0.0
          %4071 = vmatpush1.msra.mxu0 0.0
          %4072 = vmatprep.subr.mxu0 0.0
          %4073 = vmatpush1.msra.mxu0 0.0
          %4074 = vmatprep.subr.mxu0 0.0
          %4075 = vmatpush1.msra.mxu0 0.0
          %4076 = vmatprep.subr.mxu0 0.0
          %4077 = vmatpush1.msra.mxu0 0.0
          %4078 = vmatprep.subr.mxu0 0.0
          %4079 = vmatpush1.msra.mxu0 0.0
          %4080 = vmatprep.subr.mxu0 0.0
          %4081 = vmatpush1.msra.mxu0 0.0
          %4082 = vmatprep.subr.mxu0 0.0
          %4083 = vmatpush1.msra.mxu0 0.0
          %4084 = vmatprep.subr.mxu0 0.0
          %4085 = vmatpush1.msra.mxu0 0.0
          %4086 = vmatprep.subr.mxu0 0.0
          %4087 = vmatpush1.msra.mxu0 0.0
          %4088 = vmatprep.subr.mxu0 0.0
          %4089 = vmatpush1.msra.mxu0 0.0
          %4090 = vmatprep.subr.mxu0 0.0
          %4091 = vmatpush1.msra.mxu0 0.0
          %4092 = vmatprep.subr.mxu0 0.0
          %4093 = vmatpush1.msra.mxu0 0.0
          %4094 = vmatprep.subr.mxu0 0.0
          %4095 = vmatpush1.msra.mxu0 0.0
          %4096 = vmatprep.subr.mxu0 0.0
          %4097 = vmatpush1.msra.mxu0 0.0
          %4098 = vmatprep.subr.mxu0 0.0
          %4099 = vmatpush1.msra.mxu0 0.0
          %4100 = vmatprep.mubr.f32.mxu0 0.0
          %4101 = vmatmul.mubr.f32.gmra.mrb[0].mxu0 %v4032
          %v4102 = vpop.f32.mrb[0].mxu0
          %v4103 = vadd.f32 0.0, %v4102
          %v4104 = vpop.f32.mrb[0].mxu0
          %4105 = vmatprep.mubr.f32.mxu0 0.0
          %4106 = vmatmul.mubr.f32.gmra.mrb[0].mxu0 %v4034
          %v4107 = vpop.f32.mrb[0].mxu0
          %v4108 = vadd.f32 0.0, %v4107
          %v4109 = vpop.f32.mrb[0].mxu0
          %4110 = vdwg.mxu0
          %v4111 = vadd.f32 %v4019, %v4103
          %v4112 = vadd.f32 %v4024, %v4108
          %v4115 = vrot.slane %v4111, 1
          %v4116 = vrot.slane %v4112, 1
          %v4119 = vrot.slane %v4111, 2
          %v4120 = vrot.slane %v4112, 2
          %v4123 = vrot.slane %v4111, 3
          %v4124 = vrot.slane %v4112, 3
          %v4127 = vsel %vm1287, %v4111, %v4115
          %v4128 = vsel %vm1287, %v4112, %v4116
          %v4129 = vsel %vm1115, %v4127, %v4119
          %v4130 = vsel %vm1115, %v4128, %v4120
          %v4131 = vsel %vm2013, %v4129, %v4123
          %v4132 = vsel %vm2013, %v4130, %v4124
          %s4133 = scalar_lea.vmem %s10, 1
          %v4134 = vld [vmem:[%s4133] sm:$0x1]
          %s4135 = scalar_lea.vmem %s11, 1
          %v4136 = vld [vmem:[%s4135] sm:$0x1]
          %vm4137 = vcmask 519168
          %v4138 = vsel %vm4137, %v4131, 0.0
          %v4139 = vrot.slane %v4138, 4
          %v4140 = vadd.f32 %v4138, %v4139
          %v4141 = vrot.slane %v4140, 2
          %v4142 = vadd.f32 %v4140, %v4141
          %v4143 = vrot.slane %v4142, 1
          %v4144 = vadd.f32 %v4142, %v4143
          %v4145 = vsel %vm4137, %v4132, 0.0
          %v4146 = vrot.slane %v4145, 4
          %v4147 = vadd.f32 %v4145, %v4146
          %v4148 = vrot.slane %v4147, 2
          %v4149 = vadd.f32 %v4147, %v4148
          %v4150 = vrot.slane %v4149, 1
          %v4151 = vadd.f32 %v4149, %v4150
          %v4152 = vmul.f32 %v4131, %v4131
          %v4153 = vmul.f32 %v4132, %v4132
          %v4154 = vsel %vm4137, %v4152, 0.0
          %v4155 = vrot.slane %v4154, 4
          %v4156 = vadd.f32 %v4154, %v4155
          %v4157 = vrot.slane %v4156, 2
          %v4158 = vadd.f32 %v4156, %v4157
          %v4159 = vrot.slane %v4158, 1
          %v4160 = vadd.f32 %v4158, %v4159
          %v4161 = vsel %vm4137, %v4153, 0.0
          %v4162 = vrot.slane %v4161, 4
          %v4163 = vadd.f32 %v4161, %v4162
          %v4164 = vrot.slane %v4163, 2
          %v4165 = vadd.f32 %v4163, %v4164
          %v4166 = vrot.slane %v4165, 1
          %v4167 = vadd.f32 %v4165, %v4166
          %v4170 = vsel %vm1107, %v4151, %v4144
          %v4174 = vsel %vm1112, %v4167, %v4160
          %v4176 = vsel %vm1115, %v4170, %v4174
          %4178 = vrot.lane.b32.xlu0 %v4176, 127
          %v4179 = vpop.permute.xlu0 %4178
          %4181 = vrot.lane.b32.xlu0 %v4176, 63
          %v4182 = vpop.permute.xlu0 %4181
          %v4184 = vsel %vm1124, %v4179, %v4182
          %4185 = vrot.lane.b32.xlu0 %v4176, 65
          %v4186 = vpop.permute.xlu0 %4185
          %4188 = vrot.lane.b32.xlu0 %v4176, 1
          %v4189 = vpop.permute.xlu0 %4188
          %v4191 = vsel %vm1132, %v4186, %v4189
          %v4192 = vadd.f32 %v4176, %v4184
          %v4193 = vadd.f32 %v4176, %v4191
          %v4194 = vsel %vm1148, %v4192, %v4193
          %v4195 = vrcp.pop 8.0
          %v4196 = vmul.f32 %v4194, %v4195
          %v4197 = vmul.f32 %v4196, %v4196
          %v4199 = vrot.slane %v4197, 6
          %v4201 = vsub.f32 %v4196, %v4199
          %v4202 = vmax.f32 %v4201, 0.0
          %v4203 = vadd.f32 %v4202, 1e-05
          %v4204 = vrsqrt.pop %v4203
          %v4206 = vlaneseq
          %v4207 = vshrl.u32 %v4206, 7
          %v4208 = vsub.s32 0, %v4207
          %v4209 = vrot.slane %v4134, %v4208
          %v4211 = vmul.f32 %v4209, %v4204
          %v4213 = vrot.slane %v4211, 2
          %v4215 = vmul.f32 %v4196, %v4213
          %v4217 = vlaneseq
          %v4218 = vshrl.u32 %v4217, 7
          %v4219 = vsub.s32 0, %v4218
          %v4220 = vrot.slane %v4136, %v4219
          %v4222 = vsub.f32 %v4220, %v4215
          %v4224 = vunpack.c.l.s4 1966171168
          %v4225 = vunpack.c.0.s8 %v4224
          %v4226 = vlaneseq
          %v4227 = vshrl.u32 %v4226, 7
          %v4228 = vsub.s32 %v4225, %v4227
          %v4229 = vrot.slane %v4211, %v4228
          %v4230 = vcombine.high %v4229, %v4229
          %v4232 = vunpack.c.l.s4 1966171168
          %v4233 = vunpack.c.0.s8 %v4232
          %v4234 = vlaneseq
          %v4235 = vshrl.u32 %v4234, 7
          %v4236 = vsub.s32 %v4233, %v4235
          %v4237 = vrot.slane %v4229, %v4236
          %v4239 = vunpack.c.l.s4 1966171168
          %v4240 = vunpack.c.0.s8 %v4239
          %v4241 = vlaneseq
          %v4242 = vshrl.u32 %v4241, 7
          %v4243 = vsub.s32 %v4240, %v4242
          %v4244 = vrot.slane %v4230, %v4243
          %v4245 = vcombine.high %v4237, %v4237
          %v4246 = vcombine.high %v4244, %v4244
          %v4247 = vlaneseq
          %v4248 = vshrl.u32 %v4247, 7
          %v4249 = vsub.s32 0, %v4248
          %v4250 = vrot.slane %v4245, %v4249
          %v4251 = vlaneseq
          %v4252 = vshrl.u32 %v4251, 7
          %v4253 = vsub.s32 0, %v4252
          %v4254 = vrot.slane %v4246, %v4253
          %v4257 = vmul.f32 %v4131, %v4250
          %v4258 = vmul.f32 %v4132, %v4254
          %v4261 = vunpack.c.l.s4 1966171168
          %v4262 = vunpack.c.0.s8 %v4261
          %v4263 = vlaneseq
          %v4264 = vshrl.u32 %v4263, 7
          %v4265 = vsub.s32 %v4262, %v4264
          %v4266 = vrot.slane %v4222, %v4265
          %v4267 = vcombine.high %v4266, %v4266
          %v4269 = vunpack.c.l.s4 1966171168
          %v4270 = vunpack.c.0.s8 %v4269
          %v4271 = vlaneseq
          %v4272 = vshrl.u32 %v4271, 7
          %v4273 = vsub.s32 %v4270, %v4272
          %v4274 = vrot.slane %v4266, %v4273
          %v4276 = vunpack.c.l.s4 1966171168
          %v4277 = vunpack.c.0.s8 %v4276
          %v4278 = vlaneseq
          %v4279 = vshrl.u32 %v4278, 7
          %v4280 = vsub.s32 %v4277, %v4279
          %v4281 = vrot.slane %v4267, %v4280
          %v4282 = vlaneseq
          %v4283 = vshrl.u32 %v4282, 7
          %v4284 = vsub.s32 0, %v4283
          %v4285 = vrot.slane %v4274, %v4284
          %v4286 = vlaneseq
          %v4287 = vshrl.u32 %v4286, 7
          %v4288 = vsub.s32 0, %v4287
          %v4289 = vrot.slane %v4281, %v4288
          %v4292 = vadd.f32 %v4257, %v4285
          %v4293 = vadd.f32 %v4258, %v4289
          %v4294 = vmax.f32 %v4292, 0.0
          %v4295 = vmax.f32 %v4293, 0.0
          %s4296 = scalar_lea.vmem [#allocation7], 192
          %v4297 = vld [vmem:[%s4296] sm:$0xff]
          %v4298 = vld [vmem:[%s4296 + $0x8] sm:$0xff]
          %v4299 = vld [vmem:[%s4296 + $0x10] sm:$0xff]
          %v4300 = vld [vmem:[%s4296 + $0x18] sm:$0xff]
          %v4301 = vld [vmem:[%s4296 + $0x20] sm:$0xff]
          %v4302 = vld [vmem:[%s4296 + $0x28] sm:$0xff]
          %v4303 = vld [vmem:[%s4296 + $0x30] sm:$0xff]
          %v4304 = vld [vmem:[%s4296 + $0x38] sm:$0xff]
          %v4305 = vld [vmem:[%s4296 + $0x40] sm:$0xff]
          %v4306 = vld [vmem:[%s4296 + $0x48] sm:$0xff]
          %v4307 = vld [vmem:[%s4296 + $0x50] sm:$0xff]
          %v4308 = vld [vmem:[%s4296 + $0x58] sm:$0xff]
          %v4309 = vld [vmem:[%s4296 + $0x60] sm:$0xff]
          %v4310 = vld [vmem:[%s4296 + $0x68] sm:$0xff]
          %v4311 = vld [vmem:[%s4296 + $0x70] sm:$0xff]
          %v4312 = vld [vmem:[%s4296 + $0x78] sm:$0xff]
          %v4313 = vld [vmem:[%s4296 + $0x80] sm:$0xff]
          %v4314 = vld [vmem:[%s4296 + $0x88] sm:$0xff]
          %v4315 = vld [vmem:[%s4296 + $0x90] sm:$0xff]
          %v4316 = vld [vmem:[%s4296 + $0x98] sm:$0xff]
          %v4317 = vld [vmem:[%s4296 + $0xa0] sm:$0xff]
          %v4318 = vld [vmem:[%s4296 + $0xa8] sm:$0xff]
          %v4319 = vld [vmem:[%s4296 + $0xb0] sm:$0xff]
          %v4320 = vld [vmem:[%s4296 + $0xb8] sm:$0xff]
          %v4323 = vrot.slane %v4294, 7
          %v4324 = vrot.slane %v4295, 7
          %v4327 = vsel %vm1287, 0.0, %v4323
          %v4328 = vsel %vm1287, 0.0, %v4324
          %v4329 = vsel %vm2019, %v4327, 0.0
          %v4330 = vsel %vm2019, %v4328, 0.0
          %v4333 = vcombine.high %v4329, %v4329
          %v4334 = vcombine.high %v4330, %v4330
          %vm4335 = vcmask 1046532
          %vm4336 = vmor %vm2013, %vm4335
          %v4337 = vrot.slane %v4329, 5
          %v4338 = vrot.slane %v4337, 4
          %v4339 = vrot.slane %v4333, 5
          %v4340 = vsel %vm4336, %v4338, %v4339
          %v4341 = vrot.slane %v4330, 5
          %v4342 = vrot.slane %v4341, 4
          %v4343 = vrot.slane %v4334, 5
          %v4344 = vsel %vm4336, %v4342, %v4343
          %v4345 = vcombine.low %v4340, %v4344
          %v4346 = vsel %vm1063, %v4345, 0
          %4348 = vmatprep.subr.mxu0 0.0
          %4349 = vmatpush1.msra.mxu0 %v4305
          %4350 = vmatprep.subr.mxu0 0.0
          %4351 = vmatpush1.msra.mxu0 %v4306
          %4352 = vmatprep.subr.mxu0 0.0
          %4353 = vmatpush1.msra.mxu0 %v4307
          %4354 = vmatprep.subr.mxu0 0.0
          %4355 = vmatpush1.msra.mxu0 %v4308
          %4356 = vmatprep.subr.mxu0 0.0
          %4357 = vmatpush1.msra.mxu0 %v4309
          %4358 = vmatprep.subr.mxu0 0.0
          %4359 = vmatpush1.msra.mxu0 %v4310
          %4360 = vmatprep.subr.mxu0 0.0
          %4361 = vmatpush1.msra.mxu0 %v4311
          %4362 = vmatprep.subr.mxu0 0.0
          %4363 = vmatpush1.msra.mxu0 %v4312
          %4364 = vmatprep.subr.mxu0 0.0
          %4365 = vmatpush1.msra.mxu0 0.0
          %4366 = vmatprep.subr.mxu0 0.0
          %4367 = vmatpush1.msra.mxu0 0.0
          %4368 = vmatprep.subr.mxu0 0.0
          %4369 = vmatpush1.msra.mxu0 0.0
          %4370 = vmatprep.subr.mxu0 0.0
          %4371 = vmatpush1.msra.mxu0 0.0
          %4372 = vmatprep.subr.mxu0 0.0
          %4373 = vmatpush1.msra.mxu0 0.0
          %4374 = vmatprep.subr.mxu0 0.0
          %4375 = vmatpush1.msra.mxu0 0.0
          %4376 = vmatprep.subr.mxu0 0.0
          %4377 = vmatpush1.msra.mxu0 0.0
          %4378 = vmatprep.subr.mxu0 0.0
          %4379 = vmatpush1.msra.mxu0 0.0
          %4380 = vmatprep.subr.mxu0 0.0
          %4381 = vmatpush1.msra.mxu0 0.0
          %4382 = vmatprep.subr.mxu0 0.0
          %4383 = vmatpush1.msra.mxu0 0.0
          %4384 = vmatprep.subr.mxu0 0.0
          %4385 = vmatpush1.msra.mxu0 0.0
          %4386 = vmatprep.subr.mxu0 0.0
          %4387 = vmatpush1.msra.mxu0 0.0
          %4388 = vmatprep.subr.mxu0 0.0
          %4389 = vmatpush1.msra.mxu0 0.0
          %4390 = vmatprep.subr.mxu0 0.0
          %4391 = vmatpush1.msra.mxu0 0.0
          %4392 = vmatprep.subr.mxu0 0.0
          %4393 = vmatpush1.msra.mxu0 0.0
          %4394 = vmatprep.subr.mxu0 0.0
          %4395 = vmatpush1.msra.mxu0 0.0
          %4396 = vmatprep.subr.mxu0 0.0
          %4397 = vmatpush1.msra.mxu0 0.0
          %4398 = vmatprep.subr.mxu0 0.0
          %4399 = vmatpush1.msra.mxu0 0.0
          %4400 = vmatprep.subr.mxu0 0.0
          %4401 = vmatpush1.msra.mxu0 0.0
          %4402 = vmatprep.subr.mxu0 0.0
          %4403 = vmatpush1.msra.mxu0 0.0
          %4404 = vmatprep.subr.mxu0 0.0
          %4405 = vmatpush1.msra.mxu0 0.0
          %4406 = vmatprep.subr.mxu0 0.0
          %4407 = vmatpush1.msra.mxu0 0.0
          %4408 = vmatprep.subr.mxu0 0.0
          %4409 = vmatpush1.msra.mxu0 0.0
          %4410 = vmatprep.subr.mxu0 0.0
          %4411 = vmatpush1.msra.mxu0 0.0
          %4412 = vmatprep.mubr.f32.mxu0 0.0
          %4413 = vmatmul.mubr.f32.gmra.mrb[0].mxu0 %v4346
          %v4414 = vpop.f32.mrb[0].mxu0
          %v4415 = vadd.f32 0.0, %v4414
          %v4416 = vpop.f32.mrb[0].mxu0
          %4417 = vdwg.mxu0
          %v4418 = vcombine.low %v4329, %v4330
          %v4419 = vsel %vm1063, %v4418, 0
          %4421 = vmatprep.subr.mxu0 0.0
          %4422 = vmatpush1.msra.mxu0 %v4297
          %4423 = vmatprep.subr.mxu0 0.0
          %4424 = vmatpush1.msra.mxu0 %v4298
          %4425 = vmatprep.subr.mxu0 0.0
          %4426 = vmatpush1.msra.mxu0 %v4299
          %4427 = vmatprep.subr.mxu0 0.0
          %4428 = vmatpush1.msra.mxu0 %v4300
          %4429 = vmatprep.subr.mxu0 0.0
          %4430 = vmatpush1.msra.mxu0 %v4301
          %4431 = vmatprep.subr.mxu0 0.0
          %4432 = vmatpush1.msra.mxu0 %v4302
          %4433 = vmatprep.subr.mxu0 0.0
          %4434 = vmatpush1.msra.mxu0 %v4303
          %4435 = vmatprep.subr.mxu0 0.0
          %4436 = vmatpush1.msra.mxu0 %v4304
          %4437 = vmatprep.subr.mxu0 0.0
          %4438 = vmatpush1.msra.mxu0 0.0
          %4439 = vmatprep.subr.mxu0 0.0
          %4440 = vmatpush1.msra.mxu0 0.0
          %4441 = vmatprep.subr.mxu0 0.0
          %4442 = vmatpush1.msra.mxu0 0.0
          %4443 = vmatprep.subr.mxu0 0.0
          %4444 = vmatpush1.msra.mxu0 0.0
          %4445 = vmatprep.subr.mxu0 0.0
          %4446 = vmatpush1.msra.mxu0 0.0
          %4447 = vmatprep.subr.mxu0 0.0
          %4448 = vmatpush1.msra.mxu0 0.0
          %4449 = vmatprep.subr.mxu0 0.0
          %4450 = vmatpush1.msra.mxu0 0.0
          %4451 = vmatprep.subr.mxu0 0.0
          %4452 = vmatpush1.msra.mxu0 0.0
          %4453 = vmatprep.subr.mxu0 0.0
          %4454 = vmatpush1.msra.mxu0 0.0
          %4455 = vmatprep.subr.mxu0 0.0
          %4456 = vmatpush1.msra.mxu0 0.0
          %4457 = vmatprep.subr.mxu0 0.0
          %4458 = vmatpush1.msra.mxu0 0.0
          %4459 = vmatprep.subr.mxu0 0.0
          %4460 = vmatpush1.msra.mxu0 0.0
          %4461 = vmatprep.subr.mxu0 0.0
          %4462 = vmatpush1.msra.mxu0 0.0
          %4463 = vmatprep.subr.mxu0 0.0
          %4464 = vmatpush1.msra.mxu0 0.0
          %4465 = vmatprep.subr.mxu0 0.0
          %4466 = vmatpush1.msra.mxu0 0.0
          %4467 = vmatprep.subr.mxu0 0.0
          %4468 = vmatpush1.msra.mxu0 0.0
          %4469 = vmatprep.subr.mxu0 0.0
          %4470 = vmatpush1.msra.mxu0 0.0
          %4471 = vmatprep.subr.mxu0 0.0
          %4472 = vmatpush1.msra.mxu0 0.0
          %4473 = vmatprep.subr.mxu0 0.0
          %4474 = vmatpush1.msra.mxu0 0.0
          %4475 = vmatprep.subr.mxu0 0.0
          %4476 = vmatpush1.msra.mxu0 0.0
          %4477 = vmatprep.subr.mxu0 0.0
          %4478 = vmatpush1.msra.mxu0 0.0
          %4479 = vmatprep.subr.mxu0 0.0
          %4480 = vmatpush1.msra.mxu0 0.0
          %4481 = vmatprep.subr.mxu0 0.0
          %4482 = vmatpush1.msra.mxu0 0.0
          %4483 = vmatprep.subr.mxu0 0.0
          %4484 = vmatpush1.msra.mxu0 0.0
          %4485 = vmatprep.mubr.f32.mxu0 0.0
          %4486 = vmatmul.mubr.f32.gmra.mrb[0].mxu0 %v4419
          %v4487 = vpop.f32.mrb[0].mxu0
          %v4488 = vadd.f32 %v4415, %v4487
          %v4489 = vpop.f32.mrb[0].mxu0
          %4490 = vdwg.mxu0
          %vm4491 = vcmask 1045508
          %vm4492 = vmor %vm1115, %vm4491
          %v4493 = vrot.slane %v4329, 6
          %v4494 = vrot.slane %v4493, 4
          %v4495 = vrot.slane %v4333, 6
          %v4496 = vsel %vm4492, %v4494, %v4495
          %v4497 = vrot.slane %v4330, 6
          %v4498 = vrot.slane %v4497, 4
          %v4499 = vrot.slane %v4334, 6
          %v4500 = vsel %vm4492, %v4498, %v4499
          %v4501 = vcombine.low %v4496, %v4500
          %v4502 = vsel %vm1063, %v4501, 0
          %4504 = vmatprep.subr.mxu0 0.0
          %4505 = vmatpush1.msra.mxu0 %v4313
          %4506 = vmatprep.subr.mxu0 0.0
          %4507 = vmatpush1.msra.mxu0 %v4314
          %4508 = vmatprep.subr.mxu0 0.0
          %4509 = vmatpush1.msra.mxu0 %v4315
          %4510 = vmatprep.subr.mxu0 0.0
          %4511 = vmatpush1.msra.mxu0 %v4316
          %4512 = vmatprep.subr.mxu0 0.0
          %4513 = vmatpush1.msra.mxu0 %v4317
          %4514 = vmatprep.subr.mxu0 0.0
          %4515 = vmatpush1.msra.mxu0 %v4318
          %4516 = vmatprep.subr.mxu0 0.0
          %4517 = vmatpush1.msra.mxu0 %v4319
          %4518 = vmatprep.subr.mxu0 0.0
          %4519 = vmatpush1.msra.mxu0 %v4320
          %4520 = vmatprep.subr.mxu0 0.0
          %4521 = vmatpush1.msra.mxu0 0.0
          %4522 = vmatprep.subr.mxu0 0.0
          %4523 = vmatpush1.msra.mxu0 0.0
          %4524 = vmatprep.subr.mxu0 0.0
          %4525 = vmatpush1.msra.mxu0 0.0
          %4526 = vmatprep.subr.mxu0 0.0
          %4527 = vmatpush1.msra.mxu0 0.0
          %4528 = vmatprep.subr.mxu0 0.0
          %4529 = vmatpush1.msra.mxu0 0.0
          %4530 = vmatprep.subr.mxu0 0.0
          %4531 = vmatpush1.msra.mxu0 0.0
          %4532 = vmatprep.subr.mxu0 0.0
          %4533 = vmatpush1.msra.mxu0 0.0
          %4534 = vmatprep.subr.mxu0 0.0
          %4535 = vmatpush1.msra.mxu0 0.0
          %4536 = vmatprep.subr.mxu0 0.0
          %4537 = vmatpush1.msra.mxu0 0.0
          %4538 = vmatprep.subr.mxu0 0.0
          %4539 = vmatpush1.msra.mxu0 0.0
          %4540 = vmatprep.subr.mxu0 0.0
          %4541 = vmatpush1.msra.mxu0 0.0
          %4542 = vmatprep.subr.mxu0 0.0
          %4543 = vmatpush1.msra.mxu0 0.0
          %4544 = vmatprep.subr.mxu0 0.0
          %4545 = vmatpush1.msra.mxu0 0.0
          %4546 = vmatprep.subr.mxu0 0.0
          %4547 = vmatpush1.msra.mxu0 0.0
          %4548 = vmatprep.subr.mxu0 0.0
          %4549 = vmatpush1.msra.mxu0 0.0
          %4550 = vmatprep.subr.mxu0 0.0
          %4551 = vmatpush1.msra.mxu0 0.0
          %4552 = vmatprep.subr.mxu0 0.0
          %4553 = vmatpush1.msra.mxu0 0.0
          %4554 = vmatprep.subr.mxu0 0.0
          %4555 = vmatpush1.msra.mxu0 0.0
          %4556 = vmatprep.subr.mxu0 0.0
          %4557 = vmatpush1.msra.mxu0 0.0
          %4558 = vmatprep.subr.mxu0 0.0
          %4559 = vmatpush1.msra.mxu0 0.0
          %4560 = vmatprep.subr.mxu0 0.0
          %4561 = vmatpush1.msra.mxu0 0.0
          %4562 = vmatprep.subr.mxu0 0.0
          %4563 = vmatpush1.msra.mxu0 0.0
          %4564 = vmatprep.subr.mxu0 0.0
          %4565 = vmatpush1.msra.mxu0 0.0
          %4566 = vmatprep.subr.mxu0 0.0
          %4567 = vmatpush1.msra.mxu0 0.0
          %4568 = vmatprep.mubr.f32.mxu0 0.0
          %4569 = vmatmul.mubr.f32.gmra.mrb[0].mxu0 %v4502
          %v4570 = vpop.f32.mrb[0].mxu0
          %v4571 = vadd.f32 0.0, %v4570
          %v4572 = vpop.f32.mrb[0].mxu0
          %4573 = vdwg.mxu0
          %v4574 = vadd.f32 %v4488, %v4571
          %v4576 = vcombine.high %v4574, %v4574
          %4580 = vrot.lane.b32.xlu0 %v4131, 64
          %v4581 = vpop.permute.xlu0 %4580
          %4582 = vrot.lane.b32.xlu0 %v4132, 64
          %v4583 = vpop.permute.xlu0 %4582
          %v4586 = vadd.f32 %v4574, %v4581
          %v4587 = vadd.f32 %v4576, %v4583
          %4588 = vst.msk [vmem:[#allocation2] sm:$0xf] %vm4137, %v4586
          %4589 = vst.msk [vmem:[#allocation2 + $0x4] sm:$0xf] %vm4137, %v4587
        $region128: #{lstmfrn_forward.1} parent=107 // pred_fallthru
          _
        %v4590 = vld [vmem:[#allocation2] sm:$0xf]
        %v4591 = vld [vmem:[#allocation2 + $0x4] sm:$0xf]
        %v4592 = vld [vmem:[%s818] sm:$0x1]
        %v4593 = vld [vmem:[%s823] sm:$0x1]
        %vm4594 = vcmask 519168
        %v4595 = vsel %vm4594, %v4590, 0.0
        %v4596 = vrot.slane %v4595, 4
        %v4597 = vadd.f32 %v4595, %v4596
        %v4598 = vrot.slane %v4597, 2
        %v4599 = vadd.f32 %v4597, %v4598
        %v4600 = vrot.slane %v4599, 1
        %v4601 = vadd.f32 %v4599, %v4600
        %v4602 = vsel %vm4594, %v4591, 0.0
        %v4603 = vrot.slane %v4602, 4
        %v4604 = vadd.f32 %v4602, %v4603
        %v4605 = vrot.slane %v4604, 2
        %v4606 = vadd.f32 %v4604, %v4605
        %v4607 = vrot.slane %v4606, 1
        %v4608 = vadd.f32 %v4606, %v4607
        %v4609 = vmul.f32 %v4590, %v4590
        %v4610 = vmul.f32 %v4591, %v4591
        %v4611 = vsel %vm4594, %v4609, 0.0
        %v4612 = vrot.slane %v4611, 4
        %v4613 = vadd.f32 %v4611, %v4612
        %v4614 = vrot.slane %v4613, 2
        %v4615 = vadd.f32 %v4613, %v4614
        %v4616 = vrot.slane %v4615, 1
        %v4617 = vadd.f32 %v4615, %v4616
        %v4618 = vsel %vm4594, %v4610, 0.0
        %v4619 = vrot.slane %v4618, 4
        %v4620 = vadd.f32 %v4618, %v4619
        %v4621 = vrot.slane %v4620, 2
        %v4622 = vadd.f32 %v4620, %v4621
        %v4623 = vrot.slane %v4622, 1
        %v4624 = vadd.f32 %v4622, %v4623
        %vm4627 = vcmask 1041409
        %v4628 = vsel %vm4627, %v4608, %v4601
        %vm4632 = vcmask 1043459
        %v4633 = vsel %vm4632, %v4624, %v4617
        %vm4635 = vcmask 1041408
        %v4636 = vsel %vm4635, %v4628, %v4633
        %4638 = vrot.lane.b32.xlu0 %v4636, 127
        %v4639 = vpop.permute.xlu0 %4638
        %4641 = vrot.lane.b32.xlu0 %v4636, 63
        %v4642 = vpop.permute.xlu0 %4641
        %vm4644 = vcmask 515072
        %v4645 = vsel %vm4644, %v4639, %v4642
        %4646 = vrot.lane.b32.xlu0 %v4636, 65
        %v4647 = vpop.permute.xlu0 %4646
        %4649 = vrot.lane.b32.xlu0 %v4636, 1
        %v4650 = vpop.permute.xlu0 %4649
        %vm4652 = vcmask 7168
        %v4653 = vsel %vm4652, %v4647, %v4650
        %v4654 = vlaneseq
        %v4655 = vand.u32 %v4654, 127
        %vm4656 = vcmp.lt.s32.totalorder %v4655, 0
        %v4657 = vsub.s32 0, %v4655
        %v4658 = vsel %vm4656, %v4657, %v4655
        %v4659 = vshrl.u32 %v4658, 1
        %v4660 = vand.u32 %v4658, 1
        %v4661 = vsub.s32 0, %v4660
        %v4662 = vsel %vm4656, %v4661, %v4660
        %vm4663 = vcmp.ne.s32.totalorder %v4662, 0
        %vm4664 = vcmp.lt.s32.totalorder %v4662, 0
        %vm4665 = vmand %vm4664, %vm4663
        %v4666 = vadd.s32 %v4662, 2
        %v4667 = vsel %vm4665, %v4666, %v4662
        %vm4668 = vcmp.eq.s32.totalorder %v4667, 0
        %v4669 = vadd.f32 %v4636, %v4645
        %v4670 = vadd.f32 %v4636, %v4653
        %v4671 = vsel %vm4668, %v4669, %v4670
        %v4672 = vrcp.pop 8.0
        %v4673 = vmul.f32 %v4671, %v4672
        %v4674 = vmul.f32 %v4673, %v4673
        %v4676 = vrot.slane %v4674, 6
        %v4678 = vsub.f32 %v4673, %v4676
        %v4679 = vmax.f32 %v4678, 0.0
        %v4680 = vadd.f32 %v4679, 1e-05
        %v4681 = vrsqrt.pop %v4680
        %v4683 = vlaneseq
        %v4684 = vshrl.u32 %v4683, 7
        %v4685 = vsub.s32 0, %v4684
        %v4686 = vrot.slane %v4592, %v4685
        %v4688 = vmul.f32 %v4686, %v4681
        %v4690 = vrot.slane %v4688, 2
        %v4692 = vmul.f32 %v4673, %v4690
        %v4694 = vlaneseq
        %v4695 = vshrl.u32 %v4694, 7
        %v4696 = vsub.s32 0, %v4695
        %v4697 = vrot.slane %v4593, %v4696
        %v4699 = vsub.f32 %v4697, %v4692
        %v4701 = vunpack.c.l.s4 1966171168
        %v4702 = vunpack.c.0.s8 %v4701
        %v4703 = vlaneseq
        %v4704 = vshrl.u32 %v4703, 7
        %v4705 = vsub.s32 %v4702, %v4704
        %v4706 = vrot.slane %v4688, %v4705
        %v4707 = vcombine.high %v4706, %v4706
        %v4709 = vunpack.c.l.s4 1966171168
        %v4710 = vunpack.c.0.s8 %v4709
        %v4711 = vlaneseq
        %v4712 = vshrl.u32 %v4711, 7
        %v4713 = vsub.s32 %v4710, %v4712
        %v4714 = vrot.slane %v4706, %v4713
        %v4716 = vunpack.c.l.s4 1966171168
        %v4717 = vunpack.c.0.s8 %v4716
        %v4718 = vlaneseq
        %v4719 = vshrl.u32 %v4718, 7
        %v4720 = vsub.s32 %v4717, %v4719
        %v4721 = vrot.slane %v4707, %v4720
        %v4722 = vcombine.high %v4714, %v4714
        %v4723 = vcombine.high %v4721, %v4721
        %v4724 = vlaneseq
        %v4725 = vshrl.u32 %v4724, 7
        %v4726 = vsub.s32 0, %v4725
        %v4727 = vrot.slane %v4722, %v4726
        %v4728 = vlaneseq
        %v4729 = vshrl.u32 %v4728, 7
        %v4730 = vsub.s32 0, %v4729
        %v4731 = vrot.slane %v4723, %v4730
        %v4734 = vmul.f32 %v4590, %v4727
        %v4735 = vmul.f32 %v4591, %v4731
        %v4738 = vunpack.c.l.s4 1966171168
        %v4739 = vunpack.c.0.s8 %v4738
        %v4740 = vlaneseq
        %v4741 = vshrl.u32 %v4740, 7
        %v4742 = vsub.s32 %v4739, %v4741
        %v4743 = vrot.slane %v4699, %v4742
        %v4744 = vcombine.high %v4743, %v4743
        %v4746 = vunpack.c.l.s4 1966171168
        %v4747 = vunpack.c.0.s8 %v4746
        %v4748 = vlaneseq
        %v4749 = vshrl.u32 %v4748, 7
        %v4750 = vsub.s32 %v4747, %v4749
        %v4751 = vrot.slane %v4743, %v4750
        %v4753 = vunpack.c.l.s4 1966171168
        %v4754 = vunpack.c.0.s8 %v4753
        %v4755 = vlaneseq
        %v4756 = vshrl.u32 %v4755, 7
        %v4757 = vsub.s32 %v4754, %v4756
        %v4758 = vrot.slane %v4744, %v4757
        %v4759 = vlaneseq
        %v4760 = vshrl.u32 %v4759, 7
        %v4761 = vsub.s32 0, %v4760
        %v4762 = vrot.slane %v4751, %v4761
        %v4763 = vlaneseq
        %v4764 = vshrl.u32 %v4763, 7
        %v4765 = vsub.s32 0, %v4764
        %v4766 = vrot.slane %v4758, %v4765
        %v4769 = vadd.f32 %v4734, %v4762
        %v4770 = vadd.f32 %v4735, %v4766
        %v4771 = vmax.f32 %v4769, 0.0
        %v4772 = vmax.f32 %v4770, 0.0
        %v4773 = vld [vmem:[%s727] sm:$0xff]
        %v4774 = vld [vmem:[%s727 + $0x8] sm:$0xff]
        %v4775 = vld [vmem:[%s727 + $0x10] sm:$0xff]
        %v4776 = vld [vmem:[%s727 + $0x18] sm:$0xff]
        %v4777 = vld [vmem:[%s727 + $0x20] sm:$0xff]
        %v4778 = vld [vmem:[%s727 + $0x28] sm:$0xff]
        %v4779 = vld [vmem:[%s727 + $0x30] sm:$0xff]
        %v4780 = vld [vmem:[%s727 + $0x38] sm:$0xff]
        %v4781 = vld [vmem:[%s727 + $0x40] sm:$0xff]
        %v4782 = vld [vmem:[%s727 + $0x48] sm:$0xff]
        %v4783 = vld [vmem:[%s727 + $0x50] sm:$0xff]
        %v4784 = vld [vmem:[%s727 + $0x58] sm:$0xff]
        %v4785 = vld [vmem:[%s727 + $0x60] sm:$0xff]
        %v4786 = vld [vmem:[%s727 + $0x68] sm:$0xff]
        %v4787 = vld [vmem:[%s727 + $0x70] sm:$0xff]
        %v4788 = vld [vmem:[%s727 + $0x78] sm:$0xff]
        %v4789 = vld [vmem:[%s727 + $0x80] sm:$0xff]
        %v4790 = vld [vmem:[%s727 + $0x88] sm:$0xff]
        %v4791 = vld [vmem:[%s727 + $0x90] sm:$0xff]
        %v4792 = vld [vmem:[%s727 + $0x98] sm:$0xff]
        %v4793 = vld [vmem:[%s727 + $0xa0] sm:$0xff]
        %v4794 = vld [vmem:[%s727 + $0xa8] sm:$0xff]
        %v4795 = vld [vmem:[%s727 + $0xb0] sm:$0xff]
        %v4796 = vld [vmem:[%s727 + $0xb8] sm:$0xff]
        %v4799 = vrot.slane %v4771, 7
        %v4800 = vrot.slane %v4772, 7
        %vm4803 = vcmask 1040384
        %v4804 = vsel %vm4803, 0.0, %v4799
        %v4805 = vsel %vm4803, 0.0, %v4800
        %vm4806 = vcmask 1044480
        %v4807 = vsel %vm4806, %v4804, 0.0
        %v4808 = vsel %vm4806, %v4805, 0.0
        %v4811 = vcombine.high %v4807, %v4807
        %v4812 = vcombine.high %v4808, %v4808
        %vm4813 = vcmask 1042432
        %vm4814 = vcmask 1046532
        %vm4815 = vmor %vm4813, %vm4814
        %v4816 = vrot.slane %v4807, 5
        %v4817 = vrot.slane %v4816, 4
        %v4818 = vrot.slane %v4811, 5
        %v4819 = vsel %vm4815, %v4817, %v4818
        %v4820 = vrot.slane %v4808, 5
        %v4821 = vrot.slane %v4820, 4
        %v4822 = vrot.slane %v4812, 5
        %v4823 = vsel %vm4815, %v4821, %v4822
        %v4824 = vcombine.low %v4819, %v4823
        %vm4825 = vcmask 523264
        %v4826 = vsel %vm4825, %v4824, 0
        %4828 = vmatprep.subr.mxu0 0.0
        %4829 = vmatpush1.msra.mxu0 %v4781
        %4830 = vmatprep.subr.mxu0 0.0
        %4831 = vmatpush1.msra.mxu0 %v4782
        %4832 = vmatprep.subr.mxu0 0.0
        %4833 = vmatpush1.msra.mxu0 %v4783
        %4834 = vmatprep.subr.mxu0 0.0
        %4835 = vmatpush1.msra.mxu0 %v4784
        %4836 = vmatprep.subr.mxu0 0.0
        %4837 = vmatpush1.msra.mxu0 %v4785
        %4838 = vmatprep.subr.mxu0 0.0
        %4839 = vmatpush1.msra.mxu0 %v4786
        %4840 = vmatprep.subr.mxu0 0.0
        %4841 = vmatpush1.msra.mxu0 %v4787
        %4842 = vmatprep.subr.mxu0 0.0
        %4843 = vmatpush1.msra.mxu0 %v4788
        %4844 = vmatprep.subr.mxu0 0.0
        %4845 = vmatpush1.msra.mxu0 0.0
        %4846 = vmatprep.subr.mxu0 0.0
        %4847 = vmatpush1.msra.mxu0 0.0
        %4848 = vmatprep.subr.mxu0 0.0
        %4849 = vmatpush1.msra.mxu0 0.0
        %4850 = vmatprep.subr.mxu0 0.0
        %4851 = vmatpush1.msra.mxu0 0.0
        %4852 = vmatprep.subr.mxu0 0.0
        %4853 = vmatpush1.msra.mxu0 0.0
        %4854 = vmatprep.subr.mxu0 0.0
        %4855 = vmatpush1.msra.mxu0 0.0
        %4856 = vmatprep.subr.mxu0 0.0
        %4857 = vmatpush1.msra.mxu0 0.0
        %4858 = vmatprep.subr.mxu0 0.0
        %4859 = vmatpush1.msra.mxu0 0.0
        %4860 = vmatprep.subr.mxu0 0.0
        %4861 = vmatpush1.msra.mxu0 0.0
        %4862 = vmatprep.subr.mxu0 0.0
        %4863 = vmatpush1.msra.mxu0 0.0
        %4864 = vmatprep.subr.mxu0 0.0
        %4865 = vmatpush1.msra.mxu0 0.0
        %4866 = vmatprep.subr.mxu0 0.0
        %4867 = vmatpush1.msra.mxu0 0.0
        %4868 = vmatprep.subr.mxu0 0.0
        %4869 = vmatpush1.msra.mxu0 0.0
        %4870 = vmatprep.subr.mxu0 0.0
        %4871 = vmatpush1.msra.mxu0 0.0
        %4872 = vmatprep.subr.mxu0 0.0
        %4873 = vmatpush1.msra.mxu0 0.0
        %4874 = vmatprep.subr.mxu0 0.0
        %4875 = vmatpush1.msra.mxu0 0.0
        %4876 = vmatprep.subr.mxu0 0.0
        %4877 = vmatpush1.msra.mxu0 0.0
        %4878 = vmatprep.subr.mxu0 0.0
        %4879 = vmatpush1.msra.mxu0 0.0
        %4880 = vmatprep.subr.mxu0 0.0
        %4881 = vmatpush1.msra.mxu0 0.0
        %4882 = vmatprep.subr.mxu0 0.0
        %4883 = vmatpush1.msra.mxu0 0.0
        %4884 = vmatprep.subr.mxu0 0.0
        %4885 = vmatpush1.msra.mxu0 0.0
        %4886 = vmatprep.subr.mxu0 0.0
        %4887 = vmatpush1.msra.mxu0 0.0
        %4888 = vmatprep.subr.mxu0 0.0
        %4889 = vmatpush1.msra.mxu0 0.0
        %4890 = vmatprep.subr.mxu0 0.0
        %4891 = vmatpush1.msra.mxu0 0.0
        %4892 = vmatprep.mubr.f32.mxu0 0.0
        %4893 = vmatmul.mubr.f32.gmra.mrb[0].mxu0 %v4826
        %v4894 = vpop.f32.mrb[0].mxu0
        %v4895 = vadd.f32 0.0, %v4894
        %v4896 = vpop.f32.mrb[0].mxu0
        %4897 = vdwg.mxu0
        %v4898 = vcombine.low %v4807, %v4808
        %v4899 = vsel %vm4825, %v4898, 0
        %4901 = vmatprep.subr.mxu0 0.0
        %4902 = vmatpush1.msra.mxu0 %v4773
        %4903 = vmatprep.subr.mxu0 0.0
        %4904 = vmatpush1.msra.mxu0 %v4774
        %4905 = vmatprep.subr.mxu0 0.0
        %4906 = vmatpush1.msra.mxu0 %v4775
        %4907 = vmatprep.subr.mxu0 0.0
        %4908 = vmatpush1.msra.mxu0 %v4776
        %4909 = vmatprep.subr.mxu0 0.0
        %4910 = vmatpush1.msra.mxu0 %v4777
        %4911 = vmatprep.subr.mxu0 0.0
        %4912 = vmatpush1.msra.mxu0 %v4778
        %4913 = vmatprep.subr.mxu0 0.0
        %4914 = vmatpush1.msra.mxu0 %v4779
        %4915 = vmatprep.subr.mxu0 0.0
        %4916 = vmatpush1.msra.mxu0 %v4780
        %4917 = vmatprep.subr.mxu0 0.0
        %4918 = vmatpush1.msra.mxu0 0.0
        %4919 = vmatprep.subr.mxu0 0.0
        %4920 = vmatpush1.msra.mxu0 0.0
        %4921 = vmatprep.subr.mxu0 0.0
        %4922 = vmatpush1.msra.mxu0 0.0
        %4923 = vmatprep.subr.mxu0 0.0
        %4924 = vmatpush1.msra.mxu0 0.0
        %4925 = vmatprep.subr.mxu0 0.0
        %4926 = vmatpush1.msra.mxu0 0.0
        %4927 = vmatprep.subr.mxu0 0.0
        %4928 = vmatpush1.msra.mxu0 0.0
        %4929 = vmatprep.subr.mxu0 0.0
        %4930 = vmatpush1.msra.mxu0 0.0
        %4931 = vmatprep.subr.mxu0 0.0
        %4932 = vmatpush1.msra.mxu0 0.0
        %4933 = vmatprep.subr.mxu0 0.0
        %4934 = vmatpush1.msra.mxu0 0.0
        %4935 = vmatprep.subr.mxu0 0.0
        %4936 = vmatpush1.msra.mxu0 0.0
        %4937 = vmatprep.subr.mxu0 0.0
        %4938 = vmatpush1.msra.mxu0 0.0
        %4939 = vmatprep.subr.mxu0 0.0
        %4940 = vmatpush1.msra.mxu0 0.0
        %4941 = vmatprep.subr.mxu0 0.0
        %4942 = vmatpush1.msra.mxu0 0.0
        %4943 = vmatprep.subr.mxu0 0.0
        %4944 = vmatpush1.msra.mxu0 0.0
        %4945 = vmatprep.subr.mxu0 0.0
        %4946 = vmatpush1.msra.mxu0 0.0
        %4947 = vmatprep.subr.mxu0 0.0
        %4948 = vmatpush1.msra.mxu0 0.0
        %4949 = vmatprep.subr.mxu0 0.0
        %4950 = vmatpush1.msra.mxu0 0.0
        %4951 = vmatprep.subr.mxu0 0.0
        %4952 = vmatpush1.msra.mxu0 0.0
        %4953 = vmatprep.subr.mxu0 0.0
        %4954 = vmatpush1.msra.mxu0 0.0
        %4955 = vmatprep.subr.mxu0 0.0
        %4956 = vmatpush1.msra.mxu0 0.0
        %4957 = vmatprep.subr.mxu0 0.0
        %4958 = vmatpush1.msra.mxu0 0.0
        %4959 = vmatprep.subr.mxu0 0.0
        %4960 = vmatpush1.msra.mxu0 0.0
        %4961 = vmatprep.subr.mxu0 0.0
        %4962 = vmatpush1.msra.mxu0 0.0
        %4963 = vmatprep.subr.mxu0 0.0
        %4964 = vmatpush1.msra.mxu0 0.0
        %4965 = vmatprep.mubr.f32.mxu0 0.0
        %4966 = vmatmul.mubr.f32.gmra.mrb[0].mxu0 %v4899
        %v4967 = vpop.f32.mrb[0].mxu0
        %v4968 = vadd.f32 %v4895, %v4967
        %v4969 = vpop.f32.mrb[0].mxu0
        %4970 = vdwg.mxu0
        %vm4971 = vcmask 1045508
        %vm4972 = vmor %vm4635, %vm4971
        %v4973 = vrot.slane %v4807, 6
        %v4974 = vrot.slane %v4973, 4
        %v4975 = vrot.slane %v4811, 6
        %v4976 = vsel %vm4972, %v4974, %v4975
        %v4977 = vrot.slane %v4808, 6
        %v4978 = vrot.slane %v4977, 4
        %v4979 = vrot.slane %v4812, 6
        %v4980 = vsel %vm4972, %v4978, %v4979
        %v4981 = vcombine.low %v4976, %v4980
        %v4982 = vsel %vm4825, %v4981, 0
        %4984 = vmatprep.subr.mxu0 0.0
        %4985 = vmatpush1.msra.mxu0 %v4789
        %4986 = vmatprep.subr.mxu0 0.0
        %4987 = vmatpush1.msra.mxu0 %v4790
        %4988 = vmatprep.subr.mxu0 0.0
        %4989 = vmatpush1.msra.mxu0 %v4791
        %4990 = vmatprep.subr.mxu0 0.0
        %4991 = vmatpush1.msra.mxu0 %v4792
        %4992 = vmatprep.subr.mxu0 0.0
        %4993 = vmatpush1.msra.mxu0 %v4793
        %4994 = vmatprep.subr.mxu0 0.0
        %4995 = vmatpush1.msra.mxu0 %v4794
        %4996 = vmatprep.subr.mxu0 0.0
        %4997 = vmatpush1.msra.mxu0 %v4795
        %4998 = vmatprep.subr.mxu0 0.0
        %4999 = vmatpush1.msra.mxu0 %v4796
        %5000 = vmatprep.subr.mxu0 0.0
        %5001 = vmatpush1.msra.mxu0 0.0
        %5002 = vmatprep.subr.mxu0 0.0
        %5003 = vmatpush1.msra.mxu0 0.0
        %5004 = vmatprep.subr.mxu0 0.0
        %5005 = vmatpush1.msra.mxu0 0.0
        %5006 = vmatprep.subr.mxu0 0.0
        %5007 = vmatpush1.msra.mxu0 0.0
        %5008 = vmatprep.subr.mxu0 0.0
        %5009 = vmatpush1.msra.mxu0 0.0
        %5010 = vmatprep.subr.mxu0 0.0
        %5011 = vmatpush1.msra.mxu0 0.0
        %5012 = vmatprep.subr.mxu0 0.0
        %5013 = vmatpush1.msra.mxu0 0.0
        %5014 = vmatprep.subr.mxu0 0.0
        %5015 = vmatpush1.msra.mxu0 0.0
        %5016 = vmatprep.subr.mxu0 0.0
        %5017 = vmatpush1.msra.mxu0 0.0
        %5018 = vmatprep.subr.mxu0 0.0
        %5019 = vmatpush1.msra.mxu0 0.0
        %5020 = vmatprep.subr.mxu0 0.0
        %5021 = vmatpush1.msra.mxu0 0.0
        %5022 = vmatprep.subr.mxu0 0.0
        %5023 = vmatpush1.msra.mxu0 0.0
        %5024 = vmatprep.subr.mxu0 0.0
        %5025 = vmatpush1.msra.mxu0 0.0
        %5026 = vmatprep.subr.mxu0 0.0
        %5027 = vmatpush1.msra.mxu0 0.0
        %5028 = vmatprep.subr.mxu0 0.0
        %5029 = vmatpush1.msra.mxu0 0.0
        %5030 = vmatprep.subr.mxu0 0.0
        %5031 = vmatpush1.msra.mxu0 0.0
        %5032 = vmatprep.subr.mxu0 0.0
        %5033 = vmatpush1.msra.mxu0 0.0
        %5034 = vmatprep.subr.mxu0 0.0
        %5035 = vmatpush1.msra.mxu0 0.0
        %5036 = vmatprep.subr.mxu0 0.0
        %5037 = vmatpush1.msra.mxu0 0.0
        %5038 = vmatprep.subr.mxu0 0.0
        %5039 = vmatpush1.msra.mxu0 0.0
        %5040 = vmatprep.subr.mxu0 0.0
        %5041 = vmatpush1.msra.mxu0 0.0
        %5042 = vmatprep.subr.mxu0 0.0
        %5043 = vmatpush1.msra.mxu0 0.0
        %5044 = vmatprep.subr.mxu0 0.0
        %5045 = vmatpush1.msra.mxu0 0.0
        %5046 = vmatprep.subr.mxu0 0.0
        %5047 = vmatpush1.msra.mxu0 0.0
        %5048 = vmatprep.mubr.f32.mxu0 0.0
        %5049 = vmatmul.mubr.f32.gmra.mrb[0].mxu0 %v4982
        %v5050 = vpop.f32.mrb[0].mxu0
        %v5051 = vadd.f32 0.0, %v5050
        %v5052 = vpop.f32.mrb[0].mxu0
        %5053 = vdwg.mxu0
        %v5054 = vadd.f32 %v4968, %v5051
        %v5056 = vcombine.high %v5054, %v5054
        %v5058 = vld [vmem:[%s828] sm:$0x1]
        %v5059 = vld [vmem:[%s833] sm:$0x1]
        %v5060 = vsel %vm4594, %v5054, 0.0
        %v5061 = vrot.slane %v5060, 4
        %v5062 = vadd.f32 %v5060, %v5061
        %v5063 = vrot.slane %v5062, 2
        %v5064 = vadd.f32 %v5062, %v5063
        %v5065 = vrot.slane %v5064, 1
        %v5066 = vadd.f32 %v5064, %v5065
        %v5067 = vsel %vm4594, %v5056, 0.0
        %v5068 = vrot.slane %v5067, 4
        %v5069 = vadd.f32 %v5067, %v5068
        %v5070 = vrot.slane %v5069, 2
        %v5071 = vadd.f32 %v5069, %v5070
        %v5072 = vrot.slane %v5071, 1
        %v5073 = vadd.f32 %v5071, %v5072
        %v5074 = vmul.f32 %v5054, %v5054
        %v5075 = vmul.f32 %v5056, %v5056
        %v5076 = vsel %vm4594, %v5074, 0.0
        %v5077 = vrot.slane %v5076, 4
        %v5078 = vadd.f32 %v5076, %v5077
        %v5079 = vrot.slane %v5078, 2
        %v5080 = vadd.f32 %v5078, %v5079
        %v5081 = vrot.slane %v5080, 1
        %v5082 = vadd.f32 %v5080, %v5081
        %v5083 = vsel %vm4594, %v5075, 0.0
        %v5084 = vrot.slane %v5083, 4
        %v5085 = vadd.f32 %v5083, %v5084
        %v5086 = vrot.slane %v5085, 2
        %v5087 = vadd.f32 %v5085, %v5086
        %v5088 = vrot.slane %v5087, 1
        %v5089 = vadd.f32 %v5087, %v5088
        %v5092 = vsel %vm4627, %v5073, %v5066
        %v5096 = vsel %vm4632, %v5089, %v5082
        %v5098 = vsel %vm4635, %v5092, %v5096
        %5100 = vrot.lane.b32.xlu0 %v5098, 127
        %v5101 = vpop.permute.xlu0 %5100
        %5103 = vrot.lane.b32.xlu0 %v5098, 63
        %v5104 = vpop.permute.xlu0 %5103
        %v5106 = vsel %vm4644, %v5101, %v5104
        %5107 = vrot.lane.b32.xlu0 %v5098, 65
        %v5108 = vpop.permute.xlu0 %5107
        %5110 = vrot.lane.b32.xlu0 %v5098, 1
        %v5111 = vpop.permute.xlu0 %5110
        %v5113 = vsel %vm4652, %v5108, %v5111
        %v5114 = vadd.f32 %v5098, %v5106
        %v5115 = vadd.f32 %v5098, %v5113
        %v5116 = vsel %vm4668, %v5114, %v5115
        %v5117 = vmul.f32 %v5116, %v4672
        %v5118 = vmul.f32 %v5117, %v5117
        %v5120 = vrot.slane %v5118, 6
        %v5122 = vsub.f32 %v5117, %v5120
        %v5123 = vmax.f32 %v5122, 0.0
        %v5124 = vadd.f32 %v5123, 1e-05
        %v5125 = vrsqrt.pop %v5124
        %v5127 = vlaneseq
        %v5128 = vshrl.u32 %v5127, 7
        %v5129 = vsub.s32 0, %v5128
        %v5130 = vrot.slane %v5058, %v5129
        %v5132 = vmul.f32 %v5130, %v5125
        %v5134 = vrot.slane %v5132, 2
        %v5136 = vmul.f32 %v5117, %v5134
        %v5138 = vlaneseq
        %v5139 = vshrl.u32 %v5138, 7
        %v5140 = vsub.s32 0, %v5139
        %v5141 = vrot.slane %v5059, %v5140
        %v5143 = vsub.f32 %v5141, %v5136
        %v5145 = vunpack.c.l.s4 1966171168
        %v5146 = vunpack.c.0.s8 %v5145
        %v5147 = vlaneseq
        %v5148 = vshrl.u32 %v5147, 7
        %v5149 = vsub.s32 %v5146, %v5148
        %v5150 = vrot.slane %v5132, %v5149
        %v5151 = vcombine.high %v5150, %v5150
        %v5153 = vunpack.c.l.s4 1966171168
        %v5154 = vunpack.c.0.s8 %v5153
        %v5155 = vlaneseq
        %v5156 = vshrl.u32 %v5155, 7
        %v5157 = vsub.s32 %v5154, %v5156
        %v5158 = vrot.slane %v5150, %v5157
        %v5160 = vunpack.c.l.s4 1966171168
        %v5161 = vunpack.c.0.s8 %v5160
        %v5162 = vlaneseq
        %v5163 = vshrl.u32 %v5162, 7
        %v5164 = vsub.s32 %v5161, %v5163
        %v5165 = vrot.slane %v5151, %v5164
        %v5166 = vcombine.high %v5158, %v5158
        %v5167 = vcombine.high %v5165, %v5165
        %v5168 = vlaneseq
        %v5169 = vshrl.u32 %v5168, 7
        %v5170 = vsub.s32 0, %v5169
        %v5171 = vrot.slane %v5166, %v5170
        %v5172 = vlaneseq
        %v5173 = vshrl.u32 %v5172, 7
        %v5174 = vsub.s32 0, %v5173
        %v5175 = vrot.slane %v5167, %v5174
        %v5178 = vmul.f32 %v5054, %v5171
        %v5179 = vmul.f32 %v5056, %v5175
        %v5182 = vunpack.c.l.s4 1966171168
        %v5183 = vunpack.c.0.s8 %v5182
        %v5184 = vlaneseq
        %v5185 = vshrl.u32 %v5184, 7
        %v5186 = vsub.s32 %v5183, %v5185
        %v5187 = vrot.slane %v5143, %v5186
        %v5188 = vcombine.high %v5187, %v5187
        %v5190 = vunpack.c.l.s4 1966171168
        %v5191 = vunpack.c.0.s8 %v5190
        %v5192 = vlaneseq
        %v5193 = vshrl.u32 %v5192, 7
        %v5194 = vsub.s32 %v5191, %v5193
        %v5195 = vrot.slane %v5187, %v5194
        %v5197 = vunpack.c.l.s4 1966171168
        %v5198 = vunpack.c.0.s8 %v5197
        %v5199 = vlaneseq
        %v5200 = vshrl.u32 %v5199, 7
        %v5201 = vsub.s32 %v5198, %v5200
        %v5202 = vrot.slane %v5188, %v5201
        %v5203 = vlaneseq
        %v5204 = vshrl.u32 %v5203, 7
        %v5205 = vsub.s32 0, %v5204
        %v5206 = vrot.slane %v5195, %v5205
        %v5207 = vlaneseq
        %v5208 = vshrl.u32 %v5207, 7
        %v5209 = vsub.s32 0, %v5208
        %v5210 = vrot.slane %v5202, %v5209
        %v5213 = vadd.f32 %v5178, %v5206
        %v5214 = vadd.f32 %v5179, %v5210
        %v5215 = vmax.f32 %v5213, 0.0
        %v5216 = vmax.f32 %v5214, 0.0
        %v5217 = vld [vmem:[%s736] sm:$0xff]
        %v5218 = vld [vmem:[%s736 + $0x8] sm:$0xff]
        %v5219 = vld [vmem:[%s736 + $0x10] sm:$0xff]
        %v5220 = vld [vmem:[%s736 + $0x18] sm:$0xff]
        %v5221 = vld [vmem:[%s736 + $0x20] sm:$0xff]
        %v5222 = vld [vmem:[%s736 + $0x28] sm:$0xff]
        %v5223 = vld [vmem:[%s736 + $0x30] sm:$0xff]
        %v5224 = vld [vmem:[%s736 + $0x38] sm:$0xff]
        %v5225 = vld [vmem:[%s736 + $0x40] sm:$0xff]
        %v5226 = vld [vmem:[%s736 + $0x48] sm:$0xff]
        %v5227 = vld [vmem:[%s736 + $0x50] sm:$0xff]
        %v5228 = vld [vmem:[%s736 + $0x58] sm:$0xff]
        %v5229 = vld [vmem:[%s736 + $0x60] sm:$0xff]
        %v5230 = vld [vmem:[%s736 + $0x68] sm:$0xff]
        %v5231 = vld [vmem:[%s736 + $0x70] sm:$0xff]
        %v5232 = vld [vmem:[%s736 + $0x78] sm:$0xff]
        %v5233 = vld [vmem:[%s736 + $0x80] sm:$0xff]
        %v5234 = vld [vmem:[%s736 + $0x88] sm:$0xff]
        %v5235 = vld [vmem:[%s736 + $0x90] sm:$0xff]
        %v5236 = vld [vmem:[%s736 + $0x98] sm:$0xff]
        %v5237 = vld [vmem:[%s736 + $0xa0] sm:$0xff]
        %v5238 = vld [vmem:[%s736 + $0xa8] sm:$0xff]
        %v5239 = vld [vmem:[%s736 + $0xb0] sm:$0xff]
        %v5240 = vld [vmem:[%s736 + $0xb8] sm:$0xff]
        %v5243 = vrot.slane %v5215, 7
        %v5244 = vrot.slane %v5216, 7
        %v5247 = vsel %vm4803, 0.0, %v5243
        %v5248 = vsel %vm4803, 0.0, %v5244
        %v5249 = vsel %vm4806, %v5247, 0.0
        %v5250 = vsel %vm4806, %v5248, 0.0
        %v5253 = vcombine.high %v5249, %v5249
        %v5254 = vcombine.high %v5250, %v5250
        %v5255 = vrot.slane %v5249, 5
        %v5256 = vrot.slane %v5255, 4
        %v5257 = vrot.slane %v5253, 5
        %v5258 = vsel %vm4815, %v5256, %v5257
        %v5259 = vrot.slane %v5250, 5
        %v5260 = vrot.slane %v5259, 4
        %v5261 = vrot.slane %v5254, 5
        %v5262 = vsel %vm4815, %v5260, %v5261
        %v5263 = vcombine.low %v5258, %v5262
        %v5264 = vsel %vm4825, %v5263, 0
        %5266 = vmatprep.subr.mxu0 0.0
        %5267 = vmatpush1.msra.mxu0 %v5225
        %5268 = vmatprep.subr.mxu0 0.0
        %5269 = vmatpush1.msra.mxu0 %v5226
        %5270 = vmatprep.subr.mxu0 0.0
        %5271 = vmatpush1.msra.mxu0 %v5227
        %5272 = vmatprep.subr.mxu0 0.0
        %5273 = vmatpush1.msra.mxu0 %v5228
        %5274 = vmatprep.subr.mxu0 0.0
        %5275 = vmatpush1.msra.mxu0 %v5229
        %5276 = vmatprep.subr.mxu0 0.0
        %5277 = vmatpush1.msra.mxu0 %v5230
        %5278 = vmatprep.subr.mxu0 0.0
        %5279 = vmatpush1.msra.mxu0 %v5231
        %5280 = vmatprep.subr.mxu0 0.0
        %5281 = vmatpush1.msra.mxu0 %v5232
        %5282 = vmatprep.subr.mxu0 0.0
        %5283 = vmatpush1.msra.mxu0 0.0
        %5284 = vmatprep.subr.mxu0 0.0
        %5285 = vmatpush1.msra.mxu0 0.0
        %5286 = vmatprep.subr.mxu0 0.0
        %5287 = vmatpush1.msra.mxu0 0.0
        %5288 = vmatprep.subr.mxu0 0.0
        %5289 = vmatpush1.msra.mxu0 0.0
        %5290 = vmatprep.subr.mxu0 0.0
        %5291 = vmatpush1.msra.mxu0 0.0
        %5292 = vmatprep.subr.mxu0 0.0
        %5293 = vmatpush1.msra.mxu0 0.0
        %5294 = vmatprep.subr.mxu0 0.0
        %5295 = vmatpush1.msra.mxu0 0.0
        %5296 = vmatprep.subr.mxu0 0.0
        %5297 = vmatpush1.msra.mxu0 0.0
        %5298 = vmatprep.subr.mxu0 0.0
        %5299 = vmatpush1.msra.mxu0 0.0
        %5300 = vmatprep.subr.mxu0 0.0
        %5301 = vmatpush1.msra.mxu0 0.0
        %5302 = vmatprep.subr.mxu0 0.0
        %5303 = vmatpush1.msra.mxu0 0.0
        %5304 = vmatprep.subr.mxu0 0.0
        %5305 = vmatpush1.msra.mxu0 0.0
        %5306 = vmatprep.subr.mxu0 0.0
        %5307 = vmatpush1.msra.mxu0 0.0
        %5308 = vmatprep.subr.mxu0 0.0
        %5309 = vmatpush1.msra.mxu0 0.0
        %5310 = vmatprep.subr.mxu0 0.0
        %5311 = vmatpush1.msra.mxu0 0.0
        %5312 = vmatprep.subr.mxu0 0.0
        %5313 = vmatpush1.msra.mxu0 0.0
        %5314 = vmatprep.subr.mxu0 0.0
        %5315 = vmatpush1.msra.mxu0 0.0
        %5316 = vmatprep.subr.mxu0 0.0
        %5317 = vmatpush1.msra.mxu0 0.0
        %5318 = vmatprep.subr.mxu0 0.0
        %5319 = vmatpush1.msra.mxu0 0.0
        %5320 = vmatprep.subr.mxu0 0.0
        %5321 = vmatpush1.msra.mxu0 0.0
        %5322 = vmatprep.subr.mxu0 0.0
        %5323 = vmatpush1.msra.mxu0 0.0
        %5324 = vmatprep.subr.mxu0 0.0
        %5325 = vmatpush1.msra.mxu0 0.0
        %5326 = vmatprep.subr.mxu0 0.0
        %5327 = vmatpush1.msra.mxu0 0.0
        %5328 = vmatprep.subr.mxu0 0.0
        %5329 = vmatpush1.msra.mxu0 0.0
        %5330 = vmatprep.mubr.f32.mxu0 0.0
        %5331 = vmatmul.mubr.f32.gmra.mrb[0].mxu0 %v5264
        %v5332 = vpop.f32.mrb[0].mxu0
        %v5333 = vadd.f32 0.0, %v5332
        %v5334 = vpop.f32.mrb[0].mxu0
        %5335 = vdwg.mxu0
        %v5336 = vcombine.low %v5249, %v5250
        %v5337 = vsel %vm4825, %v5336, 0
        %5339 = vmatprep.subr.mxu0 0.0
        %5340 = vmatpush1.msra.mxu0 %v5217
        %5341 = vmatprep.subr.mxu0 0.0
        %5342 = vmatpush1.msra.mxu0 %v5218
        %5343 = vmatprep.subr.mxu0 0.0
        %5344 = vmatpush1.msra.mxu0 %v5219
        %5345 = vmatprep.subr.mxu0 0.0
        %5346 = vmatpush1.msra.mxu0 %v5220
        %5347 = vmatprep.subr.mxu0 0.0
        %5348 = vmatpush1.msra.mxu0 %v5221
        %5349 = vmatprep.subr.mxu0 0.0
        %5350 = vmatpush1.msra.mxu0 %v5222
        %5351 = vmatprep.subr.mxu0 0.0
        %5352 = vmatpush1.msra.mxu0 %v5223
        %5353 = vmatprep.subr.mxu0 0.0
        %5354 = vmatpush1.msra.mxu0 %v5224
        %5355 = vmatprep.subr.mxu0 0.0
        %5356 = vmatpush1.msra.mxu0 0.0
        %5357 = vmatprep.subr.mxu0 0.0
        %5358 = vmatpush1.msra.mxu0 0.0
        %5359 = vmatprep.subr.mxu0 0.0
        %5360 = vmatpush1.msra.mxu0 0.0
        %5361 = vmatprep.subr.mxu0 0.0
        %5362 = vmatpush1.msra.mxu0 0.0
        %5363 = vmatprep.subr.mxu0 0.0
        %5364 = vmatpush1.msra.mxu0 0.0
        %5365 = vmatprep.subr.mxu0 0.0
        %5366 = vmatpush1.msra.mxu0 0.0
        %5367 = vmatprep.subr.mxu0 0.0
        %5368 = vmatpush1.msra.mxu0 0.0
        %5369 = vmatprep.subr.mxu0 0.0
        %5370 = vmatpush1.msra.mxu0 0.0
        %5371 = vmatprep.subr.mxu0 0.0
        %5372 = vmatpush1.msra.mxu0 0.0
        %5373 = vmatprep.subr.mxu0 0.0
        %5374 = vmatpush1.msra.mxu0 0.0
        %5375 = vmatprep.subr.mxu0 0.0
        %5376 = vmatpush1.msra.mxu0 0.0
        %5377 = vmatprep.subr.mxu0 0.0
        %5378 = vmatpush1.msra.mxu0 0.0
        %5379 = vmatprep.subr.mxu0 0.0
        %5380 = vmatpush1.msra.mxu0 0.0
        %5381 = vmatprep.subr.mxu0 0.0
        %5382 = vmatpush1.msra.mxu0 0.0
        %5383 = vmatprep.subr.mxu0 0.0
        %5384 = vmatpush1.msra.mxu0 0.0
        %5385 = vmatprep.subr.mxu0 0.0
        %5386 = vmatpush1.msra.mxu0 0.0
        %5387 = vmatprep.subr.mxu0 0.0
        %5388 = vmatpush1.msra.mxu0 0.0
        %5389 = vmatprep.subr.mxu0 0.0
        %5390 = vmatpush1.msra.mxu0 0.0
        %5391 = vmatprep.subr.mxu0 0.0
        %5392 = vmatpush1.msra.mxu0 0.0
        %5393 = vmatprep.subr.mxu0 0.0
        %5394 = vmatpush1.msra.mxu0 0.0
        %5395 = vmatprep.subr.mxu0 0.0
        %5396 = vmatpush1.msra.mxu0 0.0
        %5397 = vmatprep.subr.mxu0 0.0
        %5398 = vmatpush1.msra.mxu0 0.0
        %5399 = vmatprep.subr.mxu0 0.0
        %5400 = vmatpush1.msra.mxu0 0.0
        %5401 = vmatprep.subr.mxu0 0.0
        %5402 = vmatpush1.msra.mxu0 0.0
        %5403 = vmatprep.mubr.f32.mxu0 0.0
        %5404 = vmatmul.mubr.f32.gmra.mrb[0].mxu0 %v5337
        %v5405 = vpop.f32.mrb[0].mxu0
        %v5406 = vadd.f32 %v5333, %v5405
        %v5407 = vpop.f32.mrb[0].mxu0
        %5408 = vdwg.mxu0
        %v5409 = vrot.slane %v5249, 6
        %v5410 = vrot.slane %v5409, 4
        %v5411 = vrot.slane %v5253, 6
        %v5412 = vsel %vm4972, %v5410, %v5411
        %v5413 = vrot.slane %v5250, 6
        %v5414 = vrot.slane %v5413, 4
        %v5415 = vrot.slane %v5254, 6
        %v5416 = vsel %vm4972, %v5414, %v5415
        %v5417 = vcombine.low %v5412, %v5416
        %v5418 = vsel %vm4825, %v5417, 0
        %5420 = vmatprep.subr.mxu0 0.0
        %5421 = vmatpush1.msra.mxu0 %v5233
        %5422 = vmatprep.subr.mxu0 0.0
        %5423 = vmatpush1.msra.mxu0 %v5234
        %5424 = vmatprep.subr.mxu0 0.0
        %5425 = vmatpush1.msra.mxu0 %v5235
        %5426 = vmatprep.subr.mxu0 0.0
        %5427 = vmatpush1.msra.mxu0 %v5236
        %5428 = vmatprep.subr.mxu0 0.0
        %5429 = vmatpush1.msra.mxu0 %v5237
        %5430 = vmatprep.subr.mxu0 0.0
        %5431 = vmatpush1.msra.mxu0 %v5238
        %5432 = vmatprep.subr.mxu0 0.0
        %5433 = vmatpush1.msra.mxu0 %v5239
        %5434 = vmatprep.subr.mxu0 0.0
        %5435 = vmatpush1.msra.mxu0 %v5240
        %5436 = vmatprep.subr.mxu0 0.0
        %5437 = vmatpush1.msra.mxu0 0.0
        %5438 = vmatprep.subr.mxu0 0.0
        %5439 = vmatpush1.msra.mxu0 0.0
        %5440 = vmatprep.subr.mxu0 0.0
        %5441 = vmatpush1.msra.mxu0 0.0
        %5442 = vmatprep.subr.mxu0 0.0
        %5443 = vmatpush1.msra.mxu0 0.0
        %5444 = vmatprep.subr.mxu0 0.0
        %5445 = vmatpush1.msra.mxu0 0.0
        %5446 = vmatprep.subr.mxu0 0.0
        %5447 = vmatpush1.msra.mxu0 0.0
        %5448 = vmatprep.subr.mxu0 0.0
        %5449 = vmatpush1.msra.mxu0 0.0
        %5450 = vmatprep.subr.mxu0 0.0
        %5451 = vmatpush1.msra.mxu0 0.0
        %5452 = vmatprep.subr.mxu0 0.0
        %5453 = vmatpush1.msra.mxu0 0.0
        %5454 = vmatprep.subr.mxu0 0.0
        %5455 = vmatpush1.msra.mxu0 0.0
        %5456 = vmatprep.subr.mxu0 0.0
        %5457 = vmatpush1.msra.mxu0 0.0
        %5458 = vmatprep.subr.mxu0 0.0
        %5459 = vmatpush1.msra.mxu0 0.0
        %5460 = vmatprep.subr.mxu0 0.0
        %5461 = vmatpush1.msra.mxu0 0.0
        %5462 = vmatprep.subr.mxu0 0.0
        %5463 = vmatpush1.msra.mxu0 0.0
        %5464 = vmatprep.subr.mxu0 0.0
        %5465 = vmatpush1.msra.mxu0 0.0
        %5466 = vmatprep.subr.mxu0 0.0
        %5467 = vmatpush1.msra.mxu0 0.0
        %5468 = vmatprep.subr.mxu0 0.0
        %5469 = vmatpush1.msra.mxu0 0.0
        %5470 = vmatprep.subr.mxu0 0.0
        %5471 = vmatpush1.msra.mxu0 0.0
        %5472 = vmatprep.subr.mxu0 0.0
        %5473 = vmatpush1.msra.mxu0 0.0
        %5474 = vmatprep.subr.mxu0 0.0
        %5475 = vmatpush1.msra.mxu0 0.0
        %5476 = vmatprep.subr.mxu0 0.0
        %5477 = vmatpush1.msra.mxu0 0.0
        %5478 = vmatprep.subr.mxu0 0.0
        %5479 = vmatpush1.msra.mxu0 0.0
        %5480 = vmatprep.subr.mxu0 0.0
        %5481 = vmatpush1.msra.mxu0 0.0
        %5482 = vmatprep.subr.mxu0 0.0
        %5483 = vmatpush1.msra.mxu0 0.0
        %5484 = vmatprep.mubr.f32.mxu0 0.0
        %5485 = vmatmul.mubr.f32.gmra.mrb[0].mxu0 %v5418
        %v5486 = vpop.f32.mrb[0].mxu0
        %v5487 = vadd.f32 0.0, %v5486
        %v5488 = vpop.f32.mrb[0].mxu0
        %5489 = vdwg.mxu0
        %v5490 = vadd.f32 %v5406, %v5487
        %v5492 = vcombine.high %v5490, %v5490
        %v5494 = vadd.f32 %v4590, %v5490
        %v5495 = vadd.f32 %v4591, %v5492
        %s5496 = scalar_lea.vmem %s818, 1
        %v5497 = vld [vmem:[%s5496] sm:$0x1]
        %s5498 = scalar_lea.vmem %s823, 1
        %v5499 = vld [vmem:[%s5498] sm:$0x1]
        %v5500 = vsel %vm4594, %v5494, 0.0
        %v5501 = vrot.slane %v5500, 4
        %v5502 = vadd.f32 %v5500, %v5501
        %v5503 = vrot.slane %v5502, 2
        %v5504 = vadd.f32 %v5502, %v5503
        %v5505 = vrot.slane %v5504, 1
        %v5506 = vadd.f32 %v5504, %v5505
        %v5507 = vsel %vm4594, %v5495, 0.0
        %v5508 = vrot.slane %v5507, 4
        %v5509 = vadd.f32 %v5507, %v5508
        %v5510 = vrot.slane %v5509, 2
        %v5511 = vadd.f32 %v5509, %v5510
        %v5512 = vrot.slane %v5511, 1
        %v5513 = vadd.f32 %v5511, %v5512
        %v5514 = vmul.f32 %v5494, %v5494
        %v5515 = vmul.f32 %v5495, %v5495
        %v5516 = vsel %vm4594, %v5514, 0.0
        %v5517 = vrot.slane %v5516, 4
        %v5518 = vadd.f32 %v5516, %v5517
        %v5519 = vrot.slane %v5518, 2
        %v5520 = vadd.f32 %v5518, %v5519
        %v5521 = vrot.slane %v5520, 1
        %v5522 = vadd.f32 %v5520, %v5521
        %v5523 = vsel %vm4594, %v5515, 0.0
        %v5524 = vrot.slane %v5523, 4
        %v5525 = vadd.f32 %v5523, %v5524
        %v5526 = vrot.slane %v5525, 2
        %v5527 = vadd.f32 %v5525, %v5526
        %v5528 = vrot.slane %v5527, 1
        %v5529 = vadd.f32 %v5527, %v5528
        %v5532 = vsel %vm4627, %v5513, %v5506
        %v5536 = vsel %vm4632, %v5529, %v5522
        %v5538 = vsel %vm4635, %v5532, %v5536
        %5540 = vrot.lane.b32.xlu0 %v5538, 127
        %v5541 = vpop.permute.xlu0 %5540
        %5543 = vrot.lane.b32.xlu0 %v5538, 63
        %v5544 = vpop.permute.xlu0 %5543
        %v5546 = vsel %vm4644, %v5541, %v5544
        %5547 = vrot.lane.b32.xlu0 %v5538, 65
        %v5548 = vpop.permute.xlu0 %5547
        %5550 = vrot.lane.b32.xlu0 %v5538, 1
        %v5551 = vpop.permute.xlu0 %5550
        %v5553 = vsel %vm4652, %v5548, %v5551
        %v5554 = vadd.f32 %v5538, %v5546
        %v5555 = vadd.f32 %v5538, %v5553
        %v5556 = vsel %vm4668, %v5554, %v5555
        %v5557 = vmul.f32 %v5556, %v4672
        %v5558 = vmul.f32 %v5557, %v5557
        %v5560 = vrot.slane %v5558, 6
        %v5562 = vsub.f32 %v5557, %v5560
        %v5563 = vmax.f32 %v5562, 0.0
        %v5564 = vadd.f32 %v5563, 1e-05
        %v5565 = vrsqrt.pop %v5564
        %v5567 = vlaneseq
        %v5568 = vshrl.u32 %v5567, 7
        %v5569 = vsub.s32 0, %v5568
        %v5570 = vrot.slane %v5497, %v5569
        %v5572 = vmul.f32 %v5570, %v5565
        %v5574 = vrot.slane %v5572, 2
        %v5576 = vmul.f32 %v5557, %v5574
        %v5578 = vlaneseq
        %v5579 = vshrl.u32 %v5578, 7
        %v5580 = vsub.s32 0, %v5579
        %v5581 = vrot.slane %v5499, %v5580
        %v5583 = vsub.f32 %v5581, %v5576
        %v5585 = vunpack.c.l.s4 1966171168
        %v5586 = vunpack.c.0.s8 %v5585
        %v5587 = vlaneseq
        %v5588 = vshrl.u32 %v5587, 7
        %v5589 = vsub.s32 %v5586, %v5588
        %v5590 = vrot.slane %v5572, %v5589
        %v5591 = vcombine.high %v5590, %v5590
        %v5593 = vunpack.c.l.s4 1966171168
        %v5594 = vunpack.c.0.s8 %v5593
        %v5595 = vlaneseq
        %v5596 = vshrl.u32 %v5595, 7
        %v5597 = vsub.s32 %v5594, %v5596
        %v5598 = vrot.slane %v5590, %v5597
        %v5600 = vunpack.c.l.s4 1966171168
        %v5601 = vunpack.c.0.s8 %v5600
        %v5602 = vlaneseq
        %v5603 = vshrl.u32 %v5602, 7
        %v5604 = vsub.s32 %v5601, %v5603
        %v5605 = vrot.slane %v5591, %v5604
        %v5606 = vcombine.high %v5598, %v5598
        %v5607 = vcombine.high %v5605, %v5605
        %v5608 = vlaneseq
        %v5609 = vshrl.u32 %v5608, 7
        %v5610 = vsub.s32 0, %v5609
        %v5611 = vrot.slane %v5606, %v5610
        %v5612 = vlaneseq
        %v5613 = vshrl.u32 %v5612, 7
        %v5614 = vsub.s32 0, %v5613
        %v5615 = vrot.slane %v5607, %v5614
        %v5618 = vmul.f32 %v5494, %v5611
        %v5619 = vmul.f32 %v5495, %v5615
        %v5622 = vunpack.c.l.s4 1966171168
        %v5623 = vunpack.c.0.s8 %v5622
        %v5624 = vlaneseq
        %v5625 = vshrl.u32 %v5624, 7
        %v5626 = vsub.s32 %v5623, %v5625
        %v5627 = vrot.slane %v5583, %v5626
        %v5628 = vcombine.high %v5627, %v5627
        %v5630 = vunpack.c.l.s4 1966171168
        %v5631 = vunpack.c.0.s8 %v5630
        %v5632 = vlaneseq
        %v5633 = vshrl.u32 %v5632, 7
        %v5634 = vsub.s32 %v5631, %v5633
        %v5635 = vrot.slane %v5627, %v5634
        %v5637 = vunpack.c.l.s4 1966171168
        %v5638 = vunpack.c.0.s8 %v5637
        %v5639 = vlaneseq
        %v5640 = vshrl.u32 %v5639, 7
        %v5641 = vsub.s32 %v5638, %v5640
        %v5642 = vrot.slane %v5628, %v5641
        %v5643 = vlaneseq
        %v5644 = vshrl.u32 %v5643, 7
        %v5645 = vsub.s32 0, %v5644
        %v5646 = vrot.slane %v5635, %v5645
        %v5647 = vlaneseq
        %v5648 = vshrl.u32 %v5647, 7
        %v5649 = vsub.s32 0, %v5648
        %v5650 = vrot.slane %v5642, %v5649
        %v5653 = vadd.f32 %v5618, %v5646
        %v5654 = vadd.f32 %v5619, %v5650
        %v5655 = vmax.f32 %v5653, 0.0
        %v5656 = vmax.f32 %v5654, 0.0
        %s5657 = scalar_lea.vmem %s727, 192 [#allocation9]
        %v5658 = vld [vmem:[%s5657] sm:$0xff]
        %v5659 = vld [vmem:[%s5657 + $0x8] sm:$0xff]
        %v5660 = vld [vmem:[%s5657 + $0x10] sm:$0xff]
        %v5661 = vld [vmem:[%s5657 + $0x18] sm:$0xff]
        %v5662 = vld [vmem:[%s5657 + $0x20] sm:$0xff]
        %v5663 = vld [vmem:[%s5657 + $0x28] sm:$0xff]
        %v5664 = vld [vmem:[%s5657 + $0x30] sm:$0xff]
        %v5665 = vld [vmem:[%s5657 + $0x38] sm:$0xff]
        %v5666 = vld [vmem:[%s5657 + $0x40] sm:$0xff]
        %v5667 = vld [vmem:[%s5657 + $0x48] sm:$0xff]
        %v5668 = vld [vmem:[%s5657 + $0x50] sm:$0xff]
        %v5669 = vld [vmem:[%s5657 + $0x58] sm:$0xff]
        %v5670 = vld [vmem:[%s5657 + $0x60] sm:$0xff]
        %v5671 = vld [vmem:[%s5657 + $0x68] sm:$0xff]
        %v5672 = vld [vmem:[%s5657 + $0x70] sm:$0xff]
        %v5673 = vld [vmem:[%s5657 + $0x78] sm:$0xff]
        %v5674 = vld [vmem:[%s5657 + $0x80] sm:$0xff]
        %v5675 = vld [vmem:[%s5657 + $0x88] sm:$0xff]
        %v5676 = vld [vmem:[%s5657 + $0x90] sm:$0xff]
        %v5677 = vld [vmem:[%s5657 + $0x98] sm:$0xff]
        %v5678 = vld [vmem:[%s5657 + $0xa0] sm:$0xff]
        %v5679 = vld [vmem:[%s5657 + $0xa8] sm:$0xff]
        %v5680 = vld [vmem:[%s5657 + $0xb0] sm:$0xff]
        %v5681 = vld [vmem:[%s5657 + $0xb8] sm:$0xff]
        %v5684 = vrot.slane %v5655, 7
        %v5685 = vrot.slane %v5656, 7
        %v5688 = vsel %vm4803, 0.0, %v5684
        %v5689 = vsel %vm4803, 0.0, %v5685
        %v5690 = vsel %vm4806, %v5688, 0.0
        %v5691 = vsel %vm4806, %v5689, 0.0
        %v5694 = vcombine.high %v5690, %v5690
        %v5695 = vcombine.high %v5691, %v5691
        %v5696 = vrot.slane %v5690, 5
        %v5697 = vrot.slane %v5696, 4
        %v5698 = vrot.slane %v5694, 5
        %v5699 = vsel %vm4815, %v5697, %v5698
        %v5700 = vrot.slane %v5691, 5
        %v5701 = vrot.slane %v5700, 4
        %v5702 = vrot.slane %v5695, 5
        %v5703 = vsel %vm4815, %v5701, %v5702
        %v5704 = vcombine.low %v5699, %v5703
        %v5705 = vsel %vm4825, %v5704, 0
        %5707 = vmatprep.subr.mxu0 0.0
        %5708 = vmatpush1.msra.mxu0 %v5666
        %5709 = vmatprep.subr.mxu0 0.0
        %5710 = vmatpush1.msra.mxu0 %v5667
        %5711 = vmatprep.subr.mxu0 0.0
        %5712 = vmatpush1.msra.mxu0 %v5668
        %5713 = vmatprep.subr.mxu0 0.0
        %5714 = vmatpush1.msra.mxu0 %v5669
        %5715 = vmatprep.subr.mxu0 0.0
        %5716 = vmatpush1.msra.mxu0 %v5670
        %5717 = vmatprep.subr.mxu0 0.0
        %5718 = vmatpush1.msra.mxu0 %v5671
        %5719 = vmatprep.subr.mxu0 0.0
        %5720 = vmatpush1.msra.mxu0 %v5672
        %5721 = vmatprep.subr.mxu0 0.0
        %5722 = vmatpush1.msra.mxu0 %v5673
        %5723 = vmatprep.subr.mxu0 0.0
        %5724 = vmatpush1.msra.mxu0 0.0
        %5725 = vmatprep.subr.mxu0 0.0
        %5726 = vmatpush1.msra.mxu0 0.0
        %5727 = vmatprep.subr.mxu0 0.0
        %5728 = vmatpush1.msra.mxu0 0.0
        %5729 = vmatprep.subr.mxu0 0.0
        %5730 = vmatpush1.msra.mxu0 0.0
        %5731 = vmatprep.subr.mxu0 0.0
        %5732 = vmatpush1.msra.mxu0 0.0
        %5733 = vmatprep.subr.mxu0 0.0
        %5734 = vmatpush1.msra.mxu0 0.0
        %5735 = vmatprep.subr.mxu0 0.0
        %5736 = vmatpush1.msra.mxu0 0.0
        %5737 = vmatprep.subr.mxu0 0.0
        %5738 = vmatpush1.msra.mxu0 0.0
        %5739 = vmatprep.subr.mxu0 0.0
        %5740 = vmatpush1.msra.mxu0 0.0
        %5741 = vmatprep.subr.mxu0 0.0
        %5742 = vmatpush1.msra.mxu0 0.0
        %5743 = vmatprep.subr.mxu0 0.0
        %5744 = vmatpush1.msra.mxu0 0.0
        %5745 = vmatprep.subr.mxu0 0.0
        %5746 = vmatpush1.msra.mxu0 0.0
        %5747 = vmatprep.subr.mxu0 0.0
        %5748 = vmatpush1.msra.mxu0 0.0
        %5749 = vmatprep.subr.mxu0 0.0
        %5750 = vmatpush1.msra.mxu0 0.0
        %5751 = vmatprep.subr.mxu0 0.0
        %5752 = vmatpush1.msra.mxu0 0.0
        %5753 = vmatprep.subr.mxu0 0.0
        %5754 = vmatpush1.msra.mxu0 0.0
        %5755 = vmatprep.subr.mxu0 0.0
        %5756 = vmatpush1.msra.mxu0 0.0
        %5757 = vmatprep.subr.mxu0 0.0
        %5758 = vmatpush1.msra.mxu0 0.0
        %5759 = vmatprep.subr.mxu0 0.0
        %5760 = vmatpush1.msra.mxu0 0.0
        %5761 = vmatprep.subr.mxu0 0.0
        %5762 = vmatpush1.msra.mxu0 0.0
        %5763 = vmatprep.subr.mxu0 0.0
        %5764 = vmatpush1.msra.mxu0 0.0
        %5765 = vmatprep.subr.mxu0 0.0
        %5766 = vmatpush1.msra.mxu0 0.0
        %5767 = vmatprep.subr.mxu0 0.0
        %5768 = vmatpush1.msra.mxu0 0.0
        %5769 = vmatprep.subr.mxu0 0.0
        %5770 = vmatpush1.msra.mxu0 0.0
        %5771 = vmatprep.mubr.f32.mxu0 0.0
        %5772 = vmatmul.mubr.f32.gmra.mrb[0].mxu0 %v5705
        %v5773 = vpop.f32.mrb[0].mxu0
        %v5774 = vadd.f32 0.0, %v5773
        %v5775 = vpop.f32.mrb[0].mxu0
        %5776 = vdwg.mxu0
        %v5777 = vcombine.low %v5690, %v5691
        %v5778 = vsel %vm4825, %v5777, 0
        %5780 = vmatprep.subr.mxu0 0.0
        %5781 = vmatpush1.msra.mxu0 %v5658
        %5782 = vmatprep.subr.mxu0 0.0
        %5783 = vmatpush1.msra.mxu0 %v5659
        %5784 = vmatprep.subr.mxu0 0.0
        %5785 = vmatpush1.msra.mxu0 %v5660
        %5786 = vmatprep.subr.mxu0 0.0
        %5787 = vmatpush1.msra.mxu0 %v5661
        %5788 = vmatprep.subr.mxu0 0.0
        %5789 = vmatpush1.msra.mxu0 %v5662
        %5790 = vmatprep.subr.mxu0 0.0
        %5791 = vmatpush1.msra.mxu0 %v5663
        %5792 = vmatprep.subr.mxu0 0.0
        %5793 = vmatpush1.msra.mxu0 %v5664
        %5794 = vmatprep.subr.mxu0 0.0
        %5795 = vmatpush1.msra.mxu0 %v5665
        %5796 = vmatprep.subr.mxu0 0.0
        %5797 = vmatpush1.msra.mxu0 0.0
        %5798 = vmatprep.subr.mxu0 0.0
        %5799 = vmatpush1.msra.mxu0 0.0
        %5800 = vmatprep.subr.mxu0 0.0
        %5801 = vmatpush1.msra.mxu0 0.0
        %5802 = vmatprep.subr.mxu0 0.0
        %5803 = vmatpush1.msra.mxu0 0.0
        %5804 = vmatprep.subr.mxu0 0.0
        %5805 = vmatpush1.msra.mxu0 0.0
        %5806 = vmatprep.subr.mxu0 0.0
        %5807 = vmatpush1.msra.mxu0 0.0
        %5808 = vmatprep.subr.mxu0 0.0
        %5809 = vmatpush1.msra.mxu0 0.0
        %5810 = vmatprep.subr.mxu0 0.0
        %5811 = vmatpush1.msra.mxu0 0.0
        %5812 = vmatprep.subr.mxu0 0.0
        %5813 = vmatpush1.msra.mxu0 0.0
        %5814 = vmatprep.subr.mxu0 0.0
        %5815 = vmatpush1.msra.mxu0 0.0
        %5816 = vmatprep.subr.mxu0 0.0
        %5817 = vmatpush1.msra.mxu0 0.0
        %5818 = vmatprep.subr.mxu0 0.0
        %5819 = vmatpush1.msra.mxu0 0.0
        %5820 = vmatprep.subr.mxu0 0.0
        %5821 = vmatpush1.msra.mxu0 0.0
        %5822 = vmatprep.subr.mxu0 0.0
        %5823 = vmatpush1.msra.mxu0 0.0
        %5824 = vmatprep.subr.mxu0 0.0
        %5825 = vmatpush1.msra.mxu0 0.0
        %5826 = vmatprep.subr.mxu0 0.0
        %5827 = vmatpush1.msra.mxu0 0.0
        %5828 = vmatprep.subr.mxu0 0.0
        %5829 = vmatpush1.msra.mxu0 0.0
        %5830 = vmatprep.subr.mxu0 0.0
        %5831 = vmatpush1.msra.mxu0 0.0
        %5832 = vmatprep.subr.mxu0 0.0
        %5833 = vmatpush1.msra.mxu0 0.0
        %5834 = vmatprep.subr.mxu0 0.0
        %5835 = vmatpush1.msra.mxu0 0.0
        %5836 = vmatprep.subr.mxu0 0.0
        %5837 = vmatpush1.msra.mxu0 0.0
        %5838 = vmatprep.subr.mxu0 0.0
        %5839 = vmatpush1.msra.mxu0 0.0
        %5840 = vmatprep.subr.mxu0 0.0
        %5841 = vmatpush1.msra.mxu0 0.0
        %5842 = vmatprep.subr.mxu0 0.0
        %5843 = vmatpush1.msra.mxu0 0.0
        %5844 = vmatprep.mubr.f32.mxu0 0.0
        %5845 = vmatmul.mubr.f32.gmra.mrb[0].mxu0 %v5778
        %v5846 = vpop.f32.mrb[0].mxu0
        %v5847 = vadd.f32 %v5774, %v5846
        %v5848 = vpop.f32.mrb[0].mxu0
        %5849 = vdwg.mxu0
        %v5850 = vrot.slane %v5690, 6
        %v5851 = vrot.slane %v5850, 4
        %v5852 = vrot.slane %v5694, 6
        %v5853 = vsel %vm4972, %v5851, %v5852
        %v5854 = vrot.slane %v5691, 6
        %v5855 = vrot.slane %v5854, 4
        %v5856 = vrot.slane %v5695, 6
        %v5857 = vsel %vm4972, %v5855, %v5856
        %v5858 = vcombine.low %v5853, %v5857
        %v5859 = vsel %vm4825, %v5858, 0
        %5861 = vmatprep.subr.mxu0 0.0
        %5862 = vmatpush1.msra.mxu0 %v5674
        %5863 = vmatprep.subr.mxu0 0.0
        %5864 = vmatpush1.msra.mxu0 %v5675
        %5865 = vmatprep.subr.mxu0 0.0
        %5866 = vmatpush1.msra.mxu0 %v5676
        %5867 = vmatprep.subr.mxu0 0.0
        %5868 = vmatpush1.msra.mxu0 %v5677
        %5869 = vmatprep.subr.mxu0 0.0
        %5870 = vmatpush1.msra.mxu0 %v5678
        %5871 = vmatprep.subr.mxu0 0.0
        %5872 = vmatpush1.msra.mxu0 %v5679
        %5873 = vmatprep.subr.mxu0 0.0
        %5874 = vmatpush1.msra.mxu0 %v5680
        %5875 = vmatprep.subr.mxu0 0.0
        %5876 = vmatpush1.msra.mxu0 %v5681
        %5877 = vmatprep.subr.mxu0 0.0
        %5878 = vmatpush1.msra.mxu0 0.0
        %5879 = vmatprep.subr.mxu0 0.0
        %5880 = vmatpush1.msra.mxu0 0.0
        %5881 = vmatprep.subr.mxu0 0.0
        %5882 = vmatpush1.msra.mxu0 0.0
        %5883 = vmatprep.subr.mxu0 0.0
        %5884 = vmatpush1.msra.mxu0 0.0
        %5885 = vmatprep.subr.mxu0 0.0
        %5886 = vmatpush1.msra.mxu0 0.0
        %5887 = vmatprep.subr.mxu0 0.0
        %5888 = vmatpush1.msra.mxu0 0.0
        %5889 = vmatprep.subr.mxu0 0.0
        %5890 = vmatpush1.msra.mxu0 0.0
        %5891 = vmatprep.subr.mxu0 0.0
        %5892 = vmatpush1.msra.mxu0 0.0
        %5893 = vmatprep.subr.mxu0 0.0
        %5894 = vmatpush1.msra.mxu0 0.0
        %5895 = vmatprep.subr.mxu0 0.0
        %5896 = vmatpush1.msra.mxu0 0.0
        %5897 = vmatprep.subr.mxu0 0.0
        %5898 = vmatpush1.msra.mxu0 0.0
        %5899 = vmatprep.subr.mxu0 0.0
        %5900 = vmatpush1.msra.mxu0 0.0
        %5901 = vmatprep.subr.mxu0 0.0
        %5902 = vmatpush1.msra.mxu0 0.0
        %5903 = vmatprep.subr.mxu0 0.0
        %5904 = vmatpush1.msra.mxu0 0.0
        %5905 = vmatprep.subr.mxu0 0.0
        %5906 = vmatpush1.msra.mxu0 0.0
        %5907 = vmatprep.subr.mxu0 0.0
        %5908 = vmatpush1.msra.mxu0 0.0
        %5909 = vmatprep.subr.mxu0 0.0
        %5910 = vmatpush1.msra.mxu0 0.0
        %5911 = vmatprep.subr.mxu0 0.0
        %5912 = vmatpush1.msra.mxu0 0.0
        %5913 = vmatprep.subr.mxu0 0.0
        %5914 = vmatpush1.msra.mxu0 0.0
        %5915 = vmatprep.subr.mxu0 0.0
        %5916 = vmatpush1.msra.mxu0 0.0
        %5917 = vmatprep.subr.mxu0 0.0
        %5918 = vmatpush1.msra.mxu0 0.0
        %5919 = vmatprep.subr.mxu0 0.0
        %5920 = vmatpush1.msra.mxu0 0.0
        %5921 = vmatprep.subr.mxu0 0.0
        %5922 = vmatpush1.msra.mxu0 0.0
        %5923 = vmatprep.subr.mxu0 0.0
        %5924 = vmatpush1.msra.mxu0 0.0
        %5925 = vmatprep.mubr.f32.mxu0 0.0
        %5926 = vmatmul.mubr.f32.gmra.mrb[0].mxu0 %v5859
        %v5927 = vpop.f32.mrb[0].mxu0
        %v5928 = vadd.f32 0.0, %v5927
        %v5929 = vpop.f32.mrb[0].mxu0
        %5930 = vdwg.mxu0
        %v5931 = vadd.f32 %v5847, %v5928
        %v5933 = vcombine.high %v5931, %v5931
        %s5935 = scalar_lea.vmem %s828, 1
        %v5936 = vld [vmem:[%s5935] sm:$0x1]
        %s5937 = scalar_lea.vmem %s833, 1
        %v5938 = vld [vmem:[%s5937] sm:$0x1]
        %v5939 = vsel %vm4594, %v5931, 0.0
        %v5940 = vrot.slane %v5939, 4
        %v5941 = vadd.f32 %v5939, %v5940
        %v5942 = vrot.slane %v5941, 2
        %v5943 = vadd.f32 %v5941, %v5942
        %v5944 = vrot.slane %v5943, 1
        %v5945 = vadd.f32 %v5943, %v5944
        %v5946 = vsel %vm4594, %v5933, 0.0
        %v5947 = vrot.slane %v5946, 4
        %v5948 = vadd.f32 %v5946, %v5947
        %v5949 = vrot.slane %v5948, 2
        %v5950 = vadd.f32 %v5948, %v5949
        %v5951 = vrot.slane %v5950, 1
        %v5952 = vadd.f32 %v5950, %v5951
        %v5953 = vmul.f32 %v5931, %v5931
        %v5954 = vmul.f32 %v5933, %v5933
        %v5955 = vsel %vm4594, %v5953, 0.0
        %v5956 = vrot.slane %v5955, 4
        %v5957 = vadd.f32 %v5955, %v5956
        %v5958 = vrot.slane %v5957, 2
        %v5959 = vadd.f32 %v5957, %v5958
        %v5960 = vrot.slane %v5959, 1
        %v5961 = vadd.f32 %v5959, %v5960
        %v5962 = vsel %vm4594, %v5954, 0.0
        %v5963 = vrot.slane %v5962, 4
        %v5964 = vadd.f32 %v5962, %v5963
        %v5965 = vrot.slane %v5964, 2
        %v5966 = vadd.f32 %v5964, %v5965
        %v5967 = vrot.slane %v5966, 1
        %v5968 = vadd.f32 %v5966, %v5967
        %v5971 = vsel %vm4627, %v5952, %v5945
        %v5975 = vsel %vm4632, %v5968, %v5961
        %v5977 = vsel %vm4635, %v5971, %v5975
        %5979 = vrot.lane.b32.xlu0 %v5977, 127
        %v5980 = vpop.permute.xlu0 %5979
        %5982 = vrot.lane.b32.xlu0 %v5977, 63
        %v5983 = vpop.permute.xlu0 %5982
        %v5985 = vsel %vm4644, %v5980, %v5983
        %5986 = vrot.lane.b32.xlu0 %v5977, 65
        %v5987 = vpop.permute.xlu0 %5986
        %5989 = vrot.lane.b32.xlu0 %v5977, 1
        %v5990 = vpop.permute.xlu0 %5989
        %v5992 = vsel %vm4652, %v5987, %v5990
        %v5993 = vadd.f32 %v5977, %v5985
        %v5994 = vadd.f32 %v5977, %v5992
        %v5995 = vsel %vm4668, %v5993, %v5994
        %v5996 = vmul.f32 %v5995, %v4672
        %v5997 = vmul.f32 %v5996, %v5996
        %v5999 = vrot.slane %v5997, 6
        %v6001 = vsub.f32 %v5996, %v5999
        %v6002 = vmax.f32 %v6001, 0.0
        %v6003 = vadd.f32 %v6002, 1e-05
        %v6004 = vrsqrt.pop %v6003
        %v6006 = vlaneseq
        %v6007 = vshrl.u32 %v6006, 7
        %v6008 = vsub.s32 0, %v6007
        %v6009 = vrot.slane %v5936, %v6008
        %v6011 = vmul.f32 %v6009, %v6004
        %v6013 = vrot.slane %v6011, 2
        %v6015 = vmul.f32 %v5996, %v6013
        %v6017 = vlaneseq
        %v6018 = vshrl.u32 %v6017, 7
        %v6019 = vsub.s32 0, %v6018
        %v6020 = vrot.slane %v5938, %v6019
        %v6022 = vsub.f32 %v6020, %v6015
        %v6024 = vunpack.c.l.s4 1966171168
        %v6025 = vunpack.c.0.s8 %v6024
        %v6026 = vlaneseq
        %v6027 = vshrl.u32 %v6026, 7
        %v6028 = vsub.s32 %v6025, %v6027
        %v6029 = vrot.slane %v6011, %v6028
        %v6030 = vcombine.high %v6029, %v6029
        %v6032 = vunpack.c.l.s4 1966171168
        %v6033 = vunpack.c.0.s8 %v6032
        %v6034 = vlaneseq
        %v6035 = vshrl.u32 %v6034, 7
        %v6036 = vsub.s32 %v6033, %v6035
        %v6037 = vrot.slane %v6029, %v6036
        %v6039 = vunpack.c.l.s4 1966171168
        %v6040 = vunpack.c.0.s8 %v6039
        %v6041 = vlaneseq
        %v6042 = vshrl.u32 %v6041, 7
        %v6043 = vsub.s32 %v6040, %v6042
        %v6044 = vrot.slane %v6030, %v6043
        %v6045 = vcombine.high %v6037, %v6037
        %v6046 = vcombine.high %v6044, %v6044
        %v6047 = vlaneseq
        %v6048 = vshrl.u32 %v6047, 7
        %v6049 = vsub.s32 0, %v6048
        %v6050 = vrot.slane %v6045, %v6049
        %v6051 = vlaneseq
        %v6052 = vshrl.u32 %v6051, 7
        %v6053 = vsub.s32 0, %v6052
        %v6054 = vrot.slane %v6046, %v6053
        %v6057 = vmul.f32 %v5931, %v6050
        %v6058 = vmul.f32 %v5933, %v6054
        %v6061 = vunpack.c.l.s4 1966171168
        %v6062 = vunpack.c.0.s8 %v6061
        %v6063 = vlaneseq
        %v6064 = vshrl.u32 %v6063, 7
        %v6065 = vsub.s32 %v6062, %v6064
        %v6066 = vrot.slane %v6022, %v6065
        %v6067 = vcombine.high %v6066, %v6066
        %v6069 = vunpack.c.l.s4 1966171168
        %v6070 = vunpack.c.0.s8 %v6069
        %v6071 = vlaneseq
        %v6072 = vshrl.u32 %v6071, 7
        %v6073 = vsub.s32 %v6070, %v6072
        %v6074 = vrot.slane %v6066, %v6073
        %v6076 = vunpack.c.l.s4 1966171168
        %v6077 = vunpack.c.0.s8 %v6076
        %v6078 = vlaneseq
        %v6079 = vshrl.u32 %v6078, 7
        %v6080 = vsub.s32 %v6077, %v6079
        %v6081 = vrot.slane %v6067, %v6080
        %v6082 = vlaneseq
        %v6083 = vshrl.u32 %v6082, 7
        %v6084 = vsub.s32 0, %v6083
        %v6085 = vrot.slane %v6074, %v6084
        %v6086 = vlaneseq
        %v6087 = vshrl.u32 %v6086, 7
        %v6088 = vsub.s32 0, %v6087
        %v6089 = vrot.slane %v6081, %v6088
        %v6092 = vadd.f32 %v6057, %v6085
        %v6093 = vadd.f32 %v6058, %v6089
        %v6094 = vmax.f32 %v6092, 0.0
        %v6095 = vmax.f32 %v6093, 0.0
        %s6096 = scalar_lea.vmem %s736, 192 [#allocation10]
        %v6097 = vld [vmem:[%s6096] sm:$0xff]
        %v6098 = vld [vmem:[%s6096 + $0x8] sm:$0xff]
        %v6099 = vld [vmem:[%s6096 + $0x10] sm:$0xff]
        %v6100 = vld [vmem:[%s6096 + $0x18] sm:$0xff]
        %v6101 = vld [vmem:[%s6096 + $0x20] sm:$0xff]
        %v6102 = vld [vmem:[%s6096 + $0x28] sm:$0xff]
        %v6103 = vld [vmem:[%s6096 + $0x30] sm:$0xff]
        %v6104 = vld [vmem:[%s6096 + $0x38] sm:$0xff]
        %v6105 = vld [vmem:[%s6096 + $0x40] sm:$0xff]
        %v6106 = vld [vmem:[%s6096 + $0x48] sm:$0xff]
        %v6107 = vld [vmem:[%s6096 + $0x50] sm:$0xff]
        %v6108 = vld [vmem:[%s6096 + $0x58] sm:$0xff]
        %v6109 = vld [vmem:[%s6096 + $0x60] sm:$0xff]
        %v6110 = vld [vmem:[%s6096 + $0x68] sm:$0xff]
        %v6111 = vld [vmem:[%s6096 + $0x70] sm:$0xff]
        %v6112 = vld [vmem:[%s6096 + $0x78] sm:$0xff]
        %v6113 = vld [vmem:[%s6096 + $0x80] sm:$0xff]
        %v6114 = vld [vmem:[%s6096 + $0x88] sm:$0xff]
        %v6115 = vld [vmem:[%s6096 + $0x90] sm:$0xff]
        %v6116 = vld [vmem:[%s6096 + $0x98] sm:$0xff]
        %v6117 = vld [vmem:[%s6096 + $0xa0] sm:$0xff]
        %v6118 = vld [vmem:[%s6096 + $0xa8] sm:$0xff]
        %v6119 = vld [vmem:[%s6096 + $0xb0] sm:$0xff]
        %v6120 = vld [vmem:[%s6096 + $0xb8] sm:$0xff]
        %v6123 = vrot.slane %v6094, 7
        %v6124 = vrot.slane %v6095, 7
        %v6127 = vsel %vm4803, 0.0, %v6123
        %v6128 = vsel %vm4803, 0.0, %v6124
        %v6129 = vsel %vm4806, %v6127, 0.0
        %v6130 = vsel %vm4806, %v6128, 0.0
        %v6133 = vcombine.high %v6129, %v6129
        %v6134 = vcombine.high %v6130, %v6130
        %v6135 = vrot.slane %v6129, 5
        %v6136 = vrot.slane %v6135, 4
        %v6137 = vrot.slane %v6133, 5
        %v6138 = vsel %vm4815, %v6136, %v6137
        %v6139 = vrot.slane %v6130, 5
        %v6140 = vrot.slane %v6139, 4
        %v6141 = vrot.slane %v6134, 5
        %v6142 = vsel %vm4815, %v6140, %v6141
        %v6143 = vcombine.low %v6138, %v6142
        %v6144 = vsel %vm4825, %v6143, 0
        %6146 = vmatprep.subr.mxu0 0.0
        %6147 = vmatpush1.msra.mxu0 %v6105
        %6148 = vmatprep.subr.mxu0 0.0
        %6149 = vmatpush1.msra.mxu0 %v6106
        %6150 = vmatprep.subr.mxu0 0.0
        %6151 = vmatpush1.msra.mxu0 %v6107
        %6152 = vmatprep.subr.mxu0 0.0
        %6153 = vmatpush1.msra.mxu0 %v6108
        %6154 = vmatprep.subr.mxu0 0.0
        %6155 = vmatpush1.msra.mxu0 %v6109
        %6156 = vmatprep.subr.mxu0 0.0
        %6157 = vmatpush1.msra.mxu0 %v6110
        %6158 = vmatprep.subr.mxu0 0.0
        %6159 = vmatpush1.msra.mxu0 %v6111
        %6160 = vmatprep.subr.mxu0 0.0
        %6161 = vmatpush1.msra.mxu0 %v6112
        %6162 = vmatprep.subr.mxu0 0.0
        %6163 = vmatpush1.msra.mxu0 0.0
        %6164 = vmatprep.subr.mxu0 0.0
        %6165 = vmatpush1.msra.mxu0 0.0
        %6166 = vmatprep.subr.mxu0 0.0
        %6167 = vmatpush1.msra.mxu0 0.0
        %6168 = vmatprep.subr.mxu0 0.0
        %6169 = vmatpush1.msra.mxu0 0.0
        %6170 = vmatprep.subr.mxu0 0.0
        %6171 = vmatpush1.msra.mxu0 0.0
        %6172 = vmatprep.subr.mxu0 0.0
        %6173 = vmatpush1.msra.mxu0 0.0
        %6174 = vmatprep.subr.mxu0 0.0
        %6175 = vmatpush1.msra.mxu0 0.0
        %6176 = vmatprep.subr.mxu0 0.0
        %6177 = vmatpush1.msra.mxu0 0.0
        %6178 = vmatprep.subr.mxu0 0.0
        %6179 = vmatpush1.msra.mxu0 0.0
        %6180 = vmatprep.subr.mxu0 0.0
        %6181 = vmatpush1.msra.mxu0 0.0
        %6182 = vmatprep.subr.mxu0 0.0
        %6183 = vmatpush1.msra.mxu0 0.0
        %6184 = vmatprep.subr.mxu0 0.0
        %6185 = vmatpush1.msra.mxu0 0.0
        %6186 = vmatprep.subr.mxu0 0.0
        %6187 = vmatpush1.msra.mxu0 0.0
        %6188 = vmatprep.subr.mxu0 0.0
        %6189 = vmatpush1.msra.mxu0 0.0
        %6190 = vmatprep.subr.mxu0 0.0
        %6191 = vmatpush1.msra.mxu0 0.0
        %6192 = vmatprep.subr.mxu0 0.0
        %6193 = vmatpush1.msra.mxu0 0.0
        %6194 = vmatprep.subr.mxu0 0.0
        %6195 = vmatpush1.msra.mxu0 0.0
        %6196 = vmatprep.subr.mxu0 0.0
        %6197 = vmatpush1.msra.mxu0 0.0
        %6198 = vmatprep.subr.mxu0 0.0
        %6199 = vmatpush1.msra.mxu0 0.0
        %6200 = vmatprep.subr.mxu0 0.0
        %6201 = vmatpush1.msra.mxu0 0.0
        %6202 = vmatprep.subr.mxu0 0.0
        %6203 = vmatpush1.msra.mxu0 0.0
        %6204 = vmatprep.subr.mxu0 0.0
        %6205 = vmatpush1.msra.mxu0 0.0
        %6206 = vmatprep.subr.mxu0 0.0
        %6207 = vmatpush1.msra.mxu0 0.0
        %6208 = vmatprep.subr.mxu0 0.0
        %6209 = vmatpush1.msra.mxu0 0.0
        %6210 = vmatprep.mubr.f32.mxu0 0.0
        %6211 = vmatmul.mubr.f32.gmra.mrb[0].mxu0 %v6144
        %v6212 = vpop.f32.mrb[0].mxu0
        %v6213 = vadd.f32 0.0, %v6212
        %v6214 = vpop.f32.mrb[0].mxu0
        %6215 = vdwg.mxu0
        %v6216 = vcombine.low %v6129, %v6130
        %v6217 = vsel %vm4825, %v6216, 0
        %6219 = vmatprep.subr.mxu0 0.0
        %6220 = vmatpush1.msra.mxu0 %v6097
        %6221 = vmatprep.subr.mxu0 0.0
        %6222 = vmatpush1.msra.mxu0 %v6098
        %6223 = vmatprep.subr.mxu0 0.0
        %6224 = vmatpush1.msra.mxu0 %v6099
        %6225 = vmatprep.subr.mxu0 0.0
        %6226 = vmatpush1.msra.mxu0 %v6100
        %6227 = vmatprep.subr.mxu0 0.0
        %6228 = vmatpush1.msra.mxu0 %v6101
        %6229 = vmatprep.subr.mxu0 0.0
        %6230 = vmatpush1.msra.mxu0 %v6102
        %6231 = vmatprep.subr.mxu0 0.0
        %6232 = vmatpush1.msra.mxu0 %v6103
        %6233 = vmatprep.subr.mxu0 0.0
        %6234 = vmatpush1.msra.mxu0 %v6104
        %6235 = vmatprep.subr.mxu0 0.0
        %6236 = vmatpush1.msra.mxu0 0.0
        %6237 = vmatprep.subr.mxu0 0.0
        %6238 = vmatpush1.msra.mxu0 0.0
        %6239 = vmatprep.subr.mxu0 0.0
        %6240 = vmatpush1.msra.mxu0 0.0
        %6241 = vmatprep.subr.mxu0 0.0
        %6242 = vmatpush1.msra.mxu0 0.0
        %6243 = vmatprep.subr.mxu0 0.0
        %6244 = vmatpush1.msra.mxu0 0.0
        %6245 = vmatprep.subr.mxu0 0.0
        %6246 = vmatpush1.msra.mxu0 0.0
        %6247 = vmatprep.subr.mxu0 0.0
        %6248 = vmatpush1.msra.mxu0 0.0
        %6249 = vmatprep.subr.mxu0 0.0
        %6250 = vmatpush1.msra.mxu0 0.0
        %6251 = vmatprep.subr.mxu0 0.0
        %6252 = vmatpush1.msra.mxu0 0.0
        %6253 = vmatprep.subr.mxu0 0.0
        %6254 = vmatpush1.msra.mxu0 0.0
        %6255 = vmatprep.subr.mxu0 0.0
        %6256 = vmatpush1.msra.mxu0 0.0
        %6257 = vmatprep.subr.mxu0 0.0
        %6258 = vmatpush1.msra.mxu0 0.0
        %6259 = vmatprep.subr.mxu0 0.0
        %6260 = vmatpush1.msra.mxu0 0.0
        %6261 = vmatprep.subr.mxu0 0.0
        %6262 = vmatpush1.msra.mxu0 0.0
        %6263 = vmatprep.subr.mxu0 0.0
        %6264 = vmatpush1.msra.mxu0 0.0
        %6265 = vmatprep.subr.mxu0 0.0
        %6266 = vmatpush1.msra.mxu0 0.0
        %6267 = vmatprep.subr.mxu0 0.0
        %6268 = vmatpush1.msra.mxu0 0.0
        %6269 = vmatprep.subr.mxu0 0.0
        %6270 = vmatpush1.msra.mxu0 0.0
        %6271 = vmatprep.subr.mxu0 0.0
        %6272 = vmatpush1.msra.mxu0 0.0
        %6273 = vmatprep.subr.mxu0 0.0
        %6274 = vmatpush1.msra.mxu0 0.0
        %6275 = vmatprep.subr.mxu0 0.0
        %6276 = vmatpush1.msra.mxu0 0.0
        %6277 = vmatprep.subr.mxu0 0.0
        %6278 = vmatpush1.msra.mxu0 0.0
        %6279 = vmatprep.subr.mxu0 0.0
        %6280 = vmatpush1.msra.mxu0 0.0
        %6281 = vmatprep.subr.mxu0 0.0
        %6282 = vmatpush1.msra.mxu0 0.0
        %6283 = vmatprep.mubr.f32.mxu0 0.0
        %6284 = vmatmul.mubr.f32.gmra.mrb[0].mxu0 %v6217
        %v6285 = vpop.f32.mrb[0].mxu0
        %v6286 = vadd.f32 %v6213, %v6285
        %v6287 = vpop.f32.mrb[0].mxu0
        %6288 = vdwg.mxu0
        %v6289 = vrot.slane %v6129, 6
        %v6290 = vrot.slane %v6289, 4
        %v6291 = vrot.slane %v6133, 6
        %v6292 = vsel %vm4972, %v6290, %v6291
        %v6293 = vrot.slane %v6130, 6
        %v6294 = vrot.slane %v6293, 4
        %v6295 = vrot.slane %v6134, 6
        %v6296 = vsel %vm4972, %v6294, %v6295
        %v6297 = vcombine.low %v6292, %v6296
        %v6298 = vsel %vm4825, %v6297, 0
        %6300 = vmatprep.subr.mxu0 0.0
        %6301 = vmatpush1.msra.mxu0 %v6113
        %6302 = vmatprep.subr.mxu0 0.0
        %6303 = vmatpush1.msra.mxu0 %v6114
        %6304 = vmatprep.subr.mxu0 0.0
        %6305 = vmatpush1.msra.mxu0 %v6115
        %6306 = vmatprep.subr.mxu0 0.0
        %6307 = vmatpush1.msra.mxu0 %v6116
        %6308 = vmatprep.subr.mxu0 0.0
        %6309 = vmatpush1.msra.mxu0 %v6117
        %6310 = vmatprep.subr.mxu0 0.0
        %6311 = vmatpush1.msra.mxu0 %v6118
        %6312 = vmatprep.subr.mxu0 0.0
        %6313 = vmatpush1.msra.mxu0 %v6119
        %6314 = vmatprep.subr.mxu0 0.0
        %6315 = vmatpush1.msra.mxu0 %v6120
        %6316 = vmatprep.subr.mxu0 0.0
        %6317 = vmatpush1.msra.mxu0 0.0
        %6318 = vmatprep.subr.mxu0 0.0
        %6319 = vmatpush1.msra.mxu0 0.0
        %6320 = vmatprep.subr.mxu0 0.0
        %6321 = vmatpush1.msra.mxu0 0.0
        %6322 = vmatprep.subr.mxu0 0.0
        %6323 = vmatpush1.msra.mxu0 0.0
        %6324 = vmatprep.subr.mxu0 0.0
        %6325 = vmatpush1.msra.mxu0 0.0
        %6326 = vmatprep.subr.mxu0 0.0
        %6327 = vmatpush1.msra.mxu0 0.0
        %6328 = vmatprep.subr.mxu0 0.0
        %6329 = vmatpush1.msra.mxu0 0.0
        %6330 = vmatprep.subr.mxu0 0.0
        %6331 = vmatpush1.msra.mxu0 0.0
        %6332 = vmatprep.subr.mxu0 0.0
        %6333 = vmatpush1.msra.mxu0 0.0
        %6334 = vmatprep.subr.mxu0 0.0
        %6335 = vmatpush1.msra.mxu0 0.0
        %6336 = vmatprep.subr.mxu0 0.0
        %6337 = vmatpush1.msra.mxu0 0.0
        %6338 = vmatprep.subr.mxu0 0.0
        %6339 = vmatpush1.msra.mxu0 0.0
        %6340 = vmatprep.subr.mxu0 0.0
        %6341 = vmatpush1.msra.mxu0 0.0
        %6342 = vmatprep.subr.mxu0 0.0
        %6343 = vmatpush1.msra.mxu0 0.0
        %6344 = vmatprep.subr.mxu0 0.0
        %6345 = vmatpush1.msra.mxu0 0.0
        %6346 = vmatprep.subr.mxu0 0.0
        %6347 = vmatpush1.msra.mxu0 0.0
        %6348 = vmatprep.subr.mxu0 0.0
        %6349 = vmatpush1.msra.mxu0 0.0
        %6350 = vmatprep.subr.mxu0 0.0
        %6351 = vmatpush1.msra.mxu0 0.0
        %6352 = vmatprep.subr.mxu0 0.0
        %6353 = vmatpush1.msra.mxu0 0.0
        %6354 = vmatprep.subr.mxu0 0.0
        %6355 = vmatpush1.msra.mxu0 0.0
        %6356 = vmatprep.subr.mxu0 0.0
        %6357 = vmatpush1.msra.mxu0 0.0
        %6358 = vmatprep.subr.mxu0 0.0
        %6359 = vmatpush1.msra.mxu0 0.0
        %6360 = vmatprep.subr.mxu0 0.0
        %6361 = vmatpush1.msra.mxu0 0.0
        %6362 = vmatprep.subr.mxu0 0.0
        %6363 = vmatpush1.msra.mxu0 0.0
        %6364 = vmatprep.mubr.f32.mxu0 0.0
        %6365 = vmatmul.mubr.f32.gmra.mrb[0].mxu0 %v6298
        %v6366 = vpop.f32.mrb[0].mxu0
        %v6367 = vadd.f32 0.0, %v6366
        %v6368 = vpop.f32.mrb[0].mxu0
        %6369 = vdwg.mxu0
        %v6370 = vadd.f32 %v6286, %v6367
        %v6372 = vcombine.high %v6370, %v6370
        %v6374 = vadd.f32 %v5494, %v6370
        %v6375 = vadd.f32 %v5495, %v6372
        %6376 = vst.msk [vmem:[#allocation2] sm:$0xf] %vm4594, %v6374
        %6377 = vst.msk [vmem:[#allocation2 + $0x4] sm:$0xf] %vm4594, %v6375
        %p6378 = scmp.eq.s32.totalorder %s37, 2
        // Predicated region
        $region129: #{lstmfrn_forward.1} parent=107 // pred_check
          %p6379 = pneg %p6378
        $region130: #{lstmfrn_forward.1} parent=107 // pred_check_branch
          %6381 = sbr.rel (%p6379) target = $region132
        $region131: #{lstmfrn_forward.1} parent=107 // pred_region
          %v6382 = vld [vmem:[#allocation2] sm:$0xf]
          %v6383 = vld [vmem:[#allocation2 + $0x4] sm:$0xf]
          %v6384 = vld [vmem:[%s18] sm:$0x1]
          %v6385 = vld [vmem:[%s19] sm:$0x1]
          %v6386 = vsel %vm4594, %v6382, 0.0
          %v6387 = vrot.slane %v6386, 4
          %v6388 = vadd.f32 %v6386, %v6387
          %v6389 = vrot.slane %v6388, 2
          %v6390 = vadd.f32 %v6388, %v6389
          %v6391 = vrot.slane %v6390, 1
          %v6392 = vadd.f32 %v6390, %v6391
          %v6393 = vsel %vm4594, %v6383, 0.0
          %v6394 = vrot.slane %v6393, 4
          %v6395 = vadd.f32 %v6393, %v6394
          %v6396 = vrot.slane %v6395, 2
          %v6397 = vadd.f32 %v6395, %v6396
          %v6398 = vrot.slane %v6397, 1
          %v6399 = vadd.f32 %v6397, %v6398
          %v6400 = vmul.f32 %v6382, %v6382
          %v6401 = vmul.f32 %v6383, %v6383
          %v6402 = vsel %vm4594, %v6400, 0.0
          %v6403 = vrot.slane %v6402, 4
          %v6404 = vadd.f32 %v6402, %v6403
          %v6405 = vrot.slane %v6404, 2
          %v6406 = vadd.f32 %v6404, %v6405
          %v6407 = vrot.slane %v6406, 1
          %v6408 = vadd.f32 %v6406, %v6407
          %v6409 = vsel %vm4594, %v6401, 0.0
          %v6410 = vrot.slane %v6409, 4
          %v6411 = vadd.f32 %v6409, %v6410
          %v6412 = vrot.slane %v6411, 2
          %v6413 = vadd.f32 %v6411, %v6412
          %v6414 = vrot.slane %v6413, 1
          %v6415 = vadd.f32 %v6413, %v6414
          %v6418 = vsel %vm4627, %v6399, %v6392
          %v6422 = vsel %vm4632, %v6415, %v6408
          %v6424 = vsel %vm4635, %v6418, %v6422
          %6426 = vrot.lane.b32.xlu0 %v6424, 127
          %v6427 = vpop.permute.xlu0 %6426
          %6429 = vrot.lane.b32.xlu0 %v6424, 63
          %v6430 = vpop.permute.xlu0 %6429
          %v6432 = vsel %vm4644, %v6427, %v6430
          %6433 = vrot.lane.b32.xlu0 %v6424, 65
          %v6434 = vpop.permute.xlu0 %6433
          %6436 = vrot.lane.b32.xlu0 %v6424, 1
          %v6437 = vpop.permute.xlu0 %6436
          %v6439 = vsel %vm4652, %v6434, %v6437
          %v6440 = vadd.f32 %v6424, %v6432
          %v6441 = vadd.f32 %v6424, %v6439
          %v6442 = vsel %vm4668, %v6440, %v6441
          %v6443 = vmul.f32 %v6442, %v4672
          %v6444 = vmul.f32 %v6443, %v6443
          %v6446 = vrot.slane %v6444, 6
          %v6448 = vsub.f32 %v6443, %v6446
          %v6449 = vmax.f32 %v6448, 0.0
          %v6450 = vadd.f32 %v6449, 1e-05
          %v6451 = vrsqrt.pop %v6450
          %v6453 = vlaneseq
          %v6454 = vshrl.u32 %v6453, 7
          %v6455 = vsub.s32 0, %v6454
          %v6456 = vrot.slane %v6384, %v6455
          %v6458 = vmul.f32 %v6456, %v6451
          %v6460 = vrot.slane %v6458, 2
          %v6462 = vmul.f32 %v6443, %v6460
          %v6464 = vlaneseq
          %v6465 = vshrl.u32 %v6464, 7
          %v6466 = vsub.s32 0, %v6465
          %v6467 = vrot.slane %v6385, %v6466
          %v6469 = vsub.f32 %v6467, %v6462
          %v6471 = vunpack.c.l.s4 1966171168
          %v6472 = vunpack.c.0.s8 %v6471
          %v6473 = vlaneseq
          %v6474 = vshrl.u32 %v6473, 7
          %v6475 = vsub.s32 %v6472, %v6474
          %v6476 = vrot.slane %v6458, %v6475
          %v6477 = vcombine.high %v6476, %v6476
          %v6479 = vunpack.c.l.s4 1966171168
          %v6480 = vunpack.c.0.s8 %v6479
          %v6481 = vlaneseq
          %v6482 = vshrl.u32 %v6481, 7
          %v6483 = vsub.s32 %v6480, %v6482
          %v6484 = vrot.slane %v6476, %v6483
          %v6486 = vunpack.c.l.s4 1966171168
          %v6487 = vunpack.c.0.s8 %v6486
          %v6488 = vlaneseq
          %v6489 = vshrl.u32 %v6488, 7
          %v6490 = vsub.s32 %v6487, %v6489
          %v6491 = vrot.slane %v6477, %v6490
          %v6492 = vcombine.high %v6484, %v6484
          %v6493 = vcombine.high %v6491, %v6491
          %v6494 = vlaneseq
          %v6495 = vshrl.u32 %v6494, 7
          %v6496 = vsub.s32 0, %v6495
          %v6497 = vrot.slane %v6492, %v6496
          %v6498 = vlaneseq
          %v6499 = vshrl.u32 %v6498, 7
          %v6500 = vsub.s32 0, %v6499
          %v6501 = vrot.slane %v6493, %v6500
          %v6504 = vmul.f32 %v6382, %v6497
          %v6505 = vmul.f32 %v6383, %v6501
          %v6508 = vunpack.c.l.s4 1966171168
          %v6509 = vunpack.c.0.s8 %v6508
          %v6510 = vlaneseq
          %v6511 = vshrl.u32 %v6510, 7
          %v6512 = vsub.s32 %v6509, %v6511
          %v6513 = vrot.slane %v6469, %v6512
          %v6514 = vcombine.high %v6513, %v6513
          %v6516 = vunpack.c.l.s4 1966171168
          %v6517 = vunpack.c.0.s8 %v6516
          %v6518 = vlaneseq
          %v6519 = vshrl.u32 %v6518, 7
          %v6520 = vsub.s32 %v6517, %v6519
          %v6521 = vrot.slane %v6513, %v6520
          %v6523 = vunpack.c.l.s4 1966171168
          %v6524 = vunpack.c.0.s8 %v6523
          %v6525 = vlaneseq
          %v6526 = vshrl.u32 %v6525, 7
          %v6527 = vsub.s32 %v6524, %v6526
          %v6528 = vrot.slane %v6514, %v6527
          %v6529 = vlaneseq
          %v6530 = vshrl.u32 %v6529, 7
          %v6531 = vsub.s32 0, %v6530
          %v6532 = vrot.slane %v6521, %v6531
          %v6533 = vlaneseq
          %v6534 = vshrl.u32 %v6533, 7
          %v6535 = vsub.s32 0, %v6534
          %v6536 = vrot.slane %v6528, %v6535
          %v6539 = vadd.f32 %v6504, %v6532
          %v6540 = vadd.f32 %v6505, %v6536
          %v6541 = vmax.f32 %v6539, 0.0
          %v6542 = vmax.f32 %v6540, 0.0
          %v6543 = vsel %vm4594, %v6541, 0.0
          %v6544 = vrot.slane %v6543, 4
          %v6545 = vadd.f32 %v6543, %v6544
          %v6546 = vrot.slane %v6545, 2
          %v6547 = vadd.f32 %v6545, %v6546
          %v6548 = vrot.slane %v6547, 1
          %v6549 = vadd.f32 %v6547, %v6548
          %v6550 = vsel %vm4594, %v6542, 0.0
          %v6551 = vrot.slane %v6550, 4
          %v6552 = vadd.f32 %v6550, %v6551
          %v6553 = vrot.slane %v6552, 2
          %v6554 = vadd.f32 %v6552, %v6553
          %v6555 = vrot.slane %v6554, 1
          %v6556 = vadd.f32 %v6554, %v6555
          %v6557 = vrcp.pop 4.0
          %v6558 = vmul.f32 %v6549, %v6557
          %v6559 = vmul.f32 %v6556, %v6557
          %v6560 = vld [vmem:[#allocation3] sm:$0x3]
          %v6563 = vsel %vm4627, %v6559, %v6558
          %6564 = vrot.lane.b32.xlu0 %v6563, 64
          %v6565 = vpop.permute.xlu0 %6564
          %v6567 = vsel %vm4825, %v6560, %v6565
          %v6568 = vld [vmem:[%s20] sm:$0xff]
          %v6569 = vld [vmem:[%s20 + $0x8] sm:$0xff]
          %v6570 = vld [vmem:[%s20 + $0x10] sm:$0xff]
          %v6571 = vld [vmem:[%s20 + $0x18] sm:$0xff]
          %v6572 = vld [vmem:[%s20 + $0x20] sm:$0xff]
          %v6573 = vld [vmem:[%s20 + $0x28] sm:$0xff]
          %v6574 = vld [vmem:[%s20 + $0x30] sm:$0xff]
          %v6575 = vld [vmem:[%s20 + $0x38] sm:$0xff]
          %v6576 = vld [vmem:[%s20 + $0x40] sm:$0xff]
          %v6577 = vld [vmem:[%s20 + $0x48] sm:$0xff]
          %v6578 = vld [vmem:[%s20 + $0x50] sm:$0xff]
          %v6579 = vld [vmem:[%s20 + $0x58] sm:$0xff]
          %v6580 = vld [vmem:[%s20 + $0x60] sm:$0xff]
          %v6581 = vld [vmem:[%s20 + $0x68] sm:$0xff]
          %v6582 = vld [vmem:[%s20 + $0x70] sm:$0xff]
          %v6583 = vld [vmem:[%s20 + $0x78] sm:$0xff]
          %v6584 = vld [vmem:[#allocation4] sm:$0x1]
          %v6586 = vlaneseq
          %v6587 = vshrl.u32 %v6586, 7
          %v6588 = vsub.s32 0, %v6587
          %v6589 = vrot.slane %v6584, %v6588
          %6591 = vmatprep.subr.mxu0 0.0
          %6592 = vmatpush1.msra.mxu0 %v6568
          %6593 = vmatprep.subr.mxu0 0.0
          %6594 = vmatpush1.msra.mxu0 %v6569
          %6595 = vmatprep.subr.mxu0 0.0
          %6596 = vmatpush1.msra.mxu0 %v6570
          %6597 = vmatprep.subr.mxu0 0.0
          %6598 = vmatpush1.msra.mxu0 %v6571
          %6599 = vmatprep.subr.mxu0 0.0
          %6600 = vmatpush1.msra.mxu0 %v6572
          %6601 = vmatprep.subr.mxu0 0.0
          %6602 = vmatpush1.msra.mxu0 %v6573
          %6603 = vmatprep.subr.mxu0 0.0
          %6604 = vmatpush1.msra.mxu0 %v6574
          %6605 = vmatprep.subr.mxu0 0.0
          %6606 = vmatpush1.msra.mxu0 %v6575
          %6607 = vmatprep.subr.mxu0 0.0
          %6608 = vmatpush1.msra.mxu0 %v6576
          %6609 = vmatprep.subr.mxu0 0.0
          %6610 = vmatpush1.msra.mxu0 %v6577
          %6611 = vmatprep.subr.mxu0 0.0
          %6612 = vmatpush1.msra.mxu0 %v6578
          %6613 = vmatprep.subr.mxu0 0.0
          %6614 = vmatpush1.msra.mxu0 %v6579
          %6615 = vmatprep.subr.mxu0 0.0
          %6616 = vmatpush1.msra.mxu0 %v6580
          %6617 = vmatprep.subr.mxu0 0.0
          %6618 = vmatpush1.msra.mxu0 %v6581
          %6619 = vmatprep.subr.mxu0 0.0
          %6620 = vmatpush1.msra.mxu0 %v6582
          %6621 = vmatprep.subr.mxu0 0.0
          %6622 = vmatpush1.msra.mxu0 %v6583
          %6623 = vmatprep.subr.mxu0 0.0
          %6624 = vmatpush1.msra.mxu0 0.0
          %6625 = vmatprep.subr.mxu0 0.0
          %6626 = vmatpush1.msra.mxu0 0.0
          %6627 = vmatprep.subr.mxu0 0.0
          %6628 = vmatpush1.msra.mxu0 0.0
          %6629 = vmatprep.subr.mxu0 0.0
          %6630 = vmatpush1.msra.mxu0 0.0
          %6631 = vmatprep.subr.mxu0 0.0
          %6632 = vmatpush1.msra.mxu0 0.0
          %6633 = vmatprep.subr.mxu0 0.0
          %6634 = vmatpush1.msra.mxu0 0.0
          %6635 = vmatprep.subr.mxu0 0.0
          %6636 = vmatpush1.msra.mxu0 0.0
          %6637 = vmatprep.subr.mxu0 0.0
          %6638 = vmatpush1.msra.mxu0 0.0
          %6639 = vmatprep.subr.mxu0 0.0
          %6640 = vmatpush1.msra.mxu0 0.0
          %6641 = vmatprep.subr.mxu0 0.0
          %6642 = vmatpush1.msra.mxu0 0.0
          %6643 = vmatprep.subr.mxu0 0.0
          %6644 = vmatpush1.msra.mxu0 0.0
          %6645 = vmatprep.subr.mxu0 0.0
          %6646 = vmatpush1.msra.mxu0 0.0
          %6647 = vmatprep.subr.mxu0 0.0
          %6648 = vmatpush1.msra.mxu0 0.0
          %6649 = vmatprep.subr.mxu0 0.0
          %6650 = vmatpush1.msra.mxu0 0.0
          %6651 = vmatprep.subr.mxu0 0.0
          %6652 = vmatpush1.msra.mxu0 0.0
          %6653 = vmatprep.subr.mxu0 0.0
          %6654 = vmatpush1.msra.mxu0 0.0
          %6655 = vmatprep.mubr.f32.mxu0 0.0
          %6656 = vmatmul.mubr.f32.gmra.mrb[0].mxu0 %v6567
          %v6657 = vpop.f32.mrb[0].mxu0
          %v6658 = vadd.f32 %v6589, %v6657
          %v6659 = vpop.f32.mrb[0].mxu0
          %6660 = vdwg.mxu0
          %vm6661 = vcmask 1024
          %6662 = vst.msk [vmem:[%s22] sm:$0x3] %vm6661, %v6658
        $region132: #{lstmfrn_forward.1} parent=107 // pred_fallthru
          _
        // Predicated region
        $region133: #{lstmfrn_forward.1} parent=107 // pred_check
          %p6663 = pneg %p542
        $region134: #{lstmfrn_forward.1} parent=107 // pred_check_branch
          %6665 = sbr.rel (%p6663) target = $region136
        $region135: #{lstmfrn_forward.1} parent=107 // pred_region
          _
        $region136: #{lstmfrn_forward.1} parent=107 // pred_fallthru
          _
        // Predicated region
        $region137: #{lstmfrn_forward.1} parent=107 // pred_check
          %p6666 = pneg %p542
        $region138: #{lstmfrn_forward.1} parent=107 // pred_check_branch
          %6668 = sbr.rel (%p6666) target = $region140
        $region139: #{lstmfrn_forward.1} parent=107 // pred_region
          _
        $region140: #{lstmfrn_forward.1} parent=107 // pred_fallthru
          _
      $region108: #{lstmfrn_forward.1} parent=5 // pred_fallthru
        _
      %p6669 = scmp.le.s32.totalorder 2, %s32
      // Predicated region
      $region141: #{lstmfrn_forward.1} parent=5 // pred_check
        %p6670 = pneg %p6669
      $region142: #{lstmfrn_forward.1} parent=5 // pred_check_branch
        %6672 = sbr.rel (%p6670) target = $region144
      $region143: #{lstmfrn_forward.1} parent=5 // pred_region
        %s6673 = ssub.s32 %s32, 2
      $region144: #{lstmfrn_forward.1} parent=5 // pred_fallthru
        _
    $region6: #{lstmfrn_forward.1} parent=1 // loop_footer
      %s36 = sadd.s32 1, %s32
    $region7: #{lstmfrn_forward.1} parent=1 // loop_footer_branch
      %31 = sbr.rel target = $region3
    $region8: #{lstmfrn_forward.1} parent=1 // loop_exit
      _
    %6674 = vsyncpa [#allocation6], 1
    %s6675 = scalar_lea.sflag [#allocation6], 1
    %6676 = vsyncpa %s6675, 1
    %6677 = vsyncpa [#allocation8], 1

</llo_original>
